<compile_context>
chip_gen: v6e
topology: v6e:2x2x1
jax: 0.10.0
libtpu: 0.0.40
codegen_flags: <defaults>
</compile_context>

<pallas_src>
import functools

import jax
import jax.numpy as jnp
from jax.experimental import pallas as pl
from jax.experimental.pallas import tpu as pltpu


def _round_up(v, m):
    return (v + m - 1) // m * m


def _vmem_capacity_bytes():
    """Best-effort physical VMEM query with a conservative (v7x) fallback."""
    try:
        info = pltpu.get_tpu_info()
        cap = getattr(info, "vmem_capacity_bytes", None)
        if cap:
            return int(cap)
    except Exception:
        pass
    return 64 * 1024 * 1024


# ---------------------------------------------------------------------------
# Fused Pallas kernel: all 9 convs of the block for one image.
# ---------------------------------------------------------------------------
def _rdb_kernel(x_ref, mask_ref, *rest, H, W, nc_pad, gc_pad, margin, pt_nom):
    Wp = W + 2
    P = (H + 2) * Wp
    ctotal_pad = nc_pad + 8 * gc_pad

    w_refs = rest[0:8]        # each (9*gc_pad, cin_pad_i), compute dtype
    b_refs = rest[8:16]       # each (gc_pad, 1), f32 (zero-padded)
    w9_ref = rest[16]         # (nc_pad, ctotal_pad), compute dtype
    b9_ref = rest[17]         # (nc_pad, 1), f32
    o_ref = rest[18]          # (1, nc_pad, P), f32
    slab = rest[19]           # (ctotal_pad, P + 2*margin), compute dtype
    y_scr = rest[20]          # (9*gc_pad, pt_max + 2*margin), f32

    # Margins are never written below, but must read as exact zeros for every
    # image; re-zero just those two column bands (cheap) every grid step so
    # correctness does not depend on which TensorCore ran step 0.
    zeros_m = jnp.zeros((ctotal_pad, margin), slab.dtype)
    slab[:, pl.ds(0, margin)] = zeros_m
    slab[:, pl.ds(margin + P, margin)] = zeros_m

    # Zero-padded input image -> channel rows [0 : nc_pad) of the slab.
    slab[pl.ds(0, nc_pad), pl.ds(margin, P)] = x_ref[0].astype(slab.dtype)

    # conv1..conv8: 3x3 "same" conv + bias + ReLU with dense slab growth.
    # Per layer and pixel chunk: one stacked MXU matmul (9 taps on M), then
    # 9 shifted row-band accumulations out of the f32 tap scratch.
    for i in range(8):
        cinp = nc_pad + i * gc_pad
        wmat = w_refs[i][...]                      # hoisted out of chunk loop
        bias = b_refs[i][...]
        for p0 in range(0, P, pt_nom):             # p0 is a multiple of 128
            pt = min(pt_nom, P - p0)
            width = pt + 2 * margin                # halo-extended, aligned read
            win = slab[pl.ds(0, cinp), pl.ds(p0, width)]
            y_scr[:, pl.ds(0, width)] = jnp.dot(
                wmat, win, preferred_element_type=jnp.float32)
            acc = jnp.zeros((gc_pad, pt), jnp.float32)
            for ky in range(3):
                for kx in range(3):
                    t = ky * 3 + kx
                    s = (ky - 1) * Wp + (kx - 1)   # constant pixel shift
                    acc = acc + y_scr[pl.ds(t * gc_pad, gc_pad),
                                      pl.ds(margin + s, pt)]
            # bias + ReLU, then re-zero padding pixels so later taps read 0.
            acc = jnp.maximum(acc + bias, 0.0) * mask_ref[:, pl.ds(p0, pt)]
            slab[pl.ds(nc_pad + i * gc_pad, gc_pad),
                 pl.ds(margin + p0, pt)] = acc.astype(slab.dtype)

    # conv9: 1x1 conv over the full slab, fused with 0.2*y9 + x residual.
    w9 = w9_ref[...]
    b9 = b9_ref[...]
    for p0 in range(0, P, pt_nom):
        pt = min(pt_nom, P - p0)
        feat = slab[pl.ds(0, ctotal_pad), pl.ds(margin + p0, pt)]
        y9 = jnp.dot(w9, feat, preferred_element_type=jnp.float32) + b9
        resid = x_ref[0, :, pl.ds(p0, pt)]          # exact f32 residual
        o_ref[0, :, pl.ds(p0, pt)] = (y9 * 0.2 + resid).astype(o_ref.dtype)


# ---------------------------------------------------------------------------
# Host-side weight layout helpers
# ---------------------------------------------------------------------------
def _place_cin(w2d, nc, gc, n_prev, nc_pad, gc_pad):
    """Scatter real input-channel columns into the padded slab channel layout."""
    M = w2d.shape[0]
    pieces = [w2d[:, :nc]]
    if nc_pad > nc:
        pieces.append(jnp.zeros((M, nc_pad - nc), w2d.dtype))
    for j in range(n_prev):
        pieces.append(w2d[:, nc + j * gc: nc + (j + 1) * gc])
        if gc_pad > gc:
            pieces.append(jnp.zeros((M, gc_pad - gc), w2d.dtype))
    return jnp.concatenate(pieces, axis=1)


# ---------------------------------------------------------------------------
# Wrapper: layout glue (NCHW -> padded channel-major flat pixels) + pallas_call
# ---------------------------------------------------------------------------
def residual_dense_block_8c(x_nchw, params, *,
                            compute_dtype=jnp.bfloat16, pixel_tile=2048):
    N, nc, H, W = x_nchw.shape
    gc = params[0][0].shape[0]
    Hp, Wp = H + 2, W + 2
    P = Hp * Wp

    # Sublane-aligned channel padding (16 rows/tile for bf16 slab, 8 for f32).
    sub = 16 if jnp.dtype(compute_dtype).itemsize == 2 else 8
    nc_pad = _round_up(nc, sub)
    gc_pad = _round_up(gc, sub)
    ctotal_pad = nc_pad + 8 * gc_pad

    # Left/right halo margin on the flattened padded pixel axis, rounded up to
    # 128 so the hot slab reads/writes start lane-aligned.
    margin = _round_up(Wp + 1, 128)

    # Pixel-chunk size (multiple of 128 so chunk starts stay lane-aligned).
    pt_nom = max(128, (int(pixel_tile) // 128) * 128)
    pt_max = min(pt_nom, P)

    # Zero-padded input (channels padded to nc_pad, spatial padded by 1),
    # channel-major with pixels flattened on the lane axis.  Kept f32 so the
    # residual add is exact even on the bf16 compute path.
    xpad = jnp.pad(x_nchw.astype(jnp.float32),
                   ((0, 0), (0, nc_pad - nc), (1, 1), (1, 1)))
    xpad = xpad.reshape(N, nc_pad, P)

    # Interior-pixel mask (1 at real pixels, 0 at padding positions).
    ys = jnp.arange(Hp).reshape(Hp, 1)
    xs = jnp.arange(Wp).reshape(1, Wp)
    interior = ((ys >= 1) & (ys <= H) & (xs >= 1) & (xs <= W))
    interior = interior.reshape(1, P).astype(jnp.float32)

    # Per-layer stacked tap weights: (gc, cin, 3, 3) -> (9*gc_pad, cin_pad),
    # with cin columns scattered into the padded slab channel layout and the
    # padded M rows / cin columns holding exact zeros.
    w_stacked, biases, in_specs = [], [], []
    in_specs.append(pl.BlockSpec((1, nc_pad, P), lambda n: (n, 0, 0)))   # x
    in_specs.append(pl.BlockSpec((1, P), lambda n: (0, 0)))              # mask
    for i in range(8):
        w, b = params[i]
        cin = w.shape[1]
        wt = jnp.transpose(w, (2, 3, 0, 1)).reshape(9 * gc, cin)
        wt = _place_cin(wt, nc, gc, i, nc_pad, gc_pad)        # (9*gc, cin_pad)
        cin_pad = wt.shape[1]
        wt = wt.reshape(9, gc, cin_pad)
        wt = jnp.pad(wt, ((0, 0), (0, gc_pad - gc), (0, 0)))
        wt = wt.reshape(9 * gc_pad, cin_pad).astype(compute_dtype)
        w_stacked.append(wt)
        biases.append(jnp.pad(b, (0, gc_pad - gc)).reshape(gc_pad, 1)
                      .astype(jnp.float32))
    for wt in w_stacked:
        in_specs.append(pl.BlockSpec(wt.shape, lambda n: (0, 0)))
    for bt in biases:
        in_specs.append(pl.BlockSpec(bt.shape, lambda n: (0, 0)))

    w9, b9 = params[8]
    w9m = w9.reshape(nc, nc + 8 * gc)
    w9m = _place_cin(w9m, nc, gc, 8, nc_pad, gc_pad)          # (nc, ctotal_pad)
    w9m = jnp.pad(w9m, ((0, nc_pad - nc), (0, 0))).astype(compute_dtype)
    b9m = jnp.pad(b9, (0, nc_pad - nc)).reshape(nc_pad, 1).astype(jnp.float32)
    in_specs.append(pl.BlockSpec(w9m.shape, lambda n: (0, 0)))
    in_specs.append(pl.BlockSpec(b9m.shape, lambda n: (0, 0)))

    # VMEM budget derived from actual buffer sizes, capped by physical VMEM.
    csize = jnp.dtype(compute_dtype).itemsize
    slab_bytes = ctotal_pad * (P + 2 * margin) * csize
    yscr_bytes = 9 * gc_pad * (pt_max + 2 * margin) * 4
    io_bytes = 2 * (2 * nc_pad * P * 4 + P * 4)      # double-buffered x/out/mask
    w_bytes = 2 * (sum(int(w.size) for w in w_stacked) + int(w9m.size)) * csize
    b_bytes = 2 * (8 * gc_pad + nc_pad) * 4
    acc_bytes = 4 * gc_pad * pt_max * 4              # headroom for acc temporaries
    need = slab_bytes + yscr_bytes + io_bytes + w_bytes + b_bytes + acc_bytes
    vmem_limit = max(int(need * 1.4) + (2 << 20), 32 * 1024 * 1024)
    vmem_limit = min(vmem_limit, int(_vmem_capacity_bytes() * 0.9))

    kernel = functools.partial(_rdb_kernel, H=H, W=W, nc_pad=nc_pad,
                               gc_pad=gc_pad, margin=margin, pt_nom=pt_nom)

    out = pl.pallas_call(
        kernel,
        out_shape=jax.ShapeDtypeStruct((N, nc_pad, P), jnp.float32),
        grid=(N,),
        in_specs=in_specs,
        out_specs=pl.BlockSpec((1, nc_pad, P), lambda n: (n, 0, 0)),
        scratch_shapes=[
            pltpu.VMEM((ctotal_pad, P + 2 * margin), compute_dtype),
            pltpu.VMEM((9 * gc_pad, pt_max + 2 * margin), jnp.float32),
        ],
        compiler_params=pltpu.CompilerParams(
            dimension_semantics=("parallel",),
            vmem_limit_bytes=vmem_limit,
        ),
    )(xpad, interior, *w_stacked, *biases, w9m, b9m)

    # Drop padding pixels and padded channels -> NCHW.
    return out.reshape(N, nc_pad, Hp, Wp)[:, :nc, 1:H + 1, 1:W + 1]


# ---------------------------------------------------------------------------
# Parameter init (PyTorch-layout weights) and pure-JAX reference
# ---------------------------------------------------------------------------
def init_params(key, nc, gc, kernel_size=3):
    params = []
    for i in range(8):
        cin = nc + i * gc
        key, k1, k2 = jax.random.split(key, 3)
        fan_in = cin * kernel_size * kernel_size
        w = jax.random.normal(k1, (gc, cin, kernel_size, kernel_size),
                              jnp.float32) / jnp.sqrt(fan_in)
        b = jax.random.normal(k2, (gc,), jnp.float32) * 0.01
        params.append((w, b))
    cin = nc + 8 * gc
    key, k1, k2 = jax.random.split(key, 3)
    w9 = jax.random.normal(k1, (nc, cin, 1, 1), jnp.float32) / jnp.sqrt(cin)
    b9 = jax.random.normal(k2, (nc,), jnp.float32) * 0.01
    params.append((w9, b9))
    return params


def reference(x_nchw, params):
    def conv(x, w, b):
        y = jax.lax.conv_general_dilated(
            x, w, (1, 1), 'SAME',
            dimension_numbers=('NCHW', 'OIHW', 'NCHW'),
            precision=jax.lax.Precision.HIGHEST)
        return y + b.reshape(1, -1, 1, 1)

    feats = [x_nchw]
    for i in range(8):
        w, b = params[i]
        feats.append(jnp.maximum(conv(jnp.concatenate(feats, axis=1), w, b), 0.0))
    w9, b9 = params[8]
    y9 = conv(jnp.concatenate(feats, axis=1), w9, b9)
    return y9 * 0.2 + x_nchw


if __name__ == "__main__":
    key = jax.random.PRNGKey(0)
    kx, kp = jax.random.split(key)

    N, nc, H, W = 2, 4, 16, 16
    gc = 8
    x = jax.random.normal(kx, (N, nc, H, W), jnp.float32)
    params = init_params(kp, nc, gc, kernel_size=3)

    ref = jax.block_until_ready(reference(x, params))

    # f32 compute path: tight tolerance against the f32 reference.
    out_f32 = jax.block_until_ready(
        residual_dense_block_8c(x, params, compute_dtype=jnp.float32))
    assert out_f32.shape == (N, nc, H, W), out_f32.shape
    err_f32 = float(jnp.max(jnp.abs(out_f32 - ref)))
    assert err_f32 < 2e-3, err_f32

    # Default bf16 MXU path (f32 accumulation / epilogue): looser tolerance.
    out_bf16 = jax.block_until_ready(residual_dense_block_8c(x, params))
    assert out_bf16.shape == (N, nc, H, W), out_bf16.shape
    err_bf16 = float(jnp.max(jnp.abs(out_bf16 - ref)))
    assert err_bf16 < 6e-2, err_bf16

    print("KERNEL_OK")
</pallas_src>

<mosaic_0001>
module attributes {stable_mosaic.version = 11 : i64} {
  func.func @_rdb_kernel(%arg0: i32, %arg1: memref<1x8x324xf32, #tpu.memory_space<vmem>>, %arg2: memref<1x324xf32, #tpu.memory_space<vmem>>, %arg3: memref<72x8xf32, #tpu.memory_space<vmem>>, %arg4: memref<72x16xf32, #tpu.memory_space<vmem>>, %arg5: memref<72x24xf32, #tpu.memory_space<vmem>>, %arg6: memref<72x32xf32, #tpu.memory_space<vmem>>, %arg7: memref<72x40xf32, #tpu.memory_space<vmem>>, %arg8: memref<72x48xf32, #tpu.memory_space<vmem>>, %arg9: memref<72x56xf32, #tpu.memory_space<vmem>>, %arg10: memref<72x64xf32, #tpu.memory_space<vmem>>, %arg11: memref<8x1xf32, #tpu.memory_space<vmem>>, %arg12: memref<8x1xf32, #tpu.memory_space<vmem>>, %arg13: memref<8x1xf32, #tpu.memory_space<vmem>>, %arg14: memref<8x1xf32, #tpu.memory_space<vmem>>, %arg15: memref<8x1xf32, #tpu.memory_space<vmem>>, %arg16: memref<8x1xf32, #tpu.memory_space<vmem>>, %arg17: memref<8x1xf32, #tpu.memory_space<vmem>>, %arg18: memref<8x1xf32, #tpu.memory_space<vmem>>, %arg19: memref<8x72xf32, #tpu.memory_space<vmem>>, %arg20: memref<8x1xf32, #tpu.memory_space<vmem>>, %arg21: memref<1x8x324xf32, #tpu.memory_space<vmem>>, %arg22: memref<72x580xf32, #tpu.memory_space<vmem>>, %arg23: memref<72x580xf32, #tpu.memory_space<vmem>>) attributes {dimension_semantics = [#tpu.dimension_semantics<parallel>], iteration_bounds = array<i64: 2>, scalar_prefetch = 0 : i64, scratch_operands = 2 : i64, tpu.core_type = #tpu.core_type<tc>, window_params = [{transform_indices = @transform_0, window_bounds = array<i64: 1, 8, 324>}, {pipeline_mode = #tpu.pipeline_mode<synchronous>, transform_indices = @transform_1, window_bounds = array<i64: 1, 324>}, {pipeline_mode = #tpu.pipeline_mode<synchronous>, transform_indices = @transform_2, window_bounds = array<i64: 72, 8>}, {pipeline_mode = #tpu.pipeline_mode<synchronous>, transform_indices = @transform_3, window_bounds = array<i64: 72, 16>}, {pipeline_mode = #tpu.pipeline_mode<synchronous>, transform_indices = @transform_4, window_bounds = array<i64: 72, 24>}, {pipeline_mode = #tpu.pipeline_mode<synchronous>, transform_indices = @transform_5, window_bounds = array<i64: 72, 32>}, {pipeline_mode = #tpu.pipeline_mode<synchronous>, transform_indices = @transform_6, window_bounds = array<i64: 72, 40>}, {pipeline_mode = #tpu.pipeline_mode<synchronous>, transform_indices = @transform_7, window_bounds = array<i64: 72, 48>}, {pipeline_mode = #tpu.pipeline_mode<synchronous>, transform_indices = @transform_8, window_bounds = array<i64: 72, 56>}, {pipeline_mode = #tpu.pipeline_mode<synchronous>, transform_indices = @transform_9, window_bounds = array<i64: 72, 64>}, {pipeline_mode = #tpu.pipeline_mode<synchronous>, transform_indices = @transform_10, window_bounds = array<i64: 8, 1>}, {pipeline_mode = #tpu.pipeline_mode<synchronous>, transform_indices = @transform_11, window_bounds = array<i64: 8, 1>}, {pipeline_mode = #tpu.pipeline_mode<synchronous>, transform_indices = @transform_12, window_bounds = array<i64: 8, 1>}, {pipeline_mode = #tpu.pipeline_mode<synchronous>, transform_indices = @transform_13, window_bounds = array<i64: 8, 1>}, {pipeline_mode = #tpu.pipeline_mode<synchronous>, transform_indices = @transform_14, window_bounds = array<i64: 8, 1>}, {pipeline_mode = #tpu.pipeline_mode<synchronous>, transform_indices = @transform_15, window_bounds = array<i64: 8, 1>}, {pipeline_mode = #tpu.pipeline_mode<synchronous>, transform_indices = @transform_16, window_bounds = array<i64: 8, 1>}, {pipeline_mode = #tpu.pipeline_mode<synchronous>, transform_indices = @transform_17, window_bounds = array<i64: 8, 1>}, {pipeline_mode = #tpu.pipeline_mode<synchronous>, transform_indices = @transform_18, window_bounds = array<i64: 8, 72>}, {pipeline_mode = #tpu.pipeline_mode<synchronous>, transform_indices = @transform_19, window_bounds = array<i64: 8, 1>}, {transform_indices = @transform_20, window_bounds = array<i64: 1, 8, 324>}]} {
    %cst = arith.constant 0.000000e+00 : f32
    %0 = vector.broadcast %cst : f32 to vector<72x128xf32>
    %c0 = arith.constant 0 : index
    %c0_0 = arith.constant 0 : index
    %1 = vector.load %arg22[%c0, %c0_0] : memref<72x580xf32, #tpu.memory_space<vmem>>, vector<72x128xf32>
    tpu.vector_store %arg22[%c0, %c0_0], %0 {strides = array<i32>} : memref<72x580xf32, #tpu.memory_space<vmem>>, vector<72x128xf32>,
    %c0_1 = arith.constant 0 : index
    %c452 = arith.constant 452 : index
    %2 = vector.load %arg22[%c0_1, %c452] : memref<72x580xf32, #tpu.memory_space<vmem>>, vector<72x128xf32>
    tpu.vector_store %arg22[%c0_1, %c452], %0 {strides = array<i32>} : memref<72x580xf32, #tpu.memory_space<vmem>>, vector<72x128xf32>,
    %c0_2 = arith.constant 0 : index
    %c0_3 = arith.constant 0 : index
    %c0_4 = arith.constant 0 : index
    %3 = vector.load %arg1[%c0_2, %c0_3, %c0_4] : memref<1x8x324xf32, #tpu.memory_space<vmem>>, vector<1x8x324xf32>
    %4 = vector.shape_cast %3 : vector<1x8x324xf32> to vector<8x324xf32>
    %c0_5 = arith.constant 0 : index
    %c128 = arith.constant 128 : index
    %5 = vector.load %arg22[%c0_5, %c128] : memref<72x580xf32, #tpu.memory_space<vmem>>, vector<8x324xf32>
    tpu.vector_store %arg22[%c0_5, %c128], %4 {strides = array<i32>} : memref<72x580xf32, #tpu.memory_space<vmem>>, vector<8x324xf32>,
    %c0_6 = arith.constant 0 : index
    %c0_7 = arith.constant 0 : index
    %6 = vector.load %arg3[%c0_6, %c0_7] : memref<72x8xf32, #tpu.memory_space<vmem>>, vector<72x8xf32>
    %c0_8 = arith.constant 0 : index
    %c0_9 = arith.constant 0 : index
    %7 = vector.load %arg11[%c0_8, %c0_9] : memref<8x1xf32, #tpu.memory_space<vmem>>, vector<8x1xf32>
    %c0_10 = arith.constant 0 : index
    %c0_11 = arith.constant 0 : index
    %8 = vector.load %arg22[%c0_10, %c0_11] : memref<72x580xf32, #tpu.memory_space<vmem>>, vector<8x580xf32>
    %cst_12 = arith.constant dense<0.000000e+00> : vector<72x580xf32>
    %9 = tpu.matmul %6, %8, %cst_12 {dimension_numbers = #tpu.dot_dimension_numbers<[1], [0], [0], [1], [0, 0, 1, 1], [], []>} : vector<72x8xf32>, vector<8x580xf32>, vector<72x580xf32> -> vector<72x580xf32>
    %c0_13 = arith.constant 0 : index
    %c0_14 = arith.constant 0 : index
    %10 = vector.load %arg23[%c0_13, %c0_14] : memref<72x580xf32, #tpu.memory_space<vmem>>, vector<72x580xf32>
    tpu.vector_store %arg23[%c0_13, %c0_14], %9 {strides = array<i32>} : memref<72x580xf32, #tpu.memory_space<vmem>>, vector<72x580xf32>,
    %cst_15 = arith.constant 0.000000e+00 : f32
    %11 = vector.broadcast %cst_15 : f32 to vector<8x324xf32>
    %c0_16 = arith.constant 0 : index
    %c109 = arith.constant 109 : index
    %12 = vector.load %arg23[%c0_16, %c109] : memref<72x580xf32, #tpu.memory_space<vmem>>, vector<8x324xf32>
    %13 = arith.addf %11, %12 : vector<8x324xf32>
    %c8 = arith.constant 8 : index
    %c110 = arith.constant 110 : index
    %14 = vector.load %arg23[%c8, %c110] : memref<72x580xf32, #tpu.memory_space<vmem>>, vector<8x324xf32>
    %15 = arith.addf %13, %14 : vector<8x324xf32>
    %c16 = arith.constant 16 : index
    %c111 = arith.constant 111 : index
    %16 = vector.load %arg23[%c16, %c111] : memref<72x580xf32, #tpu.memory_space<vmem>>, vector<8x324xf32>
    %17 = arith.addf %15, %16 : vector<8x324xf32>
    %c24 = arith.constant 24 : index
    %c127 = arith.constant 127 : index
    %18 = vector.load %arg23[%c24, %c127] : memref<72x580xf32, #tpu.memory_space<vmem>>, vector<8x324xf32>
    %19 = arith.addf %17, %18 : vector<8x324xf32>
    %c32 = arith.constant 32 : index
    %c128_17 = arith.constant 128 : index
    %20 = vector.load %arg23[%c32, %c128_17] : memref<72x580xf32, #tpu.memory_space<vmem>>, vector<8x324xf32>
    %21 = arith.addf %19, %20 : vector<8x324xf32>
    %c40 = arith.constant 40 : index
    %c129 = arith.constant 129 : index
    %22 = vector.load %arg23[%c40, %c129] : memref<72x580xf32, #tpu.memory_space<vmem>>, vector<8x324xf32>
    %23 = arith.addf %21, %22 : vector<8x324xf32>
    %c48 = arith.constant 48 : index
    %c145 = arith.constant 145 : index
    %24 = vector.load %arg23[%c48, %c145] : memref<72x580xf32, #tpu.memory_space<vmem>>, vector<8x324xf32>
    %25 = arith.addf %23, %24 : vector<8x324xf32>
    %c56 = arith.constant 56 : index
    %c146 = arith.constant 146 : index
    %26 = vector.load %arg23[%c56, %c146] : memref<72x580xf32, #tpu.memory_space<vmem>>, vector<8x324xf32>
    %27 = arith.addf %25, %26 : vector<8x324xf32>
    %c64 = arith.constant 64 : index
    %c147 = arith.constant 147 : index
    %28 = vector.load %arg23[%c64, %c147] : memref<72x580xf32, #tpu.memory_space<vmem>>, vector<8x324xf32>
    %29 = arith.addf %27, %28 : vector<8x324xf32>
    %30 = vector.broadcast %7 : vector<8x1xf32> to vector<8x324xf32>
    %31 = arith.addf %29, %30 : vector<8x324xf32>
    %cst_18 = arith.constant 0.000000e+00 : f32
    %32 = vector.broadcast %cst_18 : f32 to vector<8x324xf32>
    %33 = arith.maximumf %31, %32 : vector<8x324xf32>
    %c0_19 = arith.constant 0 : index
    %c0_20 = arith.constant 0 : index
    %34 = vector.load %arg2[%c0_19, %c0_20] : memref<1x324xf32, #tpu.memory_space<vmem>>, vector<1x324xf32>
    %35 = vector.broadcast %34 : vector<1x324xf32> to vector<8x324xf32>
    %36 = arith.mulf %33, %35 : vector<8x324xf32>
    %c8_21 = arith.constant 8 : index
    %c128_22 = arith.constant 128 : index
    %37 = vector.load %arg22[%c8_21, %c128_22] : memref<72x580xf32, #tpu.memory_space<vmem>>, vector<8x324xf32>
    tpu.vector_store %arg22[%c8_21, %c128_22], %36 {strides = array<i32>} : memref<72x580xf32, #tpu.memory_space<vmem>>, vector<8x324xf32>,
    %c0_23 = arith.constant 0 : index
    %c0_24 = arith.constant 0 : index
    %38 = vector.load %arg4[%c0_23, %c0_24] : memref<72x16xf32, #tpu.memory_space<vmem>>, vector<72x16xf32>
    %c0_25 = arith.constant 0 : index
    %c0_26 = arith.constant 0 : index
    %39 = vector.load %arg12[%c0_25, %c0_26] : memref<8x1xf32, #tpu.memory_space<vmem>>, vector<8x1xf32>
    %c0_27 = arith.constant 0 : index
    %c0_28 = arith.constant 0 : index
    %40 = vector.load %arg22[%c0_27, %c0_28] : memref<72x580xf32, #tpu.memory_space<vmem>>, vector<16x580xf32>
    %cst_29 = arith.constant dense<0.000000e+00> : vector<72x580xf32>
    %41 = tpu.matmul %38, %40, %cst_29 {dimension_numbers = #tpu.dot_dimension_numbers<[1], [0], [0], [1], [0, 0, 1, 1], [], []>} : vector<72x16xf32>, vector<16x580xf32>, vector<72x580xf32> -> vector<72x580xf32>
    %c0_30 = arith.constant 0 : index
    %c0_31 = arith.constant 0 : index
    %42 = vector.load %arg23[%c0_30, %c0_31] : memref<72x580xf32, #tpu.memory_space<vmem>>, vector<72x580xf32>
    tpu.vector_store %arg23[%c0_30, %c0_31], %41 {strides = array<i32>} : memref<72x580xf32, #tpu.memory_space<vmem>>, vector<72x580xf32>,
    %cst_32 = arith.constant 0.000000e+00 : f32
    %43 = vector.broadcast %cst_32 : f32 to vector<8x324xf32>
    %c0_33 = arith.constant 0 : index
    %c109_34 = arith.constant 109 : index
    %44 = vector.load %arg23[%c0_33, %c109_34] : memref<72x580xf32, #tpu.memory_space<vmem>>, vector<8x324xf32>
    %45 = arith.addf %43, %44 : vector<8x324xf32>
    %c8_35 = arith.constant 8 : index
    %c110_36 = arith.constant 110 : index
    %46 = vector.load %arg23[%c8_35, %c110_36] : memref<72x580xf32, #tpu.memory_space<vmem>>, vector<8x324xf32>
    %47 = arith.addf %45, %46 : vector<8x324xf32>
    %c16_37 = arith.constant 16 : index
    %c111_38 = arith.constant 111 : index
    %48 = vector.load %arg23[%c16_37, %c111_38] : memref<72x580xf32, #tpu.memory_space<vmem>>, vector<8x324xf32>
    %49 = arith.addf %47, %48 : vector<8x324xf32>
    %c24_39 = arith.constant 24 : index
    %c127_40 = arith.constant 127 : index
    %50 = vector.load %arg23[%c24_39, %c127_40] : memref<72x580xf32, #tpu.memory_space<vmem>>, vector<8x324xf32>
    %51 = arith.addf %49, %50 : vector<8x324xf32>
    %c32_41 = arith.constant 32 : index
    %c128_42 = arith.constant 128 : index
    %52 = vector.load %arg23[%c32_41, %c128_42] : memref<72x580xf32, #tpu.memory_space<vmem>>, vector<8x324xf32>
    %53 = arith.addf %51, %52 : vector<8x324xf32>
    %c40_43 = arith.constant 40 : index
    %c129_44 = arith.constant 129 : index
    %54 = vector.load %arg23[%c40_43, %c129_44] : memref<72x580xf32, #tpu.memory_space<vmem>>, vector<8x324xf32>
    %55 = arith.addf %53, %54 : vector<8x324xf32>
    %c48_45 = arith.constant 48 : index
    %c145_46 = arith.constant 145 : index
    %56 = vector.load %arg23[%c48_45, %c145_46] : memref<72x580xf32, #tpu.memory_space<vmem>>, vector<8x324xf32>
    %57 = arith.addf %55, %56 : vector<8x324xf32>
    %c56_47 = arith.constant 56 : index
    %c146_48 = arith.constant 146 : index
    %58 = vector.load %arg23[%c56_47, %c146_48] : memref<72x580xf32, #tpu.memory_space<vmem>>, vector<8x324xf32>
    %59 = arith.addf %57, %58 : vector<8x324xf32>
    %c64_49 = arith.constant 64 : index
    %c147_50 = arith.constant 147 : index
    %60 = vector.load %arg23[%c64_49, %c147_50] : memref<72x580xf32, #tpu.memory_space<vmem>>, vector<8x324xf32>
    %61 = arith.addf %59, %60 : vector<8x324xf32>
    %62 = vector.broadcast %39 : vector<8x1xf32> to vector<8x324xf32>
    %63 = arith.addf %61, %62 : vector<8x324xf32>
    %cst_51 = arith.constant 0.000000e+00 : f32
    %64 = vector.broadcast %cst_51 : f32 to vector<8x324xf32>
    %65 = arith.maximumf %63, %64 : vector<8x324xf32>
    %c0_52 = arith.constant 0 : index
    %c0_53 = arith.constant 0 : index
    %66 = vector.load %arg2[%c0_52, %c0_53] : memref<1x324xf32, #tpu.memory_space<vmem>>, vector<1x324xf32>
    %67 = vector.broadcast %66 : vector<1x324xf32> to vector<8x324xf32>
    %68 = arith.mulf %65, %67 : vector<8x324xf32>
    %c16_54 = arith.constant 16 : index
    %c128_55 = arith.constant 128 : index
    %69 = vector.load %arg22[%c16_54, %c128_55] : memref<72x580xf32, #tpu.memory_space<vmem>>, vector<8x324xf32>
    tpu.vector_store %arg22[%c16_54, %c128_55], %68 {strides = array<i32>} : memref<72x580xf32, #tpu.memory_space<vmem>>, vector<8x324xf32>,
    %c0_56 = arith.constant 0 : index
    %c0_57 = arith.constant 0 : index
    %70 = vector.load %arg5[%c0_56, %c0_57] : memref<72x24xf32, #tpu.memory_space<vmem>>, vector<72x24xf32>
    %c0_58 = arith.constant 0 : index
    %c0_59 = arith.constant 0 : index
    %71 = vector.load %arg13[%c0_58, %c0_59] : memref<8x1xf32, #tpu.memory_space<vmem>>, vector<8x1xf32>
    %c0_60 = arith.constant 0 : index
    %c0_61 = arith.constant 0 : index
    %72 = vector.load %arg22[%c0_60, %c0_61] : memref<72x580xf32, #tpu.memory_space<vmem>>, vector<24x580xf32>
    %cst_62 = arith.constant dense<0.000000e+00> : vector<72x580xf32>
    %73 = tpu.matmul %70, %72, %cst_62 {dimension_numbers = #tpu.dot_dimension_numbers<[1], [0], [0], [1], [0, 0, 1, 1], [], []>} : vector<72x24xf32>, vector<24x580xf32>, vector<72x580xf32> -> vector<72x580xf32>
    %c0_63 = arith.constant 0 : index
    %c0_64 = arith.constant 0 : index
    %74 = vector.load %arg23[%c0_63, %c0_64] : memref<72x580xf32, #tpu.memory_space<vmem>>, vector<72x580xf32>
    tpu.vector_store %arg23[%c0_63, %c0_64], %73 {strides = array<i32>} : memref<72x580xf32, #tpu.memory_space<vmem>>, vector<72x580xf32>,
    %cst_65 = arith.constant 0.000000e+00 : f32
    %75 = vector.broadcast %cst_65 : f32 to vector<8x324xf32>
    %c0_66 = arith.constant 0 : index
    %c109_67 = arith.constant 109 : index
    %76 = vector.load %arg23[%c0_66, %c109_67] : memref<72x580xf32, #tpu.memory_space<vmem>>, vector<8x324xf32>
    %77 = arith.addf %75, %76 : vector<8x324xf32>
    %c8_68 = arith.constant 8 : index
    %c110_69 = arith.constant 110 : index
    %78 = vector.load %arg23[%c8_68, %c110_69] : memref<72x580xf32, #tpu.memory_space<vmem>>, vector<8x324xf32>
    %79 = arith.addf %77, %78 : vector<8x324xf32>
    %c16_70 = arith.constant 16 : index
    %c111_71 = arith.constant 111 : index
    %80 = vector.load %arg23[%c16_70, %c111_71] : memref<72x580xf32, #tpu.memory_space<vmem>>, vector<8x324xf32>
    %81 = arith.addf %79, %80 : vector<8x324xf32>
    %c24_72 = arith.constant 24 : index
    %c127_73 = arith.constant 127 : index
    %82 = vector.load %arg23[%c24_72, %c127_73] : memref<72x580xf32, #tpu.memory_space<vmem>>, vector<8x324xf32>
    %83 = arith.addf %81, %82 : vector<8x324xf32>
    %c32_74 = arith.constant 32 : index
    %c128_75 = arith.constant 128 : index
    %84 = vector.load %arg23[%c32_74, %c128_75] : memref<72x580xf32, #tpu.memory_space<vmem>>, vector<8x324xf32>
    %85 = arith.addf %83, %84 : vector<8x324xf32>
    %c40_76 = arith.constant 40 : index
    %c129_77 = arith.constant 129 : index
    %86 = vector.load %arg23[%c40_76, %c129_77] : memref<72x580xf32, #tpu.memory_space<vmem>>, vector<8x324xf32>
    %87 = arith.addf %85, %86 : vector<8x324xf32>
    %c48_78 = arith.constant 48 : index
    %c145_79 = arith.constant 145 : index
    %88 = vector.load %arg23[%c48_78, %c145_79] : memref<72x580xf32, #tpu.memory_space<vmem>>, vector<8x324xf32>
    %89 = arith.addf %87, %88 : vector<8x324xf32>
    %c56_80 = arith.constant 56 : index
    %c146_81 = arith.constant 146 : index
    %90 = vector.load %arg23[%c56_80, %c146_81] : memref<72x580xf32, #tpu.memory_space<vmem>>, vector<8x324xf32>
    %91 = arith.addf %89, %90 : vector<8x324xf32>
    %c64_82 = arith.constant 64 : index
    %c147_83 = arith.constant 147 : index
    %92 = vector.load %arg23[%c64_82, %c147_83] : memref<72x580xf32, #tpu.memory_space<vmem>>, vector<8x324xf32>
    %93 = arith.addf %91, %92 : vector<8x324xf32>
    %94 = vector.broadcast %71 : vector<8x1xf32> to vector<8x324xf32>
    %95 = arith.addf %93, %94 : vector<8x324xf32>
    %cst_84 = arith.constant 0.000000e+00 : f32
    %96 = vector.broadcast %cst_84 : f32 to vector<8x324xf32>
    %97 = arith.maximumf %95, %96 : vector<8x324xf32>
    %c0_85 = arith.constant 0 : index
    %c0_86 = arith.constant 0 : index
    %98 = vector.load %arg2[%c0_85, %c0_86] : memref<1x324xf32, #tpu.memory_space<vmem>>, vector<1x324xf32>
    %99 = vector.broadcast %98 : vector<1x324xf32> to vector<8x324xf32>
    %100 = arith.mulf %97, %99 : vector<8x324xf32>
    %c24_87 = arith.constant 24 : index
    %c128_88 = arith.constant 128 : index
    %101 = vector.load %arg22[%c24_87, %c128_88] : memref<72x580xf32, #tpu.memory_space<vmem>>, vector<8x324xf32>
    tpu.vector_store %arg22[%c24_87, %c128_88], %100 {strides = array<i32>} : memref<72x580xf32, #tpu.memory_space<vmem>>, vector<8x324xf32>,
    %c0_89 = arith.constant 0 : index
    %c0_90 = arith.constant 0 : index
    %102 = vector.load %arg6[%c0_89, %c0_90] : memref<72x32xf32, #tpu.memory_space<vmem>>, vector<72x32xf32>
    %c0_91 = arith.constant 0 : index
    %c0_92 = arith.constant 0 : index
    %103 = vector.load %arg14[%c0_91, %c0_92] : memref<8x1xf32, #tpu.memory_space<vmem>>, vector<8x1xf32>
    %c0_93 = arith.constant 0 : index
    %c0_94 = arith.constant 0 : index
    %104 = vector.load %arg22[%c0_93, %c0_94] : memref<72x580xf32, #tpu.memory_space<vmem>>, vector<32x580xf32>
    %cst_95 = arith.constant dense<0.000000e+00> : vector<72x580xf32>
    %105 = tpu.matmul %102, %104, %cst_95 {dimension_numbers = #tpu.dot_dimension_numbers<[1], [0], [0], [1], [0, 0, 1, 1], [], []>} : vector<72x32xf32>, vector<32x580xf32>, vector<72x580xf32> -> vector<72x580xf32>
    %c0_96 = arith.constant 0 : index
    %c0_97 = arith.constant 0 : index
    %106 = vector.load %arg23[%c0_96, %c0_97] : memref<72x580xf32, #tpu.memory_space<vmem>>, vector<72x580xf32>
    tpu.vector_store %arg23[%c0_96, %c0_97], %105 {strides = array<i32>} : memref<72x580xf32, #tpu.memory_space<vmem>>, vector<72x580xf32>,
    %cst_98 = arith.constant 0.000000e+00 : f32
    %107 = vector.broadcast %cst_98 : f32 to vector<8x324xf32>
    %c0_99 = arith.constant 0 : index
    %c109_100 = arith.constant 109 : index
    %108 = vector.load %arg23[%c0_99, %c109_100] : memref<72x580xf32, #tpu.memory_space<vmem>>, vector<8x324xf32>
    %109 = arith.addf %107, %108 : vector<8x324xf32>
    %c8_101 = arith.constant 8 : index
    %c110_102 = arith.constant 110 : index
    %110 = vector.load %arg23[%c8_101, %c110_102] : memref<72x580xf32, #tpu.memory_space<vmem>>, vector<8x324xf32>
    %111 = arith.addf %109, %110 : vector<8x324xf32>
    %c16_103 = arith.constant 16 : index
    %c111_104 = arith.constant 111 : index
    %112 = vector.load %arg23[%c16_103, %c111_104] : memref<72x580xf32, #tpu.memory_space<vmem>>, vector<8x324xf32>
    %113 = arith.addf %111, %112 : vector<8x324xf32>
    %c24_105 = arith.constant 24 : index
    %c127_106 = arith.constant 127 : index
    %114 = vector.load %arg23[%c24_105, %c127_106] : memref<72x580xf32, #tpu.memory_space<vmem>>, vector<8x324xf32>
    %115 = arith.addf %113, %114 : vector<8x324xf32>
    %c32_107 = arith.constant 32 : index
    %c128_108 = arith.constant 128 : index
    %116 = vector.load %arg23[%c32_107, %c128_108] : memref<72x580xf32, #tpu.memory_space<vmem>>, vector<8x324xf32>
    %117 = arith.addf %115, %116 : vector<8x324xf32>
    %c40_109 = arith.constant 40 : index
    %c129_110 = arith.constant 129 : index
    %118 = vector.load %arg23[%c40_109, %c129_110] : memref<72x580xf32, #tpu.memory_space<vmem>>, vector<8x324xf32>
    %119 = arith.addf %117, %118 : vector<8x324xf32>
    %c48_111 = arith.constant 48 : index
    %c145_112 = arith.constant 145 : index
    %120 = vector.load %arg23[%c48_111, %c145_112] : memref<72x580xf32, #tpu.memory_space<vmem>>, vector<8x324xf32>
    %121 = arith.addf %119, %120 : vector<8x324xf32>
    %c56_113 = arith.constant 56 : index
    %c146_114 = arith.constant 146 : index
    %122 = vector.load %arg23[%c56_113, %c146_114] : memref<72x580xf32, #tpu.memory_space<vmem>>, vector<8x324xf32>
    %123 = arith.addf %121, %122 : vector<8x324xf32>
    %c64_115 = arith.constant 64 : index
    %c147_116 = arith.constant 147 : index
    %124 = vector.load %arg23[%c64_115, %c147_116] : memref<72x580xf32, #tpu.memory_space<vmem>>, vector<8x324xf32>
    %125 = arith.addf %123, %124 : vector<8x324xf32>
    %126 = vector.broadcast %103 : vector<8x1xf32> to vector<8x324xf32>
    %127 = arith.addf %125, %126 : vector<8x324xf32>
    %cst_117 = arith.constant 0.000000e+00 : f32
    %128 = vector.broadcast %cst_117 : f32 to vector<8x324xf32>
    %129 = arith.maximumf %127, %128 : vector<8x324xf32>
    %c0_118 = arith.constant 0 : index
    %c0_119 = arith.constant 0 : index
    %130 = vector.load %arg2[%c0_118, %c0_119] : memref<1x324xf32, #tpu.memory_space<vmem>>, vector<1x324xf32>
    %131 = vector.broadcast %130 : vector<1x324xf32> to vector<8x324xf32>
    %132 = arith.mulf %129, %131 : vector<8x324xf32>
    %c32_120 = arith.constant 32 : index
    %c128_121 = arith.constant 128 : index
    %133 = vector.load %arg22[%c32_120, %c128_121] : memref<72x580xf32, #tpu.memory_space<vmem>>, vector<8x324xf32>
    tpu.vector_store %arg22[%c32_120, %c128_121], %132 {strides = array<i32>} : memref<72x580xf32, #tpu.memory_space<vmem>>, vector<8x324xf32>,
    %c0_122 = arith.constant 0 : index
    %c0_123 = arith.constant 0 : index
    %134 = vector.load %arg7[%c0_122, %c0_123] : memref<72x40xf32, #tpu.memory_space<vmem>>, vector<72x40xf32>
    %c0_124 = arith.constant 0 : index
    %c0_125 = arith.constant 0 : index
    %135 = vector.load %arg15[%c0_124, %c0_125] : memref<8x1xf32, #tpu.memory_space<vmem>>, vector<8x1xf32>
    %c0_126 = arith.constant 0 : index
    %c0_127 = arith.constant 0 : index
    %136 = vector.load %arg22[%c0_126, %c0_127] : memref<72x580xf32, #tpu.memory_space<vmem>>, vector<40x580xf32>
    %cst_128 = arith.constant dense<0.000000e+00> : vector<72x580xf32>
    %137 = tpu.matmul %134, %136, %cst_128 {dimension_numbers = #tpu.dot_dimension_numbers<[1], [0], [0], [1], [0, 0, 1, 1], [], []>} : vector<72x40xf32>, vector<40x580xf32>, vector<72x580xf32> -> vector<72x580xf32>
    %c0_129 = arith.constant 0 : index
    %c0_130 = arith.constant 0 : index
    %138 = vector.load %arg23[%c0_129, %c0_130] : memref<72x580xf32, #tpu.memory_space<vmem>>, vector<72x580xf32>
    tpu.vector_store %arg23[%c0_129, %c0_130], %137 {strides = array<i32>} : memref<72x580xf32, #tpu.memory_space<vmem>>, vector<72x580xf32>,
    %cst_131 = arith.constant 0.000000e+00 : f32
    %139 = vector.broadcast %cst_131 : f32 to vector<8x324xf32>
    %c0_132 = arith.constant 0 : index
    %c109_133 = arith.constant 109 : index
    %140 = vector.load %arg23[%c0_132, %c109_133] : memref<72x580xf32, #tpu.memory_space<vmem>>, vector<8x324xf32>
    %141 = arith.addf %139, %140 : vector<8x324xf32>
    %c8_134 = arith.constant 8 : index
    %c110_135 = arith.constant 110 : index
    %142 = vector.load %arg23[%c8_134, %c110_135] : memref<72x580xf32, #tpu.memory_space<vmem>>, vector<8x324xf32>
    %143 = arith.addf %141, %142 : vector<8x324xf32>
    %c16_136 = arith.constant 16 : index
    %c111_137 = arith.constant 111 : index
    %144 = vector.load %arg23[%c16_136, %c111_137] : memref<72x580xf32, #tpu.memory_space<vmem>>, vector<8x324xf32>
    %145 = arith.addf %143, %144 : vector<8x324xf32>
    %c24_138 = arith.constant 24 : index
    %c127_139 = arith.constant 127 : index
    %146 = vector.load %arg23[%c24_138, %c127_139] : memref<72x580xf32, #tpu.memory_space<vmem>>, vector<8x324xf32>
    %147 = arith.addf %145, %146 : vector<8x324xf32>
    %c32_140 = arith.constant 32 : index
    %c128_141 = arith.constant 128 : index
    %148 = vector.load %arg23[%c32_140, %c128_141] : memref<72x580xf32, #tpu.memory_space<vmem>>, vector<8x324xf32>
    %149 = arith.addf %147, %148 : vector<8x324xf32>
    %c40_142 = arith.constant 40 : index
    %c129_143 = arith.constant 129 : index
    %150 = vector.load %arg23[%c40_142, %c129_143] : memref<72x580xf32, #tpu.memory_space<vmem>>, vector<8x324xf32>
    %151 = arith.addf %149, %150 : vector<8x324xf32>
    %c48_144 = arith.constant 48 : index
    %c145_145 = arith.constant 145 : index
    %152 = vector.load %arg23[%c48_144, %c145_145] : memref<72x580xf32, #tpu.memory_space<vmem>>, vector<8x324xf32>
    %153 = arith.addf %151, %152 : vector<8x324xf32>
    %c56_146 = arith.constant 56 : index
    %c146_147 = arith.constant 146 : index
    %154 = vector.load %arg23[%c56_146, %c146_147] : memref<72x580xf32, #tpu.memory_space<vmem>>, vector<8x324xf32>
    %155 = arith.addf %153, %154 : vector<8x324xf32>
    %c64_148 = arith.constant 64 : index
    %c147_149 = arith.constant 147 : index
    %156 = vector.load %arg23[%c64_148, %c147_149] : memref<72x580xf32, #tpu.memory_space<vmem>>, vector<8x324xf32>
    %157 = arith.addf %155, %156 : vector<8x324xf32>
    %158 = vector.broadcast %135 : vector<8x1xf32> to vector<8x324xf32>
    %159 = arith.addf %157, %158 : vector<8x324xf32>
    %cst_150 = arith.constant 0.000000e+00 : f32
    %160 = vector.broadcast %cst_150 : f32 to vector<8x324xf32>
    %161 = arith.maximumf %159, %160 : vector<8x324xf32>
    %c0_151 = arith.constant 0 : index
    %c0_152 = arith.constant 0 : index
    %162 = vector.load %arg2[%c0_151, %c0_152] : memref<1x324xf32, #tpu.memory_space<vmem>>, vector<1x324xf32>
    %163 = vector.broadcast %162 : vector<1x324xf32> to vector<8x324xf32>
    %164 = arith.mulf %161, %163 : vector<8x324xf32>
    %c40_153 = arith.constant 40 : index
    %c128_154 = arith.constant 128 : index
    %165 = vector.load %arg22[%c40_153, %c128_154] : memref<72x580xf32, #tpu.memory_space<vmem>>, vector<8x324xf32>
    tpu.vector_store %arg22[%c40_153, %c128_154], %164 {strides = array<i32>} : memref<72x580xf32, #tpu.memory_space<vmem>>, vector<8x324xf32>,
    %c0_155 = arith.constant 0 : index
    %c0_156 = arith.constant 0 : index
    %166 = vector.load %arg8[%c0_155, %c0_156] : memref<72x48xf32, #tpu.memory_space<vmem>>, vector<72x48xf32>
    %c0_157 = arith.constant 0 : index
    %c0_158 = arith.constant 0 : index
    %167 = vector.load %arg16[%c0_157, %c0_158] : memref<8x1xf32, #tpu.memory_space<vmem>>, vector<8x1xf32>
    %c0_159 = arith.constant 0 : index
    %c0_160 = arith.constant 0 : index
    %168 = vector.load %arg22[%c0_159, %c0_160] : memref<72x580xf32, #tpu.memory_space<vmem>>, vector<48x580xf32>
    %cst_161 = arith.constant dense<0.000000e+00> : vector<72x580xf32>
    %169 = tpu.matmul %166, %168, %cst_161 {dimension_numbers = #tpu.dot_dimension_numbers<[1], [0], [0], [1], [0, 0, 1, 1], [], []>} : vector<72x48xf32>, vector<48x580xf32>, vector<72x580xf32> -> vector<72x580xf32>
    %c0_162 = arith.constant 0 : index
    %c0_163 = arith.constant 0 : index
    %170 = vector.load %arg23[%c0_162, %c0_163] : memref<72x580xf32, #tpu.memory_space<vmem>>, vector<72x580xf32>
    tpu.vector_store %arg23[%c0_162, %c0_163], %169 {strides = array<i32>} : memref<72x580xf32, #tpu.memory_space<vmem>>, vector<72x580xf32>,
    %cst_164 = arith.constant 0.000000e+00 : f32
    %171 = vector.broadcast %cst_164 : f32 to vector<8x324xf32>
    %c0_165 = arith.constant 0 : index
    %c109_166 = arith.constant 109 : index
    %172 = vector.load %arg23[%c0_165, %c109_166] : memref<72x580xf32, #tpu.memory_space<vmem>>, vector<8x324xf32>
    %173 = arith.addf %171, %172 : vector<8x324xf32>
    %c8_167 = arith.constant 8 : index
    %c110_168 = arith.constant 110 : index
    %174 = vector.load %arg23[%c8_167, %c110_168] : memref<72x580xf32, #tpu.memory_space<vmem>>, vector<8x324xf32>
    %175 = arith.addf %173, %174 : vector<8x324xf32>
    %c16_169 = arith.constant 16 : index
    %c111_170 = arith.constant 111 : index
    %176 = vector.load %arg23[%c16_169, %c111_170] : memref<72x580xf32, #tpu.memory_space<vmem>>, vector<8x324xf32>
    %177 = arith.addf %175, %176 : vector<8x324xf32>
    %c24_171 = arith.constant 24 : index
    %c127_172 = arith.constant 127 : index
    %178 = vector.load %arg23[%c24_171, %c127_172] : memref<72x580xf32, #tpu.memory_space<vmem>>, vector<8x324xf32>
    %179 = arith.addf %177, %178 : vector<8x324xf32>
    %c32_173 = arith.constant 32 : index
    %c128_174 = arith.constant 128 : index
    %180 = vector.load %arg23[%c32_173, %c128_174] : memref<72x580xf32, #tpu.memory_space<vmem>>, vector<8x324xf32>
    %181 = arith.addf %179, %180 : vector<8x324xf32>
    %c40_175 = arith.constant 40 : index
    %c129_176 = arith.constant 129 : index
    %182 = vector.load %arg23[%c40_175, %c129_176] : memref<72x580xf32, #tpu.memory_space<vmem>>, vector<8x324xf32>
    %183 = arith.addf %181, %182 : vector<8x324xf32>
    %c48_177 = arith.constant 48 : index
    %c145_178 = arith.constant 145 : index
    %184 = vector.load %arg23[%c48_177, %c145_178] : memref<72x580xf32, #tpu.memory_space<vmem>>, vector<8x324xf32>
    %185 = arith.addf %183, %184 : vector<8x324xf32>
    %c56_179 = arith.constant 56 : index
    %c146_180 = arith.constant 146 : index
    %186 = vector.load %arg23[%c56_179, %c146_180] : memref<72x580xf32, #tpu.memory_space<vmem>>, vector<8x324xf32>
    %187 = arith.addf %185, %186 : vector<8x324xf32>
    %c64_181 = arith.constant 64 : index
    %c147_182 = arith.constant 147 : index
    %188 = vector.load %arg23[%c64_181, %c147_182] : memref<72x580xf32, #tpu.memory_space<vmem>>, vector<8x324xf32>
    %189 = arith.addf %187, %188 : vector<8x324xf32>
    %190 = vector.broadcast %167 : vector<8x1xf32> to vector<8x324xf32>
    %191 = arith.addf %189, %190 : vector<8x324xf32>
    %cst_183 = arith.constant 0.000000e+00 : f32
    %192 = vector.broadcast %cst_183 : f32 to vector<8x324xf32>
    %193 = arith.maximumf %191, %192 : vector<8x324xf32>
    %c0_184 = arith.constant 0 : index
    %c0_185 = arith.constant 0 : index
    %194 = vector.load %arg2[%c0_184, %c0_185] : memref<1x324xf32, #tpu.memory_space<vmem>>, vector<1x324xf32>
    %195 = vector.broadcast %194 : vector<1x324xf32> to vector<8x324xf32>
    %196 = arith.mulf %193, %195 : vector<8x324xf32>
    %c48_186 = arith.constant 48 : index
    %c128_187 = arith.constant 128 : index
    %197 = vector.load %arg22[%c48_186, %c128_187] : memref<72x580xf32, #tpu.memory_space<vmem>>, vector<8x324xf32>
    tpu.vector_store %arg22[%c48_186, %c128_187], %196 {strides = array<i32>} : memref<72x580xf32, #tpu.memory_space<vmem>>, vector<8x324xf32>,
    %c0_188 = arith.constant 0 : index
    %c0_189 = arith.constant 0 : index
    %198 = vector.load %arg9[%c0_188, %c0_189] : memref<72x56xf32, #tpu.memory_space<vmem>>, vector<72x56xf32>
    %c0_190 = arith.constant 0 : index
    %c0_191 = arith.constant 0 : index
    %199 = vector.load %arg17[%c0_190, %c0_191] : memref<8x1xf32, #tpu.memory_space<vmem>>, vector<8x1xf32>
    %c0_192 = arith.constant 0 : index
    %c0_193 = arith.constant 0 : index
    %200 = vector.load %arg22[%c0_192, %c0_193] : memref<72x580xf32, #tpu.memory_space<vmem>>, vector<56x580xf32>
    %cst_194 = arith.constant dense<0.000000e+00> : vector<72x580xf32>
    %201 = tpu.matmul %198, %200, %cst_194 {dimension_numbers = #tpu.dot_dimension_numbers<[1], [0], [0], [1], [0, 0, 1, 1], [], []>} : vector<72x56xf32>, vector<56x580xf32>, vector<72x580xf32> -> vector<72x580xf32>
    %c0_195 = arith.constant 0 : index
    %c0_196 = arith.constant 0 : index
    %202 = vector.load %arg23[%c0_195, %c0_196] : memref<72x580xf32, #tpu.memory_space<vmem>>, vector<72x580xf32>
    tpu.vector_store %arg23[%c0_195, %c0_196], %201 {strides = array<i32>} : memref<72x580xf32, #tpu.memory_space<vmem>>, vector<72x580xf32>,
    %cst_197 = arith.constant 0.000000e+00 : f32
    %203 = vector.broadcast %cst_197 : f32 to vector<8x324xf32>
    %c0_198 = arith.constant 0 : index
    %c109_199 = arith.constant 109 : index
    %204 = vector.load %arg23[%c0_198, %c109_199] : memref<72x580xf32, #tpu.memory_space<vmem>>, vector<8x324xf32>
    %205 = arith.addf %203, %204 : vector<8x324xf32>
    %c8_200 = arith.constant 8 : index
    %c110_201 = arith.constant 110 : index
    %206 = vector.load %arg23[%c8_200, %c110_201] : memref<72x580xf32, #tpu.memory_space<vmem>>, vector<8x324xf32>
    %207 = arith.addf %205, %206 : vector<8x324xf32>
    %c16_202 = arith.constant 16 : index
    %c111_203 = arith.constant 111 : index
    %208 = vector.load %arg23[%c16_202, %c111_203] : memref<72x580xf32, #tpu.memory_space<vmem>>, vector<8x324xf32>
    %209 = arith.addf %207, %208 : vector<8x324xf32>
    %c24_204 = arith.constant 24 : index
    %c127_205 = arith.constant 127 : index
    %210 = vector.load %arg23[%c24_204, %c127_205] : memref<72x580xf32, #tpu.memory_space<vmem>>, vector<8x324xf32>
    %211 = arith.addf %209, %210 : vector<8x324xf32>
    %c32_206 = arith.constant 32 : index
    %c128_207 = arith.constant 128 : index
    %212 = vector.load %arg23[%c32_206, %c128_207] : memref<72x580xf32, #tpu.memory_space<vmem>>, vector<8x324xf32>
    %213 = arith.addf %211, %212 : vector<8x324xf32>
    %c40_208 = arith.constant 40 : index
    %c129_209 = arith.constant 129 : index
    %214 = vector.load %arg23[%c40_208, %c129_209] : memref<72x580xf32, #tpu.memory_space<vmem>>, vector<8x324xf32>
    %215 = arith.addf %213, %214 : vector<8x324xf32>
    %c48_210 = arith.constant 48 : index
    %c145_211 = arith.constant 145 : index
    %216 = vector.load %arg23[%c48_210, %c145_211] : memref<72x580xf32, #tpu.memory_space<vmem>>, vector<8x324xf32>
    %217 = arith.addf %215, %216 : vector<8x324xf32>
    %c56_212 = arith.constant 56 : index
    %c146_213 = arith.constant 146 : index
    %218 = vector.load %arg23[%c56_212, %c146_213] : memref<72x580xf32, #tpu.memory_space<vmem>>, vector<8x324xf32>
    %219 = arith.addf %217, %218 : vector<8x324xf32>
    %c64_214 = arith.constant 64 : index
    %c147_215 = arith.constant 147 : index
    %220 = vector.load %arg23[%c64_214, %c147_215] : memref<72x580xf32, #tpu.memory_space<vmem>>, vector<8x324xf32>
    %221 = arith.addf %219, %220 : vector<8x324xf32>
    %222 = vector.broadcast %199 : vector<8x1xf32> to vector<8x324xf32>
    %223 = arith.addf %221, %222 : vector<8x324xf32>
    %cst_216 = arith.constant 0.000000e+00 : f32
    %224 = vector.broadcast %cst_216 : f32 to vector<8x324xf32>
    %225 = arith.maximumf %223, %224 : vector<8x324xf32>
    %c0_217 = arith.constant 0 : index
    %c0_218 = arith.constant 0 : index
    %226 = vector.load %arg2[%c0_217, %c0_218] : memref<1x324xf32, #tpu.memory_space<vmem>>, vector<1x324xf32>
    %227 = vector.broadcast %226 : vector<1x324xf32> to vector<8x324xf32>
    %228 = arith.mulf %225, %227 : vector<8x324xf32>
    %c56_219 = arith.constant 56 : index
    %c128_220 = arith.constant 128 : index
    %229 = vector.load %arg22[%c56_219, %c128_220] : memref<72x580xf32, #tpu.memory_space<vmem>>, vector<8x324xf32>
    tpu.vector_store %arg22[%c56_219, %c128_220], %228 {strides = array<i32>} : memref<72x580xf32, #tpu.memory_space<vmem>>, vector<8x324xf32>,
    %c0_221 = arith.constant 0 : index
    %c0_222 = arith.constant 0 : index
    %230 = vector.load %arg10[%c0_221, %c0_222] : memref<72x64xf32, #tpu.memory_space<vmem>>, vector<72x64xf32>
    %c0_223 = arith.constant 0 : index
    %c0_224 = arith.constant 0 : index
    %231 = vector.load %arg18[%c0_223, %c0_224] : memref<8x1xf32, #tpu.memory_space<vmem>>, vector<8x1xf32>
    %c0_225 = arith.constant 0 : index
    %c0_226 = arith.constant 0 : index
    %232 = vector.load %arg22[%c0_225, %c0_226] : memref<72x580xf32, #tpu.memory_space<vmem>>, vector<64x580xf32>
    %cst_227 = arith.constant dense<0.000000e+00> : vector<72x580xf32>
    %233 = tpu.matmul %230, %232, %cst_227 {dimension_numbers = #tpu.dot_dimension_numbers<[1], [0], [0], [1], [0, 0, 1, 1], [], []>} : vector<72x64xf32>, vector<64x580xf32>, vector<72x580xf32> -> vector<72x580xf32>
    %c0_228 = arith.constant 0 : index
    %c0_229 = arith.constant 0 : index
    %234 = vector.load %arg23[%c0_228, %c0_229] : memref<72x580xf32, #tpu.memory_space<vmem>>, vector<72x580xf32>
    tpu.vector_store %arg23[%c0_228, %c0_229], %233 {strides = array<i32>} : memref<72x580xf32, #tpu.memory_space<vmem>>, vector<72x580xf32>,
    %cst_230 = arith.constant 0.000000e+00 : f32
    %235 = vector.broadcast %cst_230 : f32 to vector<8x324xf32>
    %c0_231 = arith.constant 0 : index
    %c109_232 = arith.constant 109 : index
    %236 = vector.load %arg23[%c0_231, %c109_232] : memref<72x580xf32, #tpu.memory_space<vmem>>, vector<8x324xf32>
    %237 = arith.addf %235, %236 : vector<8x324xf32>
    %c8_233 = arith.constant 8 : index
    %c110_234 = arith.constant 110 : index
    %238 = vector.load %arg23[%c8_233, %c110_234] : memref<72x580xf32, #tpu.memory_space<vmem>>, vector<8x324xf32>
    %239 = arith.addf %237, %238 : vector<8x324xf32>
    %c16_235 = arith.constant 16 : index
    %c111_236 = arith.constant 111 : index
    %240 = vector.load %arg23[%c16_235, %c111_236] : memref<72x580xf32, #tpu.memory_space<vmem>>, vector<8x324xf32>
    %241 = arith.addf %239, %240 : vector<8x324xf32>
    %c24_237 = arith.constant 24 : index
    %c127_238 = arith.constant 127 : index
    %242 = vector.load %arg23[%c24_237, %c127_238] : memref<72x580xf32, #tpu.memory_space<vmem>>, vector<8x324xf32>
    %243 = arith.addf %241, %242 : vector<8x324xf32>
    %c32_239 = arith.constant 32 : index
    %c128_240 = arith.constant 128 : index
    %244 = vector.load %arg23[%c32_239, %c128_240] : memref<72x580xf32, #tpu.memory_space<vmem>>, vector<8x324xf32>
    %245 = arith.addf %243, %244 : vector<8x324xf32>
    %c40_241 = arith.constant 40 : index
    %c129_242 = arith.constant 129 : index
    %246 = vector.load %arg23[%c40_241, %c129_242] : memref<72x580xf32, #tpu.memory_space<vmem>>, vector<8x324xf32>
    %247 = arith.addf %245, %246 : vector<8x324xf32>
    %c48_243 = arith.constant 48 : index
    %c145_244 = arith.constant 145 : index
    %248 = vector.load %arg23[%c48_243, %c145_244] : memref<72x580xf32, #tpu.memory_space<vmem>>, vector<8x324xf32>
    %249 = arith.addf %247, %248 : vector<8x324xf32>
    %c56_245 = arith.constant 56 : index
    %c146_246 = arith.constant 146 : index
    %250 = vector.load %arg23[%c56_245, %c146_246] : memref<72x580xf32, #tpu.memory_space<vmem>>, vector<8x324xf32>
    %251 = arith.addf %249, %250 : vector<8x324xf32>
    %c64_247 = arith.constant 64 : index
    %c147_248 = arith.constant 147 : index
    %252 = vector.load %arg23[%c64_247, %c147_248] : memref<72x580xf32, #tpu.memory_space<vmem>>, vector<8x324xf32>
    %253 = arith.addf %251, %252 : vector<8x324xf32>
    %254 = vector.broadcast %231 : vector<8x1xf32> to vector<8x324xf32>
    %255 = arith.addf %253, %254 : vector<8x324xf32>
    %cst_249 = arith.constant 0.000000e+00 : f32
    %256 = vector.broadcast %cst_249 : f32 to vector<8x324xf32>
    %257 = arith.maximumf %255, %256 : vector<8x324xf32>
    %c0_250 = arith.constant 0 : index
    %c0_251 = arith.constant 0 : index
    %258 = vector.load %arg2[%c0_250, %c0_251] : memref<1x324xf32, #tpu.memory_space<vmem>>, vector<1x324xf32>
    %259 = vector.broadcast %258 : vector<1x324xf32> to vector<8x324xf32>
    %260 = arith.mulf %257, %259 : vector<8x324xf32>
    %c64_252 = arith.constant 64 : index
    %c128_253 = arith.constant 128 : index
    %261 = vector.load %arg22[%c64_252, %c128_253] : memref<72x580xf32, #tpu.memory_space<vmem>>, vector<8x324xf32>
    tpu.vector_store %arg22[%c64_252, %c128_253], %260 {strides = array<i32>} : memref<72x580xf32, #tpu.memory_space<vmem>>, vector<8x324xf32>,
    %c0_254 = arith.constant 0 : index
    %c0_255 = arith.constant 0 : index
    %262 = vector.load %arg19[%c0_254, %c0_255] : memref<8x72xf32, #tpu.memory_space<vmem>>, vector<8x72xf32>
    %c0_256 = arith.constant 0 : index
    %c0_257 = arith.constant 0 : index
    %263 = vector.load %arg20[%c0_256, %c0_257] : memref<8x1xf32, #tpu.memory_space<vmem>>, vector<8x1xf32>
    %c0_258 = arith.constant 0 : index
    %c128_259 = arith.constant 128 : index
    %264 = vector.load %arg22[%c0_258, %c128_259] : memref<72x580xf32, #tpu.memory_space<vmem>>, vector<72x324xf32>
    %cst_260 = arith.constant dense<0.000000e+00> : vector<8x324xf32>
    %265 = tpu.matmul %262, %264, %cst_260 {dimension_numbers = #tpu.dot_dimension_numbers<[1], [0], [0], [1], [0, 0, 1, 1], [], []>} : vector<8x72xf32>, vector<72x324xf32>, vector<8x324xf32> -> vector<8x324xf32>
    %266 = vector.broadcast %263 : vector<8x1xf32> to vector<8x324xf32>
    %267 = arith.addf %265, %266 : vector<8x324xf32>
    %c0_261 = arith.constant 0 : index
    %c0_262 = arith.constant 0 : index
    %c0_263 = arith.constant 0 : index
    %268 = vector.load %arg1[%c0_261, %c0_262, %c0_263] : memref<1x8x324xf32, #tpu.memory_space<vmem>>, vector<1x8x324xf32>
    %269 = vector.shape_cast %268 : vector<1x8x324xf32> to vector<8x324xf32>
    %cst_264 = arith.constant 2.000000e-01 : f32
    %270 = vector.broadcast %cst_264 : f32 to vector<8x324xf32>
    %271 = arith.mulf %267, %270 : vector<8x324xf32>
    %272 = arith.addf %271, %269 : vector<8x324xf32>
    %c0_265 = arith.constant 0 : index
    %c0_266 = arith.constant 0 : index
    %c0_267 = arith.constant 0 : index
    %273 = vector.load %arg21[%c0_265, %c0_266, %c0_267] : memref<1x8x324xf32, #tpu.memory_space<vmem>>, vector<1x8x324xf32>
    %274 = vector.shape_cast %273 : vector<1x8x324xf32> to vector<8x324xf32>
    %275 = vector.shape_cast %272 : vector<8x324xf32> to vector<1x8x324xf32>
    tpu.vector_store %arg21[%c0_265, %c0_266, %c0_267], %275 {strides = array<i32>} : memref<1x8x324xf32, #tpu.memory_space<vmem>>, vector<1x8x324xf32>,
    return
  }
  func.func @transform_0(%arg0: i32) -> (i32, i32, i32) {
    %c0_i32 = arith.constant 0 : i32
    %c0_i32_0 = arith.constant 0 : i32
    %c0_i32_1 = arith.constant 0 : i32
    return %arg0, %c0_i32, %c0_i32_0 : i32, i32, i32
  }
  func.func @transform_1(%arg0: i32) -> (i32, i32) {
    %c0_i32 = arith.constant 0 : i32
    %c0_i32_0 = arith.constant 0 : i32
    %c0_i32_1 = arith.constant 0 : i32
    return %c0_i32, %c0_i32_0 : i32, i32
  }
  func.func @transform_2(%arg0: i32) -> (i32, i32) {
    %c0_i32 = arith.constant 0 : i32
    %c0_i32_0 = arith.constant 0 : i32
    %c0_i32_1 = arith.constant 0 : i32
    return %c0_i32, %c0_i32_0 : i32, i32
  }
  func.func @transform_3(%arg0: i32) -> (i32, i32) {
    %c0_i32 = arith.constant 0 : i32
    %c0_i32_0 = arith.constant 0 : i32
    %c0_i32_1 = arith.constant 0 : i32
    return %c0_i32, %c0_i32_0 : i32, i32
  }
  func.func @transform_4(%arg0: i32) -> (i32, i32) {
    %c0_i32 = arith.constant 0 : i32
    %c0_i32_0 = arith.constant 0 : i32
    %c0_i32_1 = arith.constant 0 : i32
    return %c0_i32, %c0_i32_0 : i32, i32
  }
  func.func @transform_5(%arg0: i32) -> (i32, i32) {
    %c0_i32 = arith.constant 0 : i32
    %c0_i32_0 = arith.constant 0 : i32
    %c0_i32_1 = arith.constant 0 : i32
    return %c0_i32, %c0_i32_0 : i32, i32
  }
  func.func @transform_6(%arg0: i32) -> (i32, i32) {
    %c0_i32 = arith.constant 0 : i32
    %c0_i32_0 = arith.constant 0 : i32
    %c0_i32_1 = arith.constant 0 : i32
    return %c0_i32, %c0_i32_0 : i32, i32
  }
  func.func @transform_7(%arg0: i32) -> (i32, i32) {
    %c0_i32 = arith.constant 0 : i32
    %c0_i32_0 = arith.constant 0 : i32
    %c0_i32_1 = arith.constant 0 : i32
    return %c0_i32, %c0_i32_0 : i32, i32
  }
  func.func @transform_8(%arg0: i32) -> (i32, i32) {
    %c0_i32 = arith.constant 0 : i32
    %c0_i32_0 = arith.constant 0 : i32
    %c0_i32_1 = arith.constant 0 : i32
    return %c0_i32, %c0_i32_0 : i32, i32
  }
  func.func @transform_9(%arg0: i32) -> (i32, i32) {
    %c0_i32 = arith.constant 0 : i32
    %c0_i32_0 = arith.constant 0 : i32
    %c0_i32_1 = arith.constant 0 : i32
    return %c0_i32, %c0_i32_0 : i32, i32
  }
  func.func @transform_10(%arg0: i32) -> (i32, i32) {
    %c0_i32 = arith.constant 0 : i32
    %c0_i32_0 = arith.constant 0 : i32
    %c0_i32_1 = arith.constant 0 : i32
    return %c0_i32, %c0_i32_0 : i32, i32
  }
  func.func @transform_11(%arg0: i32) -> (i32, i32) {
    %c0_i32 = arith.constant 0 : i32
    %c0_i32_0 = arith.constant 0 : i32
    %c0_i32_1 = arith.constant 0 : i32
    return %c0_i32, %c0_i32_0 : i32, i32
  }
  func.func @transform_12(%arg0: i32) -> (i32, i32) {
    %c0_i32 = arith.constant 0 : i32
    %c0_i32_0 = arith.constant 0 : i32
    %c0_i32_1 = arith.constant 0 : i32
    return %c0_i32, %c0_i32_0 : i32, i32
  }
  func.func @transform_13(%arg0: i32) -> (i32, i32) {
    %c0_i32 = arith.constant 0 : i32
    %c0_i32_0 = arith.constant 0 : i32
    %c0_i32_1 = arith.constant 0 : i32
    return %c0_i32, %c0_i32_0 : i32, i32
  }
  func.func @transform_14(%arg0: i32) -> (i32, i32) {
    %c0_i32 = arith.constant 0 : i32
    %c0_i32_0 = arith.constant 0 : i32
    %c0_i32_1 = arith.constant 0 : i32
    return %c0_i32, %c0_i32_0 : i32, i32
  }
  func.func @transform_15(%arg0: i32) -> (i32, i32) {
    %c0_i32 = arith.constant 0 : i32
    %c0_i32_0 = arith.constant 0 : i32
    %c0_i32_1 = arith.constant 0 : i32
    return %c0_i32, %c0_i32_0 : i32, i32
  }
  func.func @transform_16(%arg0: i32) -> (i32, i32) {
    %c0_i32 = arith.constant 0 : i32
    %c0_i32_0 = arith.constant 0 : i32
    %c0_i32_1 = arith.constant 0 : i32
    return %c0_i32, %c0_i32_0 : i32, i32
  }
  func.func @transform_17(%arg0: i32) -> (i32, i32) {
    %c0_i32 = arith.constant 0 : i32
    %c0_i32_0 = arith.constant 0 : i32
    %c0_i32_1 = arith.constant 0 : i32
    return %c0_i32, %c0_i32_0 : i32, i32
  }
  func.func @transform_18(%arg0: i32) -> (i32, i32) {
    %c0_i32 = arith.constant 0 : i32
    %c0_i32_0 = arith.constant 0 : i32
    %c0_i32_1 = arith.constant 0 : i32
    return %c0_i32, %c0_i32_0 : i32, i32
  }
  func.func @transform_19(%arg0: i32) -> (i32, i32) {
    %c0_i32 = arith.constant 0 : i32
    %c0_i32_0 = arith.constant 0 : i32
    %c0_i32_1 = arith.constant 0 : i32
    return %c0_i32, %c0_i32_0 : i32, i32
  }
  func.func @transform_20(%arg0: i32) -> (i32, i32, i32) {
    %c0_i32 = arith.constant 0 : i32
    %c0_i32_0 = arith.constant 0 : i32
    %c0_i32_1 = arith.constant 0 : i32
    return %arg0, %c0_i32, %c0_i32_0 : i32, i32, i32
  }
}

</mosaic_0001>

<llo_original>
// kernel: tpu_custom_call.1
$region0: #{tpu_custom_call.1}
  #allocation0 [shape = 'u32[]', space=smem, size = 0x4, offset = 0x4, fixed_abs, tag = 'smem constant byte address 0x4 - core index']
  #allocation1 [shape = 'u32[144,128]{1,0:T(1,128)}', space=vmem, size = 0x12000, scoped, tag = 'internal scratch']
  #allocation2 [shape = 'f32[72,580]{1,0:T(8,128)}', space=vmem, size = 0x2d000, scoped, tag = 'scratch operand']
  #allocation3 [shape = 'f32[72,580]{1,0:T(8,128)}', space=vmem, size = 0x2d000, scoped, tag = 'scratch operand']
  %s0 = inlined_call_operand.vmem [shape: f32[2,8,324], index: 0, kind: input, shape index: {}]
  %s1 = inlined_call_operand.vmem [shape: f32[1,324], index: 1, kind: input, shape index: {}]
  %s2 = inlined_call_operand.vmem [shape: f32[72,8], index: 2, kind: input, shape index: {}]
  %s3 = inlined_call_operand.vmem [shape: f32[72,16], index: 3, kind: input, shape index: {}]
  %s4 = inlined_call_operand.vmem [shape: f32[72,24], index: 4, kind: input, shape index: {}]
  %s5 = inlined_call_operand.vmem [shape: f32[72,32], index: 5, kind: input, shape index: {}]
  %s6 = inlined_call_operand.vmem [shape: f32[72,40], index: 6, kind: input, shape index: {}]
  %s7 = inlined_call_operand.vmem [shape: f32[72,48], index: 7, kind: input, shape index: {}]
  %s8 = inlined_call_operand.vmem [shape: f32[72,56], index: 8, kind: input, shape index: {}]
  %s9 = inlined_call_operand.vmem [shape: f32[72,64], index: 9, kind: input, shape index: {}]
  %s10 = inlined_call_operand.vmem [shape: f32[8,1], index: 10, kind: input, shape index: {}]
  %s11 = inlined_call_operand.vmem [shape: f32[8,1], index: 11, kind: input, shape index: {}]
  %s12 = inlined_call_operand.vmem [shape: f32[8,1], index: 12, kind: input, shape index: {}]
  %s13 = inlined_call_operand.vmem [shape: f32[8,1], index: 13, kind: input, shape index: {}]
  %s14 = inlined_call_operand.vmem [shape: f32[8,1], index: 14, kind: input, shape index: {}]
  %s15 = inlined_call_operand.vmem [shape: f32[8,1], index: 15, kind: input, shape index: {}]
  %s16 = inlined_call_operand.vmem [shape: f32[8,1], index: 16, kind: input, shape index: {}]
  %s17 = inlined_call_operand.vmem [shape: f32[8,1], index: 17, kind: input, shape index: {}]
  %s18 = inlined_call_operand.vmem [shape: f32[8,72], index: 18, kind: input, shape index: {}]
  %s19 = inlined_call_operand.vmem [shape: f32[8,1], index: 19, kind: input, shape index: {}]
  %s20 = inlined_call_operand.hbm [shape: f32[2,8,324], index: 20, kind: output, shape index: {}]
  %s21 = sld [smem:[#allocation0]]
  $region113: #{tpu_custom_call.1} parent=0
    _
  %s23 = ssub.s32 1, %s21
  %s24 = scalar_select 0, %s23, %s21
  $region1: #{tpu_custom_call.1} parent=0
    #allocation4 [shape = 'u8[24576]{0}', space=vmem, size = 0x6000, scoped, tag = 'output window, operand 0']
    #allocation5 [shape = 's32[2]{0}', space=sflag, size = 0x8, scoped, tag = 'scoped memory for tpu_custom_call.1']
    %25 = vsyncpa [#allocation5], 0
    %s26 = scalar_lea.sflag [#allocation5], 1
    %27 = vsyncpa %s26, 0
    loop: start=0, step=1, limit=4
    $region2: #{tpu_custom_call.1} parent=1 // loop_pre_header
      _
    $region3: #{tpu_custom_call.1} parent=1 // loop_header
      %s29 = sphi 0, %s33
      %p30 = scmp.ge.s32.totalorder %s29, 4
      %s39 = sphi 0, %s41
      %s42 = sphi 0, %s39
      %s43 = sphi 0, %s42
      %s59 = sphi 0, %s43
      %s63 = sphi 0, %s63
      %s65 = sphi 0, %s63
      %s66 = sphi 0, %s65
      %s80 = sphi 0, %s66
      %s84 = sphi 0, %s84
      %s86 = sphi 0, %s84
      %s87 = sphi 0, %s86
      %s101 = sphi 0, %s87
      %s105 = sphi 0, %s105
      %s107 = sphi 0, %s105
      %s108 = sphi 0, %s107
      %s122 = sphi 0, %s108
      %s126 = sphi 0, %s126
      %s128 = sphi 0, %s126
      %s129 = sphi 0, %s128
      %s143 = sphi 0, %s129
      %s147 = sphi 0, %s147
      %s149 = sphi 0, %s147
      %s150 = sphi 0, %s149
      %s164 = sphi 0, %s150
      %s168 = sphi 0, %s168
      %s170 = sphi 0, %s168
      %s171 = sphi 0, %s170
      %s185 = sphi 0, %s171
      %s189 = sphi 0, %s189
      %s191 = sphi 0, %s189
      %s192 = sphi 0, %s191
      %s206 = sphi 0, %s192
      %s210 = sphi 0, %s210
      %s212 = sphi 0, %s210
      %s213 = sphi 0, %s212
      %s227 = sphi 0, %s213
      %s231 = sphi 0, %s231
      %s233 = sphi 0, %s231
      %s234 = sphi 0, %s233
      %s248 = sphi 0, %s234
      %s252 = sphi 0, %s252
      %s254 = sphi 0, %s252
      %s255 = sphi 0, %s254
      %s269 = sphi 0, %s255
      %s273 = sphi 0, %s273
      %s275 = sphi 0, %s273
      %s276 = sphi 0, %s275
      %s290 = sphi 0, %s276
      %s294 = sphi 0, %s294
      %s296 = sphi 0, %s294
      %s297 = sphi 0, %s296
      %s311 = sphi 0, %s297
      %s315 = sphi 0, %s315
      %s317 = sphi 0, %s315
      %s318 = sphi 0, %s317
      %s332 = sphi 0, %s318
      %s336 = sphi 0, %s336
      %s338 = sphi 0, %s336
      %s339 = sphi 0, %s338
      %s353 = sphi 0, %s339
      %s357 = sphi 0, %s357
      %s359 = sphi 0, %s357
      %s360 = sphi 0, %s359
      %s374 = sphi 0, %s360
      %s378 = sphi 0, %s378
      %s380 = sphi 0, %s378
      %s381 = sphi 0, %s380
      %s395 = sphi 0, %s381
      %s399 = sphi 0, %s399
      %s401 = sphi 0, %s399
      %s402 = sphi 0, %s401
      %s416 = sphi 0, %s402
      %s420 = sphi 0, %s420
      %s422 = sphi 0, %s420
      %s423 = sphi 0, %s422
      %s437 = sphi 0, %s423
      %s441 = sphi 0, %s441
      %s443 = sphi 0, %s441
      %s444 = sphi 0, %s443
      %s458 = sphi 0, %s444
      %s464 = sphi 0, %s466
      %s467 = sphi 0, %s464
      %s468 = sphi 0, %s467
      %s484 = sphi 0, %s468
    $region4: #{tpu_custom_call.1} parent=1 // loop_header_branch
      %32 = sbr.rel (%p30) target = $region8
    $region5: #{tpu_custom_call.1} parent=1 // loop_body
      %s34 = ssub.s32 %s29, 1
      %s35 = ssub.s32 %s29, 2
      %s36 = sadd.s32 %s29, 1
      %s37 = ssub.s32 %s29, %s36
      %p38 = scmp.eq.s32.totalorder %s37, 0
      %s40 = sadd.s32 %s39, 1
      %s41 = scalar_select %p38, %s39, %s40
      %p44 = pneg %p38
      %p45 = scmp.eq.s32.totalorder %s29, 1
      %p46 = por %p44, %p45
      %p47 = scmp.ne.s32.totalorder %s39, %s42
      %p48 = scmp.eq.s32.totalorder %s29, 0
      %p49 = por %p47, %p48
      %p50 = scmp.ne.s32.totalorder %s39, %s42
      %p51 = scmp.eq.s32.totalorder %s34, 1
      %p52 = por %p50, %p51
      %p53 = scmp.ne.s32.totalorder %s42, %s43
      %p54 = scmp.eq.s32.totalorder %s34, 0
      %p55 = por %p53, %p54
      %p56 = scmp.ne.s32.totalorder %s42, %s43
      %p57 = scmp.eq.s32.totalorder %s35, 1
      %p58 = por %p56, %p57
      %p60 = scmp.ne.s32.totalorder %s43, %s59
      %p61 = scmp.eq.s32.totalorder %s35, 0
      %p62 = por %p60, %p61
      %s64 = sadd.s32 %s63, 1
      %p67 = scmp.eq.s32.totalorder %s29, 1
      %p68 = scmp.ne.s32.totalorder %s63, %s65
      %p69 = scmp.eq.s32.totalorder %s29, 0
      %p70 = por %p68, %p69
      %p71 = scmp.ne.s32.totalorder %s63, %s65
      %p72 = scmp.eq.s32.totalorder %s34, 1
      %p73 = por %p71, %p72
      %p74 = scmp.ne.s32.totalorder %s65, %s66
      %p75 = scmp.eq.s32.totalorder %s34, 0
      %p76 = por %p74, %p75
      %p77 = scmp.ne.s32.totalorder %s65, %s66
      %p78 = scmp.eq.s32.totalorder %s35, 1
      %p79 = por %p77, %p78
      %p81 = scmp.ne.s32.totalorder %s66, %s80
      %p82 = scmp.eq.s32.totalorder %s35, 0
      %p83 = por %p81, %p82
      %s85 = sadd.s32 %s84, 1
      %p88 = scmp.eq.s32.totalorder %s29, 1
      %p89 = scmp.ne.s32.totalorder %s84, %s86
      %p90 = scmp.eq.s32.totalorder %s29, 0
      %p91 = por %p89, %p90
      %p92 = scmp.ne.s32.totalorder %s84, %s86
      %p93 = scmp.eq.s32.totalorder %s34, 1
      %p94 = por %p92, %p93
      %p95 = scmp.ne.s32.totalorder %s86, %s87
      %p96 = scmp.eq.s32.totalorder %s34, 0
      %p97 = por %p95, %p96
      %p98 = scmp.ne.s32.totalorder %s86, %s87
      %p99 = scmp.eq.s32.totalorder %s35, 1
      %p100 = por %p98, %p99
      %p102 = scmp.ne.s32.totalorder %s87, %s101
      %p103 = scmp.eq.s32.totalorder %s35, 0
      %p104 = por %p102, %p103
      %s106 = sadd.s32 %s105, 1
      %p109 = scmp.eq.s32.totalorder %s29, 1
      %p110 = scmp.ne.s32.totalorder %s105, %s107
      %p111 = scmp.eq.s32.totalorder %s29, 0
      %p112 = por %p110, %p111
      %p113 = scmp.ne.s32.totalorder %s105, %s107
      %p114 = scmp.eq.s32.totalorder %s34, 1
      %p115 = por %p113, %p114
      %p116 = scmp.ne.s32.totalorder %s107, %s108
      %p117 = scmp.eq.s32.totalorder %s34, 0
      %p118 = por %p116, %p117
      %p119 = scmp.ne.s32.totalorder %s107, %s108
      %p120 = scmp.eq.s32.totalorder %s35, 1
      %p121 = por %p119, %p120
      %p123 = scmp.ne.s32.totalorder %s108, %s122
      %p124 = scmp.eq.s32.totalorder %s35, 0
      %p125 = por %p123, %p124
      %s127 = sadd.s32 %s126, 1
      %p130 = scmp.eq.s32.totalorder %s29, 1
      %p131 = scmp.ne.s32.totalorder %s126, %s128
      %p132 = scmp.eq.s32.totalorder %s29, 0
      %p133 = por %p131, %p132
      %p134 = scmp.ne.s32.totalorder %s126, %s128
      %p135 = scmp.eq.s32.totalorder %s34, 1
      %p136 = por %p134, %p135
      %p137 = scmp.ne.s32.totalorder %s128, %s129
      %p138 = scmp.eq.s32.totalorder %s34, 0
      %p139 = por %p137, %p138
      %p140 = scmp.ne.s32.totalorder %s128, %s129
      %p141 = scmp.eq.s32.totalorder %s35, 1
      %p142 = por %p140, %p141
      %p144 = scmp.ne.s32.totalorder %s129, %s143
      %p145 = scmp.eq.s32.totalorder %s35, 0
      %p146 = por %p144, %p145
      %s148 = sadd.s32 %s147, 1
      %p151 = scmp.eq.s32.totalorder %s29, 1
      %p152 = scmp.ne.s32.totalorder %s147, %s149
      %p153 = scmp.eq.s32.totalorder %s29, 0
      %p154 = por %p152, %p153
      %p155 = scmp.ne.s32.totalorder %s147, %s149
      %p156 = scmp.eq.s32.totalorder %s34, 1
      %p157 = por %p155, %p156
      %p158 = scmp.ne.s32.totalorder %s149, %s150
      %p159 = scmp.eq.s32.totalorder %s34, 0
      %p160 = por %p158, %p159
      %p161 = scmp.ne.s32.totalorder %s149, %s150
      %p162 = scmp.eq.s32.totalorder %s35, 1
      %p163 = por %p161, %p162
      %p165 = scmp.ne.s32.totalorder %s150, %s164
      %p166 = scmp.eq.s32.totalorder %s35, 0
      %p167 = por %p165, %p166
      %s169 = sadd.s32 %s168, 1
      %p172 = scmp.eq.s32.totalorder %s29, 1
      %p173 = scmp.ne.s32.totalorder %s168, %s170
      %p174 = scmp.eq.s32.totalorder %s29, 0
      %p175 = por %p173, %p174
      %p176 = scmp.ne.s32.totalorder %s168, %s170
      %p177 = scmp.eq.s32.totalorder %s34, 1
      %p178 = por %p176, %p177
      %p179 = scmp.ne.s32.totalorder %s170, %s171
      %p180 = scmp.eq.s32.totalorder %s34, 0
      %p181 = por %p179, %p180
      %p182 = scmp.ne.s32.totalorder %s170, %s171
      %p183 = scmp.eq.s32.totalorder %s35, 1
      %p184 = por %p182, %p183
      %p186 = scmp.ne.s32.totalorder %s171, %s185
      %p187 = scmp.eq.s32.totalorder %s35, 0
      %p188 = por %p186, %p187
      %s190 = sadd.s32 %s189, 1
      %p193 = scmp.eq.s32.totalorder %s29, 1
      %p194 = scmp.ne.s32.totalorder %s189, %s191
      %p195 = scmp.eq.s32.totalorder %s29, 0
      %p196 = por %p194, %p195
      %p197 = scmp.ne.s32.totalorder %s189, %s191
      %p198 = scmp.eq.s32.totalorder %s34, 1
      %p199 = por %p197, %p198
      %p200 = scmp.ne.s32.totalorder %s191, %s192
      %p201 = scmp.eq.s32.totalorder %s34, 0
      %p202 = por %p200, %p201
      %p203 = scmp.ne.s32.totalorder %s191, %s192
      %p204 = scmp.eq.s32.totalorder %s35, 1
      %p205 = por %p203, %p204
      %p207 = scmp.ne.s32.totalorder %s192, %s206
      %p208 = scmp.eq.s32.totalorder %s35, 0
      %p209 = por %p207, %p208
      %s211 = sadd.s32 %s210, 1
      %p214 = scmp.eq.s32.totalorder %s29, 1
      %p215 = scmp.ne.s32.totalorder %s210, %s212
      %p216 = scmp.eq.s32.totalorder %s29, 0
      %p217 = por %p215, %p216
      %p218 = scmp.ne.s32.totalorder %s210, %s212
      %p219 = scmp.eq.s32.totalorder %s34, 1
      %p220 = por %p218, %p219
      %p221 = scmp.ne.s32.totalorder %s212, %s213
      %p222 = scmp.eq.s32.totalorder %s34, 0
      %p223 = por %p221, %p222
      %p224 = scmp.ne.s32.totalorder %s212, %s213
      %p225 = scmp.eq.s32.totalorder %s35, 1
      %p226 = por %p224, %p225
      %p228 = scmp.ne.s32.totalorder %s213, %s227
      %p229 = scmp.eq.s32.totalorder %s35, 0
      %p230 = por %p228, %p229
      %s232 = sadd.s32 %s231, 1
      %p235 = scmp.eq.s32.totalorder %s29, 1
      %p236 = scmp.ne.s32.totalorder %s231, %s233
      %p237 = scmp.eq.s32.totalorder %s29, 0
      %p238 = por %p236, %p237
      %p239 = scmp.ne.s32.totalorder %s231, %s233
      %p240 = scmp.eq.s32.totalorder %s34, 1
      %p241 = por %p239, %p240
      %p242 = scmp.ne.s32.totalorder %s233, %s234
      %p243 = scmp.eq.s32.totalorder %s34, 0
      %p244 = por %p242, %p243
      %p245 = scmp.ne.s32.totalorder %s233, %s234
      %p246 = scmp.eq.s32.totalorder %s35, 1
      %p247 = por %p245, %p246
      %p249 = scmp.ne.s32.totalorder %s234, %s248
      %p250 = scmp.eq.s32.totalorder %s35, 0
      %p251 = por %p249, %p250
      %s253 = sadd.s32 %s252, 1
      %p256 = scmp.eq.s32.totalorder %s29, 1
      %p257 = scmp.ne.s32.totalorder %s252, %s254
      %p258 = scmp.eq.s32.totalorder %s29, 0
      %p259 = por %p257, %p258
      %p260 = scmp.ne.s32.totalorder %s252, %s254
      %p261 = scmp.eq.s32.totalorder %s34, 1
      %p262 = por %p260, %p261
      %p263 = scmp.ne.s32.totalorder %s254, %s255
      %p264 = scmp.eq.s32.totalorder %s34, 0
      %p265 = por %p263, %p264
      %p266 = scmp.ne.s32.totalorder %s254, %s255
      %p267 = scmp.eq.s32.totalorder %s35, 1
      %p268 = por %p266, %p267
      %p270 = scmp.ne.s32.totalorder %s255, %s269
      %p271 = scmp.eq.s32.totalorder %s35, 0
      %p272 = por %p270, %p271
      %s274 = sadd.s32 %s273, 1
      %p277 = scmp.eq.s32.totalorder %s29, 1
      %p278 = scmp.ne.s32.totalorder %s273, %s275
      %p279 = scmp.eq.s32.totalorder %s29, 0
      %p280 = por %p278, %p279
      %p281 = scmp.ne.s32.totalorder %s273, %s275
      %p282 = scmp.eq.s32.totalorder %s34, 1
      %p283 = por %p281, %p282
      %p284 = scmp.ne.s32.totalorder %s275, %s276
      %p285 = scmp.eq.s32.totalorder %s34, 0
      %p286 = por %p284, %p285
      %p287 = scmp.ne.s32.totalorder %s275, %s276
      %p288 = scmp.eq.s32.totalorder %s35, 1
      %p289 = por %p287, %p288
      %p291 = scmp.ne.s32.totalorder %s276, %s290
      %p292 = scmp.eq.s32.totalorder %s35, 0
      %p293 = por %p291, %p292
      %s295 = sadd.s32 %s294, 1
      %p298 = scmp.eq.s32.totalorder %s29, 1
      %p299 = scmp.ne.s32.totalorder %s294, %s296
      %p300 = scmp.eq.s32.totalorder %s29, 0
      %p301 = por %p299, %p300
      %p302 = scmp.ne.s32.totalorder %s294, %s296
      %p303 = scmp.eq.s32.totalorder %s34, 1
      %p304 = por %p302, %p303
      %p305 = scmp.ne.s32.totalorder %s296, %s297
      %p306 = scmp.eq.s32.totalorder %s34, 0
      %p307 = por %p305, %p306
      %p308 = scmp.ne.s32.totalorder %s296, %s297
      %p309 = scmp.eq.s32.totalorder %s35, 1
      %p310 = por %p308, %p309
      %p312 = scmp.ne.s32.totalorder %s297, %s311
      %p313 = scmp.eq.s32.totalorder %s35, 0
      %p314 = por %p312, %p313
      %s316 = sadd.s32 %s315, 1
      %p319 = scmp.eq.s32.totalorder %s29, 1
      %p320 = scmp.ne.s32.totalorder %s315, %s317
      %p321 = scmp.eq.s32.totalorder %s29, 0
      %p322 = por %p320, %p321
      %p323 = scmp.ne.s32.totalorder %s315, %s317
      %p324 = scmp.eq.s32.totalorder %s34, 1
      %p325 = por %p323, %p324
      %p326 = scmp.ne.s32.totalorder %s317, %s318
      %p327 = scmp.eq.s32.totalorder %s34, 0
      %p328 = por %p326, %p327
      %p329 = scmp.ne.s32.totalorder %s317, %s318
      %p330 = scmp.eq.s32.totalorder %s35, 1
      %p331 = por %p329, %p330
      %p333 = scmp.ne.s32.totalorder %s318, %s332
      %p334 = scmp.eq.s32.totalorder %s35, 0
      %p335 = por %p333, %p334
      %s337 = sadd.s32 %s336, 1
      %p340 = scmp.eq.s32.totalorder %s29, 1
      %p341 = scmp.ne.s32.totalorder %s336, %s338
      %p342 = scmp.eq.s32.totalorder %s29, 0
      %p343 = por %p341, %p342
      %p344 = scmp.ne.s32.totalorder %s336, %s338
      %p345 = scmp.eq.s32.totalorder %s34, 1
      %p346 = por %p344, %p345
      %p347 = scmp.ne.s32.totalorder %s338, %s339
      %p348 = scmp.eq.s32.totalorder %s34, 0
      %p349 = por %p347, %p348
      %p350 = scmp.ne.s32.totalorder %s338, %s339
      %p351 = scmp.eq.s32.totalorder %s35, 1
      %p352 = por %p350, %p351
      %p354 = scmp.ne.s32.totalorder %s339, %s353
      %p355 = scmp.eq.s32.totalorder %s35, 0
      %p356 = por %p354, %p355
      %s358 = sadd.s32 %s357, 1
      %p361 = scmp.eq.s32.totalorder %s29, 1
      %p362 = scmp.ne.s32.totalorder %s357, %s359
      %p363 = scmp.eq.s32.totalorder %s29, 0
      %p364 = por %p362, %p363
      %p365 = scmp.ne.s32.totalorder %s357, %s359
      %p366 = scmp.eq.s32.totalorder %s34, 1
      %p367 = por %p365, %p366
      %p368 = scmp.ne.s32.totalorder %s359, %s360
      %p369 = scmp.eq.s32.totalorder %s34, 0
      %p370 = por %p368, %p369
      %p371 = scmp.ne.s32.totalorder %s359, %s360
      %p372 = scmp.eq.s32.totalorder %s35, 1
      %p373 = por %p371, %p372
      %p375 = scmp.ne.s32.totalorder %s360, %s374
      %p376 = scmp.eq.s32.totalorder %s35, 0
      %p377 = por %p375, %p376
      %s379 = sadd.s32 %s378, 1
      %p382 = scmp.eq.s32.totalorder %s29, 1
      %p383 = scmp.ne.s32.totalorder %s378, %s380
      %p384 = scmp.eq.s32.totalorder %s29, 0
      %p385 = por %p383, %p384
      %p386 = scmp.ne.s32.totalorder %s378, %s380
      %p387 = scmp.eq.s32.totalorder %s34, 1
      %p388 = por %p386, %p387
      %p389 = scmp.ne.s32.totalorder %s380, %s381
      %p390 = scmp.eq.s32.totalorder %s34, 0
      %p391 = por %p389, %p390
      %p392 = scmp.ne.s32.totalorder %s380, %s381
      %p393 = scmp.eq.s32.totalorder %s35, 1
      %p394 = por %p392, %p393
      %p396 = scmp.ne.s32.totalorder %s381, %s395
      %p397 = scmp.eq.s32.totalorder %s35, 0
      %p398 = por %p396, %p397
      %s400 = sadd.s32 %s399, 1
      %p403 = scmp.eq.s32.totalorder %s29, 1
      %p404 = scmp.ne.s32.totalorder %s399, %s401
      %p405 = scmp.eq.s32.totalorder %s29, 0
      %p406 = por %p404, %p405
      %p407 = scmp.ne.s32.totalorder %s399, %s401
      %p408 = scmp.eq.s32.totalorder %s34, 1
      %p409 = por %p407, %p408
      %p410 = scmp.ne.s32.totalorder %s401, %s402
      %p411 = scmp.eq.s32.totalorder %s34, 0
      %p412 = por %p410, %p411
      %p413 = scmp.ne.s32.totalorder %s401, %s402
      %p414 = scmp.eq.s32.totalorder %s35, 1
      %p415 = por %p413, %p414
      %p417 = scmp.ne.s32.totalorder %s402, %s416
      %p418 = scmp.eq.s32.totalorder %s35, 0
      %p419 = por %p417, %p418
      %s421 = sadd.s32 %s420, 1
      %p424 = scmp.eq.s32.totalorder %s29, 1
      %p425 = scmp.ne.s32.totalorder %s420, %s422
      %p426 = scmp.eq.s32.totalorder %s29, 0
      %p427 = por %p425, %p426
      %p428 = scmp.ne.s32.totalorder %s420, %s422
      %p429 = scmp.eq.s32.totalorder %s34, 1
      %p430 = por %p428, %p429
      %p431 = scmp.ne.s32.totalorder %s422, %s423
      %p432 = scmp.eq.s32.totalorder %s34, 0
      %p433 = por %p431, %p432
      %p434 = scmp.ne.s32.totalorder %s422, %s423
      %p435 = scmp.eq.s32.totalorder %s35, 1
      %p436 = por %p434, %p435
      %p438 = scmp.ne.s32.totalorder %s423, %s437
      %p439 = scmp.eq.s32.totalorder %s35, 0
      %p440 = por %p438, %p439
      %s442 = sadd.s32 %s441, 1
      %p445 = scmp.eq.s32.totalorder %s29, 1
      %p446 = scmp.ne.s32.totalorder %s441, %s443
      %p447 = scmp.eq.s32.totalorder %s29, 0
      %p448 = por %p446, %p447
      %p449 = scmp.ne.s32.totalorder %s441, %s443
      %p450 = scmp.eq.s32.totalorder %s34, 1
      %p451 = por %p449, %p450
      %p452 = scmp.ne.s32.totalorder %s443, %s444
      %p453 = scmp.eq.s32.totalorder %s34, 0
      %p454 = por %p452, %p453
      %p455 = scmp.ne.s32.totalorder %s443, %s444
      %p456 = scmp.eq.s32.totalorder %s35, 1
      %p457 = por %p455, %p456
      %p459 = scmp.ne.s32.totalorder %s444, %s458
      %p460 = scmp.eq.s32.totalorder %s35, 0
      %p461 = por %p459, %p460
      %s462 = ssub.s32 %s29, %s36
      %p463 = scmp.eq.s32.totalorder %s462, 0
      %s465 = sadd.s32 %s464, 1
      %s466 = scalar_select %p463, %s464, %s465
      %p469 = pneg %p463
      %p470 = scmp.eq.s32.totalorder %s29, 1
      %p471 = por %p469, %p470
      %p472 = scmp.ne.s32.totalorder %s464, %s467
      %p473 = scmp.eq.s32.totalorder %s29, 0
      %p474 = por %p472, %p473
      %p475 = scmp.ne.s32.totalorder %s464, %s467
      %p476 = scmp.eq.s32.totalorder %s34, 1
      %p477 = por %p475, %p476
      %p478 = scmp.ne.s32.totalorder %s467, %s468
      %p479 = scmp.eq.s32.totalorder %s34, 0
      %p480 = por %p478, %p479
      %p481 = scmp.ne.s32.totalorder %s467, %s468
      %p482 = scmp.eq.s32.totalorder %s35, 1
      %p483 = por %p481, %p482
      %p485 = scmp.ne.s32.totalorder %s468, %s484
      %p486 = scmp.eq.s32.totalorder %s35, 0
      %p487 = por %p485, %p486
      %p488 = scmp.le.s32.totalorder 1, %s29
      %p489 = scmp.lt.s32.totalorder %s29, 3
      %p490 = pnand %p488, %p489
      %p491 = pneg %p490
      // Predicated region
      $region9: #{tpu_custom_call.1} parent=5 // pred_check
        _
      $region10: #{tpu_custom_call.1} parent=5 // pred_check_branch
        %493 = sbr.rel (%p490) target = $region12
      $region11: #{tpu_custom_call.1} parent=5 // pred_region
        %s494 = ssub.s32 %s29, 1
        // Predicated region
        $region13: #{tpu_custom_call.1} parent=11 // pred_check
          %p495 = pneg %p76
        $region14: #{tpu_custom_call.1} parent=11 // pred_check_branch
          %497 = sbr.rel (%p495) target = $region16
        $region15: #{tpu_custom_call.1} parent=11 // pred_region
          _
        $region16: #{tpu_custom_call.1} parent=11 // pred_fallthru
          _
        // Predicated region
        $region17: #{tpu_custom_call.1} parent=11 // pred_check
          %p498 = pneg %p97
        $region18: #{tpu_custom_call.1} parent=11 // pred_check_branch
          %500 = sbr.rel (%p498) target = $region20
        $region19: #{tpu_custom_call.1} parent=11 // pred_region
          _
        $region20: #{tpu_custom_call.1} parent=11 // pred_fallthru
          _
        // Predicated region
        $region21: #{tpu_custom_call.1} parent=11 // pred_check
          %p501 = pneg %p118
        $region22: #{tpu_custom_call.1} parent=11 // pred_check_branch
          %503 = sbr.rel (%p501) target = $region24
        $region23: #{tpu_custom_call.1} parent=11 // pred_region
          _
        $region24: #{tpu_custom_call.1} parent=11 // pred_fallthru
          _
        // Predicated region
        $region25: #{tpu_custom_call.1} parent=11 // pred_check
          %p504 = pneg %p139
        $region26: #{tpu_custom_call.1} parent=11 // pred_check_branch
          %506 = sbr.rel (%p504) target = $region28
        $region27: #{tpu_custom_call.1} parent=11 // pred_region
          _
        $region28: #{tpu_custom_call.1} parent=11 // pred_fallthru
          _
        // Predicated region
        $region29: #{tpu_custom_call.1} parent=11 // pred_check
          %p507 = pneg %p160
        $region30: #{tpu_custom_call.1} parent=11 // pred_check_branch
          %509 = sbr.rel (%p507) target = $region32
        $region31: #{tpu_custom_call.1} parent=11 // pred_region
          _
        $region32: #{tpu_custom_call.1} parent=11 // pred_fallthru
          _
        // Predicated region
        $region33: #{tpu_custom_call.1} parent=11 // pred_check
          %p510 = pneg %p181
        $region34: #{tpu_custom_call.1} parent=11 // pred_check_branch
          %512 = sbr.rel (%p510) target = $region36
        $region35: #{tpu_custom_call.1} parent=11 // pred_region
          _
        $region36: #{tpu_custom_call.1} parent=11 // pred_fallthru
          _
        // Predicated region
        $region37: #{tpu_custom_call.1} parent=11 // pred_check
          %p513 = pneg %p202
        $region38: #{tpu_custom_call.1} parent=11 // pred_check_branch
          %515 = sbr.rel (%p513) target = $region40
        $region39: #{tpu_custom_call.1} parent=11 // pred_region
          _
        $region40: #{tpu_custom_call.1} parent=11 // pred_fallthru
          _
        // Predicated region
        $region41: #{tpu_custom_call.1} parent=11 // pred_check
          %p516 = pneg %p223
        $region42: #{tpu_custom_call.1} parent=11 // pred_check_branch
          %518 = sbr.rel (%p516) target = $region44
        $region43: #{tpu_custom_call.1} parent=11 // pred_region
          _
        $region44: #{tpu_custom_call.1} parent=11 // pred_fallthru
          _
        // Predicated region
        $region45: #{tpu_custom_call.1} parent=11 // pred_check
          %p519 = pneg %p244
        $region46: #{tpu_custom_call.1} parent=11 // pred_check_branch
          %521 = sbr.rel (%p519) target = $region48
        $region47: #{tpu_custom_call.1} parent=11 // pred_region
          _
        $region48: #{tpu_custom_call.1} parent=11 // pred_fallthru
          _
        // Predicated region
        $region49: #{tpu_custom_call.1} parent=11 // pred_check
          %p522 = pneg %p265
        $region50: #{tpu_custom_call.1} parent=11 // pred_check_branch
          %524 = sbr.rel (%p522) target = $region52
        $region51: #{tpu_custom_call.1} parent=11 // pred_region
          _
        $region52: #{tpu_custom_call.1} parent=11 // pred_fallthru
          _
        // Predicated region
        $region53: #{tpu_custom_call.1} parent=11 // pred_check
          %p525 = pneg %p286
        $region54: #{tpu_custom_call.1} parent=11 // pred_check_branch
          %527 = sbr.rel (%p525) target = $region56
        $region55: #{tpu_custom_call.1} parent=11 // pred_region
          _
        $region56: #{tpu_custom_call.1} parent=11 // pred_fallthru
          _
        // Predicated region
        $region57: #{tpu_custom_call.1} parent=11 // pred_check
          %p528 = pneg %p307
        $region58: #{tpu_custom_call.1} parent=11 // pred_check_branch
          %530 = sbr.rel (%p528) target = $region60
        $region59: #{tpu_custom_call.1} parent=11 // pred_region
          _
        $region60: #{tpu_custom_call.1} parent=11 // pred_fallthru
          _
        // Predicated region
        $region61: #{tpu_custom_call.1} parent=11 // pred_check
          %p531 = pneg %p328
        $region62: #{tpu_custom_call.1} parent=11 // pred_check_branch
          %533 = sbr.rel (%p531) target = $region64
        $region63: #{tpu_custom_call.1} parent=11 // pred_region
          _
        $region64: #{tpu_custom_call.1} parent=11 // pred_fallthru
          _
        // Predicated region
        $region65: #{tpu_custom_call.1} parent=11 // pred_check
          %p534 = pneg %p349
        $region66: #{tpu_custom_call.1} parent=11 // pred_check_branch
          %536 = sbr.rel (%p534) target = $region68
        $region67: #{tpu_custom_call.1} parent=11 // pred_region
          _
        $region68: #{tpu_custom_call.1} parent=11 // pred_fallthru
          _
        // Predicated region
        $region69: #{tpu_custom_call.1} parent=11 // pred_check
          %p537 = pneg %p370
        $region70: #{tpu_custom_call.1} parent=11 // pred_check_branch
          %539 = sbr.rel (%p537) target = $region72
        $region71: #{tpu_custom_call.1} parent=11 // pred_region
          _
        $region72: #{tpu_custom_call.1} parent=11 // pred_fallthru
          _
        // Predicated region
        $region73: #{tpu_custom_call.1} parent=11 // pred_check
          %p540 = pneg %p391
        $region74: #{tpu_custom_call.1} parent=11 // pred_check_branch
          %542 = sbr.rel (%p540) target = $region76
        $region75: #{tpu_custom_call.1} parent=11 // pred_region
          _
        $region76: #{tpu_custom_call.1} parent=11 // pred_fallthru
          _
        // Predicated region
        $region77: #{tpu_custom_call.1} parent=11 // pred_check
          %p543 = pneg %p412
        $region78: #{tpu_custom_call.1} parent=11 // pred_check_branch
          %545 = sbr.rel (%p543) target = $region80
        $region79: #{tpu_custom_call.1} parent=11 // pred_region
          _
        $region80: #{tpu_custom_call.1} parent=11 // pred_fallthru
          _
        // Predicated region
        $region81: #{tpu_custom_call.1} parent=11 // pred_check
          %p546 = pneg %p433
        $region82: #{tpu_custom_call.1} parent=11 // pred_check_branch
          %548 = sbr.rel (%p546) target = $region84
        $region83: #{tpu_custom_call.1} parent=11 // pred_region
          _
        $region84: #{tpu_custom_call.1} parent=11 // pred_fallthru
          _
        // Predicated region
        $region85: #{tpu_custom_call.1} parent=11 // pred_check
          %p549 = pneg %p454
        $region86: #{tpu_custom_call.1} parent=11 // pred_check_branch
          %551 = sbr.rel (%p549) target = $region88
        $region87: #{tpu_custom_call.1} parent=11 // pred_region
          _
        $region88: #{tpu_custom_call.1} parent=11 // pred_fallthru
          _
      $region12: #{tpu_custom_call.1} parent=5 // pred_fallthru
        _
      %p552 = scmp.lt.s32.totalorder %s29, 2
      // Predicated region
      $region89: #{tpu_custom_call.1} parent=5 // pred_check
        %p553 = pneg %p552
      $region90: #{tpu_custom_call.1} parent=5 // pred_check_branch
        %555 = sbr.rel (%p553) target = $region92
      $region91: #{tpu_custom_call.1} parent=5 // pred_region
        // Predicated region
        $region93: #{tpu_custom_call.1} parent=91 // pred_check
          %p556 = pneg %p49
        $region94: #{tpu_custom_call.1} parent=91 // pred_check_branch
          %558 = sbr.rel (%p556) target = $region96
        $region95: #{tpu_custom_call.1} parent=91 // pred_region
          %p559 = scmp.lt.s32.totalorder %s29, 1
          %s560 = scalar_select %p559, %s29, 1
          %s561 = smul.addr %s560, 3
          %s562 = smul.addr %s561, 8
          %s563 = scalar_lea.vmem %s0, %s562
        $region96: #{tpu_custom_call.1} parent=91 // pred_fallthru
          _
      $region92: #{tpu_custom_call.1} parent=5 // pred_fallthru
        _
      %p564 = scmp.le.s32.totalorder 1, %s29
      %p565 = scmp.lt.s32.totalorder %s29, 3
      %p566 = pnand %p564, %p565
      %p567 = pneg %p566
      // Predicated region
      $region97: #{tpu_custom_call.1} parent=5 // pred_check
        _
      $region98: #{tpu_custom_call.1} parent=5 // pred_check_branch
        %569 = sbr.rel (%p566) target = $region100
      $region99: #{tpu_custom_call.1} parent=5 // pred_region
        %s570 = ssub.s32 %s29, 1
        %p571 = scmp.lt.s32.totalorder %s34, 1
        %s572 = scalar_select %p571, %s34, 1
        %s573 = smul.addr %s572, 3
        %s574 = smul.addr %s573, 8
        %s575 = scalar_lea.vmem %s0, %s574
        %p576 = pneg %p55
        %p577 = pneg %p52
        %p578 = pneg %p76
        %p579 = pneg %p73
        %p580 = pneg %p97
        %p581 = pneg %p94
        %p582 = pneg %p118
        %p583 = pneg %p115
        %p584 = pneg %p139
        %p585 = pneg %p136
        %p586 = pneg %p160
        %p587 = pneg %p157
        %p588 = pneg %p181
        %p589 = pneg %p178
        %p590 = pneg %p202
        %p591 = pneg %p199
        %p592 = pneg %p223
        %p593 = pneg %p220
        %p594 = pneg %p244
        %p595 = pneg %p241
        %p596 = pneg %p265
        %p597 = pneg %p262
        %p598 = pneg %p286
        %p599 = pneg %p283
        %p600 = pneg %p307
        %p601 = pneg %p304
        %p602 = pneg %p328
        %p603 = pneg %p325
        %p604 = pneg %p349
        %p605 = pneg %p346
        %p606 = pneg %p370
        %p607 = pneg %p367
        %p608 = pneg %p391
        %p609 = pneg %p388
        %p610 = pneg %p412
        %p611 = pneg %p409
        %p612 = pneg %p433
        %p613 = pneg %p430
        %p614 = pneg %p454
        %p615 = pneg %p451
        %p616 = pneg %p480
        %p617 = pneg %p477
        %s618 = sand.u32 %s467, 1
        %s619 = scalar_lea.sflag [#allocation5], %s618
        %s620 = sand.u32 %s467, 1
        %s621 = smul.addr %s620, 24
        %s622 = scalar_lea.vmem [#allocation4], %s621
        %p623 = scmp.lt.s32.totalorder %s34, 1
        %s624 = scalar_select %p623, %s34, 1
        %s625 = smul.addr %s624, 3
        %s626 = smul.addr %s625, 8
        %s627 = scalar_lea.vmem %s0, %s626
        %628 = vst [vmem:[#allocation2] sm:$0xff] 0.0
        %629 = vst [vmem:[#allocation2 + $0x28] sm:$0xff] 0.0
        %630 = vst [vmem:[#allocation2 + $0x50] sm:$0xff] 0.0
        %631 = vst [vmem:[#allocation2 + $0x78] sm:$0xff] 0.0
        %632 = vst [vmem:[#allocation2 + $0xa0] sm:$0xff] 0.0
        %633 = vst [vmem:[#allocation2 + $0xc8] sm:$0xff] 0.0
        %634 = vst [vmem:[#allocation2 + $0xf0] sm:$0xff] 0.0
        %635 = vst [vmem:[#allocation2 + $0x118] sm:$0xff] 0.0
        %636 = vst [vmem:[#allocation2 + $0x140] sm:$0xff] 0.0
        %vm637 = vcmask 1048096
        %638 = vst.msk [vmem:[#allocation2 + $0x18] sm:$0xff] %vm637, 0.0
        %vm639 = vcmask 556032
        %640 = vst.msk [vmem:[#allocation2 + $0x20] sm:$0xff] %vm639, 0.0
        %641 = vst.msk [vmem:[#allocation2 + $0x40] sm:$0xff] %vm637, 0.0
        %642 = vst.msk [vmem:[#allocation2 + $0x48] sm:$0xff] %vm639, 0.0
        %643 = vst.msk [vmem:[#allocation2 + $0x68] sm:$0xff] %vm637, 0.0
        %644 = vst.msk [vmem:[#allocation2 + $0x70] sm:$0xff] %vm639, 0.0
        %645 = vst.msk [vmem:[#allocation2 + $0x90] sm:$0xff] %vm637, 0.0
        %646 = vst.msk [vmem:[#allocation2 + $0x98] sm:$0xff] %vm639, 0.0
        %647 = vst.msk [vmem:[#allocation2 + $0xb8] sm:$0xff] %vm637, 0.0
        %648 = vst.msk [vmem:[#allocation2 + $0xc0] sm:$0xff] %vm639, 0.0
        %649 = vst.msk [vmem:[#allocation2 + $0xe0] sm:$0xff] %vm637, 0.0
        %650 = vst.msk [vmem:[#allocation2 + $0xe8] sm:$0xff] %vm639, 0.0
        %651 = vst.msk [vmem:[#allocation2 + $0x108] sm:$0xff] %vm637, 0.0
        %652 = vst.msk [vmem:[#allocation2 + $0x110] sm:$0xff] %vm639, 0.0
        %653 = vst.msk [vmem:[#allocation2 + $0x130] sm:$0xff] %vm637, 0.0
        %654 = vst.msk [vmem:[#allocation2 + $0x138] sm:$0xff] %vm639, 0.0
        %655 = vst.msk [vmem:[#allocation2 + $0x158] sm:$0xff] %vm637, 0.0
        %656 = vst.msk [vmem:[#allocation2 + $0x160] sm:$0xff] %vm639, 0.0
        %v657 = vld [vmem:[%s627] sm:$0xff]
        %v658 = vld [vmem:[%s627 + $0x8] sm:$0xff]
        %v659 = vld [vmem:[%s627 + $0x10] sm:$0xff]
        %660 = vst [vmem:[#allocation2 + $0x8] sm:$0xff] %v657
        %661 = vst [vmem:[#allocation2 + $0x10] sm:$0xff] %v658
        %662 = vst.msk [vmem:[#allocation2 + $0x18] sm:$0xff] %vm639, %v659
        %v663 = vld [vmem:[%s2] sm:$0xff]
        %v664 = vld [vmem:[%s2 + $0x8] sm:$0xff]
        %v665 = vld [vmem:[%s2 + $0x10] sm:$0xff]
        %v666 = vld [vmem:[%s2 + $0x18] sm:$0xff]
        %v667 = vld [vmem:[%s2 + $0x20] sm:$0xff]
        %v668 = vld [vmem:[%s2 + $0x28] sm:$0xff]
        %v669 = vld [vmem:[%s2 + $0x30] sm:$0xff]
        %v670 = vld [vmem:[%s2 + $0x38] sm:$0xff]
        %v671 = vld [vmem:[%s2 + $0x40] sm:$0xff]
        %v672 = vld [vmem:[%s10] sm:$0xff]
        %v673 = vld [vmem:[#allocation2] sm:$0xff]
        %v674 = vld [vmem:[#allocation2 + $0x8] sm:$0xff]
        %v675 = vld [vmem:[#allocation2 + $0x10] sm:$0xff]
        %v676 = vld [vmem:[#allocation2 + $0x18] sm:$0xff]
        %v677 = vld [vmem:[#allocation2 + $0x20] sm:$0xff]
        %vm678 = vcmask 64512
        %v680 = vsel %vm678, %v663, 0
        %v683 = vsel %vm678, %v664, 0
        %v686 = vsel %vm678, %v665, 0
        %v689 = vsel %vm678, %v666, 0
        %v692 = vsel %vm678, %v667, 0
        %v695 = vsel %vm678, %v668, 0
        %v698 = vsel %vm678, %v669, 0
        %v701 = vsel %vm678, %v670, 0
        %v704 = vsel %vm678, %v671, 0
        %706 = vmatprep.subr.mxu0 0.0
        %707 = vmatpush1.msra.mxu0 0.0
        %708 = vmatprep.subr.mxu0 0.0
        %709 = vmatpush1.msra.mxu0 0.0
        %710 = vmatprep.subr.mxu0 0.0
        %711 = vmatpush1.msra.mxu0 0.0
        %712 = vmatprep.subr.mxu0 0.0
        %713 = vmatpush1.msra.mxu0 0.0
        %714 = vmatprep.subr.mxu0 0.0
        %715 = vmatpush1.msra.mxu0 0.0
        %716 = vmatprep.subr.mxu0 0.0
        %717 = vmatpush1.msra.mxu0 0.0
        %718 = vmatprep.subr.mxu0 0.0
        %719 = vmatpush1.msra.mxu0 0.0
        %720 = vmatprep.subr.mxu0 0.0
        %721 = vmatpush1.msra.mxu0 0.0
        %722 = vmatprep.subr.mxu0 0.0
        %723 = vmatpush1.msra.mxu0 0.0
        %724 = vmatprep.subr.mxu0 0.0
        %725 = vmatpush1.msra.mxu0 0.0
        %726 = vmatprep.subr.mxu0 0.0
        %727 = vmatpush1.msra.mxu0 0.0
        %728 = vmatprep.subr.mxu0 0.0
        %729 = vmatpush1.msra.mxu0 0.0
        %730 = vmatprep.subr.mxu0 0.0
        %731 = vmatpush1.msra.mxu0 0.0
        %732 = vmatprep.subr.mxu0 0.0
        %733 = vmatpush1.msra.mxu0 0.0
        %734 = vmatprep.subr.mxu0 0.0
        %735 = vmatpush1.msra.mxu0 0.0
        %736 = vmatprep.subr.mxu0 %v674
        %737 = vmatpush1.msra.mxu0 %v673
        %738 = vmatprep.subr.mxu0 0.0
        %739 = vmatpush2.msra.mxu0 0.0
        %740 = vmatprep.subr.mxu0 0.0
        %741 = vmatpush2.msra.mxu0 0.0
        %742 = vmatprep.subr.mxu0 0.0
        %743 = vmatpush2.msra.mxu0 0.0
        %744 = vmatprep.subr.mxu0 0.0
        %745 = vmatpush2.msra.mxu0 0.0
        %746 = vmatprep.subr.mxu0 0.0
        %747 = vmatpush2.msra.mxu0 0.0
        %748 = vmatprep.subr.mxu0 0.0
        %749 = vmatpush2.msra.mxu0 0.0
        %750 = vmatprep.subr.mxu0 0.0
        %751 = vmatpush2.msra.mxu0 0.0
        %752 = vmatprep.subr.mxu0 0.0
        %753 = vmatpush2.msra.mxu0 0.0
        %754 = vmatprep.subr.mxu0 0.0
        %755 = vmatpush2.msra.mxu0 0.0
        %756 = vmatprep.subr.mxu0 0.0
        %757 = vmatpush2.msra.mxu0 0.0
        %758 = vmatprep.subr.mxu0 0.0
        %759 = vmatpush2.msra.mxu0 0.0
        %760 = vmatprep.subr.mxu0 0.0
        %761 = vmatpush2.msra.mxu0 0.0
        %762 = vmatprep.subr.mxu0 0.0
        %763 = vmatpush2.msra.mxu0 0.0
        %764 = vmatprep.subr.mxu0 0.0
        %765 = vmatpush2.msra.mxu0 0.0
        %766 = vmatprep.subr.mxu0 0.0
        %767 = vmatpush2.msra.mxu0 0.0
        %768 = vmatprep.subr.mxu0 0.0
        %769 = vmatpush2.msra.mxu0 0.0
        %770 = vmatprep.mubr.f32.mxu0 0.0
        %771 = vmatmul.mubr.f32.gmra.mxu0 %v680
        %v772 = vpop.f32.mrf.mxu0
        %v773 = vadd.f32 0.0, %v772
        %v774 = vpop.f32.mrf.mxu0
        %v775 = vadd.f32 0.0, %v774
        %776 = vmatprep.mubr.f32.mxu0 0.0
        %777 = vmatmul.mubr.f32.gmra.mxu0 %v683
        %v778 = vpop.f32.mrf.mxu0
        %v779 = vadd.f32 0.0, %v778
        %v780 = vpop.f32.mrf.mxu0
        %v781 = vadd.f32 0.0, %v780
        %782 = vmatprep.mubr.f32.mxu0 0.0
        %783 = vmatmul.mubr.f32.gmra.mxu0 %v686
        %v784 = vpop.f32.mrf.mxu0
        %v785 = vadd.f32 0.0, %v784
        %v786 = vpop.f32.mrf.mxu0
        %v787 = vadd.f32 0.0, %v786
        %788 = vmatprep.mubr.f32.mxu0 0.0
        %789 = vmatmul.mubr.f32.gmra.mxu0 %v689
        %v790 = vpop.f32.mrf.mxu0
        %v791 = vadd.f32 0.0, %v790
        %v792 = vpop.f32.mrf.mxu0
        %v793 = vadd.f32 0.0, %v792
        %794 = vmatprep.mubr.f32.mxu0 0.0
        %795 = vmatmul.mubr.f32.gmra.mxu0 %v692
        %v796 = vpop.f32.mrf.mxu0
        %v797 = vadd.f32 0.0, %v796
        %v798 = vpop.f32.mrf.mxu0
        %v799 = vadd.f32 0.0, %v798
        %800 = vmatprep.mubr.f32.mxu0 0.0
        %801 = vmatmul.mubr.f32.gmra.mxu0 %v695
        %v802 = vpop.f32.mrf.mxu0
        %v803 = vadd.f32 0.0, %v802
        %v804 = vpop.f32.mrf.mxu0
        %v805 = vadd.f32 0.0, %v804
        %806 = vmatprep.mubr.f32.mxu0 0.0
        %807 = vmatmul.mubr.f32.gmra.mxu0 %v698
        %v808 = vpop.f32.mrf.mxu0
        %v809 = vadd.f32 0.0, %v808
        %v810 = vpop.f32.mrf.mxu0
        %v811 = vadd.f32 0.0, %v810
        %812 = vmatprep.mubr.f32.mxu0 0.0
        %813 = vmatmul.mubr.f32.gmra.mxu0 %v701
        %v814 = vpop.f32.mrf.mxu0
        %v815 = vadd.f32 0.0, %v814
        %v816 = vpop.f32.mrf.mxu0
        %v817 = vadd.f32 0.0, %v816
        %818 = vmatprep.mubr.f32.mxu0 0.0
        %819 = vmatmul.mubr.f32.gmra.mxu0 %v704
        %v820 = vpop.f32.mrf.mxu0
        %v821 = vadd.f32 0.0, %v820
        %v822 = vpop.f32.mrf.mxu0
        %v823 = vadd.f32 0.0, %v822
        %824 = vdwg.mxu0
        %825 = vmatprep.subr.mxu0 0.0
        %826 = vmatpush1.msra.mxu0 0.0
        %827 = vmatprep.subr.mxu0 0.0
        %828 = vmatpush1.msra.mxu0 0.0
        %829 = vmatprep.subr.mxu0 0.0
        %830 = vmatpush1.msra.mxu0 0.0
        %831 = vmatprep.subr.mxu0 0.0
        %832 = vmatpush1.msra.mxu0 0.0
        %833 = vmatprep.subr.mxu0 0.0
        %834 = vmatpush1.msra.mxu0 0.0
        %835 = vmatprep.subr.mxu0 0.0
        %836 = vmatpush1.msra.mxu0 0.0
        %837 = vmatprep.subr.mxu0 0.0
        %838 = vmatpush1.msra.mxu0 0.0
        %839 = vmatprep.subr.mxu0 0.0
        %840 = vmatpush1.msra.mxu0 0.0
        %841 = vmatprep.subr.mxu0 0.0
        %842 = vmatpush1.msra.mxu0 0.0
        %843 = vmatprep.subr.mxu0 0.0
        %844 = vmatpush1.msra.mxu0 0.0
        %845 = vmatprep.subr.mxu0 0.0
        %846 = vmatpush1.msra.mxu0 0.0
        %847 = vmatprep.subr.mxu0 0.0
        %848 = vmatpush1.msra.mxu0 0.0
        %849 = vmatprep.subr.mxu0 0.0
        %850 = vmatpush1.msra.mxu0 0.0
        %851 = vmatprep.subr.mxu0 0.0
        %852 = vmatpush1.msra.mxu0 0.0
        %853 = vmatprep.subr.mxu0 0.0
        %854 = vmatpush1.msra.mxu0 0.0
        %855 = vmatprep.subr.mxu0 %v676
        %856 = vmatpush1.msra.mxu0 %v675
        %857 = vmatprep.subr.mxu0 0.0
        %858 = vmatpush2.msra.mxu0 0.0
        %859 = vmatprep.subr.mxu0 0.0
        %860 = vmatpush2.msra.mxu0 0.0
        %861 = vmatprep.subr.mxu0 0.0
        %862 = vmatpush2.msra.mxu0 0.0
        %863 = vmatprep.subr.mxu0 0.0
        %864 = vmatpush2.msra.mxu0 0.0
        %865 = vmatprep.subr.mxu0 0.0
        %866 = vmatpush2.msra.mxu0 0.0
        %867 = vmatprep.subr.mxu0 0.0
        %868 = vmatpush2.msra.mxu0 0.0
        %869 = vmatprep.subr.mxu0 0.0
        %870 = vmatpush2.msra.mxu0 0.0
        %871 = vmatprep.subr.mxu0 0.0
        %872 = vmatpush2.msra.mxu0 0.0
        %873 = vmatprep.subr.mxu0 0.0
        %874 = vmatpush2.msra.mxu0 0.0
        %875 = vmatprep.subr.mxu0 0.0
        %876 = vmatpush2.msra.mxu0 0.0
        %877 = vmatprep.subr.mxu0 0.0
        %878 = vmatpush2.msra.mxu0 0.0
        %879 = vmatprep.subr.mxu0 0.0
        %880 = vmatpush2.msra.mxu0 0.0
        %881 = vmatprep.subr.mxu0 0.0
        %882 = vmatpush2.msra.mxu0 0.0
        %883 = vmatprep.subr.mxu0 0.0
        %884 = vmatpush2.msra.mxu0 0.0
        %885 = vmatprep.subr.mxu0 0.0
        %886 = vmatpush2.msra.mxu0 0.0
        %887 = vmatprep.subr.mxu0 0.0
        %888 = vmatpush2.msra.mxu0 0.0
        %889 = vmatprep.mubr.f32.mxu0 0.0
        %890 = vmatmul.mubr.f32.gmra.mxu0 %v680
        %v891 = vpop.f32.mrf.mxu0
        %v892 = vadd.f32 0.0, %v891
        %v893 = vpop.f32.mrf.mxu0
        %v894 = vadd.f32 0.0, %v893
        %895 = vmatprep.mubr.f32.mxu0 0.0
        %896 = vmatmul.mubr.f32.gmra.mxu0 %v683
        %v897 = vpop.f32.mrf.mxu0
        %v898 = vadd.f32 0.0, %v897
        %v899 = vpop.f32.mrf.mxu0
        %v900 = vadd.f32 0.0, %v899
        %901 = vmatprep.mubr.f32.mxu0 0.0
        %902 = vmatmul.mubr.f32.gmra.mxu0 %v686
        %v903 = vpop.f32.mrf.mxu0
        %v904 = vadd.f32 0.0, %v903
        %v905 = vpop.f32.mrf.mxu0
        %v906 = vadd.f32 0.0, %v905
        %907 = vmatprep.mubr.f32.mxu0 0.0
        %908 = vmatmul.mubr.f32.gmra.mxu0 %v689
        %v909 = vpop.f32.mrf.mxu0
        %v910 = vadd.f32 0.0, %v909
        %v911 = vpop.f32.mrf.mxu0
        %v912 = vadd.f32 0.0, %v911
        %913 = vmatprep.mubr.f32.mxu0 0.0
        %914 = vmatmul.mubr.f32.gmra.mxu0 %v692
        %v915 = vpop.f32.mrf.mxu0
        %v916 = vadd.f32 0.0, %v915
        %v917 = vpop.f32.mrf.mxu0
        %v918 = vadd.f32 0.0, %v917
        %919 = vmatprep.mubr.f32.mxu0 0.0
        %920 = vmatmul.mubr.f32.gmra.mxu0 %v695
        %v921 = vpop.f32.mrf.mxu0
        %v922 = vadd.f32 0.0, %v921
        %v923 = vpop.f32.mrf.mxu0
        %v924 = vadd.f32 0.0, %v923
        %925 = vmatprep.mubr.f32.mxu0 0.0
        %926 = vmatmul.mubr.f32.gmra.mxu0 %v698
        %v927 = vpop.f32.mrf.mxu0
        %v928 = vadd.f32 0.0, %v927
        %v929 = vpop.f32.mrf.mxu0
        %v930 = vadd.f32 0.0, %v929
        %931 = vmatprep.mubr.f32.mxu0 0.0
        %932 = vmatmul.mubr.f32.gmra.mxu0 %v701
        %v933 = vpop.f32.mrf.mxu0
        %v934 = vadd.f32 0.0, %v933
        %v935 = vpop.f32.mrf.mxu0
        %v936 = vadd.f32 0.0, %v935
        %937 = vmatprep.mubr.f32.mxu0 0.0
        %938 = vmatmul.mubr.f32.gmra.mxu0 %v704
        %v939 = vpop.f32.mrf.mxu0
        %v940 = vadd.f32 0.0, %v939
        %v941 = vpop.f32.mrf.mxu0
        %v942 = vadd.f32 0.0, %v941
        %943 = vdwg.mxu0
        %944 = vmatprep.subr.mxu0 0.0
        %945 = vmatpush1.msra.mxu0 0.0
        %946 = vmatprep.subr.mxu0 0.0
        %947 = vmatpush1.msra.mxu0 0.0
        %948 = vmatprep.subr.mxu0 0.0
        %949 = vmatpush1.msra.mxu0 0.0
        %950 = vmatprep.subr.mxu0 0.0
        %951 = vmatpush1.msra.mxu0 0.0
        %952 = vmatprep.subr.mxu0 0.0
        %953 = vmatpush1.msra.mxu0 0.0
        %954 = vmatprep.subr.mxu0 0.0
        %955 = vmatpush1.msra.mxu0 0.0
        %956 = vmatprep.subr.mxu0 0.0
        %957 = vmatpush1.msra.mxu0 0.0
        %958 = vmatprep.subr.mxu0 0.0
        %959 = vmatpush1.msra.mxu0 0.0
        %960 = vmatprep.subr.mxu0 0.0
        %961 = vmatpush1.msra.mxu0 0.0
        %962 = vmatprep.subr.mxu0 0.0
        %963 = vmatpush1.msra.mxu0 0.0
        %964 = vmatprep.subr.mxu0 0.0
        %965 = vmatpush1.msra.mxu0 0.0
        %966 = vmatprep.subr.mxu0 0.0
        %967 = vmatpush1.msra.mxu0 0.0
        %968 = vmatprep.subr.mxu0 0.0
        %969 = vmatpush1.msra.mxu0 0.0
        %970 = vmatprep.subr.mxu0 0.0
        %971 = vmatpush1.msra.mxu0 0.0
        %972 = vmatprep.subr.mxu0 0.0
        %973 = vmatpush1.msra.mxu0 0.0
        %974 = vmatprep.subr.mxu0 0.0
        %975 = vmatpush1.msra.mxu0 %v677
        %976 = vmatprep.subr.mxu0 0.0
        %977 = vmatpush2.msra.mxu0 0.0
        %978 = vmatprep.subr.mxu0 0.0
        %979 = vmatpush2.msra.mxu0 0.0
        %980 = vmatprep.subr.mxu0 0.0
        %981 = vmatpush2.msra.mxu0 0.0
        %982 = vmatprep.subr.mxu0 0.0
        %983 = vmatpush2.msra.mxu0 0.0
        %984 = vmatprep.subr.mxu0 0.0
        %985 = vmatpush2.msra.mxu0 0.0
        %986 = vmatprep.subr.mxu0 0.0
        %987 = vmatpush2.msra.mxu0 0.0
        %988 = vmatprep.subr.mxu0 0.0
        %989 = vmatpush2.msra.mxu0 0.0
        %990 = vmatprep.subr.mxu0 0.0
        %991 = vmatpush2.msra.mxu0 0.0
        %992 = vmatprep.subr.mxu0 0.0
        %993 = vmatpush2.msra.mxu0 0.0
        %994 = vmatprep.subr.mxu0 0.0
        %995 = vmatpush2.msra.mxu0 0.0
        %996 = vmatprep.subr.mxu0 0.0
        %997 = vmatpush2.msra.mxu0 0.0
        %998 = vmatprep.subr.mxu0 0.0
        %999 = vmatpush2.msra.mxu0 0.0
        %1000 = vmatprep.subr.mxu0 0.0
        %1001 = vmatpush2.msra.mxu0 0.0
        %1002 = vmatprep.subr.mxu0 0.0
        %1003 = vmatpush2.msra.mxu0 0.0
        %1004 = vmatprep.subr.mxu0 0.0
        %1005 = vmatpush2.msra.mxu0 0.0
        %1006 = vmatprep.subr.mxu0 0.0
        %1007 = vmatpush2.msra.mxu0 0.0
        %1008 = vmatprep.mubr.f32.mxu0 0.0
        %1009 = vmatmul.mubr.f32.gmra.mxu0 %v680
        %v1010 = vpop.f32.mrf.mxu0
        %v1011 = vadd.f32 0.0, %v1010
        %v1012 = vpop.f32.mrf.mxu0
        %1013 = vmatprep.mubr.f32.mxu0 0.0
        %1014 = vmatmul.mubr.f32.gmra.mxu0 %v683
        %v1015 = vpop.f32.mrf.mxu0
        %v1016 = vadd.f32 0.0, %v1015
        %v1017 = vpop.f32.mrf.mxu0
        %1018 = vmatprep.mubr.f32.mxu0 0.0
        %1019 = vmatmul.mubr.f32.gmra.mxu0 %v686
        %v1020 = vpop.f32.mrf.mxu0
        %v1021 = vadd.f32 0.0, %v1020
        %v1022 = vpop.f32.mrf.mxu0
        %1023 = vmatprep.mubr.f32.mxu0 0.0
        %1024 = vmatmul.mubr.f32.gmra.mxu0 %v689
        %v1025 = vpop.f32.mrf.mxu0
        %v1026 = vadd.f32 0.0, %v1025
        %v1027 = vpop.f32.mrf.mxu0
        %1028 = vmatprep.mubr.f32.mxu0 0.0
        %1029 = vmatmul.mubr.f32.gmra.mxu0 %v692
        %v1030 = vpop.f32.mrf.mxu0
        %v1031 = vadd.f32 0.0, %v1030
        %v1032 = vpop.f32.mrf.mxu0
        %1033 = vmatprep.mubr.f32.mxu0 0.0
        %1034 = vmatmul.mubr.f32.gmra.mxu0 %v695
        %v1035 = vpop.f32.mrf.mxu0
        %v1036 = vadd.f32 0.0, %v1035
        %v1037 = vpop.f32.mrf.mxu0
        %1038 = vmatprep.mubr.f32.mxu0 0.0
        %1039 = vmatmul.mubr.f32.gmra.mxu0 %v698
        %v1040 = vpop.f32.mrf.mxu0
        %v1041 = vadd.f32 0.0, %v1040
        %v1042 = vpop.f32.mrf.mxu0
        %1043 = vmatprep.mubr.f32.mxu0 0.0
        %1044 = vmatmul.mubr.f32.gmra.mxu0 %v701
        %v1045 = vpop.f32.mrf.mxu0
        %v1046 = vadd.f32 0.0, %v1045
        %v1047 = vpop.f32.mrf.mxu0
        %1048 = vmatprep.mubr.f32.mxu0 0.0
        %1049 = vmatmul.mubr.f32.gmra.mxu0 %v704
        %v1050 = vpop.f32.mrf.mxu0
        %v1051 = vadd.f32 0.0, %v1050
        %v1052 = vpop.f32.mrf.mxu0
        %1053 = vdwg.mxu0
        %1054 = vst [vmem:[#allocation3] sm:$0xff] %v773
        %1055 = vst [vmem:[#allocation3 + $0x8] sm:$0xff] %v775
        %1056 = vst [vmem:[#allocation3 + $0x10] sm:$0xff] %v892
        %1057 = vst [vmem:[#allocation3 + $0x18] sm:$0xff] %v894
        %1058 = vst.msk [vmem:[#allocation3 + $0x20] sm:$0xff] %vm639, %v1011
        %1059 = vst [vmem:[#allocation3 + $0x28] sm:$0xff] %v779
        %1060 = vst [vmem:[#allocation3 + $0x30] sm:$0xff] %v781
        %1061 = vst [vmem:[#allocation3 + $0x38] sm:$0xff] %v898
        %1062 = vst [vmem:[#allocation3 + $0x40] sm:$0xff] %v900
        %1063 = vst.msk [vmem:[#allocation3 + $0x48] sm:$0xff] %vm639, %v1016
        %1064 = vst [vmem:[#allocation3 + $0x50] sm:$0xff] %v785
        %1065 = vst [vmem:[#allocation3 + $0x58] sm:$0xff] %v787
        %1066 = vst [vmem:[#allocation3 + $0x60] sm:$0xff] %v904
        %1067 = vst [vmem:[#allocation3 + $0x68] sm:$0xff] %v906
        %1068 = vst.msk [vmem:[#allocation3 + $0x70] sm:$0xff] %vm639, %v1021
        %1069 = vst [vmem:[#allocation3 + $0x78] sm:$0xff] %v791
        %1070 = vst [vmem:[#allocation3 + $0x80] sm:$0xff] %v793
        %1071 = vst [vmem:[#allocation3 + $0x88] sm:$0xff] %v910
        %1072 = vst [vmem:[#allocation3 + $0x90] sm:$0xff] %v912
        %1073 = vst.msk [vmem:[#allocation3 + $0x98] sm:$0xff] %vm639, %v1026
        %1074 = vst [vmem:[#allocation3 + $0xa0] sm:$0xff] %v797
        %1075 = vst [vmem:[#allocation3 + $0xa8] sm:$0xff] %v799
        %1076 = vst [vmem:[#allocation3 + $0xb0] sm:$0xff] %v916
        %1077 = vst [vmem:[#allocation3 + $0xb8] sm:$0xff] %v918
        %1078 = vst.msk [vmem:[#allocation3 + $0xc0] sm:$0xff] %vm639, %v1031
        %1079 = vst [vmem:[#allocation3 + $0xc8] sm:$0xff] %v803
        %1080 = vst [vmem:[#allocation3 + $0xd0] sm:$0xff] %v805
        %1081 = vst [vmem:[#allocation3 + $0xd8] sm:$0xff] %v922
        %1082 = vst [vmem:[#allocation3 + $0xe0] sm:$0xff] %v924
        %1083 = vst.msk [vmem:[#allocation3 + $0xe8] sm:$0xff] %vm639, %v1036
        %1084 = vst [vmem:[#allocation3 + $0xf0] sm:$0xff] %v809
        %1085 = vst [vmem:[#allocation3 + $0xf8] sm:$0xff] %v811
        %1086 = vst [vmem:[#allocation3 + $0x100] sm:$0xff] %v928
        %1087 = vst [vmem:[#allocation3 + $0x108] sm:$0xff] %v930
        %1088 = vst.msk [vmem:[#allocation3 + $0x110] sm:$0xff] %vm639, %v1041
        %1089 = vst [vmem:[#allocation3 + $0x118] sm:$0xff] %v815
        %1090 = vst [vmem:[#allocation3 + $0x120] sm:$0xff] %v817
        %1091 = vst [vmem:[#allocation3 + $0x128] sm:$0xff] %v934
        %1092 = vst [vmem:[#allocation3 + $0x130] sm:$0xff] %v936
        %1093 = vst.msk [vmem:[#allocation3 + $0x138] sm:$0xff] %vm639, %v1046
        %1094 = vst [vmem:[#allocation3 + $0x140] sm:$0xff] %v821
        %1095 = vst [vmem:[#allocation3 + $0x148] sm:$0xff] %v823
        %1096 = vst [vmem:[#allocation3 + $0x150] sm:$0xff] %v940
        %1097 = vst [vmem:[#allocation3 + $0x158] sm:$0xff] %v942
        %1098 = vst.msk [vmem:[#allocation3 + $0x160] sm:$0xff] %vm639, %v1051
        %v1099 = vld [vmem:[#allocation3] sm:$0xff]
        %v1100 = vld [vmem:[#allocation3 + $0x8] sm:$0xff]
        %v1101 = vld [vmem:[#allocation3 + $0x10] sm:$0xff]
        %v1102 = vld [vmem:[#allocation3 + $0x18] sm:$0xff]
        %v1103 = vadd.f32 %v1099, 0.0
        %v1104 = vadd.f32 %v1100, 0.0
        %v1105 = vadd.f32 %v1101, 0.0
        %v1106 = vadd.f32 %v1102, 0.0
        %v1107 = vld [vmem:[#allocation3 + $0x28] sm:$0xff]
        %v1108 = vld [vmem:[#allocation3 + $0x30] sm:$0xff]
        %v1109 = vld [vmem:[#allocation3 + $0x38] sm:$0xff]
        %v1110 = vld [vmem:[#allocation3 + $0x40] sm:$0xff]
        %1115 = vrot.lane.b32.xlu0 %v1107, 127
        %v1116 = vpop.permute.xlu0 %1115
        %1117 = vrot.lane.b32.xlu0 %v1108, 127
        %v1118 = vpop.permute.xlu0 %1117
        %1119 = vrot.lane.b32.xlu0 %v1109, 127
        %v1120 = vpop.permute.xlu0 %1119
        %1121 = vrot.lane.b32.xlu0 %v1110, 127
        %v1122 = vpop.permute.xlu0 %1121
        %vm1123 = vcmask 1039360
        %v1124 = vsel %vm1123, %v1116, %v1118
        %v1125 = vsel %vm1123, %v1118, %v1120
        %v1126 = vsel %vm1123, %v1120, %v1122
        %v1131 = vadd.f32 %v1103, %v1124
        %v1132 = vadd.f32 %v1104, %v1125
        %v1133 = vadd.f32 %v1105, %v1126
        %v1134 = vadd.f32 %v1106, %v1122
        %v1135 = vld [vmem:[#allocation3 + $0x50] sm:$0xff]
        %v1136 = vld [vmem:[#allocation3 + $0x58] sm:$0xff]
        %v1137 = vld [vmem:[#allocation3 + $0x60] sm:$0xff]
        %v1138 = vld [vmem:[#allocation3 + $0x68] sm:$0xff]
        %1143 = vrot.lane.b32.xlu0 %v1135, 126
        %v1144 = vpop.permute.xlu0 %1143
        %1145 = vrot.lane.b32.xlu0 %v1136, 126
        %v1146 = vpop.permute.xlu0 %1145
        %1147 = vrot.lane.b32.xlu0 %v1137, 126
        %v1148 = vpop.permute.xlu0 %1147
        %1149 = vrot.lane.b32.xlu0 %v1138, 126
        %v1150 = vpop.permute.xlu0 %1149
        %vm1151 = vcmask 1031168
        %v1152 = vsel %vm1151, %v1144, %v1146
        %v1153 = vsel %vm1151, %v1146, %v1148
        %v1154 = vsel %vm1151, %v1148, %v1150
        %v1159 = vadd.f32 %v1131, %v1152
        %v1160 = vadd.f32 %v1132, %v1153
        %v1161 = vadd.f32 %v1133, %v1154
        %v1162 = vadd.f32 %v1134, %v1150
        %v1163 = vld [vmem:[#allocation3 + $0x78] sm:$0xff]
        %v1164 = vld [vmem:[#allocation3 + $0x80] sm:$0xff]
        %v1165 = vld [vmem:[#allocation3 + $0x88] sm:$0xff]
        %v1166 = vld [vmem:[#allocation3 + $0x90] sm:$0xff]
        %1171 = vrot.lane.b32.xlu0 %v1163, 110
        %v1172 = vpop.permute.xlu0 %1171
        %1173 = vrot.lane.b32.xlu0 %v1164, 110
        %v1174 = vpop.permute.xlu0 %1173
        %1175 = vrot.lane.b32.xlu0 %v1165, 110
        %v1176 = vpop.permute.xlu0 %1175
        %1177 = vrot.lane.b32.xlu0 %v1166, 110
        %v1178 = vpop.permute.xlu0 %1177
        %vm1179 = vcmask 900096
        %v1180 = vsel %vm1179, %v1172, %v1174
        %v1181 = vsel %vm1179, %v1174, %v1176
        %v1182 = vsel %vm1179, %v1176, %v1178
        %v1187 = vadd.f32 %v1159, %v1180
        %v1188 = vadd.f32 %v1160, %v1181
        %v1189 = vadd.f32 %v1161, %v1182
        %v1190 = vadd.f32 %v1162, %v1178
        %v1191 = vld [vmem:[#allocation3 + $0xa8] sm:$0xff]
        %v1192 = vld [vmem:[#allocation3 + $0xb0] sm:$0xff]
        %v1193 = vld [vmem:[#allocation3 + $0xb8] sm:$0xff]
        %1197 = vrot.lane.b32.xlu0 %v1191, 109
        %v1198 = vpop.permute.xlu0 %1197
        %1199 = vrot.lane.b32.xlu0 %v1192, 109
        %v1200 = vpop.permute.xlu0 %1199
        %1201 = vrot.lane.b32.xlu0 %v1193, 109
        %v1202 = vpop.permute.xlu0 %1201
        %vm1203 = vcmask 891904
        %v1204 = vsel %vm1203, %v1198, %v1200
        %v1205 = vsel %vm1203, %v1200, %v1202
        %v1210 = vadd.f32 %v1187, %v1198
        %v1211 = vadd.f32 %v1188, %v1204
        %v1212 = vadd.f32 %v1189, %v1205
        %v1213 = vadd.f32 %v1190, %v1202
        %v1214 = vld [vmem:[#allocation3 + $0xd0] sm:$0xff]
        %v1215 = vld [vmem:[#allocation3 + $0xd8] sm:$0xff]
        %v1216 = vld [vmem:[#allocation3 + $0xe0] sm:$0xff]
        %1220 = vrot.lane.b32.xlu0 %v1214, 108
        %v1221 = vpop.permute.xlu0 %1220
        %1222 = vrot.lane.b32.xlu0 %v1215, 108
        %v1223 = vpop.permute.xlu0 %1222
        %1224 = vrot.lane.b32.xlu0 %v1216, 108
        %v1225 = vpop.permute.xlu0 %1224
        %vm1226 = vcmask 883712
        %v1227 = vsel %vm1226, %v1221, %v1223
        %v1228 = vsel %vm1226, %v1223, %v1225
        %v1233 = vadd.f32 %v1210, %v1221
        %v1234 = vadd.f32 %v1211, %v1227
        %v1235 = vadd.f32 %v1212, %v1228
        %v1236 = vadd.f32 %v1213, %v1225
        %v1237 = vld [vmem:[#allocation3 + $0xf8] sm:$0xff]
        %v1238 = vld [vmem:[#allocation3 + $0x100] sm:$0xff]
        %v1239 = vld [vmem:[#allocation3 + $0x108] sm:$0xff]
        %1243 = vrot.lane.b32.xlu0 %v1237, 92
        %v1244 = vpop.permute.xlu0 %1243
        %1245 = vrot.lane.b32.xlu0 %v1238, 92
        %v1246 = vpop.permute.xlu0 %1245
        %1247 = vrot.lane.b32.xlu0 %v1239, 92
        %v1248 = vpop.permute.xlu0 %1247
        %vm1249 = vcmask 752640
        %v1250 = vsel %vm1249, %v1244, %v1246
        %v1251 = vsel %vm1249, %v1246, %v1248
        %v1256 = vadd.f32 %v1233, %v1244
        %v1257 = vadd.f32 %v1234, %v1250
        %v1258 = vadd.f32 %v1235, %v1251
        %v1259 = vadd.f32 %v1236, %v1248
        %v1260 = vld [vmem:[#allocation3 + $0x120] sm:$0xff]
        %v1261 = vld [vmem:[#allocation3 + $0x128] sm:$0xff]
        %v1262 = vld [vmem:[#allocation3 + $0x130] sm:$0xff]
        %1266 = vrot.lane.b32.xlu0 %v1260, 91
        %v1267 = vpop.permute.xlu0 %1266
        %1268 = vrot.lane.b32.xlu0 %v1261, 91
        %v1269 = vpop.permute.xlu0 %1268
        %1270 = vrot.lane.b32.xlu0 %v1262, 91
        %v1271 = vpop.permute.xlu0 %1270
        %vm1272 = vcmask 744448
        %v1273 = vsel %vm1272, %v1267, %v1269
        %v1274 = vsel %vm1272, %v1269, %v1271
        %v1279 = vadd.f32 %v1256, %v1267
        %v1280 = vadd.f32 %v1257, %v1273
        %v1281 = vadd.f32 %v1258, %v1274
        %v1282 = vadd.f32 %v1259, %v1271
        %v1283 = vld [vmem:[#allocation3 + $0x148] sm:$0xff]
        %v1284 = vld [vmem:[#allocation3 + $0x150] sm:$0xff]
        %v1285 = vld [vmem:[#allocation3 + $0x158] sm:$0xff]
        %1289 = vrot.lane.b32.xlu0 %v1283, 90
        %v1290 = vpop.permute.xlu0 %1289
        %1291 = vrot.lane.b32.xlu0 %v1284, 90
        %v1292 = vpop.permute.xlu0 %1291
        %1293 = vrot.lane.b32.xlu0 %v1285, 90
        %v1294 = vpop.permute.xlu0 %1293
        %vm1295 = vcmask 736256
        %v1296 = vsel %vm1295, %v1290, %v1292
        %v1297 = vsel %vm1295, %v1292, %v1294
        %v1302 = vadd.f32 %v1279, %v1290
        %v1303 = vadd.f32 %v1280, %v1296
        %v1304 = vadd.f32 %v1281, %v1297
        %v1305 = vadd.f32 %v1282, %v1294
        %1307 = vset.pattern.permute.xlu0 0
        %1308 = vperm.xlu0 %1307, %v672
        %v1309 = vpop.permute.xlu0 %1308
        %v1311 = vadd.f32 %v1302, %v1309
        %v1312 = vadd.f32 %v1303, %v1309
        %v1313 = vadd.f32 %v1304, %v1309
        %v1314 = vadd.f32 %v1305, %v1309
        %v1315 = vmax.f32 %v1311, 0.0
        %v1316 = vmax.f32 %v1312, 0.0
        %v1317 = vmax.f32 %v1313, 0.0
        %v1318 = vmax.f32 %v1314, 0.0
        %v1319 = vld [vmem:[%s1] sm:$0x7]
        %v1321 = vlaneseq
        %v1322 = vshrl.u32 %v1321, 7
        %v1323 = vsub.s32 0, %v1322
        %v1324 = vrot.slane %v1319, %v1323
        %v1325 = vlaneseq
        %v1326 = vshrl.u32 %v1325, 7
        %v1327 = vsub.s32 1, %v1326
        %v1328 = vrot.slane %v1319, %v1327
        %v1329 = vlaneseq
        %v1330 = vshrl.u32 %v1329, 7
        %v1331 = vsub.s32 2, %v1330
        %v1332 = vrot.slane %v1319, %v1331
        %1333 = vrot.lane.b32.xlu0 %v1324, 109
        %v1334 = vpop.permute.xlu0 %1333
        %1335 = vrot.lane.b32.xlu0 %v1328, 109
        %v1336 = vpop.permute.xlu0 %1335
        %1337 = vrot.lane.b32.xlu0 %v1332, 109
        %v1338 = vpop.permute.xlu0 %1337
        %v1339 = vsel %vm1203, %v1334, %v1336
        %v1340 = vsel %vm1203, %v1336, %v1338
        %v1345 = vmul.f32 %v1315, %v1334
        %v1346 = vmul.f32 %v1316, %v1339
        %v1347 = vmul.f32 %v1317, %v1340
        %v1348 = vmul.f32 %v1318, %v1338
        %1353 = vrot.lane.b32.xlu0 %v1345, 19
        %v1354 = vpop.permute.xlu0 %1353
        %1355 = vrot.lane.b32.xlu0 %v1346, 19
        %v1356 = vpop.permute.xlu0 %1355
        %1357 = vrot.lane.b32.xlu0 %v1347, 19
        %v1358 = vpop.permute.xlu0 %1357
        %1359 = vrot.lane.b32.xlu0 %v1348, 19
        %v1360 = vpop.permute.xlu0 %1359
        %vm1361 = vcmask 154624
        %v1362 = vsel %vm1361, %v1354, %v1356
        %v1363 = vsel %vm1361, %v1356, %v1358
        %v1364 = vsel %vm1361, %v1358, %v1360
        %1368 = vst [vmem:[#allocation2 + $0x30] sm:$0xff] %v1362
        %1369 = vst [vmem:[#allocation2 + $0x38] sm:$0xff] %v1363
        %1370 = vst.msk [vmem:[#allocation2 + $0x40] sm:$0xff] %vm639, %v1364
        %v1371 = vld [vmem:[%s3] sm:$0xff]
        %v1372 = vld [vmem:[%s3 + $0x8] sm:$0xff]
        %v1373 = vld [vmem:[%s3 + $0x10] sm:$0xff]
        %v1374 = vld [vmem:[%s3 + $0x18] sm:$0xff]
        %v1375 = vld [vmem:[%s3 + $0x20] sm:$0xff]
        %v1376 = vld [vmem:[%s3 + $0x28] sm:$0xff]
        %v1377 = vld [vmem:[%s3 + $0x30] sm:$0xff]
        %v1378 = vld [vmem:[%s3 + $0x38] sm:$0xff]
        %v1379 = vld [vmem:[%s3 + $0x40] sm:$0xff]
        %v1380 = vld [vmem:[%s11] sm:$0xff]
        %v1381 = vld [vmem:[#allocation2] sm:$0xff]
        %v1382 = vld [vmem:[#allocation2 + $0x8] sm:$0xff]
        %v1383 = vld [vmem:[#allocation2 + $0x10] sm:$0xff]
        %v1384 = vld [vmem:[#allocation2 + $0x18] sm:$0xff]
        %v1385 = vld [vmem:[#allocation2 + $0x20] sm:$0xff]
        %v1386 = vld [vmem:[#allocation2 + $0x28] sm:$0xff]
        %v1387 = vld [vmem:[#allocation2 + $0x30] sm:$0xff]
        %v1388 = vld [vmem:[#allocation2 + $0x38] sm:$0xff]
        %v1389 = vld [vmem:[#allocation2 + $0x40] sm:$0xff]
        %v1390 = vld [vmem:[#allocation2 + $0x48] sm:$0xff]
        %vm1391 = vcmask 130048
        %v1393 = vsel %vm1391, %v1371, 0
        %v1396 = vsel %vm1391, %v1372, 0
        %v1399 = vsel %vm1391, %v1373, 0
        %v1402 = vsel %vm1391, %v1374, 0
        %v1405 = vsel %vm1391, %v1375, 0
        %v1408 = vsel %vm1391, %v1376, 0
        %v1411 = vsel %vm1391, %v1377, 0
        %v1414 = vsel %vm1391, %v1378, 0
        %v1417 = vsel %vm1391, %v1379, 0
        %1419 = vmatprep.subr.mxu0 0.0
        %1420 = vmatpush1.msra.mxu0 0.0
        %1421 = vmatprep.subr.mxu0 0.0
        %1422 = vmatpush1.msra.mxu0 0.0
        %1423 = vmatprep.subr.mxu0 0.0
        %1424 = vmatpush1.msra.mxu0 0.0
        %1425 = vmatprep.subr.mxu0 0.0
        %1426 = vmatpush1.msra.mxu0 0.0
        %1427 = vmatprep.subr.mxu0 0.0
        %1428 = vmatpush1.msra.mxu0 0.0
        %1429 = vmatprep.subr.mxu0 0.0
        %1430 = vmatpush1.msra.mxu0 0.0
        %1431 = vmatprep.subr.mxu0 0.0
        %1432 = vmatpush1.msra.mxu0 0.0
        %1433 = vmatprep.subr.mxu0 0.0
        %1434 = vmatpush1.msra.mxu0 0.0
        %1435 = vmatprep.subr.mxu0 0.0
        %1436 = vmatpush1.msra.mxu0 0.0
        %1437 = vmatprep.subr.mxu0 0.0
        %1438 = vmatpush1.msra.mxu0 0.0
        %1439 = vmatprep.subr.mxu0 0.0
        %1440 = vmatpush1.msra.mxu0 0.0
        %1441 = vmatprep.subr.mxu0 0.0
        %1442 = vmatpush1.msra.mxu0 0.0
        %1443 = vmatprep.subr.mxu0 0.0
        %1444 = vmatpush1.msra.mxu0 0.0
        %1445 = vmatprep.subr.mxu0 0.0
        %1446 = vmatpush1.msra.mxu0 0.0
        %1447 = vmatprep.subr.mxu0 %v1387
        %1448 = vmatpush1.msra.mxu0 %v1386
        %1449 = vmatprep.subr.mxu0 %v1382
        %1450 = vmatpush1.msra.mxu0 %v1381
        %1451 = vmatprep.subr.mxu0 0.0
        %1452 = vmatpush2.msra.mxu0 0.0
        %1453 = vmatprep.subr.mxu0 0.0
        %1454 = vmatpush2.msra.mxu0 0.0
        %1455 = vmatprep.subr.mxu0 0.0
        %1456 = vmatpush2.msra.mxu0 0.0
        %1457 = vmatprep.subr.mxu0 0.0
        %1458 = vmatpush2.msra.mxu0 0.0
        %1459 = vmatprep.subr.mxu0 0.0
        %1460 = vmatpush2.msra.mxu0 0.0
        %1461 = vmatprep.subr.mxu0 0.0
        %1462 = vmatpush2.msra.mxu0 0.0
        %1463 = vmatprep.subr.mxu0 0.0
        %1464 = vmatpush2.msra.mxu0 0.0
        %1465 = vmatprep.subr.mxu0 0.0
        %1466 = vmatpush2.msra.mxu0 0.0
        %1467 = vmatprep.subr.mxu0 0.0
        %1468 = vmatpush2.msra.mxu0 0.0
        %1469 = vmatprep.subr.mxu0 0.0
        %1470 = vmatpush2.msra.mxu0 0.0
        %1471 = vmatprep.subr.mxu0 0.0
        %1472 = vmatpush2.msra.mxu0 0.0
        %1473 = vmatprep.subr.mxu0 0.0
        %1474 = vmatpush2.msra.mxu0 0.0
        %1475 = vmatprep.subr.mxu0 0.0
        %1476 = vmatpush2.msra.mxu0 0.0
        %1477 = vmatprep.subr.mxu0 0.0
        %1478 = vmatpush2.msra.mxu0 0.0
        %1479 = vmatprep.subr.mxu0 0.0
        %1480 = vmatpush2.msra.mxu0 0.0
        %1481 = vmatprep.subr.mxu0 0.0
        %1482 = vmatpush2.msra.mxu0 0.0
        %1483 = vmatprep.mubr.f32.mxu0 0.0
        %1484 = vmatmul.mubr.f32.gmra.mxu0 %v1393
        %v1485 = vpop.f32.mrf.mxu0
        %v1486 = vadd.f32 0.0, %v1485
        %v1487 = vpop.f32.mrf.mxu0
        %v1488 = vadd.f32 0.0, %v1487
        %1489 = vmatprep.mubr.f32.mxu0 0.0
        %1490 = vmatmul.mubr.f32.gmra.mxu0 %v1396
        %v1491 = vpop.f32.mrf.mxu0
        %v1492 = vadd.f32 0.0, %v1491
        %v1493 = vpop.f32.mrf.mxu0
        %v1494 = vadd.f32 0.0, %v1493
        %1495 = vmatprep.mubr.f32.mxu0 0.0
        %1496 = vmatmul.mubr.f32.gmra.mxu0 %v1399
        %v1497 = vpop.f32.mrf.mxu0
        %v1498 = vadd.f32 0.0, %v1497
        %v1499 = vpop.f32.mrf.mxu0
        %v1500 = vadd.f32 0.0, %v1499
        %1501 = vmatprep.mubr.f32.mxu0 0.0
        %1502 = vmatmul.mubr.f32.gmra.mxu0 %v1402
        %v1503 = vpop.f32.mrf.mxu0
        %v1504 = vadd.f32 0.0, %v1503
        %v1505 = vpop.f32.mrf.mxu0
        %v1506 = vadd.f32 0.0, %v1505
        %1507 = vmatprep.mubr.f32.mxu0 0.0
        %1508 = vmatmul.mubr.f32.gmra.mxu0 %v1405
        %v1509 = vpop.f32.mrf.mxu0
        %v1510 = vadd.f32 0.0, %v1509
        %v1511 = vpop.f32.mrf.mxu0
        %v1512 = vadd.f32 0.0, %v1511
        %1513 = vmatprep.mubr.f32.mxu0 0.0
        %1514 = vmatmul.mubr.f32.gmra.mxu0 %v1408
        %v1515 = vpop.f32.mrf.mxu0
        %v1516 = vadd.f32 0.0, %v1515
        %v1517 = vpop.f32.mrf.mxu0
        %v1518 = vadd.f32 0.0, %v1517
        %1519 = vmatprep.mubr.f32.mxu0 0.0
        %1520 = vmatmul.mubr.f32.gmra.mxu0 %v1411
        %v1521 = vpop.f32.mrf.mxu0
        %v1522 = vadd.f32 0.0, %v1521
        %v1523 = vpop.f32.mrf.mxu0
        %v1524 = vadd.f32 0.0, %v1523
        %1525 = vmatprep.mubr.f32.mxu0 0.0
        %1526 = vmatmul.mubr.f32.gmra.mxu0 %v1414
        %v1527 = vpop.f32.mrf.mxu0
        %v1528 = vadd.f32 0.0, %v1527
        %v1529 = vpop.f32.mrf.mxu0
        %v1530 = vadd.f32 0.0, %v1529
        %1531 = vmatprep.mubr.f32.mxu0 0.0
        %1532 = vmatmul.mubr.f32.gmra.mxu0 %v1417
        %v1533 = vpop.f32.mrf.mxu0
        %v1534 = vadd.f32 0.0, %v1533
        %v1535 = vpop.f32.mrf.mxu0
        %v1536 = vadd.f32 0.0, %v1535
        %1537 = vdwg.mxu0
        %1538 = vmatprep.subr.mxu0 0.0
        %1539 = vmatpush1.msra.mxu0 0.0
        %1540 = vmatprep.subr.mxu0 0.0
        %1541 = vmatpush1.msra.mxu0 0.0
        %1542 = vmatprep.subr.mxu0 0.0
        %1543 = vmatpush1.msra.mxu0 0.0
        %1544 = vmatprep.subr.mxu0 0.0
        %1545 = vmatpush1.msra.mxu0 0.0
        %1546 = vmatprep.subr.mxu0 0.0
        %1547 = vmatpush1.msra.mxu0 0.0
        %1548 = vmatprep.subr.mxu0 0.0
        %1549 = vmatpush1.msra.mxu0 0.0
        %1550 = vmatprep.subr.mxu0 0.0
        %1551 = vmatpush1.msra.mxu0 0.0
        %1552 = vmatprep.subr.mxu0 0.0
        %1553 = vmatpush1.msra.mxu0 0.0
        %1554 = vmatprep.subr.mxu0 0.0
        %1555 = vmatpush1.msra.mxu0 0.0
        %1556 = vmatprep.subr.mxu0 0.0
        %1557 = vmatpush1.msra.mxu0 0.0
        %1558 = vmatprep.subr.mxu0 0.0
        %1559 = vmatpush1.msra.mxu0 0.0
        %1560 = vmatprep.subr.mxu0 0.0
        %1561 = vmatpush1.msra.mxu0 0.0
        %1562 = vmatprep.subr.mxu0 0.0
        %1563 = vmatpush1.msra.mxu0 0.0
        %1564 = vmatprep.subr.mxu0 0.0
        %1565 = vmatpush1.msra.mxu0 0.0
        %1566 = vmatprep.subr.mxu0 %v1389
        %1567 = vmatpush1.msra.mxu0 %v1388
        %1568 = vmatprep.subr.mxu0 %v1384
        %1569 = vmatpush1.msra.mxu0 %v1383
        %1570 = vmatprep.subr.mxu0 0.0
        %1571 = vmatpush2.msra.mxu0 0.0
        %1572 = vmatprep.subr.mxu0 0.0
        %1573 = vmatpush2.msra.mxu0 0.0
        %1574 = vmatprep.subr.mxu0 0.0
        %1575 = vmatpush2.msra.mxu0 0.0
        %1576 = vmatprep.subr.mxu0 0.0
        %1577 = vmatpush2.msra.mxu0 0.0
        %1578 = vmatprep.subr.mxu0 0.0
        %1579 = vmatpush2.msra.mxu0 0.0
        %1580 = vmatprep.subr.mxu0 0.0
        %1581 = vmatpush2.msra.mxu0 0.0
        %1582 = vmatprep.subr.mxu0 0.0
        %1583 = vmatpush2.msra.mxu0 0.0
        %1584 = vmatprep.subr.mxu0 0.0
        %1585 = vmatpush2.msra.mxu0 0.0
        %1586 = vmatprep.subr.mxu0 0.0
        %1587 = vmatpush2.msra.mxu0 0.0
        %1588 = vmatprep.subr.mxu0 0.0
        %1589 = vmatpush2.msra.mxu0 0.0
        %1590 = vmatprep.subr.mxu0 0.0
        %1591 = vmatpush2.msra.mxu0 0.0
        %1592 = vmatprep.subr.mxu0 0.0
        %1593 = vmatpush2.msra.mxu0 0.0
        %1594 = vmatprep.subr.mxu0 0.0
        %1595 = vmatpush2.msra.mxu0 0.0
        %1596 = vmatprep.subr.mxu0 0.0
        %1597 = vmatpush2.msra.mxu0 0.0
        %1598 = vmatprep.subr.mxu0 0.0
        %1599 = vmatpush2.msra.mxu0 0.0
        %1600 = vmatprep.subr.mxu0 0.0
        %1601 = vmatpush2.msra.mxu0 0.0
        %1602 = vmatprep.mubr.f32.mxu0 0.0
        %1603 = vmatmul.mubr.f32.gmra.mxu0 %v1393
        %v1604 = vpop.f32.mrf.mxu0
        %v1605 = vadd.f32 0.0, %v1604
        %v1606 = vpop.f32.mrf.mxu0
        %v1607 = vadd.f32 0.0, %v1606
        %1608 = vmatprep.mubr.f32.mxu0 0.0
        %1609 = vmatmul.mubr.f32.gmra.mxu0 %v1396
        %v1610 = vpop.f32.mrf.mxu0
        %v1611 = vadd.f32 0.0, %v1610
        %v1612 = vpop.f32.mrf.mxu0
        %v1613 = vadd.f32 0.0, %v1612
        %1614 = vmatprep.mubr.f32.mxu0 0.0
        %1615 = vmatmul.mubr.f32.gmra.mxu0 %v1399
        %v1616 = vpop.f32.mrf.mxu0
        %v1617 = vadd.f32 0.0, %v1616
        %v1618 = vpop.f32.mrf.mxu0
        %v1619 = vadd.f32 0.0, %v1618
        %1620 = vmatprep.mubr.f32.mxu0 0.0
        %1621 = vmatmul.mubr.f32.gmra.mxu0 %v1402
        %v1622 = vpop.f32.mrf.mxu0
        %v1623 = vadd.f32 0.0, %v1622
        %v1624 = vpop.f32.mrf.mxu0
        %v1625 = vadd.f32 0.0, %v1624
        %1626 = vmatprep.mubr.f32.mxu0 0.0
        %1627 = vmatmul.mubr.f32.gmra.mxu0 %v1405
        %v1628 = vpop.f32.mrf.mxu0
        %v1629 = vadd.f32 0.0, %v1628
        %v1630 = vpop.f32.mrf.mxu0
        %v1631 = vadd.f32 0.0, %v1630
        %1632 = vmatprep.mubr.f32.mxu0 0.0
        %1633 = vmatmul.mubr.f32.gmra.mxu0 %v1408
        %v1634 = vpop.f32.mrf.mxu0
        %v1635 = vadd.f32 0.0, %v1634
        %v1636 = vpop.f32.mrf.mxu0
        %v1637 = vadd.f32 0.0, %v1636
        %1638 = vmatprep.mubr.f32.mxu0 0.0
        %1639 = vmatmul.mubr.f32.gmra.mxu0 %v1411
        %v1640 = vpop.f32.mrf.mxu0
        %v1641 = vadd.f32 0.0, %v1640
        %v1642 = vpop.f32.mrf.mxu0
        %v1643 = vadd.f32 0.0, %v1642
        %1644 = vmatprep.mubr.f32.mxu0 0.0
        %1645 = vmatmul.mubr.f32.gmra.mxu0 %v1414
        %v1646 = vpop.f32.mrf.mxu0
        %v1647 = vadd.f32 0.0, %v1646
        %v1648 = vpop.f32.mrf.mxu0
        %v1649 = vadd.f32 0.0, %v1648
        %1650 = vmatprep.mubr.f32.mxu0 0.0
        %1651 = vmatmul.mubr.f32.gmra.mxu0 %v1417
        %v1652 = vpop.f32.mrf.mxu0
        %v1653 = vadd.f32 0.0, %v1652
        %v1654 = vpop.f32.mrf.mxu0
        %v1655 = vadd.f32 0.0, %v1654
        %1656 = vdwg.mxu0
        %1657 = vmatprep.subr.mxu0 0.0
        %1658 = vmatpush1.msra.mxu0 0.0
        %1659 = vmatprep.subr.mxu0 0.0
        %1660 = vmatpush1.msra.mxu0 0.0
        %1661 = vmatprep.subr.mxu0 0.0
        %1662 = vmatpush1.msra.mxu0 0.0
        %1663 = vmatprep.subr.mxu0 0.0
        %1664 = vmatpush1.msra.mxu0 0.0
        %1665 = vmatprep.subr.mxu0 0.0
        %1666 = vmatpush1.msra.mxu0 0.0
        %1667 = vmatprep.subr.mxu0 0.0
        %1668 = vmatpush1.msra.mxu0 0.0
        %1669 = vmatprep.subr.mxu0 0.0
        %1670 = vmatpush1.msra.mxu0 0.0
        %1671 = vmatprep.subr.mxu0 0.0
        %1672 = vmatpush1.msra.mxu0 0.0
        %1673 = vmatprep.subr.mxu0 0.0
        %1674 = vmatpush1.msra.mxu0 0.0
        %1675 = vmatprep.subr.mxu0 0.0
        %1676 = vmatpush1.msra.mxu0 0.0
        %1677 = vmatprep.subr.mxu0 0.0
        %1678 = vmatpush1.msra.mxu0 0.0
        %1679 = vmatprep.subr.mxu0 0.0
        %1680 = vmatpush1.msra.mxu0 0.0
        %1681 = vmatprep.subr.mxu0 0.0
        %1682 = vmatpush1.msra.mxu0 0.0
        %1683 = vmatprep.subr.mxu0 0.0
        %1684 = vmatpush1.msra.mxu0 0.0
        %1685 = vmatprep.subr.mxu0 0.0
        %1686 = vmatpush1.msra.mxu0 %v1390
        %1687 = vmatprep.subr.mxu0 0.0
        %1688 = vmatpush1.msra.mxu0 %v1385
        %1689 = vmatprep.subr.mxu0 0.0
        %1690 = vmatpush2.msra.mxu0 0.0
        %1691 = vmatprep.subr.mxu0 0.0
        %1692 = vmatpush2.msra.mxu0 0.0
        %1693 = vmatprep.subr.mxu0 0.0
        %1694 = vmatpush2.msra.mxu0 0.0
        %1695 = vmatprep.subr.mxu0 0.0
        %1696 = vmatpush2.msra.mxu0 0.0
        %1697 = vmatprep.subr.mxu0 0.0
        %1698 = vmatpush2.msra.mxu0 0.0
        %1699 = vmatprep.subr.mxu0 0.0
        %1700 = vmatpush2.msra.mxu0 0.0
        %1701 = vmatprep.subr.mxu0 0.0
        %1702 = vmatpush2.msra.mxu0 0.0
        %1703 = vmatprep.subr.mxu0 0.0
        %1704 = vmatpush2.msra.mxu0 0.0
        %1705 = vmatprep.subr.mxu0 0.0
        %1706 = vmatpush2.msra.mxu0 0.0
        %1707 = vmatprep.subr.mxu0 0.0
        %1708 = vmatpush2.msra.mxu0 0.0
        %1709 = vmatprep.subr.mxu0 0.0
        %1710 = vmatpush2.msra.mxu0 0.0
        %1711 = vmatprep.subr.mxu0 0.0
        %1712 = vmatpush2.msra.mxu0 0.0
        %1713 = vmatprep.subr.mxu0 0.0
        %1714 = vmatpush2.msra.mxu0 0.0
        %1715 = vmatprep.subr.mxu0 0.0
        %1716 = vmatpush2.msra.mxu0 0.0
        %1717 = vmatprep.subr.mxu0 0.0
        %1718 = vmatpush2.msra.mxu0 0.0
        %1719 = vmatprep.subr.mxu0 0.0
        %1720 = vmatpush2.msra.mxu0 0.0
        %1721 = vmatprep.mubr.f32.mxu0 0.0
        %1722 = vmatmul.mubr.f32.gmra.mxu0 %v1393
        %v1723 = vpop.f32.mrf.mxu0
        %v1724 = vadd.f32 0.0, %v1723
        %v1725 = vpop.f32.mrf.mxu0
        %1726 = vmatprep.mubr.f32.mxu0 0.0
        %1727 = vmatmul.mubr.f32.gmra.mxu0 %v1396
        %v1728 = vpop.f32.mrf.mxu0
        %v1729 = vadd.f32 0.0, %v1728
        %v1730 = vpop.f32.mrf.mxu0
        %1731 = vmatprep.mubr.f32.mxu0 0.0
        %1732 = vmatmul.mubr.f32.gmra.mxu0 %v1399
        %v1733 = vpop.f32.mrf.mxu0
        %v1734 = vadd.f32 0.0, %v1733
        %v1735 = vpop.f32.mrf.mxu0
        %1736 = vmatprep.mubr.f32.mxu0 0.0
        %1737 = vmatmul.mubr.f32.gmra.mxu0 %v1402
        %v1738 = vpop.f32.mrf.mxu0
        %v1739 = vadd.f32 0.0, %v1738
        %v1740 = vpop.f32.mrf.mxu0
        %1741 = vmatprep.mubr.f32.mxu0 0.0
        %1742 = vmatmul.mubr.f32.gmra.mxu0 %v1405
        %v1743 = vpop.f32.mrf.mxu0
        %v1744 = vadd.f32 0.0, %v1743
        %v1745 = vpop.f32.mrf.mxu0
        %1746 = vmatprep.mubr.f32.mxu0 0.0
        %1747 = vmatmul.mubr.f32.gmra.mxu0 %v1408
        %v1748 = vpop.f32.mrf.mxu0
        %v1749 = vadd.f32 0.0, %v1748
        %v1750 = vpop.f32.mrf.mxu0
        %1751 = vmatprep.mubr.f32.mxu0 0.0
        %1752 = vmatmul.mubr.f32.gmra.mxu0 %v1411
        %v1753 = vpop.f32.mrf.mxu0
        %v1754 = vadd.f32 0.0, %v1753
        %v1755 = vpop.f32.mrf.mxu0
        %1756 = vmatprep.mubr.f32.mxu0 0.0
        %1757 = vmatmul.mubr.f32.gmra.mxu0 %v1414
        %v1758 = vpop.f32.mrf.mxu0
        %v1759 = vadd.f32 0.0, %v1758
        %v1760 = vpop.f32.mrf.mxu0
        %1761 = vmatprep.mubr.f32.mxu0 0.0
        %1762 = vmatmul.mubr.f32.gmra.mxu0 %v1417
        %v1763 = vpop.f32.mrf.mxu0
        %v1764 = vadd.f32 0.0, %v1763
        %v1765 = vpop.f32.mrf.mxu0
        %1766 = vdwg.mxu0
        %1767 = vst [vmem:[#allocation3] sm:$0xff] %v1486
        %1768 = vst [vmem:[#allocation3 + $0x8] sm:$0xff] %v1488
        %1769 = vst [vmem:[#allocation3 + $0x10] sm:$0xff] %v1605
        %1770 = vst [vmem:[#allocation3 + $0x18] sm:$0xff] %v1607
        %1771 = vst.msk [vmem:[#allocation3 + $0x20] sm:$0xff] %vm639, %v1724
        %1772 = vst [vmem:[#allocation3 + $0x28] sm:$0xff] %v1492
        %1773 = vst [vmem:[#allocation3 + $0x30] sm:$0xff] %v1494
        %1774 = vst [vmem:[#allocation3 + $0x38] sm:$0xff] %v1611
        %1775 = vst [vmem:[#allocation3 + $0x40] sm:$0xff] %v1613
        %1776 = vst.msk [vmem:[#allocation3 + $0x48] sm:$0xff] %vm639, %v1729
        %1777 = vst [vmem:[#allocation3 + $0x50] sm:$0xff] %v1498
        %1778 = vst [vmem:[#allocation3 + $0x58] sm:$0xff] %v1500
        %1779 = vst [vmem:[#allocation3 + $0x60] sm:$0xff] %v1617
        %1780 = vst [vmem:[#allocation3 + $0x68] sm:$0xff] %v1619
        %1781 = vst.msk [vmem:[#allocation3 + $0x70] sm:$0xff] %vm639, %v1734
        %1782 = vst [vmem:[#allocation3 + $0x78] sm:$0xff] %v1504
        %1783 = vst [vmem:[#allocation3 + $0x80] sm:$0xff] %v1506
        %1784 = vst [vmem:[#allocation3 + $0x88] sm:$0xff] %v1623
        %1785 = vst [vmem:[#allocation3 + $0x90] sm:$0xff] %v1625
        %1786 = vst.msk [vmem:[#allocation3 + $0x98] sm:$0xff] %vm639, %v1739
        %1787 = vst [vmem:[#allocation3 + $0xa0] sm:$0xff] %v1510
        %1788 = vst [vmem:[#allocation3 + $0xa8] sm:$0xff] %v1512
        %1789 = vst [vmem:[#allocation3 + $0xb0] sm:$0xff] %v1629
        %1790 = vst [vmem:[#allocation3 + $0xb8] sm:$0xff] %v1631
        %1791 = vst.msk [vmem:[#allocation3 + $0xc0] sm:$0xff] %vm639, %v1744
        %1792 = vst [vmem:[#allocation3 + $0xc8] sm:$0xff] %v1516
        %1793 = vst [vmem:[#allocation3 + $0xd0] sm:$0xff] %v1518
        %1794 = vst [vmem:[#allocation3 + $0xd8] sm:$0xff] %v1635
        %1795 = vst [vmem:[#allocation3 + $0xe0] sm:$0xff] %v1637
        %1796 = vst.msk [vmem:[#allocation3 + $0xe8] sm:$0xff] %vm639, %v1749
        %1797 = vst [vmem:[#allocation3 + $0xf0] sm:$0xff] %v1522
        %1798 = vst [vmem:[#allocation3 + $0xf8] sm:$0xff] %v1524
        %1799 = vst [vmem:[#allocation3 + $0x100] sm:$0xff] %v1641
        %1800 = vst [vmem:[#allocation3 + $0x108] sm:$0xff] %v1643
        %1801 = vst.msk [vmem:[#allocation3 + $0x110] sm:$0xff] %vm639, %v1754
        %1802 = vst [vmem:[#allocation3 + $0x118] sm:$0xff] %v1528
        %1803 = vst [vmem:[#allocation3 + $0x120] sm:$0xff] %v1530
        %1804 = vst [vmem:[#allocation3 + $0x128] sm:$0xff] %v1647
        %1805 = vst [vmem:[#allocation3 + $0x130] sm:$0xff] %v1649
        %1806 = vst.msk [vmem:[#allocation3 + $0x138] sm:$0xff] %vm639, %v1759
        %1807 = vst [vmem:[#allocation3 + $0x140] sm:$0xff] %v1534
        %1808 = vst [vmem:[#allocation3 + $0x148] sm:$0xff] %v1536
        %1809 = vst [vmem:[#allocation3 + $0x150] sm:$0xff] %v1653
        %1810 = vst [vmem:[#allocation3 + $0x158] sm:$0xff] %v1655
        %1811 = vst.msk [vmem:[#allocation3 + $0x160] sm:$0xff] %vm639, %v1764
        %v1812 = vld [vmem:[#allocation3] sm:$0xff]
        %v1813 = vld [vmem:[#allocation3 + $0x8] sm:$0xff]
        %v1814 = vld [vmem:[#allocation3 + $0x10] sm:$0xff]
        %v1815 = vld [vmem:[#allocation3 + $0x18] sm:$0xff]
        %v1816 = vadd.f32 %v1812, 0.0
        %v1817 = vadd.f32 %v1813, 0.0
        %v1818 = vadd.f32 %v1814, 0.0
        %v1819 = vadd.f32 %v1815, 0.0
        %v1820 = vld [vmem:[#allocation3 + $0x28] sm:$0xff]
        %v1821 = vld [vmem:[#allocation3 + $0x30] sm:$0xff]
        %v1822 = vld [vmem:[#allocation3 + $0x38] sm:$0xff]
        %v1823 = vld [vmem:[#allocation3 + $0x40] sm:$0xff]
        %1828 = vrot.lane.b32.xlu0 %v1820, 127
        %v1829 = vpop.permute.xlu0 %1828
        %1830 = vrot.lane.b32.xlu0 %v1821, 127
        %v1831 = vpop.permute.xlu0 %1830
        %1832 = vrot.lane.b32.xlu0 %v1822, 127
        %v1833 = vpop.permute.xlu0 %1832
        %1834 = vrot.lane.b32.xlu0 %v1823, 127
        %v1835 = vpop.permute.xlu0 %1834
        %v1836 = vsel %vm1123, %v1829, %v1831
        %v1837 = vsel %vm1123, %v1831, %v1833
        %v1838 = vsel %vm1123, %v1833, %v1835
        %v1843 = vadd.f32 %v1816, %v1836
        %v1844 = vadd.f32 %v1817, %v1837
        %v1845 = vadd.f32 %v1818, %v1838
        %v1846 = vadd.f32 %v1819, %v1835
        %v1847 = vld [vmem:[#allocation3 + $0x50] sm:$0xff]
        %v1848 = vld [vmem:[#allocation3 + $0x58] sm:$0xff]
        %v1849 = vld [vmem:[#allocation3 + $0x60] sm:$0xff]
        %v1850 = vld [vmem:[#allocation3 + $0x68] sm:$0xff]
        %1855 = vrot.lane.b32.xlu0 %v1847, 126
        %v1856 = vpop.permute.xlu0 %1855
        %1857 = vrot.lane.b32.xlu0 %v1848, 126
        %v1858 = vpop.permute.xlu0 %1857
        %1859 = vrot.lane.b32.xlu0 %v1849, 126
        %v1860 = vpop.permute.xlu0 %1859
        %1861 = vrot.lane.b32.xlu0 %v1850, 126
        %v1862 = vpop.permute.xlu0 %1861
        %v1863 = vsel %vm1151, %v1856, %v1858
        %v1864 = vsel %vm1151, %v1858, %v1860
        %v1865 = vsel %vm1151, %v1860, %v1862
        %v1870 = vadd.f32 %v1843, %v1863
        %v1871 = vadd.f32 %v1844, %v1864
        %v1872 = vadd.f32 %v1845, %v1865
        %v1873 = vadd.f32 %v1846, %v1862
        %v1874 = vld [vmem:[#allocation3 + $0x78] sm:$0xff]
        %v1875 = vld [vmem:[#allocation3 + $0x80] sm:$0xff]
        %v1876 = vld [vmem:[#allocation3 + $0x88] sm:$0xff]
        %v1877 = vld [vmem:[#allocation3 + $0x90] sm:$0xff]
        %1882 = vrot.lane.b32.xlu0 %v1874, 110
        %v1883 = vpop.permute.xlu0 %1882
        %1884 = vrot.lane.b32.xlu0 %v1875, 110
        %v1885 = vpop.permute.xlu0 %1884
        %1886 = vrot.lane.b32.xlu0 %v1876, 110
        %v1887 = vpop.permute.xlu0 %1886
        %1888 = vrot.lane.b32.xlu0 %v1877, 110
        %v1889 = vpop.permute.xlu0 %1888
        %v1890 = vsel %vm1179, %v1883, %v1885
        %v1891 = vsel %vm1179, %v1885, %v1887
        %v1892 = vsel %vm1179, %v1887, %v1889
        %v1897 = vadd.f32 %v1870, %v1890
        %v1898 = vadd.f32 %v1871, %v1891
        %v1899 = vadd.f32 %v1872, %v1892
        %v1900 = vadd.f32 %v1873, %v1889
        %v1901 = vld [vmem:[#allocation3 + $0xa8] sm:$0xff]
        %v1902 = vld [vmem:[#allocation3 + $0xb0] sm:$0xff]
        %v1903 = vld [vmem:[#allocation3 + $0xb8] sm:$0xff]
        %1907 = vrot.lane.b32.xlu0 %v1901, 109
        %v1908 = vpop.permute.xlu0 %1907
        %1909 = vrot.lane.b32.xlu0 %v1902, 109
        %v1910 = vpop.permute.xlu0 %1909
        %1911 = vrot.lane.b32.xlu0 %v1903, 109
        %v1912 = vpop.permute.xlu0 %1911
        %v1913 = vsel %vm1203, %v1908, %v1910
        %v1914 = vsel %vm1203, %v1910, %v1912
        %v1919 = vadd.f32 %v1897, %v1908
        %v1920 = vadd.f32 %v1898, %v1913
        %v1921 = vadd.f32 %v1899, %v1914
        %v1922 = vadd.f32 %v1900, %v1912
        %v1923 = vld [vmem:[#allocation3 + $0xd0] sm:$0xff]
        %v1924 = vld [vmem:[#allocation3 + $0xd8] sm:$0xff]
        %v1925 = vld [vmem:[#allocation3 + $0xe0] sm:$0xff]
        %1929 = vrot.lane.b32.xlu0 %v1923, 108
        %v1930 = vpop.permute.xlu0 %1929
        %1931 = vrot.lane.b32.xlu0 %v1924, 108
        %v1932 = vpop.permute.xlu0 %1931
        %1933 = vrot.lane.b32.xlu0 %v1925, 108
        %v1934 = vpop.permute.xlu0 %1933
        %v1935 = vsel %vm1226, %v1930, %v1932
        %v1936 = vsel %vm1226, %v1932, %v1934
        %v1941 = vadd.f32 %v1919, %v1930
        %v1942 = vadd.f32 %v1920, %v1935
        %v1943 = vadd.f32 %v1921, %v1936
        %v1944 = vadd.f32 %v1922, %v1934
        %v1945 = vld [vmem:[#allocation3 + $0xf8] sm:$0xff]
        %v1946 = vld [vmem:[#allocation3 + $0x100] sm:$0xff]
        %v1947 = vld [vmem:[#allocation3 + $0x108] sm:$0xff]
        %1951 = vrot.lane.b32.xlu0 %v1945, 92
        %v1952 = vpop.permute.xlu0 %1951
        %1953 = vrot.lane.b32.xlu0 %v1946, 92
        %v1954 = vpop.permute.xlu0 %1953
        %1955 = vrot.lane.b32.xlu0 %v1947, 92
        %v1956 = vpop.permute.xlu0 %1955
        %v1957 = vsel %vm1249, %v1952, %v1954
        %v1958 = vsel %vm1249, %v1954, %v1956
        %v1963 = vadd.f32 %v1941, %v1952
        %v1964 = vadd.f32 %v1942, %v1957
        %v1965 = vadd.f32 %v1943, %v1958
        %v1966 = vadd.f32 %v1944, %v1956
        %v1967 = vld [vmem:[#allocation3 + $0x120] sm:$0xff]
        %v1968 = vld [vmem:[#allocation3 + $0x128] sm:$0xff]
        %v1969 = vld [vmem:[#allocation3 + $0x130] sm:$0xff]
        %1973 = vrot.lane.b32.xlu0 %v1967, 91
        %v1974 = vpop.permute.xlu0 %1973
        %1975 = vrot.lane.b32.xlu0 %v1968, 91
        %v1976 = vpop.permute.xlu0 %1975
        %1977 = vrot.lane.b32.xlu0 %v1969, 91
        %v1978 = vpop.permute.xlu0 %1977
        %v1979 = vsel %vm1272, %v1974, %v1976
        %v1980 = vsel %vm1272, %v1976, %v1978
        %v1985 = vadd.f32 %v1963, %v1974
        %v1986 = vadd.f32 %v1964, %v1979
        %v1987 = vadd.f32 %v1965, %v1980
        %v1988 = vadd.f32 %v1966, %v1978
        %v1989 = vld [vmem:[#allocation3 + $0x148] sm:$0xff]
        %v1990 = vld [vmem:[#allocation3 + $0x150] sm:$0xff]
        %v1991 = vld [vmem:[#allocation3 + $0x158] sm:$0xff]
        %1995 = vrot.lane.b32.xlu0 %v1989, 90
        %v1996 = vpop.permute.xlu0 %1995
        %1997 = vrot.lane.b32.xlu0 %v1990, 90
        %v1998 = vpop.permute.xlu0 %1997
        %1999 = vrot.lane.b32.xlu0 %v1991, 90
        %v2000 = vpop.permute.xlu0 %1999
        %v2001 = vsel %vm1295, %v1996, %v1998
        %v2002 = vsel %vm1295, %v1998, %v2000
        %v2007 = vadd.f32 %v1985, %v1996
        %v2008 = vadd.f32 %v1986, %v2001
        %v2009 = vadd.f32 %v1987, %v2002
        %v2010 = vadd.f32 %v1988, %v2000
        %2012 = vset.pattern.permute.xlu0 0
        %2013 = vperm.xlu0 %2012, %v1380
        %v2014 = vpop.permute.xlu0 %2013
        %v2016 = vadd.f32 %v2007, %v2014
        %v2017 = vadd.f32 %v2008, %v2014
        %v2018 = vadd.f32 %v2009, %v2014
        %v2019 = vadd.f32 %v2010, %v2014
        %v2020 = vmax.f32 %v2016, 0.0
        %v2021 = vmax.f32 %v2017, 0.0
        %v2022 = vmax.f32 %v2018, 0.0
        %v2023 = vmax.f32 %v2019, 0.0
        %v2024 = vld [vmem:[%s1] sm:$0x7]
        %v2026 = vlaneseq
        %v2027 = vshrl.u32 %v2026, 7
        %v2028 = vsub.s32 0, %v2027
        %v2029 = vrot.slane %v2024, %v2028
        %v2030 = vlaneseq
        %v2031 = vshrl.u32 %v2030, 7
        %v2032 = vsub.s32 1, %v2031
        %v2033 = vrot.slane %v2024, %v2032
        %v2034 = vlaneseq
        %v2035 = vshrl.u32 %v2034, 7
        %v2036 = vsub.s32 2, %v2035
        %v2037 = vrot.slane %v2024, %v2036
        %2038 = vrot.lane.b32.xlu0 %v2029, 109
        %v2039 = vpop.permute.xlu0 %2038
        %2040 = vrot.lane.b32.xlu0 %v2033, 109
        %v2041 = vpop.permute.xlu0 %2040
        %2042 = vrot.lane.b32.xlu0 %v2037, 109
        %v2043 = vpop.permute.xlu0 %2042
        %v2044 = vsel %vm1203, %v2039, %v2041
        %v2045 = vsel %vm1203, %v2041, %v2043
        %v2050 = vmul.f32 %v2020, %v2039
        %v2051 = vmul.f32 %v2021, %v2044
        %v2052 = vmul.f32 %v2022, %v2045
        %v2053 = vmul.f32 %v2023, %v2043
        %2058 = vrot.lane.b32.xlu0 %v2050, 19
        %v2059 = vpop.permute.xlu0 %2058
        %2060 = vrot.lane.b32.xlu0 %v2051, 19
        %v2061 = vpop.permute.xlu0 %2060
        %2062 = vrot.lane.b32.xlu0 %v2052, 19
        %v2063 = vpop.permute.xlu0 %2062
        %2064 = vrot.lane.b32.xlu0 %v2053, 19
        %v2065 = vpop.permute.xlu0 %2064
        %v2066 = vsel %vm1361, %v2059, %v2061
        %v2067 = vsel %vm1361, %v2061, %v2063
        %v2068 = vsel %vm1361, %v2063, %v2065
        %2072 = vst [vmem:[#allocation2 + $0x58] sm:$0xff] %v2066
        %2073 = vst [vmem:[#allocation2 + $0x60] sm:$0xff] %v2067
        %2074 = vst.msk [vmem:[#allocation2 + $0x68] sm:$0xff] %vm639, %v2068
        %v2075 = vld [vmem:[%s4] sm:$0xff]
        %v2076 = vld [vmem:[%s4 + $0x8] sm:$0xff]
        %v2077 = vld [vmem:[%s4 + $0x10] sm:$0xff]
        %v2078 = vld [vmem:[%s4 + $0x18] sm:$0xff]
        %v2079 = vld [vmem:[%s4 + $0x20] sm:$0xff]
        %v2080 = vld [vmem:[%s4 + $0x28] sm:$0xff]
        %v2081 = vld [vmem:[%s4 + $0x30] sm:$0xff]
        %v2082 = vld [vmem:[%s4 + $0x38] sm:$0xff]
        %v2083 = vld [vmem:[%s4 + $0x40] sm:$0xff]
        %v2084 = vld [vmem:[%s12] sm:$0xff]
        %v2085 = vld [vmem:[#allocation2] sm:$0xff]
        %v2086 = vld [vmem:[#allocation2 + $0x8] sm:$0xff]
        %v2087 = vld [vmem:[#allocation2 + $0x10] sm:$0xff]
        %v2088 = vld [vmem:[#allocation2 + $0x18] sm:$0xff]
        %v2089 = vld [vmem:[#allocation2 + $0x20] sm:$0xff]
        %v2090 = vld [vmem:[#allocation2 + $0x28] sm:$0xff]
        %v2091 = vld [vmem:[#allocation2 + $0x30] sm:$0xff]
        %v2092 = vld [vmem:[#allocation2 + $0x38] sm:$0xff]
        %v2093 = vld [vmem:[#allocation2 + $0x40] sm:$0xff]
        %v2094 = vld [vmem:[#allocation2 + $0x48] sm:$0xff]
        %v2095 = vld [vmem:[#allocation2 + $0x50] sm:$0xff]
        %v2096 = vld [vmem:[#allocation2 + $0x58] sm:$0xff]
        %v2097 = vld [vmem:[#allocation2 + $0x60] sm:$0xff]
        %v2098 = vld [vmem:[#allocation2 + $0x68] sm:$0xff]
        %v2099 = vld [vmem:[#allocation2 + $0x70] sm:$0xff]
        %vm2100 = vcmask 195584
        %v2102 = vsel %vm2100, %v2075, 0
        %v2105 = vsel %vm2100, %v2076, 0
        %v2108 = vsel %vm2100, %v2077, 0
        %v2111 = vsel %vm2100, %v2078, 0
        %v2114 = vsel %vm2100, %v2079, 0
        %v2117 = vsel %vm2100, %v2080, 0
        %v2120 = vsel %vm2100, %v2081, 0
        %v2123 = vsel %vm2100, %v2082, 0
        %v2126 = vsel %vm2100, %v2083, 0
        %2128 = vmatprep.subr.mxu0 0.0
        %2129 = vmatpush1.msra.mxu0 0.0
        %2130 = vmatprep.subr.mxu0 0.0
        %2131 = vmatpush1.msra.mxu0 0.0
        %2132 = vmatprep.subr.mxu0 0.0
        %2133 = vmatpush1.msra.mxu0 0.0
        %2134 = vmatprep.subr.mxu0 0.0
        %2135 = vmatpush1.msra.mxu0 0.0
        %2136 = vmatprep.subr.mxu0 0.0
        %2137 = vmatpush1.msra.mxu0 0.0
        %2138 = vmatprep.subr.mxu0 0.0
        %2139 = vmatpush1.msra.mxu0 0.0
        %2140 = vmatprep.subr.mxu0 0.0
        %2141 = vmatpush1.msra.mxu0 0.0
        %2142 = vmatprep.subr.mxu0 0.0
        %2143 = vmatpush1.msra.mxu0 0.0
        %2144 = vmatprep.subr.mxu0 0.0
        %2145 = vmatpush1.msra.mxu0 0.0
        %2146 = vmatprep.subr.mxu0 0.0
        %2147 = vmatpush1.msra.mxu0 0.0
        %2148 = vmatprep.subr.mxu0 0.0
        %2149 = vmatpush1.msra.mxu0 0.0
        %2150 = vmatprep.subr.mxu0 0.0
        %2151 = vmatpush1.msra.mxu0 0.0
        %2152 = vmatprep.subr.mxu0 0.0
        %2153 = vmatpush1.msra.mxu0 0.0
        %2154 = vmatprep.subr.mxu0 %v2096
        %2155 = vmatpush1.msra.mxu0 %v2095
        %2156 = vmatprep.subr.mxu0 %v2091
        %2157 = vmatpush1.msra.mxu0 %v2090
        %2158 = vmatprep.subr.mxu0 %v2086
        %2159 = vmatpush1.msra.mxu0 %v2085
        %2160 = vmatprep.subr.mxu0 0.0
        %2161 = vmatpush2.msra.mxu0 0.0
        %2162 = vmatprep.subr.mxu0 0.0
        %2163 = vmatpush2.msra.mxu0 0.0
        %2164 = vmatprep.subr.mxu0 0.0
        %2165 = vmatpush2.msra.mxu0 0.0
        %2166 = vmatprep.subr.mxu0 0.0
        %2167 = vmatpush2.msra.mxu0 0.0
        %2168 = vmatprep.subr.mxu0 0.0
        %2169 = vmatpush2.msra.mxu0 0.0
        %2170 = vmatprep.subr.mxu0 0.0
        %2171 = vmatpush2.msra.mxu0 0.0
        %2172 = vmatprep.subr.mxu0 0.0
        %2173 = vmatpush2.msra.mxu0 0.0
        %2174 = vmatprep.subr.mxu0 0.0
        %2175 = vmatpush2.msra.mxu0 0.0
        %2176 = vmatprep.subr.mxu0 0.0
        %2177 = vmatpush2.msra.mxu0 0.0
        %2178 = vmatprep.subr.mxu0 0.0
        %2179 = vmatpush2.msra.mxu0 0.0
        %2180 = vmatprep.subr.mxu0 0.0
        %2181 = vmatpush2.msra.mxu0 0.0
        %2182 = vmatprep.subr.mxu0 0.0
        %2183 = vmatpush2.msra.mxu0 0.0
        %2184 = vmatprep.subr.mxu0 0.0
        %2185 = vmatpush2.msra.mxu0 0.0
        %2186 = vmatprep.subr.mxu0 0.0
        %2187 = vmatpush2.msra.mxu0 0.0
        %2188 = vmatprep.subr.mxu0 0.0
        %2189 = vmatpush2.msra.mxu0 0.0
        %2190 = vmatprep.subr.mxu0 0.0
        %2191 = vmatpush2.msra.mxu0 0.0
        %2192 = vmatprep.mubr.f32.mxu0 0.0
        %2193 = vmatmul.mubr.f32.gmra.mxu0 %v2102
        %v2194 = vpop.f32.mrf.mxu0
        %v2195 = vadd.f32 0.0, %v2194
        %v2196 = vpop.f32.mrf.mxu0
        %v2197 = vadd.f32 0.0, %v2196
        %2198 = vmatprep.mubr.f32.mxu0 0.0
        %2199 = vmatmul.mubr.f32.gmra.mxu0 %v2105
        %v2200 = vpop.f32.mrf.mxu0
        %v2201 = vadd.f32 0.0, %v2200
        %v2202 = vpop.f32.mrf.mxu0
        %v2203 = vadd.f32 0.0, %v2202
        %2204 = vmatprep.mubr.f32.mxu0 0.0
        %2205 = vmatmul.mubr.f32.gmra.mxu0 %v2108
        %v2206 = vpop.f32.mrf.mxu0
        %v2207 = vadd.f32 0.0, %v2206
        %v2208 = vpop.f32.mrf.mxu0
        %v2209 = vadd.f32 0.0, %v2208
        %2210 = vmatprep.mubr.f32.mxu0 0.0
        %2211 = vmatmul.mubr.f32.gmra.mxu0 %v2111
        %v2212 = vpop.f32.mrf.mxu0
        %v2213 = vadd.f32 0.0, %v2212
        %v2214 = vpop.f32.mrf.mxu0
        %v2215 = vadd.f32 0.0, %v2214
        %2216 = vmatprep.mubr.f32.mxu0 0.0
        %2217 = vmatmul.mubr.f32.gmra.mxu0 %v2114
        %v2218 = vpop.f32.mrf.mxu0
        %v2219 = vadd.f32 0.0, %v2218
        %v2220 = vpop.f32.mrf.mxu0
        %v2221 = vadd.f32 0.0, %v2220
        %2222 = vmatprep.mubr.f32.mxu0 0.0
        %2223 = vmatmul.mubr.f32.gmra.mxu0 %v2117
        %v2224 = vpop.f32.mrf.mxu0
        %v2225 = vadd.f32 0.0, %v2224
        %v2226 = vpop.f32.mrf.mxu0
        %v2227 = vadd.f32 0.0, %v2226
        %2228 = vmatprep.mubr.f32.mxu0 0.0
        %2229 = vmatmul.mubr.f32.gmra.mxu0 %v2120
        %v2230 = vpop.f32.mrf.mxu0
        %v2231 = vadd.f32 0.0, %v2230
        %v2232 = vpop.f32.mrf.mxu0
        %v2233 = vadd.f32 0.0, %v2232
        %2234 = vmatprep.mubr.f32.mxu0 0.0
        %2235 = vmatmul.mubr.f32.gmra.mxu0 %v2123
        %v2236 = vpop.f32.mrf.mxu0
        %v2237 = vadd.f32 0.0, %v2236
        %v2238 = vpop.f32.mrf.mxu0
        %v2239 = vadd.f32 0.0, %v2238
        %2240 = vmatprep.mubr.f32.mxu0 0.0
        %2241 = vmatmul.mubr.f32.gmra.mxu0 %v2126
        %v2242 = vpop.f32.mrf.mxu0
        %v2243 = vadd.f32 0.0, %v2242
        %v2244 = vpop.f32.mrf.mxu0
        %v2245 = vadd.f32 0.0, %v2244
        %2246 = vdwg.mxu0
        %2247 = vmatprep.subr.mxu0 0.0
        %2248 = vmatpush1.msra.mxu0 0.0
        %2249 = vmatprep.subr.mxu0 0.0
        %2250 = vmatpush1.msra.mxu0 0.0
        %2251 = vmatprep.subr.mxu0 0.0
        %2252 = vmatpush1.msra.mxu0 0.0
        %2253 = vmatprep.subr.mxu0 0.0
        %2254 = vmatpush1.msra.mxu0 0.0
        %2255 = vmatprep.subr.mxu0 0.0
        %2256 = vmatpush1.msra.mxu0 0.0
        %2257 = vmatprep.subr.mxu0 0.0
        %2258 = vmatpush1.msra.mxu0 0.0
        %2259 = vmatprep.subr.mxu0 0.0
        %2260 = vmatpush1.msra.mxu0 0.0
        %2261 = vmatprep.subr.mxu0 0.0
        %2262 = vmatpush1.msra.mxu0 0.0
        %2263 = vmatprep.subr.mxu0 0.0
        %2264 = vmatpush1.msra.mxu0 0.0
        %2265 = vmatprep.subr.mxu0 0.0
        %2266 = vmatpush1.msra.mxu0 0.0
        %2267 = vmatprep.subr.mxu0 0.0
        %2268 = vmatpush1.msra.mxu0 0.0
        %2269 = vmatprep.subr.mxu0 0.0
        %2270 = vmatpush1.msra.mxu0 0.0
        %2271 = vmatprep.subr.mxu0 0.0
        %2272 = vmatpush1.msra.mxu0 0.0
        %2273 = vmatprep.subr.mxu0 %v2098
        %2274 = vmatpush1.msra.mxu0 %v2097
        %2275 = vmatprep.subr.mxu0 %v2093
        %2276 = vmatpush1.msra.mxu0 %v2092
        %2277 = vmatprep.subr.mxu0 %v2088
        %2278 = vmatpush1.msra.mxu0 %v2087
        %2279 = vmatprep.subr.mxu0 0.0
        %2280 = vmatpush2.msra.mxu0 0.0
        %2281 = vmatprep.subr.mxu0 0.0
        %2282 = vmatpush2.msra.mxu0 0.0
        %2283 = vmatprep.subr.mxu0 0.0
        %2284 = vmatpush2.msra.mxu0 0.0
        %2285 = vmatprep.subr.mxu0 0.0
        %2286 = vmatpush2.msra.mxu0 0.0
        %2287 = vmatprep.subr.mxu0 0.0
        %2288 = vmatpush2.msra.mxu0 0.0
        %2289 = vmatprep.subr.mxu0 0.0
        %2290 = vmatpush2.msra.mxu0 0.0
        %2291 = vmatprep.subr.mxu0 0.0
        %2292 = vmatpush2.msra.mxu0 0.0
        %2293 = vmatprep.subr.mxu0 0.0
        %2294 = vmatpush2.msra.mxu0 0.0
        %2295 = vmatprep.subr.mxu0 0.0
        %2296 = vmatpush2.msra.mxu0 0.0
        %2297 = vmatprep.subr.mxu0 0.0
        %2298 = vmatpush2.msra.mxu0 0.0
        %2299 = vmatprep.subr.mxu0 0.0
        %2300 = vmatpush2.msra.mxu0 0.0
        %2301 = vmatprep.subr.mxu0 0.0
        %2302 = vmatpush2.msra.mxu0 0.0
        %2303 = vmatprep.subr.mxu0 0.0
        %2304 = vmatpush2.msra.mxu0 0.0
        %2305 = vmatprep.subr.mxu0 0.0
        %2306 = vmatpush2.msra.mxu0 0.0
        %2307 = vmatprep.subr.mxu0 0.0
        %2308 = vmatpush2.msra.mxu0 0.0
        %2309 = vmatprep.subr.mxu0 0.0
        %2310 = vmatpush2.msra.mxu0 0.0
        %2311 = vmatprep.mubr.f32.mxu0 0.0
        %2312 = vmatmul.mubr.f32.gmra.mxu0 %v2102
        %v2313 = vpop.f32.mrf.mxu0
        %v2314 = vadd.f32 0.0, %v2313
        %v2315 = vpop.f32.mrf.mxu0
        %v2316 = vadd.f32 0.0, %v2315
        %2317 = vmatprep.mubr.f32.mxu0 0.0
        %2318 = vmatmul.mubr.f32.gmra.mxu0 %v2105
        %v2319 = vpop.f32.mrf.mxu0
        %v2320 = vadd.f32 0.0, %v2319
        %v2321 = vpop.f32.mrf.mxu0
        %v2322 = vadd.f32 0.0, %v2321
        %2323 = vmatprep.mubr.f32.mxu0 0.0
        %2324 = vmatmul.mubr.f32.gmra.mxu0 %v2108
        %v2325 = vpop.f32.mrf.mxu0
        %v2326 = vadd.f32 0.0, %v2325
        %v2327 = vpop.f32.mrf.mxu0
        %v2328 = vadd.f32 0.0, %v2327
        %2329 = vmatprep.mubr.f32.mxu0 0.0
        %2330 = vmatmul.mubr.f32.gmra.mxu0 %v2111
        %v2331 = vpop.f32.mrf.mxu0
        %v2332 = vadd.f32 0.0, %v2331
        %v2333 = vpop.f32.mrf.mxu0
        %v2334 = vadd.f32 0.0, %v2333
        %2335 = vmatprep.mubr.f32.mxu0 0.0
        %2336 = vmatmul.mubr.f32.gmra.mxu0 %v2114
        %v2337 = vpop.f32.mrf.mxu0
        %v2338 = vadd.f32 0.0, %v2337
        %v2339 = vpop.f32.mrf.mxu0
        %v2340 = vadd.f32 0.0, %v2339
        %2341 = vmatprep.mubr.f32.mxu0 0.0
        %2342 = vmatmul.mubr.f32.gmra.mxu0 %v2117
        %v2343 = vpop.f32.mrf.mxu0
        %v2344 = vadd.f32 0.0, %v2343
        %v2345 = vpop.f32.mrf.mxu0
        %v2346 = vadd.f32 0.0, %v2345
        %2347 = vmatprep.mubr.f32.mxu0 0.0
        %2348 = vmatmul.mubr.f32.gmra.mxu0 %v2120
        %v2349 = vpop.f32.mrf.mxu0
        %v2350 = vadd.f32 0.0, %v2349
        %v2351 = vpop.f32.mrf.mxu0
        %v2352 = vadd.f32 0.0, %v2351
        %2353 = vmatprep.mubr.f32.mxu0 0.0
        %2354 = vmatmul.mubr.f32.gmra.mxu0 %v2123
        %v2355 = vpop.f32.mrf.mxu0
        %v2356 = vadd.f32 0.0, %v2355
        %v2357 = vpop.f32.mrf.mxu0
        %v2358 = vadd.f32 0.0, %v2357
        %2359 = vmatprep.mubr.f32.mxu0 0.0
        %2360 = vmatmul.mubr.f32.gmra.mxu0 %v2126
        %v2361 = vpop.f32.mrf.mxu0
        %v2362 = vadd.f32 0.0, %v2361
        %v2363 = vpop.f32.mrf.mxu0
        %v2364 = vadd.f32 0.0, %v2363
        %2365 = vdwg.mxu0
        %2366 = vmatprep.subr.mxu0 0.0
        %2367 = vmatpush1.msra.mxu0 0.0
        %2368 = vmatprep.subr.mxu0 0.0
        %2369 = vmatpush1.msra.mxu0 0.0
        %2370 = vmatprep.subr.mxu0 0.0
        %2371 = vmatpush1.msra.mxu0 0.0
        %2372 = vmatprep.subr.mxu0 0.0
        %2373 = vmatpush1.msra.mxu0 0.0
        %2374 = vmatprep.subr.mxu0 0.0
        %2375 = vmatpush1.msra.mxu0 0.0
        %2376 = vmatprep.subr.mxu0 0.0
        %2377 = vmatpush1.msra.mxu0 0.0
        %2378 = vmatprep.subr.mxu0 0.0
        %2379 = vmatpush1.msra.mxu0 0.0
        %2380 = vmatprep.subr.mxu0 0.0
        %2381 = vmatpush1.msra.mxu0 0.0
        %2382 = vmatprep.subr.mxu0 0.0
        %2383 = vmatpush1.msra.mxu0 0.0
        %2384 = vmatprep.subr.mxu0 0.0
        %2385 = vmatpush1.msra.mxu0 0.0
        %2386 = vmatprep.subr.mxu0 0.0
        %2387 = vmatpush1.msra.mxu0 0.0
        %2388 = vmatprep.subr.mxu0 0.0
        %2389 = vmatpush1.msra.mxu0 0.0
        %2390 = vmatprep.subr.mxu0 0.0
        %2391 = vmatpush1.msra.mxu0 0.0
        %2392 = vmatprep.subr.mxu0 0.0
        %2393 = vmatpush1.msra.mxu0 %v2099
        %2394 = vmatprep.subr.mxu0 0.0
        %2395 = vmatpush1.msra.mxu0 %v2094
        %2396 = vmatprep.subr.mxu0 0.0
        %2397 = vmatpush1.msra.mxu0 %v2089
        %2398 = vmatprep.subr.mxu0 0.0
        %2399 = vmatpush2.msra.mxu0 0.0
        %2400 = vmatprep.subr.mxu0 0.0
        %2401 = vmatpush2.msra.mxu0 0.0
        %2402 = vmatprep.subr.mxu0 0.0
        %2403 = vmatpush2.msra.mxu0 0.0
        %2404 = vmatprep.subr.mxu0 0.0
        %2405 = vmatpush2.msra.mxu0 0.0
        %2406 = vmatprep.subr.mxu0 0.0
        %2407 = vmatpush2.msra.mxu0 0.0
        %2408 = vmatprep.subr.mxu0 0.0
        %2409 = vmatpush2.msra.mxu0 0.0
        %2410 = vmatprep.subr.mxu0 0.0
        %2411 = vmatpush2.msra.mxu0 0.0
        %2412 = vmatprep.subr.mxu0 0.0
        %2413 = vmatpush2.msra.mxu0 0.0
        %2414 = vmatprep.subr.mxu0 0.0
        %2415 = vmatpush2.msra.mxu0 0.0
        %2416 = vmatprep.subr.mxu0 0.0
        %2417 = vmatpush2.msra.mxu0 0.0
        %2418 = vmatprep.subr.mxu0 0.0
        %2419 = vmatpush2.msra.mxu0 0.0
        %2420 = vmatprep.subr.mxu0 0.0
        %2421 = vmatpush2.msra.mxu0 0.0
        %2422 = vmatprep.subr.mxu0 0.0
        %2423 = vmatpush2.msra.mxu0 0.0
        %2424 = vmatprep.subr.mxu0 0.0
        %2425 = vmatpush2.msra.mxu0 0.0
        %2426 = vmatprep.subr.mxu0 0.0
        %2427 = vmatpush2.msra.mxu0 0.0
        %2428 = vmatprep.subr.mxu0 0.0
        %2429 = vmatpush2.msra.mxu0 0.0
        %2430 = vmatprep.mubr.f32.mxu0 0.0
        %2431 = vmatmul.mubr.f32.gmra.mxu0 %v2102
        %v2432 = vpop.f32.mrf.mxu0
        %v2433 = vadd.f32 0.0, %v2432
        %v2434 = vpop.f32.mrf.mxu0
        %2435 = vmatprep.mubr.f32.mxu0 0.0
        %2436 = vmatmul.mubr.f32.gmra.mxu0 %v2105
        %v2437 = vpop.f32.mrf.mxu0
        %v2438 = vadd.f32 0.0, %v2437
        %v2439 = vpop.f32.mrf.mxu0
        %2440 = vmatprep.mubr.f32.mxu0 0.0
        %2441 = vmatmul.mubr.f32.gmra.mxu0 %v2108
        %v2442 = vpop.f32.mrf.mxu0
        %v2443 = vadd.f32 0.0, %v2442
        %v2444 = vpop.f32.mrf.mxu0
        %2445 = vmatprep.mubr.f32.mxu0 0.0
        %2446 = vmatmul.mubr.f32.gmra.mxu0 %v2111
        %v2447 = vpop.f32.mrf.mxu0
        %v2448 = vadd.f32 0.0, %v2447
        %v2449 = vpop.f32.mrf.mxu0
        %2450 = vmatprep.mubr.f32.mxu0 0.0
        %2451 = vmatmul.mubr.f32.gmra.mxu0 %v2114
        %v2452 = vpop.f32.mrf.mxu0
        %v2453 = vadd.f32 0.0, %v2452
        %v2454 = vpop.f32.mrf.mxu0
        %2455 = vmatprep.mubr.f32.mxu0 0.0
        %2456 = vmatmul.mubr.f32.gmra.mxu0 %v2117
        %v2457 = vpop.f32.mrf.mxu0
        %v2458 = vadd.f32 0.0, %v2457
        %v2459 = vpop.f32.mrf.mxu0
        %2460 = vmatprep.mubr.f32.mxu0 0.0
        %2461 = vmatmul.mubr.f32.gmra.mxu0 %v2120
        %v2462 = vpop.f32.mrf.mxu0
        %v2463 = vadd.f32 0.0, %v2462
        %v2464 = vpop.f32.mrf.mxu0
        %2465 = vmatprep.mubr.f32.mxu0 0.0
        %2466 = vmatmul.mubr.f32.gmra.mxu0 %v2123
        %v2467 = vpop.f32.mrf.mxu0
        %v2468 = vadd.f32 0.0, %v2467
        %v2469 = vpop.f32.mrf.mxu0
        %2470 = vmatprep.mubr.f32.mxu0 0.0
        %2471 = vmatmul.mubr.f32.gmra.mxu0 %v2126
        %v2472 = vpop.f32.mrf.mxu0
        %v2473 = vadd.f32 0.0, %v2472
        %v2474 = vpop.f32.mrf.mxu0
        %2475 = vdwg.mxu0
        %2476 = vst [vmem:[#allocation3] sm:$0xff] %v2195
        %2477 = vst [vmem:[#allocation3 + $0x8] sm:$0xff] %v2197
        %2478 = vst [vmem:[#allocation3 + $0x10] sm:$0xff] %v2314
        %2479 = vst [vmem:[#allocation3 + $0x18] sm:$0xff] %v2316
        %2480 = vst.msk [vmem:[#allocation3 + $0x20] sm:$0xff] %vm639, %v2433
        %2481 = vst [vmem:[#allocation3 + $0x28] sm:$0xff] %v2201
        %2482 = vst [vmem:[#allocation3 + $0x30] sm:$0xff] %v2203
        %2483 = vst [vmem:[#allocation3 + $0x38] sm:$0xff] %v2320
        %2484 = vst [vmem:[#allocation3 + $0x40] sm:$0xff] %v2322
        %2485 = vst.msk [vmem:[#allocation3 + $0x48] sm:$0xff] %vm639, %v2438
        %2486 = vst [vmem:[#allocation3 + $0x50] sm:$0xff] %v2207
        %2487 = vst [vmem:[#allocation3 + $0x58] sm:$0xff] %v2209
        %2488 = vst [vmem:[#allocation3 + $0x60] sm:$0xff] %v2326
        %2489 = vst [vmem:[#allocation3 + $0x68] sm:$0xff] %v2328
        %2490 = vst.msk [vmem:[#allocation3 + $0x70] sm:$0xff] %vm639, %v2443
        %2491 = vst [vmem:[#allocation3 + $0x78] sm:$0xff] %v2213
        %2492 = vst [vmem:[#allocation3 + $0x80] sm:$0xff] %v2215
        %2493 = vst [vmem:[#allocation3 + $0x88] sm:$0xff] %v2332
        %2494 = vst [vmem:[#allocation3 + $0x90] sm:$0xff] %v2334
        %2495 = vst.msk [vmem:[#allocation3 + $0x98] sm:$0xff] %vm639, %v2448
        %2496 = vst [vmem:[#allocation3 + $0xa0] sm:$0xff] %v2219
        %2497 = vst [vmem:[#allocation3 + $0xa8] sm:$0xff] %v2221
        %2498 = vst [vmem:[#allocation3 + $0xb0] sm:$0xff] %v2338
        %2499 = vst [vmem:[#allocation3 + $0xb8] sm:$0xff] %v2340
        %2500 = vst.msk [vmem:[#allocation3 + $0xc0] sm:$0xff] %vm639, %v2453
        %2501 = vst [vmem:[#allocation3 + $0xc8] sm:$0xff] %v2225
        %2502 = vst [vmem:[#allocation3 + $0xd0] sm:$0xff] %v2227
        %2503 = vst [vmem:[#allocation3 + $0xd8] sm:$0xff] %v2344
        %2504 = vst [vmem:[#allocation3 + $0xe0] sm:$0xff] %v2346
        %2505 = vst.msk [vmem:[#allocation3 + $0xe8] sm:$0xff] %vm639, %v2458
        %2506 = vst [vmem:[#allocation3 + $0xf0] sm:$0xff] %v2231
        %2507 = vst [vmem:[#allocation3 + $0xf8] sm:$0xff] %v2233
        %2508 = vst [vmem:[#allocation3 + $0x100] sm:$0xff] %v2350
        %2509 = vst [vmem:[#allocation3 + $0x108] sm:$0xff] %v2352
        %2510 = vst.msk [vmem:[#allocation3 + $0x110] sm:$0xff] %vm639, %v2463
        %2511 = vst [vmem:[#allocation3 + $0x118] sm:$0xff] %v2237
        %2512 = vst [vmem:[#allocation3 + $0x120] sm:$0xff] %v2239
        %2513 = vst [vmem:[#allocation3 + $0x128] sm:$0xff] %v2356
        %2514 = vst [vmem:[#allocation3 + $0x130] sm:$0xff] %v2358
        %2515 = vst.msk [vmem:[#allocation3 + $0x138] sm:$0xff] %vm639, %v2468
        %2516 = vst [vmem:[#allocation3 + $0x140] sm:$0xff] %v2243
        %2517 = vst [vmem:[#allocation3 + $0x148] sm:$0xff] %v2245
        %2518 = vst [vmem:[#allocation3 + $0x150] sm:$0xff] %v2362
        %2519 = vst [vmem:[#allocation3 + $0x158] sm:$0xff] %v2364
        %2520 = vst.msk [vmem:[#allocation3 + $0x160] sm:$0xff] %vm639, %v2473
        %v2521 = vld [vmem:[#allocation3] sm:$0xff]
        %v2522 = vld [vmem:[#allocation3 + $0x8] sm:$0xff]
        %v2523 = vld [vmem:[#allocation3 + $0x10] sm:$0xff]
        %v2524 = vld [vmem:[#allocation3 + $0x18] sm:$0xff]
        %v2525 = vadd.f32 %v2521, 0.0
        %v2526 = vadd.f32 %v2522, 0.0
        %v2527 = vadd.f32 %v2523, 0.0
        %v2528 = vadd.f32 %v2524, 0.0
        %v2529 = vld [vmem:[#allocation3 + $0x28] sm:$0xff]
        %v2530 = vld [vmem:[#allocation3 + $0x30] sm:$0xff]
        %v2531 = vld [vmem:[#allocation3 + $0x38] sm:$0xff]
        %v2532 = vld [vmem:[#allocation3 + $0x40] sm:$0xff]
        %2537 = vrot.lane.b32.xlu0 %v2529, 127
        %v2538 = vpop.permute.xlu0 %2537
        %2539 = vrot.lane.b32.xlu0 %v2530, 127
        %v2540 = vpop.permute.xlu0 %2539
        %2541 = vrot.lane.b32.xlu0 %v2531, 127
        %v2542 = vpop.permute.xlu0 %2541
        %2543 = vrot.lane.b32.xlu0 %v2532, 127
        %v2544 = vpop.permute.xlu0 %2543
        %v2545 = vsel %vm1123, %v2538, %v2540
        %v2546 = vsel %vm1123, %v2540, %v2542
        %v2547 = vsel %vm1123, %v2542, %v2544
        %v2552 = vadd.f32 %v2525, %v2545
        %v2553 = vadd.f32 %v2526, %v2546
        %v2554 = vadd.f32 %v2527, %v2547
        %v2555 = vadd.f32 %v2528, %v2544
        %v2556 = vld [vmem:[#allocation3 + $0x50] sm:$0xff]
        %v2557 = vld [vmem:[#allocation3 + $0x58] sm:$0xff]
        %v2558 = vld [vmem:[#allocation3 + $0x60] sm:$0xff]
        %v2559 = vld [vmem:[#allocation3 + $0x68] sm:$0xff]
        %2564 = vrot.lane.b32.xlu0 %v2556, 126
        %v2565 = vpop.permute.xlu0 %2564
        %2566 = vrot.lane.b32.xlu0 %v2557, 126
        %v2567 = vpop.permute.xlu0 %2566
        %2568 = vrot.lane.b32.xlu0 %v2558, 126
        %v2569 = vpop.permute.xlu0 %2568
        %2570 = vrot.lane.b32.xlu0 %v2559, 126
        %v2571 = vpop.permute.xlu0 %2570
        %v2572 = vsel %vm1151, %v2565, %v2567
        %v2573 = vsel %vm1151, %v2567, %v2569
        %v2574 = vsel %vm1151, %v2569, %v2571
        %v2579 = vadd.f32 %v2552, %v2572
        %v2580 = vadd.f32 %v2553, %v2573
        %v2581 = vadd.f32 %v2554, %v2574
        %v2582 = vadd.f32 %v2555, %v2571
        %v2583 = vld [vmem:[#allocation3 + $0x78] sm:$0xff]
        %v2584 = vld [vmem:[#allocation3 + $0x80] sm:$0xff]
        %v2585 = vld [vmem:[#allocation3 + $0x88] sm:$0xff]
        %v2586 = vld [vmem:[#allocation3 + $0x90] sm:$0xff]
        %2591 = vrot.lane.b32.xlu0 %v2583, 110
        %v2592 = vpop.permute.xlu0 %2591
        %2593 = vrot.lane.b32.xlu0 %v2584, 110
        %v2594 = vpop.permute.xlu0 %2593
        %2595 = vrot.lane.b32.xlu0 %v2585, 110
        %v2596 = vpop.permute.xlu0 %2595
        %2597 = vrot.lane.b32.xlu0 %v2586, 110
        %v2598 = vpop.permute.xlu0 %2597
        %v2599 = vsel %vm1179, %v2592, %v2594
        %v2600 = vsel %vm1179, %v2594, %v2596
        %v2601 = vsel %vm1179, %v2596, %v2598
        %v2606 = vadd.f32 %v2579, %v2599
        %v2607 = vadd.f32 %v2580, %v2600
        %v2608 = vadd.f32 %v2581, %v2601
        %v2609 = vadd.f32 %v2582, %v2598
        %v2610 = vld [vmem:[#allocation3 + $0xa8] sm:$0xff]
        %v2611 = vld [vmem:[#allocation3 + $0xb0] sm:$0xff]
        %v2612 = vld [vmem:[#allocation3 + $0xb8] sm:$0xff]
        %2616 = vrot.lane.b32.xlu0 %v2610, 109
        %v2617 = vpop.permute.xlu0 %2616
        %2618 = vrot.lane.b32.xlu0 %v2611, 109
        %v2619 = vpop.permute.xlu0 %2618
        %2620 = vrot.lane.b32.xlu0 %v2612, 109
        %v2621 = vpop.permute.xlu0 %2620
        %v2622 = vsel %vm1203, %v2617, %v2619
        %v2623 = vsel %vm1203, %v2619, %v2621
        %v2628 = vadd.f32 %v2606, %v2617
        %v2629 = vadd.f32 %v2607, %v2622
        %v2630 = vadd.f32 %v2608, %v2623
        %v2631 = vadd.f32 %v2609, %v2621
        %v2632 = vld [vmem:[#allocation3 + $0xd0] sm:$0xff]
        %v2633 = vld [vmem:[#allocation3 + $0xd8] sm:$0xff]
        %v2634 = vld [vmem:[#allocation3 + $0xe0] sm:$0xff]
        %2638 = vrot.lane.b32.xlu0 %v2632, 108
        %v2639 = vpop.permute.xlu0 %2638
        %2640 = vrot.lane.b32.xlu0 %v2633, 108
        %v2641 = vpop.permute.xlu0 %2640
        %2642 = vrot.lane.b32.xlu0 %v2634, 108
        %v2643 = vpop.permute.xlu0 %2642
        %v2644 = vsel %vm1226, %v2639, %v2641
        %v2645 = vsel %vm1226, %v2641, %v2643
        %v2650 = vadd.f32 %v2628, %v2639
        %v2651 = vadd.f32 %v2629, %v2644
        %v2652 = vadd.f32 %v2630, %v2645
        %v2653 = vadd.f32 %v2631, %v2643
        %v2654 = vld [vmem:[#allocation3 + $0xf8] sm:$0xff]
        %v2655 = vld [vmem:[#allocation3 + $0x100] sm:$0xff]
        %v2656 = vld [vmem:[#allocation3 + $0x108] sm:$0xff]
        %2660 = vrot.lane.b32.xlu0 %v2654, 92
        %v2661 = vpop.permute.xlu0 %2660
        %2662 = vrot.lane.b32.xlu0 %v2655, 92
        %v2663 = vpop.permute.xlu0 %2662
        %2664 = vrot.lane.b32.xlu0 %v2656, 92
        %v2665 = vpop.permute.xlu0 %2664
        %v2666 = vsel %vm1249, %v2661, %v2663
        %v2667 = vsel %vm1249, %v2663, %v2665
        %v2672 = vadd.f32 %v2650, %v2661
        %v2673 = vadd.f32 %v2651, %v2666
        %v2674 = vadd.f32 %v2652, %v2667
        %v2675 = vadd.f32 %v2653, %v2665
        %v2676 = vld [vmem:[#allocation3 + $0x120] sm:$0xff]
        %v2677 = vld [vmem:[#allocation3 + $0x128] sm:$0xff]
        %v2678 = vld [vmem:[#allocation3 + $0x130] sm:$0xff]
        %2682 = vrot.lane.b32.xlu0 %v2676, 91
        %v2683 = vpop.permute.xlu0 %2682
        %2684 = vrot.lane.b32.xlu0 %v2677, 91
        %v2685 = vpop.permute.xlu0 %2684
        %2686 = vrot.lane.b32.xlu0 %v2678, 91
        %v2687 = vpop.permute.xlu0 %2686
        %v2688 = vsel %vm1272, %v2683, %v2685
        %v2689 = vsel %vm1272, %v2685, %v2687
        %v2694 = vadd.f32 %v2672, %v2683
        %v2695 = vadd.f32 %v2673, %v2688
        %v2696 = vadd.f32 %v2674, %v2689
        %v2697 = vadd.f32 %v2675, %v2687
        %v2698 = vld [vmem:[#allocation3 + $0x148] sm:$0xff]
        %v2699 = vld [vmem:[#allocation3 + $0x150] sm:$0xff]
        %v2700 = vld [vmem:[#allocation3 + $0x158] sm:$0xff]
        %2704 = vrot.lane.b32.xlu0 %v2698, 90
        %v2705 = vpop.permute.xlu0 %2704
        %2706 = vrot.lane.b32.xlu0 %v2699, 90
        %v2707 = vpop.permute.xlu0 %2706
        %2708 = vrot.lane.b32.xlu0 %v2700, 90
        %v2709 = vpop.permute.xlu0 %2708
        %v2710 = vsel %vm1295, %v2705, %v2707
        %v2711 = vsel %vm1295, %v2707, %v2709
        %v2716 = vadd.f32 %v2694, %v2705
        %v2717 = vadd.f32 %v2695, %v2710
        %v2718 = vadd.f32 %v2696, %v2711
        %v2719 = vadd.f32 %v2697, %v2709
        %2721 = vset.pattern.permute.xlu0 0
        %2722 = vperm.xlu0 %2721, %v2084
        %v2723 = vpop.permute.xlu0 %2722
        %v2725 = vadd.f32 %v2716, %v2723
        %v2726 = vadd.f32 %v2717, %v2723
        %v2727 = vadd.f32 %v2718, %v2723
        %v2728 = vadd.f32 %v2719, %v2723
        %v2729 = vmax.f32 %v2725, 0.0
        %v2730 = vmax.f32 %v2726, 0.0
        %v2731 = vmax.f32 %v2727, 0.0
        %v2732 = vmax.f32 %v2728, 0.0
        %v2733 = vld [vmem:[%s1] sm:$0x7]
        %v2735 = vlaneseq
        %v2736 = vshrl.u32 %v2735, 7
        %v2737 = vsub.s32 0, %v2736
        %v2738 = vrot.slane %v2733, %v2737
        %v2739 = vlaneseq
        %v2740 = vshrl.u32 %v2739, 7
        %v2741 = vsub.s32 1, %v2740
        %v2742 = vrot.slane %v2733, %v2741
        %v2743 = vlaneseq
        %v2744 = vshrl.u32 %v2743, 7
        %v2745 = vsub.s32 2, %v2744
        %v2746 = vrot.slane %v2733, %v2745
        %2747 = vrot.lane.b32.xlu0 %v2738, 109
        %v2748 = vpop.permute.xlu0 %2747
        %2749 = vrot.lane.b32.xlu0 %v2742, 109
        %v2750 = vpop.permute.xlu0 %2749
        %2751 = vrot.lane.b32.xlu0 %v2746, 109
        %v2752 = vpop.permute.xlu0 %2751
        %v2753 = vsel %vm1203, %v2748, %v2750
        %v2754 = vsel %vm1203, %v2750, %v2752
        %v2759 = vmul.f32 %v2729, %v2748
        %v2760 = vmul.f32 %v2730, %v2753
        %v2761 = vmul.f32 %v2731, %v2754
        %v2762 = vmul.f32 %v2732, %v2752
        %2767 = vrot.lane.b32.xlu0 %v2759, 19
        %v2768 = vpop.permute.xlu0 %2767
        %2769 = vrot.lane.b32.xlu0 %v2760, 19
        %v2770 = vpop.permute.xlu0 %2769
        %2771 = vrot.lane.b32.xlu0 %v2761, 19
        %v2772 = vpop.permute.xlu0 %2771
        %2773 = vrot.lane.b32.xlu0 %v2762, 19
        %v2774 = vpop.permute.xlu0 %2773
        %v2775 = vsel %vm1361, %v2768, %v2770
        %v2776 = vsel %vm1361, %v2770, %v2772
        %v2777 = vsel %vm1361, %v2772, %v2774
        %2781 = vst [vmem:[#allocation2 + $0x80] sm:$0xff] %v2775
        %2782 = vst [vmem:[#allocation2 + $0x88] sm:$0xff] %v2776
        %2783 = vst.msk [vmem:[#allocation2 + $0x90] sm:$0xff] %vm639, %v2777
        %v2784 = vld [vmem:[%s5] sm:$0xff]
        %v2785 = vld [vmem:[%s5 + $0x8] sm:$0xff]
        %v2786 = vld [vmem:[%s5 + $0x10] sm:$0xff]
        %v2787 = vld [vmem:[%s5 + $0x18] sm:$0xff]
        %v2788 = vld [vmem:[%s5 + $0x20] sm:$0xff]
        %v2789 = vld [vmem:[%s5 + $0x28] sm:$0xff]
        %v2790 = vld [vmem:[%s5 + $0x30] sm:$0xff]
        %v2791 = vld [vmem:[%s5 + $0x38] sm:$0xff]
        %v2792 = vld [vmem:[%s5 + $0x40] sm:$0xff]
        %v2793 = vld [vmem:[%s13] sm:$0xff]
        %v2794 = vld [vmem:[#allocation2] sm:$0xff]
        %v2795 = vld [vmem:[#allocation2 + $0x8] sm:$0xff]
        %v2796 = vld [vmem:[#allocation2 + $0x10] sm:$0xff]
        %v2797 = vld [vmem:[#allocation2 + $0x18] sm:$0xff]
        %v2798 = vld [vmem:[#allocation2 + $0x20] sm:$0xff]
        %v2799 = vld [vmem:[#allocation2 + $0x28] sm:$0xff]
        %v2800 = vld [vmem:[#allocation2 + $0x30] sm:$0xff]
        %v2801 = vld [vmem:[#allocation2 + $0x38] sm:$0xff]
        %v2802 = vld [vmem:[#allocation2 + $0x40] sm:$0xff]
        %v2803 = vld [vmem:[#allocation2 + $0x48] sm:$0xff]
        %v2804 = vld [vmem:[#allocation2 + $0x50] sm:$0xff]
        %v2805 = vld [vmem:[#allocation2 + $0x58] sm:$0xff]
        %v2806 = vld [vmem:[#allocation2 + $0x60] sm:$0xff]
        %v2807 = vld [vmem:[#allocation2 + $0x68] sm:$0xff]
        %v2808 = vld [vmem:[#allocation2 + $0x70] sm:$0xff]
        %v2809 = vld [vmem:[#allocation2 + $0x78] sm:$0xff]
        %v2810 = vld [vmem:[#allocation2 + $0x80] sm:$0xff]
        %v2811 = vld [vmem:[#allocation2 + $0x88] sm:$0xff]
        %v2812 = vld [vmem:[#allocation2 + $0x90] sm:$0xff]
        %v2813 = vld [vmem:[#allocation2 + $0x98] sm:$0xff]
        %vm2814 = vcmask 261120
        %v2816 = vsel %vm2814, %v2784, 0
        %v2819 = vsel %vm2814, %v2785, 0
        %v2822 = vsel %vm2814, %v2786, 0
        %v2825 = vsel %vm2814, %v2787, 0
        %v2828 = vsel %vm2814, %v2788, 0
        %v2831 = vsel %vm2814, %v2789, 0
        %v2834 = vsel %vm2814, %v2790, 0
        %v2837 = vsel %vm2814, %v2791, 0
        %v2840 = vsel %vm2814, %v2792, 0
        %2842 = vmatprep.subr.mxu0 0.0
        %2843 = vmatpush1.msra.mxu0 0.0
        %2844 = vmatprep.subr.mxu0 0.0
        %2845 = vmatpush1.msra.mxu0 0.0
        %2846 = vmatprep.subr.mxu0 0.0
        %2847 = vmatpush1.msra.mxu0 0.0
        %2848 = vmatprep.subr.mxu0 0.0
        %2849 = vmatpush1.msra.mxu0 0.0
        %2850 = vmatprep.subr.mxu0 0.0
        %2851 = vmatpush1.msra.mxu0 0.0
        %2852 = vmatprep.subr.mxu0 0.0
        %2853 = vmatpush1.msra.mxu0 0.0
        %2854 = vmatprep.subr.mxu0 0.0
        %2855 = vmatpush1.msra.mxu0 0.0
        %2856 = vmatprep.subr.mxu0 0.0
        %2857 = vmatpush1.msra.mxu0 0.0
        %2858 = vmatprep.subr.mxu0 0.0
        %2859 = vmatpush1.msra.mxu0 0.0
        %2860 = vmatprep.subr.mxu0 0.0
        %2861 = vmatpush1.msra.mxu0 0.0
        %2862 = vmatprep.subr.mxu0 0.0
        %2863 = vmatpush1.msra.mxu0 0.0
        %2864 = vmatprep.subr.mxu0 0.0
        %2865 = vmatpush1.msra.mxu0 0.0
        %2866 = vmatprep.subr.mxu0 %v2810
        %2867 = vmatpush1.msra.mxu0 %v2809
        %2868 = vmatprep.subr.mxu0 %v2805
        %2869 = vmatpush1.msra.mxu0 %v2804
        %2870 = vmatprep.subr.mxu0 %v2800
        %2871 = vmatpush1.msra.mxu0 %v2799
        %2872 = vmatprep.subr.mxu0 %v2795
        %2873 = vmatpush1.msra.mxu0 %v2794
        %2874 = vmatprep.subr.mxu0 0.0
        %2875 = vmatpush2.msra.mxu0 0.0
        %2876 = vmatprep.subr.mxu0 0.0
        %2877 = vmatpush2.msra.mxu0 0.0
        %2878 = vmatprep.subr.mxu0 0.0
        %2879 = vmatpush2.msra.mxu0 0.0
        %2880 = vmatprep.subr.mxu0 0.0
        %2881 = vmatpush2.msra.mxu0 0.0
        %2882 = vmatprep.subr.mxu0 0.0
        %2883 = vmatpush2.msra.mxu0 0.0
        %2884 = vmatprep.subr.mxu0 0.0
        %2885 = vmatpush2.msra.mxu0 0.0
        %2886 = vmatprep.subr.mxu0 0.0
        %2887 = vmatpush2.msra.mxu0 0.0
        %2888 = vmatprep.subr.mxu0 0.0
        %2889 = vmatpush2.msra.mxu0 0.0
        %2890 = vmatprep.subr.mxu0 0.0
        %2891 = vmatpush2.msra.mxu0 0.0
        %2892 = vmatprep.subr.mxu0 0.0
        %2893 = vmatpush2.msra.mxu0 0.0
        %2894 = vmatprep.subr.mxu0 0.0
        %2895 = vmatpush2.msra.mxu0 0.0
        %2896 = vmatprep.subr.mxu0 0.0
        %2897 = vmatpush2.msra.mxu0 0.0
        %2898 = vmatprep.subr.mxu0 0.0
        %2899 = vmatpush2.msra.mxu0 0.0
        %2900 = vmatprep.subr.mxu0 0.0
        %2901 = vmatpush2.msra.mxu0 0.0
        %2902 = vmatprep.subr.mxu0 0.0
        %2903 = vmatpush2.msra.mxu0 0.0
        %2904 = vmatprep.subr.mxu0 0.0
        %2905 = vmatpush2.msra.mxu0 0.0
        %2906 = vmatprep.mubr.f32.mxu0 0.0
        %2907 = vmatmul.mubr.f32.gmra.mxu0 %v2816
        %v2908 = vpop.f32.mrf.mxu0
        %v2909 = vadd.f32 0.0, %v2908
        %v2910 = vpop.f32.mrf.mxu0
        %v2911 = vadd.f32 0.0, %v2910
        %2912 = vmatprep.mubr.f32.mxu0 0.0
        %2913 = vmatmul.mubr.f32.gmra.mxu0 %v2819
        %v2914 = vpop.f32.mrf.mxu0
        %v2915 = vadd.f32 0.0, %v2914
        %v2916 = vpop.f32.mrf.mxu0
        %v2917 = vadd.f32 0.0, %v2916
        %2918 = vmatprep.mubr.f32.mxu0 0.0
        %2919 = vmatmul.mubr.f32.gmra.mxu0 %v2822
        %v2920 = vpop.f32.mrf.mxu0
        %v2921 = vadd.f32 0.0, %v2920
        %v2922 = vpop.f32.mrf.mxu0
        %v2923 = vadd.f32 0.0, %v2922
        %2924 = vmatprep.mubr.f32.mxu0 0.0
        %2925 = vmatmul.mubr.f32.gmra.mxu0 %v2825
        %v2926 = vpop.f32.mrf.mxu0
        %v2927 = vadd.f32 0.0, %v2926
        %v2928 = vpop.f32.mrf.mxu0
        %v2929 = vadd.f32 0.0, %v2928
        %2930 = vmatprep.mubr.f32.mxu0 0.0
        %2931 = vmatmul.mubr.f32.gmra.mxu0 %v2828
        %v2932 = vpop.f32.mrf.mxu0
        %v2933 = vadd.f32 0.0, %v2932
        %v2934 = vpop.f32.mrf.mxu0
        %v2935 = vadd.f32 0.0, %v2934
        %2936 = vmatprep.mubr.f32.mxu0 0.0
        %2937 = vmatmul.mubr.f32.gmra.mxu0 %v2831
        %v2938 = vpop.f32.mrf.mxu0
        %v2939 = vadd.f32 0.0, %v2938
        %v2940 = vpop.f32.mrf.mxu0
        %v2941 = vadd.f32 0.0, %v2940
        %2942 = vmatprep.mubr.f32.mxu0 0.0
        %2943 = vmatmul.mubr.f32.gmra.mxu0 %v2834
        %v2944 = vpop.f32.mrf.mxu0
        %v2945 = vadd.f32 0.0, %v2944
        %v2946 = vpop.f32.mrf.mxu0
        %v2947 = vadd.f32 0.0, %v2946
        %2948 = vmatprep.mubr.f32.mxu0 0.0
        %2949 = vmatmul.mubr.f32.gmra.mxu0 %v2837
        %v2950 = vpop.f32.mrf.mxu0
        %v2951 = vadd.f32 0.0, %v2950
        %v2952 = vpop.f32.mrf.mxu0
        %v2953 = vadd.f32 0.0, %v2952
        %2954 = vmatprep.mubr.f32.mxu0 0.0
        %2955 = vmatmul.mubr.f32.gmra.mxu0 %v2840
        %v2956 = vpop.f32.mrf.mxu0
        %v2957 = vadd.f32 0.0, %v2956
        %v2958 = vpop.f32.mrf.mxu0
        %v2959 = vadd.f32 0.0, %v2958
        %2960 = vdwg.mxu0
        %2961 = vmatprep.subr.mxu0 0.0
        %2962 = vmatpush1.msra.mxu0 0.0
        %2963 = vmatprep.subr.mxu0 0.0
        %2964 = vmatpush1.msra.mxu0 0.0
        %2965 = vmatprep.subr.mxu0 0.0
        %2966 = vmatpush1.msra.mxu0 0.0
        %2967 = vmatprep.subr.mxu0 0.0
        %2968 = vmatpush1.msra.mxu0 0.0
        %2969 = vmatprep.subr.mxu0 0.0
        %2970 = vmatpush1.msra.mxu0 0.0
        %2971 = vmatprep.subr.mxu0 0.0
        %2972 = vmatpush1.msra.mxu0 0.0
        %2973 = vmatprep.subr.mxu0 0.0
        %2974 = vmatpush1.msra.mxu0 0.0
        %2975 = vmatprep.subr.mxu0 0.0
        %2976 = vmatpush1.msra.mxu0 0.0
        %2977 = vmatprep.subr.mxu0 0.0
        %2978 = vmatpush1.msra.mxu0 0.0
        %2979 = vmatprep.subr.mxu0 0.0
        %2980 = vmatpush1.msra.mxu0 0.0
        %2981 = vmatprep.subr.mxu0 0.0
        %2982 = vmatpush1.msra.mxu0 0.0
        %2983 = vmatprep.subr.mxu0 0.0
        %2984 = vmatpush1.msra.mxu0 0.0
        %2985 = vmatprep.subr.mxu0 %v2812
        %2986 = vmatpush1.msra.mxu0 %v2811
        %2987 = vmatprep.subr.mxu0 %v2807
        %2988 = vmatpush1.msra.mxu0 %v2806
        %2989 = vmatprep.subr.mxu0 %v2802
        %2990 = vmatpush1.msra.mxu0 %v2801
        %2991 = vmatprep.subr.mxu0 %v2797
        %2992 = vmatpush1.msra.mxu0 %v2796
        %2993 = vmatprep.subr.mxu0 0.0
        %2994 = vmatpush2.msra.mxu0 0.0
        %2995 = vmatprep.subr.mxu0 0.0
        %2996 = vmatpush2.msra.mxu0 0.0
        %2997 = vmatprep.subr.mxu0 0.0
        %2998 = vmatpush2.msra.mxu0 0.0
        %2999 = vmatprep.subr.mxu0 0.0
        %3000 = vmatpush2.msra.mxu0 0.0
        %3001 = vmatprep.subr.mxu0 0.0
        %3002 = vmatpush2.msra.mxu0 0.0
        %3003 = vmatprep.subr.mxu0 0.0
        %3004 = vmatpush2.msra.mxu0 0.0
        %3005 = vmatprep.subr.mxu0 0.0
        %3006 = vmatpush2.msra.mxu0 0.0
        %3007 = vmatprep.subr.mxu0 0.0
        %3008 = vmatpush2.msra.mxu0 0.0
        %3009 = vmatprep.subr.mxu0 0.0
        %3010 = vmatpush2.msra.mxu0 0.0
        %3011 = vmatprep.subr.mxu0 0.0
        %3012 = vmatpush2.msra.mxu0 0.0
        %3013 = vmatprep.subr.mxu0 0.0
        %3014 = vmatpush2.msra.mxu0 0.0
        %3015 = vmatprep.subr.mxu0 0.0
        %3016 = vmatpush2.msra.mxu0 0.0
        %3017 = vmatprep.subr.mxu0 0.0
        %3018 = vmatpush2.msra.mxu0 0.0
        %3019 = vmatprep.subr.mxu0 0.0
        %3020 = vmatpush2.msra.mxu0 0.0
        %3021 = vmatprep.subr.mxu0 0.0
        %3022 = vmatpush2.msra.mxu0 0.0
        %3023 = vmatprep.subr.mxu0 0.0
        %3024 = vmatpush2.msra.mxu0 0.0
        %3025 = vmatprep.mubr.f32.mxu0 0.0
        %3026 = vmatmul.mubr.f32.gmra.mxu0 %v2816
        %v3027 = vpop.f32.mrf.mxu0
        %v3028 = vadd.f32 0.0, %v3027
        %v3029 = vpop.f32.mrf.mxu0
        %v3030 = vadd.f32 0.0, %v3029
        %3031 = vmatprep.mubr.f32.mxu0 0.0
        %3032 = vmatmul.mubr.f32.gmra.mxu0 %v2819
        %v3033 = vpop.f32.mrf.mxu0
        %v3034 = vadd.f32 0.0, %v3033
        %v3035 = vpop.f32.mrf.mxu0
        %v3036 = vadd.f32 0.0, %v3035
        %3037 = vmatprep.mubr.f32.mxu0 0.0
        %3038 = vmatmul.mubr.f32.gmra.mxu0 %v2822
        %v3039 = vpop.f32.mrf.mxu0
        %v3040 = vadd.f32 0.0, %v3039
        %v3041 = vpop.f32.mrf.mxu0
        %v3042 = vadd.f32 0.0, %v3041
        %3043 = vmatprep.mubr.f32.mxu0 0.0
        %3044 = vmatmul.mubr.f32.gmra.mxu0 %v2825
        %v3045 = vpop.f32.mrf.mxu0
        %v3046 = vadd.f32 0.0, %v3045
        %v3047 = vpop.f32.mrf.mxu0
        %v3048 = vadd.f32 0.0, %v3047
        %3049 = vmatprep.mubr.f32.mxu0 0.0
        %3050 = vmatmul.mubr.f32.gmra.mxu0 %v2828
        %v3051 = vpop.f32.mrf.mxu0
        %v3052 = vadd.f32 0.0, %v3051
        %v3053 = vpop.f32.mrf.mxu0
        %v3054 = vadd.f32 0.0, %v3053
        %3055 = vmatprep.mubr.f32.mxu0 0.0
        %3056 = vmatmul.mubr.f32.gmra.mxu0 %v2831
        %v3057 = vpop.f32.mrf.mxu0
        %v3058 = vadd.f32 0.0, %v3057
        %v3059 = vpop.f32.mrf.mxu0
        %v3060 = vadd.f32 0.0, %v3059
        %3061 = vmatprep.mubr.f32.mxu0 0.0
        %3062 = vmatmul.mubr.f32.gmra.mxu0 %v2834
        %v3063 = vpop.f32.mrf.mxu0
        %v3064 = vadd.f32 0.0, %v3063
        %v3065 = vpop.f32.mrf.mxu0
        %v3066 = vadd.f32 0.0, %v3065
        %3067 = vmatprep.mubr.f32.mxu0 0.0
        %3068 = vmatmul.mubr.f32.gmra.mxu0 %v2837
        %v3069 = vpop.f32.mrf.mxu0
        %v3070 = vadd.f32 0.0, %v3069
        %v3071 = vpop.f32.mrf.mxu0
        %v3072 = vadd.f32 0.0, %v3071
        %3073 = vmatprep.mubr.f32.mxu0 0.0
        %3074 = vmatmul.mubr.f32.gmra.mxu0 %v2840
        %v3075 = vpop.f32.mrf.mxu0
        %v3076 = vadd.f32 0.0, %v3075
        %v3077 = vpop.f32.mrf.mxu0
        %v3078 = vadd.f32 0.0, %v3077
        %3079 = vdwg.mxu0
        %3080 = vmatprep.subr.mxu0 0.0
        %3081 = vmatpush1.msra.mxu0 0.0
        %3082 = vmatprep.subr.mxu0 0.0
        %3083 = vmatpush1.msra.mxu0 0.0
        %3084 = vmatprep.subr.mxu0 0.0
        %3085 = vmatpush1.msra.mxu0 0.0
        %3086 = vmatprep.subr.mxu0 0.0
        %3087 = vmatpush1.msra.mxu0 0.0
        %3088 = vmatprep.subr.mxu0 0.0
        %3089 = vmatpush1.msra.mxu0 0.0
        %3090 = vmatprep.subr.mxu0 0.0
        %3091 = vmatpush1.msra.mxu0 0.0
        %3092 = vmatprep.subr.mxu0 0.0
        %3093 = vmatpush1.msra.mxu0 0.0
        %3094 = vmatprep.subr.mxu0 0.0
        %3095 = vmatpush1.msra.mxu0 0.0
        %3096 = vmatprep.subr.mxu0 0.0
        %3097 = vmatpush1.msra.mxu0 0.0
        %3098 = vmatprep.subr.mxu0 0.0
        %3099 = vmatpush1.msra.mxu0 0.0
        %3100 = vmatprep.subr.mxu0 0.0
        %3101 = vmatpush1.msra.mxu0 0.0
        %3102 = vmatprep.subr.mxu0 0.0
        %3103 = vmatpush1.msra.mxu0 0.0
        %3104 = vmatprep.subr.mxu0 0.0
        %3105 = vmatpush1.msra.mxu0 %v2813
        %3106 = vmatprep.subr.mxu0 0.0
        %3107 = vmatpush1.msra.mxu0 %v2808
        %3108 = vmatprep.subr.mxu0 0.0
        %3109 = vmatpush1.msra.mxu0 %v2803
        %3110 = vmatprep.subr.mxu0 0.0
        %3111 = vmatpush1.msra.mxu0 %v2798
        %3112 = vmatprep.subr.mxu0 0.0
        %3113 = vmatpush2.msra.mxu0 0.0
        %3114 = vmatprep.subr.mxu0 0.0
        %3115 = vmatpush2.msra.mxu0 0.0
        %3116 = vmatprep.subr.mxu0 0.0
        %3117 = vmatpush2.msra.mxu0 0.0
        %3118 = vmatprep.subr.mxu0 0.0
        %3119 = vmatpush2.msra.mxu0 0.0
        %3120 = vmatprep.subr.mxu0 0.0
        %3121 = vmatpush2.msra.mxu0 0.0
        %3122 = vmatprep.subr.mxu0 0.0
        %3123 = vmatpush2.msra.mxu0 0.0
        %3124 = vmatprep.subr.mxu0 0.0
        %3125 = vmatpush2.msra.mxu0 0.0
        %3126 = vmatprep.subr.mxu0 0.0
        %3127 = vmatpush2.msra.mxu0 0.0
        %3128 = vmatprep.subr.mxu0 0.0
        %3129 = vmatpush2.msra.mxu0 0.0
        %3130 = vmatprep.subr.mxu0 0.0
        %3131 = vmatpush2.msra.mxu0 0.0
        %3132 = vmatprep.subr.mxu0 0.0
        %3133 = vmatpush2.msra.mxu0 0.0
        %3134 = vmatprep.subr.mxu0 0.0
        %3135 = vmatpush2.msra.mxu0 0.0
        %3136 = vmatprep.subr.mxu0 0.0
        %3137 = vmatpush2.msra.mxu0 0.0
        %3138 = vmatprep.subr.mxu0 0.0
        %3139 = vmatpush2.msra.mxu0 0.0
        %3140 = vmatprep.subr.mxu0 0.0
        %3141 = vmatpush2.msra.mxu0 0.0
        %3142 = vmatprep.subr.mxu0 0.0
        %3143 = vmatpush2.msra.mxu0 0.0
        %3144 = vmatprep.mubr.f32.mxu0 0.0
        %3145 = vmatmul.mubr.f32.gmra.mxu0 %v2816
        %v3146 = vpop.f32.mrf.mxu0
        %v3147 = vadd.f32 0.0, %v3146
        %v3148 = vpop.f32.mrf.mxu0
        %3149 = vmatprep.mubr.f32.mxu0 0.0
        %3150 = vmatmul.mubr.f32.gmra.mxu0 %v2819
        %v3151 = vpop.f32.mrf.mxu0
        %v3152 = vadd.f32 0.0, %v3151
        %v3153 = vpop.f32.mrf.mxu0
        %3154 = vmatprep.mubr.f32.mxu0 0.0
        %3155 = vmatmul.mubr.f32.gmra.mxu0 %v2822
        %v3156 = vpop.f32.mrf.mxu0
        %v3157 = vadd.f32 0.0, %v3156
        %v3158 = vpop.f32.mrf.mxu0
        %3159 = vmatprep.mubr.f32.mxu0 0.0
        %3160 = vmatmul.mubr.f32.gmra.mxu0 %v2825
        %v3161 = vpop.f32.mrf.mxu0
        %v3162 = vadd.f32 0.0, %v3161
        %v3163 = vpop.f32.mrf.mxu0
        %3164 = vmatprep.mubr.f32.mxu0 0.0
        %3165 = vmatmul.mubr.f32.gmra.mxu0 %v2828
        %v3166 = vpop.f32.mrf.mxu0
        %v3167 = vadd.f32 0.0, %v3166
        %v3168 = vpop.f32.mrf.mxu0
        %3169 = vmatprep.mubr.f32.mxu0 0.0
        %3170 = vmatmul.mubr.f32.gmra.mxu0 %v2831
        %v3171 = vpop.f32.mrf.mxu0
        %v3172 = vadd.f32 0.0, %v3171
        %v3173 = vpop.f32.mrf.mxu0
        %3174 = vmatprep.mubr.f32.mxu0 0.0
        %3175 = vmatmul.mubr.f32.gmra.mxu0 %v2834
        %v3176 = vpop.f32.mrf.mxu0
        %v3177 = vadd.f32 0.0, %v3176
        %v3178 = vpop.f32.mrf.mxu0
        %3179 = vmatprep.mubr.f32.mxu0 0.0
        %3180 = vmatmul.mubr.f32.gmra.mxu0 %v2837
        %v3181 = vpop.f32.mrf.mxu0
        %v3182 = vadd.f32 0.0, %v3181
        %v3183 = vpop.f32.mrf.mxu0
        %3184 = vmatprep.mubr.f32.mxu0 0.0
        %3185 = vmatmul.mubr.f32.gmra.mxu0 %v2840
        %v3186 = vpop.f32.mrf.mxu0
        %v3187 = vadd.f32 0.0, %v3186
        %v3188 = vpop.f32.mrf.mxu0
        %3189 = vdwg.mxu0
        %3190 = vst [vmem:[#allocation3] sm:$0xff] %v2909
        %3191 = vst [vmem:[#allocation3 + $0x8] sm:$0xff] %v2911
        %3192 = vst [vmem:[#allocation3 + $0x10] sm:$0xff] %v3028
        %3193 = vst [vmem:[#allocation3 + $0x18] sm:$0xff] %v3030
        %3194 = vst.msk [vmem:[#allocation3 + $0x20] sm:$0xff] %vm639, %v3147
        %3195 = vst [vmem:[#allocation3 + $0x28] sm:$0xff] %v2915
        %3196 = vst [vmem:[#allocation3 + $0x30] sm:$0xff] %v2917
        %3197 = vst [vmem:[#allocation3 + $0x38] sm:$0xff] %v3034
        %3198 = vst [vmem:[#allocation3 + $0x40] sm:$0xff] %v3036
        %3199 = vst.msk [vmem:[#allocation3 + $0x48] sm:$0xff] %vm639, %v3152
        %3200 = vst [vmem:[#allocation3 + $0x50] sm:$0xff] %v2921
        %3201 = vst [vmem:[#allocation3 + $0x58] sm:$0xff] %v2923
        %3202 = vst [vmem:[#allocation3 + $0x60] sm:$0xff] %v3040
        %3203 = vst [vmem:[#allocation3 + $0x68] sm:$0xff] %v3042
        %3204 = vst.msk [vmem:[#allocation3 + $0x70] sm:$0xff] %vm639, %v3157
        %3205 = vst [vmem:[#allocation3 + $0x78] sm:$0xff] %v2927
        %3206 = vst [vmem:[#allocation3 + $0x80] sm:$0xff] %v2929
        %3207 = vst [vmem:[#allocation3 + $0x88] sm:$0xff] %v3046
        %3208 = vst [vmem:[#allocation3 + $0x90] sm:$0xff] %v3048
        %3209 = vst.msk [vmem:[#allocation3 + $0x98] sm:$0xff] %vm639, %v3162
        %3210 = vst [vmem:[#allocation3 + $0xa0] sm:$0xff] %v2933
        %3211 = vst [vmem:[#allocation3 + $0xa8] sm:$0xff] %v2935
        %3212 = vst [vmem:[#allocation3 + $0xb0] sm:$0xff] %v3052
        %3213 = vst [vmem:[#allocation3 + $0xb8] sm:$0xff] %v3054
        %3214 = vst.msk [vmem:[#allocation3 + $0xc0] sm:$0xff] %vm639, %v3167
        %3215 = vst [vmem:[#allocation3 + $0xc8] sm:$0xff] %v2939
        %3216 = vst [vmem:[#allocation3 + $0xd0] sm:$0xff] %v2941
        %3217 = vst [vmem:[#allocation3 + $0xd8] sm:$0xff] %v3058
        %3218 = vst [vmem:[#allocation3 + $0xe0] sm:$0xff] %v3060
        %3219 = vst.msk [vmem:[#allocation3 + $0xe8] sm:$0xff] %vm639, %v3172
        %3220 = vst [vmem:[#allocation3 + $0xf0] sm:$0xff] %v2945
        %3221 = vst [vmem:[#allocation3 + $0xf8] sm:$0xff] %v2947
        %3222 = vst [vmem:[#allocation3 + $0x100] sm:$0xff] %v3064
        %3223 = vst [vmem:[#allocation3 + $0x108] sm:$0xff] %v3066
        %3224 = vst.msk [vmem:[#allocation3 + $0x110] sm:$0xff] %vm639, %v3177
        %3225 = vst [vmem:[#allocation3 + $0x118] sm:$0xff] %v2951
        %3226 = vst [vmem:[#allocation3 + $0x120] sm:$0xff] %v2953
        %3227 = vst [vmem:[#allocation3 + $0x128] sm:$0xff] %v3070
        %3228 = vst [vmem:[#allocation3 + $0x130] sm:$0xff] %v3072
        %3229 = vst.msk [vmem:[#allocation3 + $0x138] sm:$0xff] %vm639, %v3182
        %3230 = vst [vmem:[#allocation3 + $0x140] sm:$0xff] %v2957
        %3231 = vst [vmem:[#allocation3 + $0x148] sm:$0xff] %v2959
        %3232 = vst [vmem:[#allocation3 + $0x150] sm:$0xff] %v3076
        %3233 = vst [vmem:[#allocation3 + $0x158] sm:$0xff] %v3078
        %3234 = vst.msk [vmem:[#allocation3 + $0x160] sm:$0xff] %vm639, %v3187
        %v3235 = vld [vmem:[#allocation3] sm:$0xff]
        %v3236 = vld [vmem:[#allocation3 + $0x8] sm:$0xff]
        %v3237 = vld [vmem:[#allocation3 + $0x10] sm:$0xff]
        %v3238 = vld [vmem:[#allocation3 + $0x18] sm:$0xff]
        %v3239 = vadd.f32 %v3235, 0.0
        %v3240 = vadd.f32 %v3236, 0.0
        %v3241 = vadd.f32 %v3237, 0.0
        %v3242 = vadd.f32 %v3238, 0.0
        %v3243 = vld [vmem:[#allocation3 + $0x28] sm:$0xff]
        %v3244 = vld [vmem:[#allocation3 + $0x30] sm:$0xff]
        %v3245 = vld [vmem:[#allocation3 + $0x38] sm:$0xff]
        %v3246 = vld [vmem:[#allocation3 + $0x40] sm:$0xff]
        %3251 = vrot.lane.b32.xlu0 %v3243, 127
        %v3252 = vpop.permute.xlu0 %3251
        %3253 = vrot.lane.b32.xlu0 %v3244, 127
        %v3254 = vpop.permute.xlu0 %3253
        %3255 = vrot.lane.b32.xlu0 %v3245, 127
        %v3256 = vpop.permute.xlu0 %3255
        %3257 = vrot.lane.b32.xlu0 %v3246, 127
        %v3258 = vpop.permute.xlu0 %3257
        %v3259 = vsel %vm1123, %v3252, %v3254
        %v3260 = vsel %vm1123, %v3254, %v3256
        %v3261 = vsel %vm1123, %v3256, %v3258
        %v3266 = vadd.f32 %v3239, %v3259
        %v3267 = vadd.f32 %v3240, %v3260
        %v3268 = vadd.f32 %v3241, %v3261
        %v3269 = vadd.f32 %v3242, %v3258
        %v3270 = vld [vmem:[#allocation3 + $0x50] sm:$0xff]
        %v3271 = vld [vmem:[#allocation3 + $0x58] sm:$0xff]
        %v3272 = vld [vmem:[#allocation3 + $0x60] sm:$0xff]
        %v3273 = vld [vmem:[#allocation3 + $0x68] sm:$0xff]
        %3278 = vrot.lane.b32.xlu0 %v3270, 126
        %v3279 = vpop.permute.xlu0 %3278
        %3280 = vrot.lane.b32.xlu0 %v3271, 126
        %v3281 = vpop.permute.xlu0 %3280
        %3282 = vrot.lane.b32.xlu0 %v3272, 126
        %v3283 = vpop.permute.xlu0 %3282
        %3284 = vrot.lane.b32.xlu0 %v3273, 126
        %v3285 = vpop.permute.xlu0 %3284
        %v3286 = vsel %vm1151, %v3279, %v3281
        %v3287 = vsel %vm1151, %v3281, %v3283
        %v3288 = vsel %vm1151, %v3283, %v3285
        %v3293 = vadd.f32 %v3266, %v3286
        %v3294 = vadd.f32 %v3267, %v3287
        %v3295 = vadd.f32 %v3268, %v3288
        %v3296 = vadd.f32 %v3269, %v3285
        %v3297 = vld [vmem:[#allocation3 + $0x78] sm:$0xff]
        %v3298 = vld [vmem:[#allocation3 + $0x80] sm:$0xff]
        %v3299 = vld [vmem:[#allocation3 + $0x88] sm:$0xff]
        %v3300 = vld [vmem:[#allocation3 + $0x90] sm:$0xff]
        %3305 = vrot.lane.b32.xlu0 %v3297, 110
        %v3306 = vpop.permute.xlu0 %3305
        %3307 = vrot.lane.b32.xlu0 %v3298, 110
        %v3308 = vpop.permute.xlu0 %3307
        %3309 = vrot.lane.b32.xlu0 %v3299, 110
        %v3310 = vpop.permute.xlu0 %3309
        %3311 = vrot.lane.b32.xlu0 %v3300, 110
        %v3312 = vpop.permute.xlu0 %3311
        %v3313 = vsel %vm1179, %v3306, %v3308
        %v3314 = vsel %vm1179, %v3308, %v3310
        %v3315 = vsel %vm1179, %v3310, %v3312
        %v3320 = vadd.f32 %v3293, %v3313
        %v3321 = vadd.f32 %v3294, %v3314
        %v3322 = vadd.f32 %v3295, %v3315
        %v3323 = vadd.f32 %v3296, %v3312
        %v3324 = vld [vmem:[#allocation3 + $0xa8] sm:$0xff]
        %v3325 = vld [vmem:[#allocation3 + $0xb0] sm:$0xff]
        %v3326 = vld [vmem:[#allocation3 + $0xb8] sm:$0xff]
        %3330 = vrot.lane.b32.xlu0 %v3324, 109
        %v3331 = vpop.permute.xlu0 %3330
        %3332 = vrot.lane.b32.xlu0 %v3325, 109
        %v3333 = vpop.permute.xlu0 %3332
        %3334 = vrot.lane.b32.xlu0 %v3326, 109
        %v3335 = vpop.permute.xlu0 %3334
        %v3336 = vsel %vm1203, %v3331, %v3333
        %v3337 = vsel %vm1203, %v3333, %v3335
        %v3342 = vadd.f32 %v3320, %v3331
        %v3343 = vadd.f32 %v3321, %v3336
        %v3344 = vadd.f32 %v3322, %v3337
        %v3345 = vadd.f32 %v3323, %v3335
        %v3346 = vld [vmem:[#allocation3 + $0xd0] sm:$0xff]
        %v3347 = vld [vmem:[#allocation3 + $0xd8] sm:$0xff]
        %v3348 = vld [vmem:[#allocation3 + $0xe0] sm:$0xff]
        %3352 = vrot.lane.b32.xlu0 %v3346, 108
        %v3353 = vpop.permute.xlu0 %3352
        %3354 = vrot.lane.b32.xlu0 %v3347, 108
        %v3355 = vpop.permute.xlu0 %3354
        %3356 = vrot.lane.b32.xlu0 %v3348, 108
        %v3357 = vpop.permute.xlu0 %3356
        %v3358 = vsel %vm1226, %v3353, %v3355
        %v3359 = vsel %vm1226, %v3355, %v3357
        %v3364 = vadd.f32 %v3342, %v3353
        %v3365 = vadd.f32 %v3343, %v3358
        %v3366 = vadd.f32 %v3344, %v3359
        %v3367 = vadd.f32 %v3345, %v3357
        %v3368 = vld [vmem:[#allocation3 + $0xf8] sm:$0xff]
        %v3369 = vld [vmem:[#allocation3 + $0x100] sm:$0xff]
        %v3370 = vld [vmem:[#allocation3 + $0x108] sm:$0xff]
        %3374 = vrot.lane.b32.xlu0 %v3368, 92
        %v3375 = vpop.permute.xlu0 %3374
        %3376 = vrot.lane.b32.xlu0 %v3369, 92
        %v3377 = vpop.permute.xlu0 %3376
        %3378 = vrot.lane.b32.xlu0 %v3370, 92
        %v3379 = vpop.permute.xlu0 %3378
        %v3380 = vsel %vm1249, %v3375, %v3377
        %v3381 = vsel %vm1249, %v3377, %v3379
        %v3386 = vadd.f32 %v3364, %v3375
        %v3387 = vadd.f32 %v3365, %v3380
        %v3388 = vadd.f32 %v3366, %v3381
        %v3389 = vadd.f32 %v3367, %v3379
        %v3390 = vld [vmem:[#allocation3 + $0x120] sm:$0xff]
        %v3391 = vld [vmem:[#allocation3 + $0x128] sm:$0xff]
        %v3392 = vld [vmem:[#allocation3 + $0x130] sm:$0xff]
        %3396 = vrot.lane.b32.xlu0 %v3390, 91
        %v3397 = vpop.permute.xlu0 %3396
        %3398 = vrot.lane.b32.xlu0 %v3391, 91
        %v3399 = vpop.permute.xlu0 %3398
        %3400 = vrot.lane.b32.xlu0 %v3392, 91
        %v3401 = vpop.permute.xlu0 %3400
        %v3402 = vsel %vm1272, %v3397, %v3399
        %v3403 = vsel %vm1272, %v3399, %v3401
        %v3408 = vadd.f32 %v3386, %v3397
        %v3409 = vadd.f32 %v3387, %v3402
        %v3410 = vadd.f32 %v3388, %v3403
        %v3411 = vadd.f32 %v3389, %v3401
        %v3412 = vld [vmem:[#allocation3 + $0x148] sm:$0xff]
        %v3413 = vld [vmem:[#allocation3 + $0x150] sm:$0xff]
        %v3414 = vld [vmem:[#allocation3 + $0x158] sm:$0xff]
        %3418 = vrot.lane.b32.xlu0 %v3412, 90
        %v3419 = vpop.permute.xlu0 %3418
        %3420 = vrot.lane.b32.xlu0 %v3413, 90
        %v3421 = vpop.permute.xlu0 %3420
        %3422 = vrot.lane.b32.xlu0 %v3414, 90
        %v3423 = vpop.permute.xlu0 %3422
        %v3424 = vsel %vm1295, %v3419, %v3421
        %v3425 = vsel %vm1295, %v3421, %v3423
        %v3430 = vadd.f32 %v3408, %v3419
        %v3431 = vadd.f32 %v3409, %v3424
        %v3432 = vadd.f32 %v3410, %v3425
        %v3433 = vadd.f32 %v3411, %v3423
        %3435 = vset.pattern.permute.xlu0 0
        %3436 = vperm.xlu0 %3435, %v2793
        %v3437 = vpop.permute.xlu0 %3436
        %v3439 = vadd.f32 %v3430, %v3437
        %v3440 = vadd.f32 %v3431, %v3437
        %v3441 = vadd.f32 %v3432, %v3437
        %v3442 = vadd.f32 %v3433, %v3437
        %v3443 = vmax.f32 %v3439, 0.0
        %v3444 = vmax.f32 %v3440, 0.0
        %v3445 = vmax.f32 %v3441, 0.0
        %v3446 = vmax.f32 %v3442, 0.0
        %v3447 = vld [vmem:[%s1] sm:$0x7]
        %v3449 = vlaneseq
        %v3450 = vshrl.u32 %v3449, 7
        %v3451 = vsub.s32 0, %v3450
        %v3452 = vrot.slane %v3447, %v3451
        %v3453 = vlaneseq
        %v3454 = vshrl.u32 %v3453, 7
        %v3455 = vsub.s32 1, %v3454
        %v3456 = vrot.slane %v3447, %v3455
        %v3457 = vlaneseq
        %v3458 = vshrl.u32 %v3457, 7
        %v3459 = vsub.s32 2, %v3458
        %v3460 = vrot.slane %v3447, %v3459
        %3461 = vrot.lane.b32.xlu0 %v3452, 109
        %v3462 = vpop.permute.xlu0 %3461
        %3463 = vrot.lane.b32.xlu0 %v3456, 109
        %v3464 = vpop.permute.xlu0 %3463
        %3465 = vrot.lane.b32.xlu0 %v3460, 109
        %v3466 = vpop.permute.xlu0 %3465
        %v3467 = vsel %vm1203, %v3462, %v3464
        %v3468 = vsel %vm1203, %v3464, %v3466
        %v3473 = vmul.f32 %v3443, %v3462
        %v3474 = vmul.f32 %v3444, %v3467
        %v3475 = vmul.f32 %v3445, %v3468
        %v3476 = vmul.f32 %v3446, %v3466
        %3481 = vrot.lane.b32.xlu0 %v3473, 19
        %v3482 = vpop.permute.xlu0 %3481
        %3483 = vrot.lane.b32.xlu0 %v3474, 19
        %v3484 = vpop.permute.xlu0 %3483
        %3485 = vrot.lane.b32.xlu0 %v3475, 19
        %v3486 = vpop.permute.xlu0 %3485
        %3487 = vrot.lane.b32.xlu0 %v3476, 19
        %v3488 = vpop.permute.xlu0 %3487
        %v3489 = vsel %vm1361, %v3482, %v3484
        %v3490 = vsel %vm1361, %v3484, %v3486
        %v3491 = vsel %vm1361, %v3486, %v3488
        %3495 = vst [vmem:[#allocation2 + $0xa8] sm:$0xff] %v3489
        %3496 = vst [vmem:[#allocation2 + $0xb0] sm:$0xff] %v3490
        %3497 = vst.msk [vmem:[#allocation2 + $0xb8] sm:$0xff] %vm639, %v3491
        %v3498 = vld [vmem:[%s6] sm:$0xff]
        %v3499 = vld [vmem:[%s6 + $0x8] sm:$0xff]
        %v3500 = vld [vmem:[%s6 + $0x10] sm:$0xff]
        %v3501 = vld [vmem:[%s6 + $0x18] sm:$0xff]
        %v3502 = vld [vmem:[%s6 + $0x20] sm:$0xff]
        %v3503 = vld [vmem:[%s6 + $0x28] sm:$0xff]
        %v3504 = vld [vmem:[%s6 + $0x30] sm:$0xff]
        %v3505 = vld [vmem:[%s6 + $0x38] sm:$0xff]
        %v3506 = vld [vmem:[%s6 + $0x40] sm:$0xff]
        %v3507 = vld [vmem:[%s14] sm:$0xff]
        %v3508 = vld [vmem:[#allocation2] sm:$0xff]
        %v3509 = vld [vmem:[#allocation2 + $0x8] sm:$0xff]
        %v3510 = vld [vmem:[#allocation2 + $0x10] sm:$0xff]
        %v3511 = vld [vmem:[#allocation2 + $0x18] sm:$0xff]
        %v3512 = vld [vmem:[#allocation2 + $0x20] sm:$0xff]
        %v3513 = vld [vmem:[#allocation2 + $0x28] sm:$0xff]
        %v3514 = vld [vmem:[#allocation2 + $0x30] sm:$0xff]
        %v3515 = vld [vmem:[#allocation2 + $0x38] sm:$0xff]
        %v3516 = vld [vmem:[#allocation2 + $0x40] sm:$0xff]
        %v3517 = vld [vmem:[#allocation2 + $0x48] sm:$0xff]
        %v3518 = vld [vmem:[#allocation2 + $0x50] sm:$0xff]
        %v3519 = vld [vmem:[#allocation2 + $0x58] sm:$0xff]
        %v3520 = vld [vmem:[#allocation2 + $0x60] sm:$0xff]
        %v3521 = vld [vmem:[#allocation2 + $0x68] sm:$0xff]
        %v3522 = vld [vmem:[#allocation2 + $0x70] sm:$0xff]
        %v3523 = vld [vmem:[#allocation2 + $0x78] sm:$0xff]
        %v3524 = vld [vmem:[#allocation2 + $0x80] sm:$0xff]
        %v3525 = vld [vmem:[#allocation2 + $0x88] sm:$0xff]
        %v3526 = vld [vmem:[#allocation2 + $0x90] sm:$0xff]
        %v3527 = vld [vmem:[#allocation2 + $0x98] sm:$0xff]
        %v3528 = vld [vmem:[#allocation2 + $0xa0] sm:$0xff]
        %v3529 = vld [vmem:[#allocation2 + $0xa8] sm:$0xff]
        %v3530 = vld [vmem:[#allocation2 + $0xb0] sm:$0xff]
        %v3531 = vld [vmem:[#allocation2 + $0xb8] sm:$0xff]
        %v3532 = vld [vmem:[#allocation2 + $0xc0] sm:$0xff]
        %vm3533 = vcmask 326656
        %v3535 = vsel %vm3533, %v3498, 0
        %v3538 = vsel %vm3533, %v3499, 0
        %v3541 = vsel %vm3533, %v3500, 0
        %v3544 = vsel %vm3533, %v3501, 0
        %v3547 = vsel %vm3533, %v3502, 0
        %v3550 = vsel %vm3533, %v3503, 0
        %v3553 = vsel %vm3533, %v3504, 0
        %v3556 = vsel %vm3533, %v3505, 0
        %v3559 = vsel %vm3533, %v3506, 0
        %3561 = vmatprep.subr.mxu0 0.0
        %3562 = vmatpush1.msra.mxu0 0.0
        %3563 = vmatprep.subr.mxu0 0.0
        %3564 = vmatpush1.msra.mxu0 0.0
        %3565 = vmatprep.subr.mxu0 0.0
        %3566 = vmatpush1.msra.mxu0 0.0
        %3567 = vmatprep.subr.mxu0 0.0
        %3568 = vmatpush1.msra.mxu0 0.0
        %3569 = vmatprep.subr.mxu0 0.0
        %3570 = vmatpush1.msra.mxu0 0.0
        %3571 = vmatprep.subr.mxu0 0.0
        %3572 = vmatpush1.msra.mxu0 0.0
        %3573 = vmatprep.subr.mxu0 0.0
        %3574 = vmatpush1.msra.mxu0 0.0
        %3575 = vmatprep.subr.mxu0 0.0
        %3576 = vmatpush1.msra.mxu0 0.0
        %3577 = vmatprep.subr.mxu0 0.0
        %3578 = vmatpush1.msra.mxu0 0.0
        %3579 = vmatprep.subr.mxu0 0.0
        %3580 = vmatpush1.msra.mxu0 0.0
        %3581 = vmatprep.subr.mxu0 0.0
        %3582 = vmatpush1.msra.mxu0 0.0
        %3583 = vmatprep.subr.mxu0 %v3529
        %3584 = vmatpush1.msra.mxu0 %v3528
        %3585 = vmatprep.subr.mxu0 %v3524
        %3586 = vmatpush1.msra.mxu0 %v3523
        %3587 = vmatprep.subr.mxu0 %v3519
        %3588 = vmatpush1.msra.mxu0 %v3518
        %3589 = vmatprep.subr.mxu0 %v3514
        %3590 = vmatpush1.msra.mxu0 %v3513
        %3591 = vmatprep.subr.mxu0 %v3509
        %3592 = vmatpush1.msra.mxu0 %v3508
        %3593 = vmatprep.subr.mxu0 0.0
        %3594 = vmatpush2.msra.mxu0 0.0
        %3595 = vmatprep.subr.mxu0 0.0
        %3596 = vmatpush2.msra.mxu0 0.0
        %3597 = vmatprep.subr.mxu0 0.0
        %3598 = vmatpush2.msra.mxu0 0.0
        %3599 = vmatprep.subr.mxu0 0.0
        %3600 = vmatpush2.msra.mxu0 0.0
        %3601 = vmatprep.subr.mxu0 0.0
        %3602 = vmatpush2.msra.mxu0 0.0
        %3603 = vmatprep.subr.mxu0 0.0
        %3604 = vmatpush2.msra.mxu0 0.0
        %3605 = vmatprep.subr.mxu0 0.0
        %3606 = vmatpush2.msra.mxu0 0.0
        %3607 = vmatprep.subr.mxu0 0.0
        %3608 = vmatpush2.msra.mxu0 0.0
        %3609 = vmatprep.subr.mxu0 0.0
        %3610 = vmatpush2.msra.mxu0 0.0
        %3611 = vmatprep.subr.mxu0 0.0
        %3612 = vmatpush2.msra.mxu0 0.0
        %3613 = vmatprep.subr.mxu0 0.0
        %3614 = vmatpush2.msra.mxu0 0.0
        %3615 = vmatprep.subr.mxu0 0.0
        %3616 = vmatpush2.msra.mxu0 0.0
        %3617 = vmatprep.subr.mxu0 0.0
        %3618 = vmatpush2.msra.mxu0 0.0
        %3619 = vmatprep.subr.mxu0 0.0
        %3620 = vmatpush2.msra.mxu0 0.0
        %3621 = vmatprep.subr.mxu0 0.0
        %3622 = vmatpush2.msra.mxu0 0.0
        %3623 = vmatprep.subr.mxu0 0.0
        %3624 = vmatpush2.msra.mxu0 0.0
        %3625 = vmatprep.mubr.f32.mxu0 0.0
        %3626 = vmatmul.mubr.f32.gmra.mxu0 %v3535
        %v3627 = vpop.f32.mrf.mxu0
        %v3628 = vadd.f32 0.0, %v3627
        %v3629 = vpop.f32.mrf.mxu0
        %v3630 = vadd.f32 0.0, %v3629
        %3631 = vmatprep.mubr.f32.mxu0 0.0
        %3632 = vmatmul.mubr.f32.gmra.mxu0 %v3538
        %v3633 = vpop.f32.mrf.mxu0
        %v3634 = vadd.f32 0.0, %v3633
        %v3635 = vpop.f32.mrf.mxu0
        %v3636 = vadd.f32 0.0, %v3635
        %3637 = vmatprep.mubr.f32.mxu0 0.0
        %3638 = vmatmul.mubr.f32.gmra.mxu0 %v3541
        %v3639 = vpop.f32.mrf.mxu0
        %v3640 = vadd.f32 0.0, %v3639
        %v3641 = vpop.f32.mrf.mxu0
        %v3642 = vadd.f32 0.0, %v3641
        %3643 = vmatprep.mubr.f32.mxu0 0.0
        %3644 = vmatmul.mubr.f32.gmra.mxu0 %v3544
        %v3645 = vpop.f32.mrf.mxu0
        %v3646 = vadd.f32 0.0, %v3645
        %v3647 = vpop.f32.mrf.mxu0
        %v3648 = vadd.f32 0.0, %v3647
        %3649 = vmatprep.mubr.f32.mxu0 0.0
        %3650 = vmatmul.mubr.f32.gmra.mxu0 %v3547
        %v3651 = vpop.f32.mrf.mxu0
        %v3652 = vadd.f32 0.0, %v3651
        %v3653 = vpop.f32.mrf.mxu0
        %v3654 = vadd.f32 0.0, %v3653
        %3655 = vmatprep.mubr.f32.mxu0 0.0
        %3656 = vmatmul.mubr.f32.gmra.mxu0 %v3550
        %v3657 = vpop.f32.mrf.mxu0
        %v3658 = vadd.f32 0.0, %v3657
        %v3659 = vpop.f32.mrf.mxu0
        %v3660 = vadd.f32 0.0, %v3659
        %3661 = vmatprep.mubr.f32.mxu0 0.0
        %3662 = vmatmul.mubr.f32.gmra.mxu0 %v3553
        %v3663 = vpop.f32.mrf.mxu0
        %v3664 = vadd.f32 0.0, %v3663
        %v3665 = vpop.f32.mrf.mxu0
        %v3666 = vadd.f32 0.0, %v3665
        %3667 = vmatprep.mubr.f32.mxu0 0.0
        %3668 = vmatmul.mubr.f32.gmra.mxu0 %v3556
        %v3669 = vpop.f32.mrf.mxu0
        %v3670 = vadd.f32 0.0, %v3669
        %v3671 = vpop.f32.mrf.mxu0
        %v3672 = vadd.f32 0.0, %v3671
        %3673 = vmatprep.mubr.f32.mxu0 0.0
        %3674 = vmatmul.mubr.f32.gmra.mxu0 %v3559
        %v3675 = vpop.f32.mrf.mxu0
        %v3676 = vadd.f32 0.0, %v3675
        %v3677 = vpop.f32.mrf.mxu0
        %v3678 = vadd.f32 0.0, %v3677
        %3679 = vdwg.mxu0
        %3680 = vmatprep.subr.mxu0 0.0
        %3681 = vmatpush1.msra.mxu0 0.0
        %3682 = vmatprep.subr.mxu0 0.0
        %3683 = vmatpush1.msra.mxu0 0.0
        %3684 = vmatprep.subr.mxu0 0.0
        %3685 = vmatpush1.msra.mxu0 0.0
        %3686 = vmatprep.subr.mxu0 0.0
        %3687 = vmatpush1.msra.mxu0 0.0
        %3688 = vmatprep.subr.mxu0 0.0
        %3689 = vmatpush1.msra.mxu0 0.0
        %3690 = vmatprep.subr.mxu0 0.0
        %3691 = vmatpush1.msra.mxu0 0.0
        %3692 = vmatprep.subr.mxu0 0.0
        %3693 = vmatpush1.msra.mxu0 0.0
        %3694 = vmatprep.subr.mxu0 0.0
        %3695 = vmatpush1.msra.mxu0 0.0
        %3696 = vmatprep.subr.mxu0 0.0
        %3697 = vmatpush1.msra.mxu0 0.0
        %3698 = vmatprep.subr.mxu0 0.0
        %3699 = vmatpush1.msra.mxu0 0.0
        %3700 = vmatprep.subr.mxu0 0.0
        %3701 = vmatpush1.msra.mxu0 0.0
        %3702 = vmatprep.subr.mxu0 %v3531
        %3703 = vmatpush1.msra.mxu0 %v3530
        %3704 = vmatprep.subr.mxu0 %v3526
        %3705 = vmatpush1.msra.mxu0 %v3525
        %3706 = vmatprep.subr.mxu0 %v3521
        %3707 = vmatpush1.msra.mxu0 %v3520
        %3708 = vmatprep.subr.mxu0 %v3516
        %3709 = vmatpush1.msra.mxu0 %v3515
        %3710 = vmatprep.subr.mxu0 %v3511
        %3711 = vmatpush1.msra.mxu0 %v3510
        %3712 = vmatprep.subr.mxu0 0.0
        %3713 = vmatpush2.msra.mxu0 0.0
        %3714 = vmatprep.subr.mxu0 0.0
        %3715 = vmatpush2.msra.mxu0 0.0
        %3716 = vmatprep.subr.mxu0 0.0
        %3717 = vmatpush2.msra.mxu0 0.0
        %3718 = vmatprep.subr.mxu0 0.0
        %3719 = vmatpush2.msra.mxu0 0.0
        %3720 = vmatprep.subr.mxu0 0.0
        %3721 = vmatpush2.msra.mxu0 0.0
        %3722 = vmatprep.subr.mxu0 0.0
        %3723 = vmatpush2.msra.mxu0 0.0
        %3724 = vmatprep.subr.mxu0 0.0
        %3725 = vmatpush2.msra.mxu0 0.0
        %3726 = vmatprep.subr.mxu0 0.0
        %3727 = vmatpush2.msra.mxu0 0.0
        %3728 = vmatprep.subr.mxu0 0.0
        %3729 = vmatpush2.msra.mxu0 0.0
        %3730 = vmatprep.subr.mxu0 0.0
        %3731 = vmatpush2.msra.mxu0 0.0
        %3732 = vmatprep.subr.mxu0 0.0
        %3733 = vmatpush2.msra.mxu0 0.0
        %3734 = vmatprep.subr.mxu0 0.0
        %3735 = vmatpush2.msra.mxu0 0.0
        %3736 = vmatprep.subr.mxu0 0.0
        %3737 = vmatpush2.msra.mxu0 0.0
        %3738 = vmatprep.subr.mxu0 0.0
        %3739 = vmatpush2.msra.mxu0 0.0
        %3740 = vmatprep.subr.mxu0 0.0
        %3741 = vmatpush2.msra.mxu0 0.0
        %3742 = vmatprep.subr.mxu0 0.0
        %3743 = vmatpush2.msra.mxu0 0.0
        %3744 = vmatprep.mubr.f32.mxu0 0.0
        %3745 = vmatmul.mubr.f32.gmra.mxu0 %v3535
        %v3746 = vpop.f32.mrf.mxu0
        %v3747 = vadd.f32 0.0, %v3746
        %v3748 = vpop.f32.mrf.mxu0
        %v3749 = vadd.f32 0.0, %v3748
        %3750 = vmatprep.mubr.f32.mxu0 0.0
        %3751 = vmatmul.mubr.f32.gmra.mxu0 %v3538
        %v3752 = vpop.f32.mrf.mxu0
        %v3753 = vadd.f32 0.0, %v3752
        %v3754 = vpop.f32.mrf.mxu0
        %v3755 = vadd.f32 0.0, %v3754
        %3756 = vmatprep.mubr.f32.mxu0 0.0
        %3757 = vmatmul.mubr.f32.gmra.mxu0 %v3541
        %v3758 = vpop.f32.mrf.mxu0
        %v3759 = vadd.f32 0.0, %v3758
        %v3760 = vpop.f32.mrf.mxu0
        %v3761 = vadd.f32 0.0, %v3760
        %3762 = vmatprep.mubr.f32.mxu0 0.0
        %3763 = vmatmul.mubr.f32.gmra.mxu0 %v3544
        %v3764 = vpop.f32.mrf.mxu0
        %v3765 = vadd.f32 0.0, %v3764
        %v3766 = vpop.f32.mrf.mxu0
        %v3767 = vadd.f32 0.0, %v3766
        %3768 = vmatprep.mubr.f32.mxu0 0.0
        %3769 = vmatmul.mubr.f32.gmra.mxu0 %v3547
        %v3770 = vpop.f32.mrf.mxu0
        %v3771 = vadd.f32 0.0, %v3770
        %v3772 = vpop.f32.mrf.mxu0
        %v3773 = vadd.f32 0.0, %v3772
        %3774 = vmatprep.mubr.f32.mxu0 0.0
        %3775 = vmatmul.mubr.f32.gmra.mxu0 %v3550
        %v3776 = vpop.f32.mrf.mxu0
        %v3777 = vadd.f32 0.0, %v3776
        %v3778 = vpop.f32.mrf.mxu0
        %v3779 = vadd.f32 0.0, %v3778
        %3780 = vmatprep.mubr.f32.mxu0 0.0
        %3781 = vmatmul.mubr.f32.gmra.mxu0 %v3553
        %v3782 = vpop.f32.mrf.mxu0
        %v3783 = vadd.f32 0.0, %v3782
        %v3784 = vpop.f32.mrf.mxu0
        %v3785 = vadd.f32 0.0, %v3784
        %3786 = vmatprep.mubr.f32.mxu0 0.0
        %3787 = vmatmul.mubr.f32.gmra.mxu0 %v3556
        %v3788 = vpop.f32.mrf.mxu0
        %v3789 = vadd.f32 0.0, %v3788
        %v3790 = vpop.f32.mrf.mxu0
        %v3791 = vadd.f32 0.0, %v3790
        %3792 = vmatprep.mubr.f32.mxu0 0.0
        %3793 = vmatmul.mubr.f32.gmra.mxu0 %v3559
        %v3794 = vpop.f32.mrf.mxu0
        %v3795 = vadd.f32 0.0, %v3794
        %v3796 = vpop.f32.mrf.mxu0
        %v3797 = vadd.f32 0.0, %v3796
        %3798 = vdwg.mxu0
        %3799 = vmatprep.subr.mxu0 0.0
        %3800 = vmatpush1.msra.mxu0 0.0
        %3801 = vmatprep.subr.mxu0 0.0
        %3802 = vmatpush1.msra.mxu0 0.0
        %3803 = vmatprep.subr.mxu0 0.0
        %3804 = vmatpush1.msra.mxu0 0.0
        %3805 = vmatprep.subr.mxu0 0.0
        %3806 = vmatpush1.msra.mxu0 0.0
        %3807 = vmatprep.subr.mxu0 0.0
        %3808 = vmatpush1.msra.mxu0 0.0
        %3809 = vmatprep.subr.mxu0 0.0
        %3810 = vmatpush1.msra.mxu0 0.0
        %3811 = vmatprep.subr.mxu0 0.0
        %3812 = vmatpush1.msra.mxu0 0.0
        %3813 = vmatprep.subr.mxu0 0.0
        %3814 = vmatpush1.msra.mxu0 0.0
        %3815 = vmatprep.subr.mxu0 0.0
        %3816 = vmatpush1.msra.mxu0 0.0
        %3817 = vmatprep.subr.mxu0 0.0
        %3818 = vmatpush1.msra.mxu0 0.0
        %3819 = vmatprep.subr.mxu0 0.0
        %3820 = vmatpush1.msra.mxu0 0.0
        %3821 = vmatprep.subr.mxu0 0.0
        %3822 = vmatpush1.msra.mxu0 %v3532
        %3823 = vmatprep.subr.mxu0 0.0
        %3824 = vmatpush1.msra.mxu0 %v3527
        %3825 = vmatprep.subr.mxu0 0.0
        %3826 = vmatpush1.msra.mxu0 %v3522
        %3827 = vmatprep.subr.mxu0 0.0
        %3828 = vmatpush1.msra.mxu0 %v3517
        %3829 = vmatprep.subr.mxu0 0.0
        %3830 = vmatpush1.msra.mxu0 %v3512
        %3831 = vmatprep.subr.mxu0 0.0
        %3832 = vmatpush2.msra.mxu0 0.0
        %3833 = vmatprep.subr.mxu0 0.0
        %3834 = vmatpush2.msra.mxu0 0.0
        %3835 = vmatprep.subr.mxu0 0.0
        %3836 = vmatpush2.msra.mxu0 0.0
        %3837 = vmatprep.subr.mxu0 0.0
        %3838 = vmatpush2.msra.mxu0 0.0
        %3839 = vmatprep.subr.mxu0 0.0
        %3840 = vmatpush2.msra.mxu0 0.0
        %3841 = vmatprep.subr.mxu0 0.0
        %3842 = vmatpush2.msra.mxu0 0.0
        %3843 = vmatprep.subr.mxu0 0.0
        %3844 = vmatpush2.msra.mxu0 0.0
        %3845 = vmatprep.subr.mxu0 0.0
        %3846 = vmatpush2.msra.mxu0 0.0
        %3847 = vmatprep.subr.mxu0 0.0
        %3848 = vmatpush2.msra.mxu0 0.0
        %3849 = vmatprep.subr.mxu0 0.0
        %3850 = vmatpush2.msra.mxu0 0.0
        %3851 = vmatprep.subr.mxu0 0.0
        %3852 = vmatpush2.msra.mxu0 0.0
        %3853 = vmatprep.subr.mxu0 0.0
        %3854 = vmatpush2.msra.mxu0 0.0
        %3855 = vmatprep.subr.mxu0 0.0
        %3856 = vmatpush2.msra.mxu0 0.0
        %3857 = vmatprep.subr.mxu0 0.0
        %3858 = vmatpush2.msra.mxu0 0.0
        %3859 = vmatprep.subr.mxu0 0.0
        %3860 = vmatpush2.msra.mxu0 0.0
        %3861 = vmatprep.subr.mxu0 0.0
        %3862 = vmatpush2.msra.mxu0 0.0
        %3863 = vmatprep.mubr.f32.mxu0 0.0
        %3864 = vmatmul.mubr.f32.gmra.mxu0 %v3535
        %v3865 = vpop.f32.mrf.mxu0
        %v3866 = vadd.f32 0.0, %v3865
        %v3867 = vpop.f32.mrf.mxu0
        %3868 = vmatprep.mubr.f32.mxu0 0.0
        %3869 = vmatmul.mubr.f32.gmra.mxu0 %v3538
        %v3870 = vpop.f32.mrf.mxu0
        %v3871 = vadd.f32 0.0, %v3870
        %v3872 = vpop.f32.mrf.mxu0
        %3873 = vmatprep.mubr.f32.mxu0 0.0
        %3874 = vmatmul.mubr.f32.gmra.mxu0 %v3541
        %v3875 = vpop.f32.mrf.mxu0
        %v3876 = vadd.f32 0.0, %v3875
        %v3877 = vpop.f32.mrf.mxu0
        %3878 = vmatprep.mubr.f32.mxu0 0.0
        %3879 = vmatmul.mubr.f32.gmra.mxu0 %v3544
        %v3880 = vpop.f32.mrf.mxu0
        %v3881 = vadd.f32 0.0, %v3880
        %v3882 = vpop.f32.mrf.mxu0
        %3883 = vmatprep.mubr.f32.mxu0 0.0
        %3884 = vmatmul.mubr.f32.gmra.mxu0 %v3547
        %v3885 = vpop.f32.mrf.mxu0
        %v3886 = vadd.f32 0.0, %v3885
        %v3887 = vpop.f32.mrf.mxu0
        %3888 = vmatprep.mubr.f32.mxu0 0.0
        %3889 = vmatmul.mubr.f32.gmra.mxu0 %v3550
        %v3890 = vpop.f32.mrf.mxu0
        %v3891 = vadd.f32 0.0, %v3890
        %v3892 = vpop.f32.mrf.mxu0
        %3893 = vmatprep.mubr.f32.mxu0 0.0
        %3894 = vmatmul.mubr.f32.gmra.mxu0 %v3553
        %v3895 = vpop.f32.mrf.mxu0
        %v3896 = vadd.f32 0.0, %v3895
        %v3897 = vpop.f32.mrf.mxu0
        %3898 = vmatprep.mubr.f32.mxu0 0.0
        %3899 = vmatmul.mubr.f32.gmra.mxu0 %v3556
        %v3900 = vpop.f32.mrf.mxu0
        %v3901 = vadd.f32 0.0, %v3900
        %v3902 = vpop.f32.mrf.mxu0
        %3903 = vmatprep.mubr.f32.mxu0 0.0
        %3904 = vmatmul.mubr.f32.gmra.mxu0 %v3559
        %v3905 = vpop.f32.mrf.mxu0
        %v3906 = vadd.f32 0.0, %v3905
        %v3907 = vpop.f32.mrf.mxu0
        %3908 = vdwg.mxu0
        %3909 = vst [vmem:[#allocation3] sm:$0xff] %v3628
        %3910 = vst [vmem:[#allocation3 + $0x8] sm:$0xff] %v3630
        %3911 = vst [vmem:[#allocation3 + $0x10] sm:$0xff] %v3747
        %3912 = vst [vmem:[#allocation3 + $0x18] sm:$0xff] %v3749
        %3913 = vst.msk [vmem:[#allocation3 + $0x20] sm:$0xff] %vm639, %v3866
        %3914 = vst [vmem:[#allocation3 + $0x28] sm:$0xff] %v3634
        %3915 = vst [vmem:[#allocation3 + $0x30] sm:$0xff] %v3636
        %3916 = vst [vmem:[#allocation3 + $0x38] sm:$0xff] %v3753
        %3917 = vst [vmem:[#allocation3 + $0x40] sm:$0xff] %v3755
        %3918 = vst.msk [vmem:[#allocation3 + $0x48] sm:$0xff] %vm639, %v3871
        %3919 = vst [vmem:[#allocation3 + $0x50] sm:$0xff] %v3640
        %3920 = vst [vmem:[#allocation3 + $0x58] sm:$0xff] %v3642
        %3921 = vst [vmem:[#allocation3 + $0x60] sm:$0xff] %v3759
        %3922 = vst [vmem:[#allocation3 + $0x68] sm:$0xff] %v3761
        %3923 = vst.msk [vmem:[#allocation3 + $0x70] sm:$0xff] %vm639, %v3876
        %3924 = vst [vmem:[#allocation3 + $0x78] sm:$0xff] %v3646
        %3925 = vst [vmem:[#allocation3 + $0x80] sm:$0xff] %v3648
        %3926 = vst [vmem:[#allocation3 + $0x88] sm:$0xff] %v3765
        %3927 = vst [vmem:[#allocation3 + $0x90] sm:$0xff] %v3767
        %3928 = vst.msk [vmem:[#allocation3 + $0x98] sm:$0xff] %vm639, %v3881
        %3929 = vst [vmem:[#allocation3 + $0xa0] sm:$0xff] %v3652
        %3930 = vst [vmem:[#allocation3 + $0xa8] sm:$0xff] %v3654
        %3931 = vst [vmem:[#allocation3 + $0xb0] sm:$0xff] %v3771
        %3932 = vst [vmem:[#allocation3 + $0xb8] sm:$0xff] %v3773
        %3933 = vst.msk [vmem:[#allocation3 + $0xc0] sm:$0xff] %vm639, %v3886
        %3934 = vst [vmem:[#allocation3 + $0xc8] sm:$0xff] %v3658
        %3935 = vst [vmem:[#allocation3 + $0xd0] sm:$0xff] %v3660
        %3936 = vst [vmem:[#allocation3 + $0xd8] sm:$0xff] %v3777
        %3937 = vst [vmem:[#allocation3 + $0xe0] sm:$0xff] %v3779
        %3938 = vst.msk [vmem:[#allocation3 + $0xe8] sm:$0xff] %vm639, %v3891
        %3939 = vst [vmem:[#allocation3 + $0xf0] sm:$0xff] %v3664
        %3940 = vst [vmem:[#allocation3 + $0xf8] sm:$0xff] %v3666
        %3941 = vst [vmem:[#allocation3 + $0x100] sm:$0xff] %v3783
        %3942 = vst [vmem:[#allocation3 + $0x108] sm:$0xff] %v3785
        %3943 = vst.msk [vmem:[#allocation3 + $0x110] sm:$0xff] %vm639, %v3896
        %3944 = vst [vmem:[#allocation3 + $0x118] sm:$0xff] %v3670
        %3945 = vst [vmem:[#allocation3 + $0x120] sm:$0xff] %v3672
        %3946 = vst [vmem:[#allocation3 + $0x128] sm:$0xff] %v3789
        %3947 = vst [vmem:[#allocation3 + $0x130] sm:$0xff] %v3791
        %3948 = vst.msk [vmem:[#allocation3 + $0x138] sm:$0xff] %vm639, %v3901
        %3949 = vst [vmem:[#allocation3 + $0x140] sm:$0xff] %v3676
        %3950 = vst [vmem:[#allocation3 + $0x148] sm:$0xff] %v3678
        %3951 = vst [vmem:[#allocation3 + $0x150] sm:$0xff] %v3795
        %3952 = vst [vmem:[#allocation3 + $0x158] sm:$0xff] %v3797
        %3953 = vst.msk [vmem:[#allocation3 + $0x160] sm:$0xff] %vm639, %v3906
        %v3954 = vld [vmem:[#allocation3] sm:$0xff]
        %v3955 = vld [vmem:[#allocation3 + $0x8] sm:$0xff]
        %v3956 = vld [vmem:[#allocation3 + $0x10] sm:$0xff]
        %v3957 = vld [vmem:[#allocation3 + $0x18] sm:$0xff]
        %v3958 = vadd.f32 %v3954, 0.0
        %v3959 = vadd.f32 %v3955, 0.0
        %v3960 = vadd.f32 %v3956, 0.0
        %v3961 = vadd.f32 %v3957, 0.0
        %v3962 = vld [vmem:[#allocation3 + $0x28] sm:$0xff]
        %v3963 = vld [vmem:[#allocation3 + $0x30] sm:$0xff]
        %v3964 = vld [vmem:[#allocation3 + $0x38] sm:$0xff]
        %v3965 = vld [vmem:[#allocation3 + $0x40] sm:$0xff]
        %3970 = vrot.lane.b32.xlu0 %v3962, 127
        %v3971 = vpop.permute.xlu0 %3970
        %3972 = vrot.lane.b32.xlu0 %v3963, 127
        %v3973 = vpop.permute.xlu0 %3972
        %3974 = vrot.lane.b32.xlu0 %v3964, 127
        %v3975 = vpop.permute.xlu0 %3974
        %3976 = vrot.lane.b32.xlu0 %v3965, 127
        %v3977 = vpop.permute.xlu0 %3976
        %v3978 = vsel %vm1123, %v3971, %v3973
        %v3979 = vsel %vm1123, %v3973, %v3975
        %v3980 = vsel %vm1123, %v3975, %v3977
        %v3985 = vadd.f32 %v3958, %v3978
        %v3986 = vadd.f32 %v3959, %v3979
        %v3987 = vadd.f32 %v3960, %v3980
        %v3988 = vadd.f32 %v3961, %v3977
        %v3989 = vld [vmem:[#allocation3 + $0x50] sm:$0xff]
        %v3990 = vld [vmem:[#allocation3 + $0x58] sm:$0xff]
        %v3991 = vld [vmem:[#allocation3 + $0x60] sm:$0xff]
        %v3992 = vld [vmem:[#allocation3 + $0x68] sm:$0xff]
        %3997 = vrot.lane.b32.xlu0 %v3989, 126
        %v3998 = vpop.permute.xlu0 %3997
        %3999 = vrot.lane.b32.xlu0 %v3990, 126
        %v4000 = vpop.permute.xlu0 %3999
        %4001 = vrot.lane.b32.xlu0 %v3991, 126
        %v4002 = vpop.permute.xlu0 %4001
        %4003 = vrot.lane.b32.xlu0 %v3992, 126
        %v4004 = vpop.permute.xlu0 %4003
        %v4005 = vsel %vm1151, %v3998, %v4000
        %v4006 = vsel %vm1151, %v4000, %v4002
        %v4007 = vsel %vm1151, %v4002, %v4004
        %v4012 = vadd.f32 %v3985, %v4005
        %v4013 = vadd.f32 %v3986, %v4006
        %v4014 = vadd.f32 %v3987, %v4007
        %v4015 = vadd.f32 %v3988, %v4004
        %v4016 = vld [vmem:[#allocation3 + $0x78] sm:$0xff]
        %v4017 = vld [vmem:[#allocation3 + $0x80] sm:$0xff]
        %v4018 = vld [vmem:[#allocation3 + $0x88] sm:$0xff]
        %v4019 = vld [vmem:[#allocation3 + $0x90] sm:$0xff]
        %4024 = vrot.lane.b32.xlu0 %v4016, 110
        %v4025 = vpop.permute.xlu0 %4024
        %4026 = vrot.lane.b32.xlu0 %v4017, 110
        %v4027 = vpop.permute.xlu0 %4026
        %4028 = vrot.lane.b32.xlu0 %v4018, 110
        %v4029 = vpop.permute.xlu0 %4028
        %4030 = vrot.lane.b32.xlu0 %v4019, 110
        %v4031 = vpop.permute.xlu0 %4030
        %v4032 = vsel %vm1179, %v4025, %v4027
        %v4033 = vsel %vm1179, %v4027, %v4029
        %v4034 = vsel %vm1179, %v4029, %v4031
        %v4039 = vadd.f32 %v4012, %v4032
        %v4040 = vadd.f32 %v4013, %v4033
        %v4041 = vadd.f32 %v4014, %v4034
        %v4042 = vadd.f32 %v4015, %v4031
        %v4043 = vld [vmem:[#allocation3 + $0xa8] sm:$0xff]
        %v4044 = vld [vmem:[#allocation3 + $0xb0] sm:$0xff]
        %v4045 = vld [vmem:[#allocation3 + $0xb8] sm:$0xff]
        %4049 = vrot.lane.b32.xlu0 %v4043, 109
        %v4050 = vpop.permute.xlu0 %4049
        %4051 = vrot.lane.b32.xlu0 %v4044, 109
        %v4052 = vpop.permute.xlu0 %4051
        %4053 = vrot.lane.b32.xlu0 %v4045, 109
        %v4054 = vpop.permute.xlu0 %4053
        %v4055 = vsel %vm1203, %v4050, %v4052
        %v4056 = vsel %vm1203, %v4052, %v4054
        %v4061 = vadd.f32 %v4039, %v4050
        %v4062 = vadd.f32 %v4040, %v4055
        %v4063 = vadd.f32 %v4041, %v4056
        %v4064 = vadd.f32 %v4042, %v4054
        %v4065 = vld [vmem:[#allocation3 + $0xd0] sm:$0xff]
        %v4066 = vld [vmem:[#allocation3 + $0xd8] sm:$0xff]
        %v4067 = vld [vmem:[#allocation3 + $0xe0] sm:$0xff]
        %4071 = vrot.lane.b32.xlu0 %v4065, 108
        %v4072 = vpop.permute.xlu0 %4071
        %4073 = vrot.lane.b32.xlu0 %v4066, 108
        %v4074 = vpop.permute.xlu0 %4073
        %4075 = vrot.lane.b32.xlu0 %v4067, 108
        %v4076 = vpop.permute.xlu0 %4075
        %v4077 = vsel %vm1226, %v4072, %v4074
        %v4078 = vsel %vm1226, %v4074, %v4076
        %v4083 = vadd.f32 %v4061, %v4072
        %v4084 = vadd.f32 %v4062, %v4077
        %v4085 = vadd.f32 %v4063, %v4078
        %v4086 = vadd.f32 %v4064, %v4076
        %v4087 = vld [vmem:[#allocation3 + $0xf8] sm:$0xff]
        %v4088 = vld [vmem:[#allocation3 + $0x100] sm:$0xff]
        %v4089 = vld [vmem:[#allocation3 + $0x108] sm:$0xff]
        %4093 = vrot.lane.b32.xlu0 %v4087, 92
        %v4094 = vpop.permute.xlu0 %4093
        %4095 = vrot.lane.b32.xlu0 %v4088, 92
        %v4096 = vpop.permute.xlu0 %4095
        %4097 = vrot.lane.b32.xlu0 %v4089, 92
        %v4098 = vpop.permute.xlu0 %4097
        %v4099 = vsel %vm1249, %v4094, %v4096
        %v4100 = vsel %vm1249, %v4096, %v4098
        %v4105 = vadd.f32 %v4083, %v4094
        %v4106 = vadd.f32 %v4084, %v4099
        %v4107 = vadd.f32 %v4085, %v4100
        %v4108 = vadd.f32 %v4086, %v4098
        %v4109 = vld [vmem:[#allocation3 + $0x120] sm:$0xff]
        %v4110 = vld [vmem:[#allocation3 + $0x128] sm:$0xff]
        %v4111 = vld [vmem:[#allocation3 + $0x130] sm:$0xff]
        %4115 = vrot.lane.b32.xlu0 %v4109, 91
        %v4116 = vpop.permute.xlu0 %4115
        %4117 = vrot.lane.b32.xlu0 %v4110, 91
        %v4118 = vpop.permute.xlu0 %4117
        %4119 = vrot.lane.b32.xlu0 %v4111, 91
        %v4120 = vpop.permute.xlu0 %4119
        %v4121 = vsel %vm1272, %v4116, %v4118
        %v4122 = vsel %vm1272, %v4118, %v4120
        %v4127 = vadd.f32 %v4105, %v4116
        %v4128 = vadd.f32 %v4106, %v4121
        %v4129 = vadd.f32 %v4107, %v4122
        %v4130 = vadd.f32 %v4108, %v4120
        %v4131 = vld [vmem:[#allocation3 + $0x148] sm:$0xff]
        %v4132 = vld [vmem:[#allocation3 + $0x150] sm:$0xff]
        %v4133 = vld [vmem:[#allocation3 + $0x158] sm:$0xff]
        %4137 = vrot.lane.b32.xlu0 %v4131, 90
        %v4138 = vpop.permute.xlu0 %4137
        %4139 = vrot.lane.b32.xlu0 %v4132, 90
        %v4140 = vpop.permute.xlu0 %4139
        %4141 = vrot.lane.b32.xlu0 %v4133, 90
        %v4142 = vpop.permute.xlu0 %4141
        %v4143 = vsel %vm1295, %v4138, %v4140
        %v4144 = vsel %vm1295, %v4140, %v4142
        %v4149 = vadd.f32 %v4127, %v4138
        %v4150 = vadd.f32 %v4128, %v4143
        %v4151 = vadd.f32 %v4129, %v4144
        %v4152 = vadd.f32 %v4130, %v4142
        %4154 = vset.pattern.permute.xlu0 0
        %4155 = vperm.xlu0 %4154, %v3507
        %v4156 = vpop.permute.xlu0 %4155
        %v4158 = vadd.f32 %v4149, %v4156
        %v4159 = vadd.f32 %v4150, %v4156
        %v4160 = vadd.f32 %v4151, %v4156
        %v4161 = vadd.f32 %v4152, %v4156
        %v4162 = vmax.f32 %v4158, 0.0
        %v4163 = vmax.f32 %v4159, 0.0
        %v4164 = vmax.f32 %v4160, 0.0
        %v4165 = vmax.f32 %v4161, 0.0
        %v4166 = vld [vmem:[%s1] sm:$0x7]
        %v4168 = vlaneseq
        %v4169 = vshrl.u32 %v4168, 7
        %v4170 = vsub.s32 0, %v4169
        %v4171 = vrot.slane %v4166, %v4170
        %v4172 = vlaneseq
        %v4173 = vshrl.u32 %v4172, 7
        %v4174 = vsub.s32 1, %v4173
        %v4175 = vrot.slane %v4166, %v4174
        %v4176 = vlaneseq
        %v4177 = vshrl.u32 %v4176, 7
        %v4178 = vsub.s32 2, %v4177
        %v4179 = vrot.slane %v4166, %v4178
        %4180 = vrot.lane.b32.xlu0 %v4171, 109
        %v4181 = vpop.permute.xlu0 %4180
        %4182 = vrot.lane.b32.xlu0 %v4175, 109
        %v4183 = vpop.permute.xlu0 %4182
        %4184 = vrot.lane.b32.xlu0 %v4179, 109
        %v4185 = vpop.permute.xlu0 %4184
        %v4186 = vsel %vm1203, %v4181, %v4183
        %v4187 = vsel %vm1203, %v4183, %v4185
        %v4192 = vmul.f32 %v4162, %v4181
        %v4193 = vmul.f32 %v4163, %v4186
        %v4194 = vmul.f32 %v4164, %v4187
        %v4195 = vmul.f32 %v4165, %v4185
        %4200 = vrot.lane.b32.xlu0 %v4192, 19
        %v4201 = vpop.permute.xlu0 %4200
        %4202 = vrot.lane.b32.xlu0 %v4193, 19
        %v4203 = vpop.permute.xlu0 %4202
        %4204 = vrot.lane.b32.xlu0 %v4194, 19
        %v4205 = vpop.permute.xlu0 %4204
        %4206 = vrot.lane.b32.xlu0 %v4195, 19
        %v4207 = vpop.permute.xlu0 %4206
        %v4208 = vsel %vm1361, %v4201, %v4203
        %v4209 = vsel %vm1361, %v4203, %v4205
        %v4210 = vsel %vm1361, %v4205, %v4207
        %4214 = vst [vmem:[#allocation2 + $0xd0] sm:$0xff] %v4208
        %4215 = vst [vmem:[#allocation2 + $0xd8] sm:$0xff] %v4209
        %4216 = vst.msk [vmem:[#allocation2 + $0xe0] sm:$0xff] %vm639, %v4210
        %v4217 = vld [vmem:[%s7] sm:$0xff]
        %v4218 = vld [vmem:[%s7 + $0x8] sm:$0xff]
        %v4219 = vld [vmem:[%s7 + $0x10] sm:$0xff]
        %v4220 = vld [vmem:[%s7 + $0x18] sm:$0xff]
        %v4221 = vld [vmem:[%s7 + $0x20] sm:$0xff]
        %v4222 = vld [vmem:[%s7 + $0x28] sm:$0xff]
        %v4223 = vld [vmem:[%s7 + $0x30] sm:$0xff]
        %v4224 = vld [vmem:[%s7 + $0x38] sm:$0xff]
        %v4225 = vld [vmem:[%s7 + $0x40] sm:$0xff]
        %v4226 = vld [vmem:[%s15] sm:$0xff]
        %v4227 = vld [vmem:[#allocation2] sm:$0xff]
        %v4228 = vld [vmem:[#allocation2 + $0x8] sm:$0xff]
        %v4229 = vld [vmem:[#allocation2 + $0x10] sm:$0xff]
        %v4230 = vld [vmem:[#allocation2 + $0x18] sm:$0xff]
        %v4231 = vld [vmem:[#allocation2 + $0x20] sm:$0xff]
        %v4232 = vld [vmem:[#allocation2 + $0x28] sm:$0xff]
        %v4233 = vld [vmem:[#allocation2 + $0x30] sm:$0xff]
        %v4234 = vld [vmem:[#allocation2 + $0x38] sm:$0xff]
        %v4235 = vld [vmem:[#allocation2 + $0x40] sm:$0xff]
        %v4236 = vld [vmem:[#allocation2 + $0x48] sm:$0xff]
        %v4237 = vld [vmem:[#allocation2 + $0x50] sm:$0xff]
        %v4238 = vld [vmem:[#allocation2 + $0x58] sm:$0xff]
        %v4239 = vld [vmem:[#allocation2 + $0x60] sm:$0xff]
        %v4240 = vld [vmem:[#allocation2 + $0x68] sm:$0xff]
        %v4241 = vld [vmem:[#allocation2 + $0x70] sm:$0xff]
        %v4242 = vld [vmem:[#allocation2 + $0x78] sm:$0xff]
        %v4243 = vld [vmem:[#allocation2 + $0x80] sm:$0xff]
        %v4244 = vld [vmem:[#allocation2 + $0x88] sm:$0xff]
        %v4245 = vld [vmem:[#allocation2 + $0x90] sm:$0xff]
        %v4246 = vld [vmem:[#allocation2 + $0x98] sm:$0xff]
        %v4247 = vld [vmem:[#allocation2 + $0xa0] sm:$0xff]
        %v4248 = vld [vmem:[#allocation2 + $0xa8] sm:$0xff]
        %v4249 = vld [vmem:[#allocation2 + $0xb0] sm:$0xff]
        %v4250 = vld [vmem:[#allocation2 + $0xb8] sm:$0xff]
        %v4251 = vld [vmem:[#allocation2 + $0xc0] sm:$0xff]
        %v4252 = vld [vmem:[#allocation2 + $0xc8] sm:$0xff]
        %v4253 = vld [vmem:[#allocation2 + $0xd0] sm:$0xff]
        %v4254 = vld [vmem:[#allocation2 + $0xd8] sm:$0xff]
        %v4255 = vld [vmem:[#allocation2 + $0xe0] sm:$0xff]
        %v4256 = vld [vmem:[#allocation2 + $0xe8] sm:$0xff]
        %vm4257 = vcmask 392192
        %v4259 = vsel %vm4257, %v4217, 0
        %v4262 = vsel %vm4257, %v4218, 0
        %v4265 = vsel %vm4257, %v4219, 0
        %v4268 = vsel %vm4257, %v4220, 0
        %v4271 = vsel %vm4257, %v4221, 0
        %v4274 = vsel %vm4257, %v4222, 0
        %v4277 = vsel %vm4257, %v4223, 0
        %v4280 = vsel %vm4257, %v4224, 0
        %v4283 = vsel %vm4257, %v4225, 0
        %4285 = vmatprep.subr.mxu0 0.0
        %4286 = vmatpush1.msra.mxu0 0.0
        %4287 = vmatprep.subr.mxu0 0.0
        %4288 = vmatpush1.msra.mxu0 0.0
        %4289 = vmatprep.subr.mxu0 0.0
        %4290 = vmatpush1.msra.mxu0 0.0
        %4291 = vmatprep.subr.mxu0 0.0
        %4292 = vmatpush1.msra.mxu0 0.0
        %4293 = vmatprep.subr.mxu0 0.0
        %4294 = vmatpush1.msra.mxu0 0.0
        %4295 = vmatprep.subr.mxu0 0.0
        %4296 = vmatpush1.msra.mxu0 0.0
        %4297 = vmatprep.subr.mxu0 0.0
        %4298 = vmatpush1.msra.mxu0 0.0
        %4299 = vmatprep.subr.mxu0 0.0
        %4300 = vmatpush1.msra.mxu0 0.0
        %4301 = vmatprep.subr.mxu0 0.0
        %4302 = vmatpush1.msra.mxu0 0.0
        %4303 = vmatprep.subr.mxu0 0.0
        %4304 = vmatpush1.msra.mxu0 0.0
        %4305 = vmatprep.subr.mxu0 %v4253
        %4306 = vmatpush1.msra.mxu0 %v4252
        %4307 = vmatprep.subr.mxu0 %v4248
        %4308 = vmatpush1.msra.mxu0 %v4247
        %4309 = vmatprep.subr.mxu0 %v4243
        %4310 = vmatpush1.msra.mxu0 %v4242
        %4311 = vmatprep.subr.mxu0 %v4238
        %4312 = vmatpush1.msra.mxu0 %v4237
        %4313 = vmatprep.subr.mxu0 %v4233
        %4314 = vmatpush1.msra.mxu0 %v4232
        %4315 = vmatprep.subr.mxu0 %v4228
        %4316 = vmatpush1.msra.mxu0 %v4227
        %4317 = vmatprep.subr.mxu0 0.0
        %4318 = vmatpush2.msra.mxu0 0.0
        %4319 = vmatprep.subr.mxu0 0.0
        %4320 = vmatpush2.msra.mxu0 0.0
        %4321 = vmatprep.subr.mxu0 0.0
        %4322 = vmatpush2.msra.mxu0 0.0
        %4323 = vmatprep.subr.mxu0 0.0
        %4324 = vmatpush2.msra.mxu0 0.0
        %4325 = vmatprep.subr.mxu0 0.0
        %4326 = vmatpush2.msra.mxu0 0.0
        %4327 = vmatprep.subr.mxu0 0.0
        %4328 = vmatpush2.msra.mxu0 0.0
        %4329 = vmatprep.subr.mxu0 0.0
        %4330 = vmatpush2.msra.mxu0 0.0
        %4331 = vmatprep.subr.mxu0 0.0
        %4332 = vmatpush2.msra.mxu0 0.0
        %4333 = vmatprep.subr.mxu0 0.0
        %4334 = vmatpush2.msra.mxu0 0.0
        %4335 = vmatprep.subr.mxu0 0.0
        %4336 = vmatpush2.msra.mxu0 0.0
        %4337 = vmatprep.subr.mxu0 0.0
        %4338 = vmatpush2.msra.mxu0 0.0
        %4339 = vmatprep.subr.mxu0 0.0
        %4340 = vmatpush2.msra.mxu0 0.0
        %4341 = vmatprep.subr.mxu0 0.0
        %4342 = vmatpush2.msra.mxu0 0.0
        %4343 = vmatprep.subr.mxu0 0.0
        %4344 = vmatpush2.msra.mxu0 0.0
        %4345 = vmatprep.subr.mxu0 0.0
        %4346 = vmatpush2.msra.mxu0 0.0
        %4347 = vmatprep.subr.mxu0 0.0
        %4348 = vmatpush2.msra.mxu0 0.0
        %4349 = vmatprep.mubr.f32.mxu0 0.0
        %4350 = vmatmul.mubr.f32.gmra.mxu0 %v4259
        %v4351 = vpop.f32.mrf.mxu0
        %v4352 = vadd.f32 0.0, %v4351
        %v4353 = vpop.f32.mrf.mxu0
        %v4354 = vadd.f32 0.0, %v4353
        %4355 = vmatprep.mubr.f32.mxu0 0.0
        %4356 = vmatmul.mubr.f32.gmra.mxu0 %v4262
        %v4357 = vpop.f32.mrf.mxu0
        %v4358 = vadd.f32 0.0, %v4357
        %v4359 = vpop.f32.mrf.mxu0
        %v4360 = vadd.f32 0.0, %v4359
        %4361 = vmatprep.mubr.f32.mxu0 0.0
        %4362 = vmatmul.mubr.f32.gmra.mxu0 %v4265
        %v4363 = vpop.f32.mrf.mxu0
        %v4364 = vadd.f32 0.0, %v4363
        %v4365 = vpop.f32.mrf.mxu0
        %v4366 = vadd.f32 0.0, %v4365
        %4367 = vmatprep.mubr.f32.mxu0 0.0
        %4368 = vmatmul.mubr.f32.gmra.mxu0 %v4268
        %v4369 = vpop.f32.mrf.mxu0
        %v4370 = vadd.f32 0.0, %v4369
        %v4371 = vpop.f32.mrf.mxu0
        %v4372 = vadd.f32 0.0, %v4371
        %4373 = vmatprep.mubr.f32.mxu0 0.0
        %4374 = vmatmul.mubr.f32.gmra.mxu0 %v4271
        %v4375 = vpop.f32.mrf.mxu0
        %v4376 = vadd.f32 0.0, %v4375
        %v4377 = vpop.f32.mrf.mxu0
        %v4378 = vadd.f32 0.0, %v4377
        %4379 = vmatprep.mubr.f32.mxu0 0.0
        %4380 = vmatmul.mubr.f32.gmra.mxu0 %v4274
        %v4381 = vpop.f32.mrf.mxu0
        %v4382 = vadd.f32 0.0, %v4381
        %v4383 = vpop.f32.mrf.mxu0
        %v4384 = vadd.f32 0.0, %v4383
        %4385 = vmatprep.mubr.f32.mxu0 0.0
        %4386 = vmatmul.mubr.f32.gmra.mxu0 %v4277
        %v4387 = vpop.f32.mrf.mxu0
        %v4388 = vadd.f32 0.0, %v4387
        %v4389 = vpop.f32.mrf.mxu0
        %v4390 = vadd.f32 0.0, %v4389
        %4391 = vmatprep.mubr.f32.mxu0 0.0
        %4392 = vmatmul.mubr.f32.gmra.mxu0 %v4280
        %v4393 = vpop.f32.mrf.mxu0
        %v4394 = vadd.f32 0.0, %v4393
        %v4395 = vpop.f32.mrf.mxu0
        %v4396 = vadd.f32 0.0, %v4395
        %4397 = vmatprep.mubr.f32.mxu0 0.0
        %4398 = vmatmul.mubr.f32.gmra.mxu0 %v4283
        %v4399 = vpop.f32.mrf.mxu0
        %v4400 = vadd.f32 0.0, %v4399
        %v4401 = vpop.f32.mrf.mxu0
        %v4402 = vadd.f32 0.0, %v4401
        %4403 = vdwg.mxu0
        %4404 = vmatprep.subr.mxu0 0.0
        %4405 = vmatpush1.msra.mxu0 0.0
        %4406 = vmatprep.subr.mxu0 0.0
        %4407 = vmatpush1.msra.mxu0 0.0
        %4408 = vmatprep.subr.mxu0 0.0
        %4409 = vmatpush1.msra.mxu0 0.0
        %4410 = vmatprep.subr.mxu0 0.0
        %4411 = vmatpush1.msra.mxu0 0.0
        %4412 = vmatprep.subr.mxu0 0.0
        %4413 = vmatpush1.msra.mxu0 0.0
        %4414 = vmatprep.subr.mxu0 0.0
        %4415 = vmatpush1.msra.mxu0 0.0
        %4416 = vmatprep.subr.mxu0 0.0
        %4417 = vmatpush1.msra.mxu0 0.0
        %4418 = vmatprep.subr.mxu0 0.0
        %4419 = vmatpush1.msra.mxu0 0.0
        %4420 = vmatprep.subr.mxu0 0.0
        %4421 = vmatpush1.msra.mxu0 0.0
        %4422 = vmatprep.subr.mxu0 0.0
        %4423 = vmatpush1.msra.mxu0 0.0
        %4424 = vmatprep.subr.mxu0 %v4255
        %4425 = vmatpush1.msra.mxu0 %v4254
        %4426 = vmatprep.subr.mxu0 %v4250
        %4427 = vmatpush1.msra.mxu0 %v4249
        %4428 = vmatprep.subr.mxu0 %v4245
        %4429 = vmatpush1.msra.mxu0 %v4244
        %4430 = vmatprep.subr.mxu0 %v4240
        %4431 = vmatpush1.msra.mxu0 %v4239
        %4432 = vmatprep.subr.mxu0 %v4235
        %4433 = vmatpush1.msra.mxu0 %v4234
        %4434 = vmatprep.subr.mxu0 %v4230
        %4435 = vmatpush1.msra.mxu0 %v4229
        %4436 = vmatprep.subr.mxu0 0.0
        %4437 = vmatpush2.msra.mxu0 0.0
        %4438 = vmatprep.subr.mxu0 0.0
        %4439 = vmatpush2.msra.mxu0 0.0
        %4440 = vmatprep.subr.mxu0 0.0
        %4441 = vmatpush2.msra.mxu0 0.0
        %4442 = vmatprep.subr.mxu0 0.0
        %4443 = vmatpush2.msra.mxu0 0.0
        %4444 = vmatprep.subr.mxu0 0.0
        %4445 = vmatpush2.msra.mxu0 0.0
        %4446 = vmatprep.subr.mxu0 0.0
        %4447 = vmatpush2.msra.mxu0 0.0
        %4448 = vmatprep.subr.mxu0 0.0
        %4449 = vmatpush2.msra.mxu0 0.0
        %4450 = vmatprep.subr.mxu0 0.0
        %4451 = vmatpush2.msra.mxu0 0.0
        %4452 = vmatprep.subr.mxu0 0.0
        %4453 = vmatpush2.msra.mxu0 0.0
        %4454 = vmatprep.subr.mxu0 0.0
        %4455 = vmatpush2.msra.mxu0 0.0
        %4456 = vmatprep.subr.mxu0 0.0
        %4457 = vmatpush2.msra.mxu0 0.0
        %4458 = vmatprep.subr.mxu0 0.0
        %4459 = vmatpush2.msra.mxu0 0.0
        %4460 = vmatprep.subr.mxu0 0.0
        %4461 = vmatpush2.msra.mxu0 0.0
        %4462 = vmatprep.subr.mxu0 0.0
        %4463 = vmatpush2.msra.mxu0 0.0
        %4464 = vmatprep.subr.mxu0 0.0
        %4465 = vmatpush2.msra.mxu0 0.0
        %4466 = vmatprep.subr.mxu0 0.0
        %4467 = vmatpush2.msra.mxu0 0.0
        %4468 = vmatprep.mubr.f32.mxu0 0.0
        %4469 = vmatmul.mubr.f32.gmra.mxu0 %v4259
        %v4470 = vpop.f32.mrf.mxu0
        %v4471 = vadd.f32 0.0, %v4470
        %v4472 = vpop.f32.mrf.mxu0
        %v4473 = vadd.f32 0.0, %v4472
        %4474 = vmatprep.mubr.f32.mxu0 0.0
        %4475 = vmatmul.mubr.f32.gmra.mxu0 %v4262
        %v4476 = vpop.f32.mrf.mxu0
        %v4477 = vadd.f32 0.0, %v4476
        %v4478 = vpop.f32.mrf.mxu0
        %v4479 = vadd.f32 0.0, %v4478
        %4480 = vmatprep.mubr.f32.mxu0 0.0
        %4481 = vmatmul.mubr.f32.gmra.mxu0 %v4265
        %v4482 = vpop.f32.mrf.mxu0
        %v4483 = vadd.f32 0.0, %v4482
        %v4484 = vpop.f32.mrf.mxu0
        %v4485 = vadd.f32 0.0, %v4484
        %4486 = vmatprep.mubr.f32.mxu0 0.0
        %4487 = vmatmul.mubr.f32.gmra.mxu0 %v4268
        %v4488 = vpop.f32.mrf.mxu0
        %v4489 = vadd.f32 0.0, %v4488
        %v4490 = vpop.f32.mrf.mxu0
        %v4491 = vadd.f32 0.0, %v4490
        %4492 = vmatprep.mubr.f32.mxu0 0.0
        %4493 = vmatmul.mubr.f32.gmra.mxu0 %v4271
        %v4494 = vpop.f32.mrf.mxu0
        %v4495 = vadd.f32 0.0, %v4494
        %v4496 = vpop.f32.mrf.mxu0
        %v4497 = vadd.f32 0.0, %v4496
        %4498 = vmatprep.mubr.f32.mxu0 0.0
        %4499 = vmatmul.mubr.f32.gmra.mxu0 %v4274
        %v4500 = vpop.f32.mrf.mxu0
        %v4501 = vadd.f32 0.0, %v4500
        %v4502 = vpop.f32.mrf.mxu0
        %v4503 = vadd.f32 0.0, %v4502
        %4504 = vmatprep.mubr.f32.mxu0 0.0
        %4505 = vmatmul.mubr.f32.gmra.mxu0 %v4277
        %v4506 = vpop.f32.mrf.mxu0
        %v4507 = vadd.f32 0.0, %v4506
        %v4508 = vpop.f32.mrf.mxu0
        %v4509 = vadd.f32 0.0, %v4508
        %4510 = vmatprep.mubr.f32.mxu0 0.0
        %4511 = vmatmul.mubr.f32.gmra.mxu0 %v4280
        %v4512 = vpop.f32.mrf.mxu0
        %v4513 = vadd.f32 0.0, %v4512
        %v4514 = vpop.f32.mrf.mxu0
        %v4515 = vadd.f32 0.0, %v4514
        %4516 = vmatprep.mubr.f32.mxu0 0.0
        %4517 = vmatmul.mubr.f32.gmra.mxu0 %v4283
        %v4518 = vpop.f32.mrf.mxu0
        %v4519 = vadd.f32 0.0, %v4518
        %v4520 = vpop.f32.mrf.mxu0
        %v4521 = vadd.f32 0.0, %v4520
        %4522 = vdwg.mxu0
        %4523 = vmatprep.subr.mxu0 0.0
        %4524 = vmatpush1.msra.mxu0 0.0
        %4525 = vmatprep.subr.mxu0 0.0
        %4526 = vmatpush1.msra.mxu0 0.0
        %4527 = vmatprep.subr.mxu0 0.0
        %4528 = vmatpush1.msra.mxu0 0.0
        %4529 = vmatprep.subr.mxu0 0.0
        %4530 = vmatpush1.msra.mxu0 0.0
        %4531 = vmatprep.subr.mxu0 0.0
        %4532 = vmatpush1.msra.mxu0 0.0
        %4533 = vmatprep.subr.mxu0 0.0
        %4534 = vmatpush1.msra.mxu0 0.0
        %4535 = vmatprep.subr.mxu0 0.0
        %4536 = vmatpush1.msra.mxu0 0.0
        %4537 = vmatprep.subr.mxu0 0.0
        %4538 = vmatpush1.msra.mxu0 0.0
        %4539 = vmatprep.subr.mxu0 0.0
        %4540 = vmatpush1.msra.mxu0 0.0
        %4541 = vmatprep.subr.mxu0 0.0
        %4542 = vmatpush1.msra.mxu0 0.0
        %4543 = vmatprep.subr.mxu0 0.0
        %4544 = vmatpush1.msra.mxu0 %v4256
        %4545 = vmatprep.subr.mxu0 0.0
        %4546 = vmatpush1.msra.mxu0 %v4251
        %4547 = vmatprep.subr.mxu0 0.0
        %4548 = vmatpush1.msra.mxu0 %v4246
        %4549 = vmatprep.subr.mxu0 0.0
        %4550 = vmatpush1.msra.mxu0 %v4241
        %4551 = vmatprep.subr.mxu0 0.0
        %4552 = vmatpush1.msra.mxu0 %v4236
        %4553 = vmatprep.subr.mxu0 0.0
        %4554 = vmatpush1.msra.mxu0 %v4231
        %4555 = vmatprep.subr.mxu0 0.0
        %4556 = vmatpush2.msra.mxu0 0.0
        %4557 = vmatprep.subr.mxu0 0.0
        %4558 = vmatpush2.msra.mxu0 0.0
        %4559 = vmatprep.subr.mxu0 0.0
        %4560 = vmatpush2.msra.mxu0 0.0
        %4561 = vmatprep.subr.mxu0 0.0
        %4562 = vmatpush2.msra.mxu0 0.0
        %4563 = vmatprep.subr.mxu0 0.0
        %4564 = vmatpush2.msra.mxu0 0.0
        %4565 = vmatprep.subr.mxu0 0.0
        %4566 = vmatpush2.msra.mxu0 0.0
        %4567 = vmatprep.subr.mxu0 0.0
        %4568 = vmatpush2.msra.mxu0 0.0
        %4569 = vmatprep.subr.mxu0 0.0
        %4570 = vmatpush2.msra.mxu0 0.0
        %4571 = vmatprep.subr.mxu0 0.0
        %4572 = vmatpush2.msra.mxu0 0.0
        %4573 = vmatprep.subr.mxu0 0.0
        %4574 = vmatpush2.msra.mxu0 0.0
        %4575 = vmatprep.subr.mxu0 0.0
        %4576 = vmatpush2.msra.mxu0 0.0
        %4577 = vmatprep.subr.mxu0 0.0
        %4578 = vmatpush2.msra.mxu0 0.0
        %4579 = vmatprep.subr.mxu0 0.0
        %4580 = vmatpush2.msra.mxu0 0.0
        %4581 = vmatprep.subr.mxu0 0.0
        %4582 = vmatpush2.msra.mxu0 0.0
        %4583 = vmatprep.subr.mxu0 0.0
        %4584 = vmatpush2.msra.mxu0 0.0
        %4585 = vmatprep.subr.mxu0 0.0
        %4586 = vmatpush2.msra.mxu0 0.0
        %4587 = vmatprep.mubr.f32.mxu0 0.0
        %4588 = vmatmul.mubr.f32.gmra.mxu0 %v4259
        %v4589 = vpop.f32.mrf.mxu0
        %v4590 = vadd.f32 0.0, %v4589
        %v4591 = vpop.f32.mrf.mxu0
        %4592 = vmatprep.mubr.f32.mxu0 0.0
        %4593 = vmatmul.mubr.f32.gmra.mxu0 %v4262
        %v4594 = vpop.f32.mrf.mxu0
        %v4595 = vadd.f32 0.0, %v4594
        %v4596 = vpop.f32.mrf.mxu0
        %4597 = vmatprep.mubr.f32.mxu0 0.0
        %4598 = vmatmul.mubr.f32.gmra.mxu0 %v4265
        %v4599 = vpop.f32.mrf.mxu0
        %v4600 = vadd.f32 0.0, %v4599
        %v4601 = vpop.f32.mrf.mxu0
        %4602 = vmatprep.mubr.f32.mxu0 0.0
        %4603 = vmatmul.mubr.f32.gmra.mxu0 %v4268
        %v4604 = vpop.f32.mrf.mxu0
        %v4605 = vadd.f32 0.0, %v4604
        %v4606 = vpop.f32.mrf.mxu0
        %4607 = vmatprep.mubr.f32.mxu0 0.0
        %4608 = vmatmul.mubr.f32.gmra.mxu0 %v4271
        %v4609 = vpop.f32.mrf.mxu0
        %v4610 = vadd.f32 0.0, %v4609
        %v4611 = vpop.f32.mrf.mxu0
        %4612 = vmatprep.mubr.f32.mxu0 0.0
        %4613 = vmatmul.mubr.f32.gmra.mxu0 %v4274
        %v4614 = vpop.f32.mrf.mxu0
        %v4615 = vadd.f32 0.0, %v4614
        %v4616 = vpop.f32.mrf.mxu0
        %4617 = vmatprep.mubr.f32.mxu0 0.0
        %4618 = vmatmul.mubr.f32.gmra.mxu0 %v4277
        %v4619 = vpop.f32.mrf.mxu0
        %v4620 = vadd.f32 0.0, %v4619
        %v4621 = vpop.f32.mrf.mxu0
        %4622 = vmatprep.mubr.f32.mxu0 0.0
        %4623 = vmatmul.mubr.f32.gmra.mxu0 %v4280
        %v4624 = vpop.f32.mrf.mxu0
        %v4625 = vadd.f32 0.0, %v4624
        %v4626 = vpop.f32.mrf.mxu0
        %4627 = vmatprep.mubr.f32.mxu0 0.0
        %4628 = vmatmul.mubr.f32.gmra.mxu0 %v4283
        %v4629 = vpop.f32.mrf.mxu0
        %v4630 = vadd.f32 0.0, %v4629
        %v4631 = vpop.f32.mrf.mxu0
        %4632 = vdwg.mxu0
        %4633 = vst [vmem:[#allocation3] sm:$0xff] %v4352
        %4634 = vst [vmem:[#allocation3 + $0x8] sm:$0xff] %v4354
        %4635 = vst [vmem:[#allocation3 + $0x10] sm:$0xff] %v4471
        %4636 = vst [vmem:[#allocation3 + $0x18] sm:$0xff] %v4473
        %4637 = vst.msk [vmem:[#allocation3 + $0x20] sm:$0xff] %vm639, %v4590
        %4638 = vst [vmem:[#allocation3 + $0x28] sm:$0xff] %v4358
        %4639 = vst [vmem:[#allocation3 + $0x30] sm:$0xff] %v4360
        %4640 = vst [vmem:[#allocation3 + $0x38] sm:$0xff] %v4477
        %4641 = vst [vmem:[#allocation3 + $0x40] sm:$0xff] %v4479
        %4642 = vst.msk [vmem:[#allocation3 + $0x48] sm:$0xff] %vm639, %v4595
        %4643 = vst [vmem:[#allocation3 + $0x50] sm:$0xff] %v4364
        %4644 = vst [vmem:[#allocation3 + $0x58] sm:$0xff] %v4366
        %4645 = vst [vmem:[#allocation3 + $0x60] sm:$0xff] %v4483
        %4646 = vst [vmem:[#allocation3 + $0x68] sm:$0xff] %v4485
        %4647 = vst.msk [vmem:[#allocation3 + $0x70] sm:$0xff] %vm639, %v4600
        %4648 = vst [vmem:[#allocation3 + $0x78] sm:$0xff] %v4370
        %4649 = vst [vmem:[#allocation3 + $0x80] sm:$0xff] %v4372
        %4650 = vst [vmem:[#allocation3 + $0x88] sm:$0xff] %v4489
        %4651 = vst [vmem:[#allocation3 + $0x90] sm:$0xff] %v4491
        %4652 = vst.msk [vmem:[#allocation3 + $0x98] sm:$0xff] %vm639, %v4605
        %4653 = vst [vmem:[#allocation3 + $0xa0] sm:$0xff] %v4376
        %4654 = vst [vmem:[#allocation3 + $0xa8] sm:$0xff] %v4378
        %4655 = vst [vmem:[#allocation3 + $0xb0] sm:$0xff] %v4495
        %4656 = vst [vmem:[#allocation3 + $0xb8] sm:$0xff] %v4497
        %4657 = vst.msk [vmem:[#allocation3 + $0xc0] sm:$0xff] %vm639, %v4610
        %4658 = vst [vmem:[#allocation3 + $0xc8] sm:$0xff] %v4382
        %4659 = vst [vmem:[#allocation3 + $0xd0] sm:$0xff] %v4384
        %4660 = vst [vmem:[#allocation3 + $0xd8] sm:$0xff] %v4501
        %4661 = vst [vmem:[#allocation3 + $0xe0] sm:$0xff] %v4503
        %4662 = vst.msk [vmem:[#allocation3 + $0xe8] sm:$0xff] %vm639, %v4615
        %4663 = vst [vmem:[#allocation3 + $0xf0] sm:$0xff] %v4388
        %4664 = vst [vmem:[#allocation3 + $0xf8] sm:$0xff] %v4390
        %4665 = vst [vmem:[#allocation3 + $0x100] sm:$0xff] %v4507
        %4666 = vst [vmem:[#allocation3 + $0x108] sm:$0xff] %v4509
        %4667 = vst.msk [vmem:[#allocation3 + $0x110] sm:$0xff] %vm639, %v4620
        %4668 = vst [vmem:[#allocation3 + $0x118] sm:$0xff] %v4394
        %4669 = vst [vmem:[#allocation3 + $0x120] sm:$0xff] %v4396
        %4670 = vst [vmem:[#allocation3 + $0x128] sm:$0xff] %v4513
        %4671 = vst [vmem:[#allocation3 + $0x130] sm:$0xff] %v4515
        %4672 = vst.msk [vmem:[#allocation3 + $0x138] sm:$0xff] %vm639, %v4625
        %4673 = vst [vmem:[#allocation3 + $0x140] sm:$0xff] %v4400
        %4674 = vst [vmem:[#allocation3 + $0x148] sm:$0xff] %v4402
        %4675 = vst [vmem:[#allocation3 + $0x150] sm:$0xff] %v4519
        %4676 = vst [vmem:[#allocation3 + $0x158] sm:$0xff] %v4521
        %4677 = vst.msk [vmem:[#allocation3 + $0x160] sm:$0xff] %vm639, %v4630
        %v4678 = vld [vmem:[#allocation3] sm:$0xff]
        %v4679 = vld [vmem:[#allocation3 + $0x8] sm:$0xff]
        %v4680 = vld [vmem:[#allocation3 + $0x10] sm:$0xff]
        %v4681 = vld [vmem:[#allocation3 + $0x18] sm:$0xff]
        %v4682 = vadd.f32 %v4678, 0.0
        %v4683 = vadd.f32 %v4679, 0.0
        %v4684 = vadd.f32 %v4680, 0.0
        %v4685 = vadd.f32 %v4681, 0.0
        %v4686 = vld [vmem:[#allocation3 + $0x28] sm:$0xff]
        %v4687 = vld [vmem:[#allocation3 + $0x30] sm:$0xff]
        %v4688 = vld [vmem:[#allocation3 + $0x38] sm:$0xff]
        %v4689 = vld [vmem:[#allocation3 + $0x40] sm:$0xff]
        %4694 = vrot.lane.b32.xlu0 %v4686, 127
        %v4695 = vpop.permute.xlu0 %4694
        %4696 = vrot.lane.b32.xlu0 %v4687, 127
        %v4697 = vpop.permute.xlu0 %4696
        %4698 = vrot.lane.b32.xlu0 %v4688, 127
        %v4699 = vpop.permute.xlu0 %4698
        %4700 = vrot.lane.b32.xlu0 %v4689, 127
        %v4701 = vpop.permute.xlu0 %4700
        %v4702 = vsel %vm1123, %v4695, %v4697
        %v4703 = vsel %vm1123, %v4697, %v4699
        %v4704 = vsel %vm1123, %v4699, %v4701
        %v4709 = vadd.f32 %v4682, %v4702
        %v4710 = vadd.f32 %v4683, %v4703
        %v4711 = vadd.f32 %v4684, %v4704
        %v4712 = vadd.f32 %v4685, %v4701
        %v4713 = vld [vmem:[#allocation3 + $0x50] sm:$0xff]
        %v4714 = vld [vmem:[#allocation3 + $0x58] sm:$0xff]
        %v4715 = vld [vmem:[#allocation3 + $0x60] sm:$0xff]
        %v4716 = vld [vmem:[#allocation3 + $0x68] sm:$0xff]
        %4721 = vrot.lane.b32.xlu0 %v4713, 126
        %v4722 = vpop.permute.xlu0 %4721
        %4723 = vrot.lane.b32.xlu0 %v4714, 126
        %v4724 = vpop.permute.xlu0 %4723
        %4725 = vrot.lane.b32.xlu0 %v4715, 126
        %v4726 = vpop.permute.xlu0 %4725
        %4727 = vrot.lane.b32.xlu0 %v4716, 126
        %v4728 = vpop.permute.xlu0 %4727
        %v4729 = vsel %vm1151, %v4722, %v4724
        %v4730 = vsel %vm1151, %v4724, %v4726
        %v4731 = vsel %vm1151, %v4726, %v4728
        %v4736 = vadd.f32 %v4709, %v4729
        %v4737 = vadd.f32 %v4710, %v4730
        %v4738 = vadd.f32 %v4711, %v4731
        %v4739 = vadd.f32 %v4712, %v4728
        %v4740 = vld [vmem:[#allocation3 + $0x78] sm:$0xff]
        %v4741 = vld [vmem:[#allocation3 + $0x80] sm:$0xff]
        %v4742 = vld [vmem:[#allocation3 + $0x88] sm:$0xff]
        %v4743 = vld [vmem:[#allocation3 + $0x90] sm:$0xff]
        %4748 = vrot.lane.b32.xlu0 %v4740, 110
        %v4749 = vpop.permute.xlu0 %4748
        %4750 = vrot.lane.b32.xlu0 %v4741, 110
        %v4751 = vpop.permute.xlu0 %4750
        %4752 = vrot.lane.b32.xlu0 %v4742, 110
        %v4753 = vpop.permute.xlu0 %4752
        %4754 = vrot.lane.b32.xlu0 %v4743, 110
        %v4755 = vpop.permute.xlu0 %4754
        %v4756 = vsel %vm1179, %v4749, %v4751
        %v4757 = vsel %vm1179, %v4751, %v4753
        %v4758 = vsel %vm1179, %v4753, %v4755
        %v4763 = vadd.f32 %v4736, %v4756
        %v4764 = vadd.f32 %v4737, %v4757
        %v4765 = vadd.f32 %v4738, %v4758
        %v4766 = vadd.f32 %v4739, %v4755
        %v4767 = vld [vmem:[#allocation3 + $0xa8] sm:$0xff]
        %v4768 = vld [vmem:[#allocation3 + $0xb0] sm:$0xff]
        %v4769 = vld [vmem:[#allocation3 + $0xb8] sm:$0xff]
        %4773 = vrot.lane.b32.xlu0 %v4767, 109
        %v4774 = vpop.permute.xlu0 %4773
        %4775 = vrot.lane.b32.xlu0 %v4768, 109
        %v4776 = vpop.permute.xlu0 %4775
        %4777 = vrot.lane.b32.xlu0 %v4769, 109
        %v4778 = vpop.permute.xlu0 %4777
        %v4779 = vsel %vm1203, %v4774, %v4776
        %v4780 = vsel %vm1203, %v4776, %v4778
        %v4785 = vadd.f32 %v4763, %v4774
        %v4786 = vadd.f32 %v4764, %v4779
        %v4787 = vadd.f32 %v4765, %v4780
        %v4788 = vadd.f32 %v4766, %v4778
        %v4789 = vld [vmem:[#allocation3 + $0xd0] sm:$0xff]
        %v4790 = vld [vmem:[#allocation3 + $0xd8] sm:$0xff]
        %v4791 = vld [vmem:[#allocation3 + $0xe0] sm:$0xff]
        %4795 = vrot.lane.b32.xlu0 %v4789, 108
        %v4796 = vpop.permute.xlu0 %4795
        %4797 = vrot.lane.b32.xlu0 %v4790, 108
        %v4798 = vpop.permute.xlu0 %4797
        %4799 = vrot.lane.b32.xlu0 %v4791, 108
        %v4800 = vpop.permute.xlu0 %4799
        %v4801 = vsel %vm1226, %v4796, %v4798
        %v4802 = vsel %vm1226, %v4798, %v4800
        %v4807 = vadd.f32 %v4785, %v4796
        %v4808 = vadd.f32 %v4786, %v4801
        %v4809 = vadd.f32 %v4787, %v4802
        %v4810 = vadd.f32 %v4788, %v4800
        %v4811 = vld [vmem:[#allocation3 + $0xf8] sm:$0xff]
        %v4812 = vld [vmem:[#allocation3 + $0x100] sm:$0xff]
        %v4813 = vld [vmem:[#allocation3 + $0x108] sm:$0xff]
        %4817 = vrot.lane.b32.xlu0 %v4811, 92
        %v4818 = vpop.permute.xlu0 %4817
        %4819 = vrot.lane.b32.xlu0 %v4812, 92
        %v4820 = vpop.permute.xlu0 %4819
        %4821 = vrot.lane.b32.xlu0 %v4813, 92
        %v4822 = vpop.permute.xlu0 %4821
        %v4823 = vsel %vm1249, %v4818, %v4820
        %v4824 = vsel %vm1249, %v4820, %v4822
        %v4829 = vadd.f32 %v4807, %v4818
        %v4830 = vadd.f32 %v4808, %v4823
        %v4831 = vadd.f32 %v4809, %v4824
        %v4832 = vadd.f32 %v4810, %v4822
        %v4833 = vld [vmem:[#allocation3 + $0x120] sm:$0xff]
        %v4834 = vld [vmem:[#allocation3 + $0x128] sm:$0xff]
        %v4835 = vld [vmem:[#allocation3 + $0x130] sm:$0xff]
        %4839 = vrot.lane.b32.xlu0 %v4833, 91
        %v4840 = vpop.permute.xlu0 %4839
        %4841 = vrot.lane.b32.xlu0 %v4834, 91
        %v4842 = vpop.permute.xlu0 %4841
        %4843 = vrot.lane.b32.xlu0 %v4835, 91
        %v4844 = vpop.permute.xlu0 %4843
        %v4845 = vsel %vm1272, %v4840, %v4842
        %v4846 = vsel %vm1272, %v4842, %v4844
        %v4851 = vadd.f32 %v4829, %v4840
        %v4852 = vadd.f32 %v4830, %v4845
        %v4853 = vadd.f32 %v4831, %v4846
        %v4854 = vadd.f32 %v4832, %v4844
        %v4855 = vld [vmem:[#allocation3 + $0x148] sm:$0xff]
        %v4856 = vld [vmem:[#allocation3 + $0x150] sm:$0xff]
        %v4857 = vld [vmem:[#allocation3 + $0x158] sm:$0xff]
        %4861 = vrot.lane.b32.xlu0 %v4855, 90
        %v4862 = vpop.permute.xlu0 %4861
        %4863 = vrot.lane.b32.xlu0 %v4856, 90
        %v4864 = vpop.permute.xlu0 %4863
        %4865 = vrot.lane.b32.xlu0 %v4857, 90
        %v4866 = vpop.permute.xlu0 %4865
        %v4867 = vsel %vm1295, %v4862, %v4864
        %v4868 = vsel %vm1295, %v4864, %v4866
        %v4873 = vadd.f32 %v4851, %v4862
        %v4874 = vadd.f32 %v4852, %v4867
        %v4875 = vadd.f32 %v4853, %v4868
        %v4876 = vadd.f32 %v4854, %v4866
        %4878 = vset.pattern.permute.xlu0 0
        %4879 = vperm.xlu0 %4878, %v4226
        %v4880 = vpop.permute.xlu0 %4879
        %v4882 = vadd.f32 %v4873, %v4880
        %v4883 = vadd.f32 %v4874, %v4880
        %v4884 = vadd.f32 %v4875, %v4880
        %v4885 = vadd.f32 %v4876, %v4880
        %v4886 = vmax.f32 %v4882, 0.0
        %v4887 = vmax.f32 %v4883, 0.0
        %v4888 = vmax.f32 %v4884, 0.0
        %v4889 = vmax.f32 %v4885, 0.0
        %v4890 = vld [vmem:[%s1] sm:$0x7]
        %v4892 = vlaneseq
        %v4893 = vshrl.u32 %v4892, 7
        %v4894 = vsub.s32 0, %v4893
        %v4895 = vrot.slane %v4890, %v4894
        %v4896 = vlaneseq
        %v4897 = vshrl.u32 %v4896, 7
        %v4898 = vsub.s32 1, %v4897
        %v4899 = vrot.slane %v4890, %v4898
        %v4900 = vlaneseq
        %v4901 = vshrl.u32 %v4900, 7
        %v4902 = vsub.s32 2, %v4901
        %v4903 = vrot.slane %v4890, %v4902
        %4904 = vrot.lane.b32.xlu0 %v4895, 109
        %v4905 = vpop.permute.xlu0 %4904
        %4906 = vrot.lane.b32.xlu0 %v4899, 109
        %v4907 = vpop.permute.xlu0 %4906
        %4908 = vrot.lane.b32.xlu0 %v4903, 109
        %v4909 = vpop.permute.xlu0 %4908
        %v4910 = vsel %vm1203, %v4905, %v4907
        %v4911 = vsel %vm1203, %v4907, %v4909
        %v4916 = vmul.f32 %v4886, %v4905
        %v4917 = vmul.f32 %v4887, %v4910
        %v4918 = vmul.f32 %v4888, %v4911
        %v4919 = vmul.f32 %v4889, %v4909
        %4924 = vrot.lane.b32.xlu0 %v4916, 19
        %v4925 = vpop.permute.xlu0 %4924
        %4926 = vrot.lane.b32.xlu0 %v4917, 19
        %v4927 = vpop.permute.xlu0 %4926
        %4928 = vrot.lane.b32.xlu0 %v4918, 19
        %v4929 = vpop.permute.xlu0 %4928
        %4930 = vrot.lane.b32.xlu0 %v4919, 19
        %v4931 = vpop.permute.xlu0 %4930
        %v4932 = vsel %vm1361, %v4925, %v4927
        %v4933 = vsel %vm1361, %v4927, %v4929
        %v4934 = vsel %vm1361, %v4929, %v4931
        %4938 = vst [vmem:[#allocation2 + $0xf8] sm:$0xff] %v4932
        %4939 = vst [vmem:[#allocation2 + $0x100] sm:$0xff] %v4933
        %4940 = vst.msk [vmem:[#allocation2 + $0x108] sm:$0xff] %vm639, %v4934
        %v4941 = vld [vmem:[%s8] sm:$0xff]
        %v4942 = vld [vmem:[%s8 + $0x8] sm:$0xff]
        %v4943 = vld [vmem:[%s8 + $0x10] sm:$0xff]
        %v4944 = vld [vmem:[%s8 + $0x18] sm:$0xff]
        %v4945 = vld [vmem:[%s8 + $0x20] sm:$0xff]
        %v4946 = vld [vmem:[%s8 + $0x28] sm:$0xff]
        %v4947 = vld [vmem:[%s8 + $0x30] sm:$0xff]
        %v4948 = vld [vmem:[%s8 + $0x38] sm:$0xff]
        %v4949 = vld [vmem:[%s8 + $0x40] sm:$0xff]
        %v4950 = vld [vmem:[%s16] sm:$0xff]
        %v4951 = vld [vmem:[#allocation2] sm:$0xff]
        %v4952 = vld [vmem:[#allocation2 + $0x8] sm:$0xff]
        %v4953 = vld [vmem:[#allocation2 + $0x10] sm:$0xff]
        %v4954 = vld [vmem:[#allocation2 + $0x18] sm:$0xff]
        %v4955 = vld [vmem:[#allocation2 + $0x20] sm:$0xff]
        %v4956 = vld [vmem:[#allocation2 + $0x28] sm:$0xff]
        %v4957 = vld [vmem:[#allocation2 + $0x30] sm:$0xff]
        %v4958 = vld [vmem:[#allocation2 + $0x38] sm:$0xff]
        %v4959 = vld [vmem:[#allocation2 + $0x40] sm:$0xff]
        %v4960 = vld [vmem:[#allocation2 + $0x48] sm:$0xff]
        %v4961 = vld [vmem:[#allocation2 + $0x50] sm:$0xff]
        %v4962 = vld [vmem:[#allocation2 + $0x58] sm:$0xff]
        %v4963 = vld [vmem:[#allocation2 + $0x60] sm:$0xff]
        %v4964 = vld [vmem:[#allocation2 + $0x68] sm:$0xff]
        %v4965 = vld [vmem:[#allocation2 + $0x70] sm:$0xff]
        %v4966 = vld [vmem:[#allocation2 + $0x78] sm:$0xff]
        %v4967 = vld [vmem:[#allocation2 + $0x80] sm:$0xff]
        %v4968 = vld [vmem:[#allocation2 + $0x88] sm:$0xff]
        %v4969 = vld [vmem:[#allocation2 + $0x90] sm:$0xff]
        %v4970 = vld [vmem:[#allocation2 + $0x98] sm:$0xff]
        %v4971 = vld [vmem:[#allocation2 + $0xa0] sm:$0xff]
        %v4972 = vld [vmem:[#allocation2 + $0xa8] sm:$0xff]
        %v4973 = vld [vmem:[#allocation2 + $0xb0] sm:$0xff]
        %v4974 = vld [vmem:[#allocation2 + $0xb8] sm:$0xff]
        %v4975 = vld [vmem:[#allocation2 + $0xc0] sm:$0xff]
        %v4976 = vld [vmem:[#allocation2 + $0xc8] sm:$0xff]
        %v4977 = vld [vmem:[#allocation2 + $0xd0] sm:$0xff]
        %v4978 = vld [vmem:[#allocation2 + $0xd8] sm:$0xff]
        %v4979 = vld [vmem:[#allocation2 + $0xe0] sm:$0xff]
        %v4980 = vld [vmem:[#allocation2 + $0xe8] sm:$0xff]
        %v4981 = vld [vmem:[#allocation2 + $0xf0] sm:$0xff]
        %v4982 = vld [vmem:[#allocation2 + $0xf8] sm:$0xff]
        %v4983 = vld [vmem:[#allocation2 + $0x100] sm:$0xff]
        %v4984 = vld [vmem:[#allocation2 + $0x108] sm:$0xff]
        %v4985 = vld [vmem:[#allocation2 + $0x110] sm:$0xff]
        %vm4986 = vcmask 457728
        %v4988 = vsel %vm4986, %v4941, 0
        %v4991 = vsel %vm4986, %v4942, 0
        %v4994 = vsel %vm4986, %v4943, 0
        %v4997 = vsel %vm4986, %v4944, 0
        %v5000 = vsel %vm4986, %v4945, 0
        %v5003 = vsel %vm4986, %v4946, 0
        %v5006 = vsel %vm4986, %v4947, 0
        %v5009 = vsel %vm4986, %v4948, 0
        %v5012 = vsel %vm4986, %v4949, 0
        %5014 = vmatprep.subr.mxu0 0.0
        %5015 = vmatpush1.msra.mxu0 0.0
        %5016 = vmatprep.subr.mxu0 0.0
        %5017 = vmatpush1.msra.mxu0 0.0
        %5018 = vmatprep.subr.mxu0 0.0
        %5019 = vmatpush1.msra.mxu0 0.0
        %5020 = vmatprep.subr.mxu0 0.0
        %5021 = vmatpush1.msra.mxu0 0.0
        %5022 = vmatprep.subr.mxu0 0.0
        %5023 = vmatpush1.msra.mxu0 0.0
        %5024 = vmatprep.subr.mxu0 0.0
        %5025 = vmatpush1.msra.mxu0 0.0
        %5026 = vmatprep.subr.mxu0 0.0
        %5027 = vmatpush1.msra.mxu0 0.0
        %5028 = vmatprep.subr.mxu0 0.0
        %5029 = vmatpush1.msra.mxu0 0.0
        %5030 = vmatprep.subr.mxu0 0.0
        %5031 = vmatpush1.msra.mxu0 0.0
        %5032 = vmatprep.subr.mxu0 %v4982
        %5033 = vmatpush1.msra.mxu0 %v4981
        %5034 = vmatprep.subr.mxu0 %v4977
        %5035 = vmatpush1.msra.mxu0 %v4976
        %5036 = vmatprep.subr.mxu0 %v4972
        %5037 = vmatpush1.msra.mxu0 %v4971
        %5038 = vmatprep.subr.mxu0 %v4967
        %5039 = vmatpush1.msra.mxu0 %v4966
        %5040 = vmatprep.subr.mxu0 %v4962
        %5041 = vmatpush1.msra.mxu0 %v4961
        %5042 = vmatprep.subr.mxu0 %v4957
        %5043 = vmatpush1.msra.mxu0 %v4956
        %5044 = vmatprep.subr.mxu0 %v4952
        %5045 = vmatpush1.msra.mxu0 %v4951
        %5046 = vmatprep.subr.mxu0 0.0
        %5047 = vmatpush2.msra.mxu0 0.0
        %5048 = vmatprep.subr.mxu0 0.0
        %5049 = vmatpush2.msra.mxu0 0.0
        %5050 = vmatprep.subr.mxu0 0.0
        %5051 = vmatpush2.msra.mxu0 0.0
        %5052 = vmatprep.subr.mxu0 0.0
        %5053 = vmatpush2.msra.mxu0 0.0
        %5054 = vmatprep.subr.mxu0 0.0
        %5055 = vmatpush2.msra.mxu0 0.0
        %5056 = vmatprep.subr.mxu0 0.0
        %5057 = vmatpush2.msra.mxu0 0.0
        %5058 = vmatprep.subr.mxu0 0.0
        %5059 = vmatpush2.msra.mxu0 0.0
        %5060 = vmatprep.subr.mxu0 0.0
        %5061 = vmatpush2.msra.mxu0 0.0
        %5062 = vmatprep.subr.mxu0 0.0
        %5063 = vmatpush2.msra.mxu0 0.0
        %5064 = vmatprep.subr.mxu0 0.0
        %5065 = vmatpush2.msra.mxu0 0.0
        %5066 = vmatprep.subr.mxu0 0.0
        %5067 = vmatpush2.msra.mxu0 0.0
        %5068 = vmatprep.subr.mxu0 0.0
        %5069 = vmatpush2.msra.mxu0 0.0
        %5070 = vmatprep.subr.mxu0 0.0
        %5071 = vmatpush2.msra.mxu0 0.0
        %5072 = vmatprep.subr.mxu0 0.0
        %5073 = vmatpush2.msra.mxu0 0.0
        %5074 = vmatprep.subr.mxu0 0.0
        %5075 = vmatpush2.msra.mxu0 0.0
        %5076 = vmatprep.subr.mxu0 0.0
        %5077 = vmatpush2.msra.mxu0 0.0
        %5078 = vmatprep.mubr.f32.mxu0 0.0
        %5079 = vmatmul.mubr.f32.gmra.mxu0 %v4988
        %v5080 = vpop.f32.mrf.mxu0
        %v5081 = vadd.f32 0.0, %v5080
        %v5082 = vpop.f32.mrf.mxu0
        %v5083 = vadd.f32 0.0, %v5082
        %5084 = vmatprep.mubr.f32.mxu0 0.0
        %5085 = vmatmul.mubr.f32.gmra.mxu0 %v4991
        %v5086 = vpop.f32.mrf.mxu0
        %v5087 = vadd.f32 0.0, %v5086
        %v5088 = vpop.f32.mrf.mxu0
        %v5089 = vadd.f32 0.0, %v5088
        %5090 = vmatprep.mubr.f32.mxu0 0.0
        %5091 = vmatmul.mubr.f32.gmra.mxu0 %v4994
        %v5092 = vpop.f32.mrf.mxu0
        %v5093 = vadd.f32 0.0, %v5092
        %v5094 = vpop.f32.mrf.mxu0
        %v5095 = vadd.f32 0.0, %v5094
        %5096 = vmatprep.mubr.f32.mxu0 0.0
        %5097 = vmatmul.mubr.f32.gmra.mxu0 %v4997
        %v5098 = vpop.f32.mrf.mxu0
        %v5099 = vadd.f32 0.0, %v5098
        %v5100 = vpop.f32.mrf.mxu0
        %v5101 = vadd.f32 0.0, %v5100
        %5102 = vmatprep.mubr.f32.mxu0 0.0
        %5103 = vmatmul.mubr.f32.gmra.mxu0 %v5000
        %v5104 = vpop.f32.mrf.mxu0
        %v5105 = vadd.f32 0.0, %v5104
        %v5106 = vpop.f32.mrf.mxu0
        %v5107 = vadd.f32 0.0, %v5106
        %5108 = vmatprep.mubr.f32.mxu0 0.0
        %5109 = vmatmul.mubr.f32.gmra.mxu0 %v5003
        %v5110 = vpop.f32.mrf.mxu0
        %v5111 = vadd.f32 0.0, %v5110
        %v5112 = vpop.f32.mrf.mxu0
        %v5113 = vadd.f32 0.0, %v5112
        %5114 = vmatprep.mubr.f32.mxu0 0.0
        %5115 = vmatmul.mubr.f32.gmra.mxu0 %v5006
        %v5116 = vpop.f32.mrf.mxu0
        %v5117 = vadd.f32 0.0, %v5116
        %v5118 = vpop.f32.mrf.mxu0
        %v5119 = vadd.f32 0.0, %v5118
        %5120 = vmatprep.mubr.f32.mxu0 0.0
        %5121 = vmatmul.mubr.f32.gmra.mxu0 %v5009
        %v5122 = vpop.f32.mrf.mxu0
        %v5123 = vadd.f32 0.0, %v5122
        %v5124 = vpop.f32.mrf.mxu0
        %v5125 = vadd.f32 0.0, %v5124
        %5126 = vmatprep.mubr.f32.mxu0 0.0
        %5127 = vmatmul.mubr.f32.gmra.mxu0 %v5012
        %v5128 = vpop.f32.mrf.mxu0
        %v5129 = vadd.f32 0.0, %v5128
        %v5130 = vpop.f32.mrf.mxu0
        %v5131 = vadd.f32 0.0, %v5130
        %5132 = vdwg.mxu0
        %5133 = vmatprep.subr.mxu0 0.0
        %5134 = vmatpush1.msra.mxu0 0.0
        %5135 = vmatprep.subr.mxu0 0.0
        %5136 = vmatpush1.msra.mxu0 0.0
        %5137 = vmatprep.subr.mxu0 0.0
        %5138 = vmatpush1.msra.mxu0 0.0
        %5139 = vmatprep.subr.mxu0 0.0
        %5140 = vmatpush1.msra.mxu0 0.0
        %5141 = vmatprep.subr.mxu0 0.0
        %5142 = vmatpush1.msra.mxu0 0.0
        %5143 = vmatprep.subr.mxu0 0.0
        %5144 = vmatpush1.msra.mxu0 0.0
        %5145 = vmatprep.subr.mxu0 0.0
        %5146 = vmatpush1.msra.mxu0 0.0
        %5147 = vmatprep.subr.mxu0 0.0
        %5148 = vmatpush1.msra.mxu0 0.0
        %5149 = vmatprep.subr.mxu0 0.0
        %5150 = vmatpush1.msra.mxu0 0.0
        %5151 = vmatprep.subr.mxu0 %v4984
        %5152 = vmatpush1.msra.mxu0 %v4983
        %5153 = vmatprep.subr.mxu0 %v4979
        %5154 = vmatpush1.msra.mxu0 %v4978
        %5155 = vmatprep.subr.mxu0 %v4974
        %5156 = vmatpush1.msra.mxu0 %v4973
        %5157 = vmatprep.subr.mxu0 %v4969
        %5158 = vmatpush1.msra.mxu0 %v4968
        %5159 = vmatprep.subr.mxu0 %v4964
        %5160 = vmatpush1.msra.mxu0 %v4963
        %5161 = vmatprep.subr.mxu0 %v4959
        %5162 = vmatpush1.msra.mxu0 %v4958
        %5163 = vmatprep.subr.mxu0 %v4954
        %5164 = vmatpush1.msra.mxu0 %v4953
        %5165 = vmatprep.subr.mxu0 0.0
        %5166 = vmatpush2.msra.mxu0 0.0
        %5167 = vmatprep.subr.mxu0 0.0
        %5168 = vmatpush2.msra.mxu0 0.0
        %5169 = vmatprep.subr.mxu0 0.0
        %5170 = vmatpush2.msra.mxu0 0.0
        %5171 = vmatprep.subr.mxu0 0.0
        %5172 = vmatpush2.msra.mxu0 0.0
        %5173 = vmatprep.subr.mxu0 0.0
        %5174 = vmatpush2.msra.mxu0 0.0
        %5175 = vmatprep.subr.mxu0 0.0
        %5176 = vmatpush2.msra.mxu0 0.0
        %5177 = vmatprep.subr.mxu0 0.0
        %5178 = vmatpush2.msra.mxu0 0.0
        %5179 = vmatprep.subr.mxu0 0.0
        %5180 = vmatpush2.msra.mxu0 0.0
        %5181 = vmatprep.subr.mxu0 0.0
        %5182 = vmatpush2.msra.mxu0 0.0
        %5183 = vmatprep.subr.mxu0 0.0
        %5184 = vmatpush2.msra.mxu0 0.0
        %5185 = vmatprep.subr.mxu0 0.0
        %5186 = vmatpush2.msra.mxu0 0.0
        %5187 = vmatprep.subr.mxu0 0.0
        %5188 = vmatpush2.msra.mxu0 0.0
        %5189 = vmatprep.subr.mxu0 0.0
        %5190 = vmatpush2.msra.mxu0 0.0
        %5191 = vmatprep.subr.mxu0 0.0
        %5192 = vmatpush2.msra.mxu0 0.0
        %5193 = vmatprep.subr.mxu0 0.0
        %5194 = vmatpush2.msra.mxu0 0.0
        %5195 = vmatprep.subr.mxu0 0.0
        %5196 = vmatpush2.msra.mxu0 0.0
        %5197 = vmatprep.mubr.f32.mxu0 0.0
        %5198 = vmatmul.mubr.f32.gmra.mxu0 %v4988
        %v5199 = vpop.f32.mrf.mxu0
        %v5200 = vadd.f32 0.0, %v5199
        %v5201 = vpop.f32.mrf.mxu0
        %v5202 = vadd.f32 0.0, %v5201
        %5203 = vmatprep.mubr.f32.mxu0 0.0
        %5204 = vmatmul.mubr.f32.gmra.mxu0 %v4991
        %v5205 = vpop.f32.mrf.mxu0
        %v5206 = vadd.f32 0.0, %v5205
        %v5207 = vpop.f32.mrf.mxu0
        %v5208 = vadd.f32 0.0, %v5207
        %5209 = vmatprep.mubr.f32.mxu0 0.0
        %5210 = vmatmul.mubr.f32.gmra.mxu0 %v4994
        %v5211 = vpop.f32.mrf.mxu0
        %v5212 = vadd.f32 0.0, %v5211
        %v5213 = vpop.f32.mrf.mxu0
        %v5214 = vadd.f32 0.0, %v5213
        %5215 = vmatprep.mubr.f32.mxu0 0.0
        %5216 = vmatmul.mubr.f32.gmra.mxu0 %v4997
        %v5217 = vpop.f32.mrf.mxu0
        %v5218 = vadd.f32 0.0, %v5217
        %v5219 = vpop.f32.mrf.mxu0
        %v5220 = vadd.f32 0.0, %v5219
        %5221 = vmatprep.mubr.f32.mxu0 0.0
        %5222 = vmatmul.mubr.f32.gmra.mxu0 %v5000
        %v5223 = vpop.f32.mrf.mxu0
        %v5224 = vadd.f32 0.0, %v5223
        %v5225 = vpop.f32.mrf.mxu0
        %v5226 = vadd.f32 0.0, %v5225
        %5227 = vmatprep.mubr.f32.mxu0 0.0
        %5228 = vmatmul.mubr.f32.gmra.mxu0 %v5003
        %v5229 = vpop.f32.mrf.mxu0
        %v5230 = vadd.f32 0.0, %v5229
        %v5231 = vpop.f32.mrf.mxu0
        %v5232 = vadd.f32 0.0, %v5231
        %5233 = vmatprep.mubr.f32.mxu0 0.0
        %5234 = vmatmul.mubr.f32.gmra.mxu0 %v5006
        %v5235 = vpop.f32.mrf.mxu0
        %v5236 = vadd.f32 0.0, %v5235
        %v5237 = vpop.f32.mrf.mxu0
        %v5238 = vadd.f32 0.0, %v5237
        %5239 = vmatprep.mubr.f32.mxu0 0.0
        %5240 = vmatmul.mubr.f32.gmra.mxu0 %v5009
        %v5241 = vpop.f32.mrf.mxu0
        %v5242 = vadd.f32 0.0, %v5241
        %v5243 = vpop.f32.mrf.mxu0
        %v5244 = vadd.f32 0.0, %v5243
        %5245 = vmatprep.mubr.f32.mxu0 0.0
        %5246 = vmatmul.mubr.f32.gmra.mxu0 %v5012
        %v5247 = vpop.f32.mrf.mxu0
        %v5248 = vadd.f32 0.0, %v5247
        %v5249 = vpop.f32.mrf.mxu0
        %v5250 = vadd.f32 0.0, %v5249
        %5251 = vdwg.mxu0
        %5252 = vmatprep.subr.mxu0 0.0
        %5253 = vmatpush1.msra.mxu0 0.0
        %5254 = vmatprep.subr.mxu0 0.0
        %5255 = vmatpush1.msra.mxu0 0.0
        %5256 = vmatprep.subr.mxu0 0.0
        %5257 = vmatpush1.msra.mxu0 0.0
        %5258 = vmatprep.subr.mxu0 0.0
        %5259 = vmatpush1.msra.mxu0 0.0
        %5260 = vmatprep.subr.mxu0 0.0
        %5261 = vmatpush1.msra.mxu0 0.0
        %5262 = vmatprep.subr.mxu0 0.0
        %5263 = vmatpush1.msra.mxu0 0.0
        %5264 = vmatprep.subr.mxu0 0.0
        %5265 = vmatpush1.msra.mxu0 0.0
        %5266 = vmatprep.subr.mxu0 0.0
        %5267 = vmatpush1.msra.mxu0 0.0
        %5268 = vmatprep.subr.mxu0 0.0
        %5269 = vmatpush1.msra.mxu0 0.0
        %5270 = vmatprep.subr.mxu0 0.0
        %5271 = vmatpush1.msra.mxu0 %v4985
        %5272 = vmatprep.subr.mxu0 0.0
        %5273 = vmatpush1.msra.mxu0 %v4980
        %5274 = vmatprep.subr.mxu0 0.0
        %5275 = vmatpush1.msra.mxu0 %v4975
        %5276 = vmatprep.subr.mxu0 0.0
        %5277 = vmatpush1.msra.mxu0 %v4970
        %5278 = vmatprep.subr.mxu0 0.0
        %5279 = vmatpush1.msra.mxu0 %v4965
        %5280 = vmatprep.subr.mxu0 0.0
        %5281 = vmatpush1.msra.mxu0 %v4960
        %5282 = vmatprep.subr.mxu0 0.0
        %5283 = vmatpush1.msra.mxu0 %v4955
        %5284 = vmatprep.subr.mxu0 0.0
        %5285 = vmatpush2.msra.mxu0 0.0
        %5286 = vmatprep.subr.mxu0 0.0
        %5287 = vmatpush2.msra.mxu0 0.0
        %5288 = vmatprep.subr.mxu0 0.0
        %5289 = vmatpush2.msra.mxu0 0.0
        %5290 = vmatprep.subr.mxu0 0.0
        %5291 = vmatpush2.msra.mxu0 0.0
        %5292 = vmatprep.subr.mxu0 0.0
        %5293 = vmatpush2.msra.mxu0 0.0
        %5294 = vmatprep.subr.mxu0 0.0
        %5295 = vmatpush2.msra.mxu0 0.0
        %5296 = vmatprep.subr.mxu0 0.0
        %5297 = vmatpush2.msra.mxu0 0.0
        %5298 = vmatprep.subr.mxu0 0.0
        %5299 = vmatpush2.msra.mxu0 0.0
        %5300 = vmatprep.subr.mxu0 0.0
        %5301 = vmatpush2.msra.mxu0 0.0
        %5302 = vmatprep.subr.mxu0 0.0
        %5303 = vmatpush2.msra.mxu0 0.0
        %5304 = vmatprep.subr.mxu0 0.0
        %5305 = vmatpush2.msra.mxu0 0.0
        %5306 = vmatprep.subr.mxu0 0.0
        %5307 = vmatpush2.msra.mxu0 0.0
        %5308 = vmatprep.subr.mxu0 0.0
        %5309 = vmatpush2.msra.mxu0 0.0
        %5310 = vmatprep.subr.mxu0 0.0
        %5311 = vmatpush2.msra.mxu0 0.0
        %5312 = vmatprep.subr.mxu0 0.0
        %5313 = vmatpush2.msra.mxu0 0.0
        %5314 = vmatprep.subr.mxu0 0.0
        %5315 = vmatpush2.msra.mxu0 0.0
        %5316 = vmatprep.mubr.f32.mxu0 0.0
        %5317 = vmatmul.mubr.f32.gmra.mxu0 %v4988
        %v5318 = vpop.f32.mrf.mxu0
        %v5319 = vadd.f32 0.0, %v5318
        %v5320 = vpop.f32.mrf.mxu0
        %5321 = vmatprep.mubr.f32.mxu0 0.0
        %5322 = vmatmul.mubr.f32.gmra.mxu0 %v4991
        %v5323 = vpop.f32.mrf.mxu0
        %v5324 = vadd.f32 0.0, %v5323
        %v5325 = vpop.f32.mrf.mxu0
        %5326 = vmatprep.mubr.f32.mxu0 0.0
        %5327 = vmatmul.mubr.f32.gmra.mxu0 %v4994
        %v5328 = vpop.f32.mrf.mxu0
        %v5329 = vadd.f32 0.0, %v5328
        %v5330 = vpop.f32.mrf.mxu0
        %5331 = vmatprep.mubr.f32.mxu0 0.0
        %5332 = vmatmul.mubr.f32.gmra.mxu0 %v4997
        %v5333 = vpop.f32.mrf.mxu0
        %v5334 = vadd.f32 0.0, %v5333
        %v5335 = vpop.f32.mrf.mxu0
        %5336 = vmatprep.mubr.f32.mxu0 0.0
        %5337 = vmatmul.mubr.f32.gmra.mxu0 %v5000
        %v5338 = vpop.f32.mrf.mxu0
        %v5339 = vadd.f32 0.0, %v5338
        %v5340 = vpop.f32.mrf.mxu0
        %5341 = vmatprep.mubr.f32.mxu0 0.0
        %5342 = vmatmul.mubr.f32.gmra.mxu0 %v5003
        %v5343 = vpop.f32.mrf.mxu0
        %v5344 = vadd.f32 0.0, %v5343
        %v5345 = vpop.f32.mrf.mxu0
        %5346 = vmatprep.mubr.f32.mxu0 0.0
        %5347 = vmatmul.mubr.f32.gmra.mxu0 %v5006
        %v5348 = vpop.f32.mrf.mxu0
        %v5349 = vadd.f32 0.0, %v5348
        %v5350 = vpop.f32.mrf.mxu0
        %5351 = vmatprep.mubr.f32.mxu0 0.0
        %5352 = vmatmul.mubr.f32.gmra.mxu0 %v5009
        %v5353 = vpop.f32.mrf.mxu0
        %v5354 = vadd.f32 0.0, %v5353
        %v5355 = vpop.f32.mrf.mxu0
        %5356 = vmatprep.mubr.f32.mxu0 0.0
        %5357 = vmatmul.mubr.f32.gmra.mxu0 %v5012
        %v5358 = vpop.f32.mrf.mxu0
        %v5359 = vadd.f32 0.0, %v5358
        %v5360 = vpop.f32.mrf.mxu0
        %5361 = vdwg.mxu0
        %5362 = vst [vmem:[#allocation3] sm:$0xff] %v5081
        %5363 = vst [vmem:[#allocation3 + $0x8] sm:$0xff] %v5083
        %5364 = vst [vmem:[#allocation3 + $0x10] sm:$0xff] %v5200
        %5365 = vst [vmem:[#allocation3 + $0x18] sm:$0xff] %v5202
        %5366 = vst.msk [vmem:[#allocation3 + $0x20] sm:$0xff] %vm639, %v5319
        %5367 = vst [vmem:[#allocation3 + $0x28] sm:$0xff] %v5087
        %5368 = vst [vmem:[#allocation3 + $0x30] sm:$0xff] %v5089
        %5369 = vst [vmem:[#allocation3 + $0x38] sm:$0xff] %v5206
        %5370 = vst [vmem:[#allocation3 + $0x40] sm:$0xff] %v5208
        %5371 = vst.msk [vmem:[#allocation3 + $0x48] sm:$0xff] %vm639, %v5324
        %5372 = vst [vmem:[#allocation3 + $0x50] sm:$0xff] %v5093
        %5373 = vst [vmem:[#allocation3 + $0x58] sm:$0xff] %v5095
        %5374 = vst [vmem:[#allocation3 + $0x60] sm:$0xff] %v5212
        %5375 = vst [vmem:[#allocation3 + $0x68] sm:$0xff] %v5214
        %5376 = vst.msk [vmem:[#allocation3 + $0x70] sm:$0xff] %vm639, %v5329
        %5377 = vst [vmem:[#allocation3 + $0x78] sm:$0xff] %v5099
        %5378 = vst [vmem:[#allocation3 + $0x80] sm:$0xff] %v5101
        %5379 = vst [vmem:[#allocation3 + $0x88] sm:$0xff] %v5218
        %5380 = vst [vmem:[#allocation3 + $0x90] sm:$0xff] %v5220
        %5381 = vst.msk [vmem:[#allocation3 + $0x98] sm:$0xff] %vm639, %v5334
        %5382 = vst [vmem:[#allocation3 + $0xa0] sm:$0xff] %v5105
        %5383 = vst [vmem:[#allocation3 + $0xa8] sm:$0xff] %v5107
        %5384 = vst [vmem:[#allocation3 + $0xb0] sm:$0xff] %v5224
        %5385 = vst [vmem:[#allocation3 + $0xb8] sm:$0xff] %v5226
        %5386 = vst.msk [vmem:[#allocation3 + $0xc0] sm:$0xff] %vm639, %v5339
        %5387 = vst [vmem:[#allocation3 + $0xc8] sm:$0xff] %v5111
        %5388 = vst [vmem:[#allocation3 + $0xd0] sm:$0xff] %v5113
        %5389 = vst [vmem:[#allocation3 + $0xd8] sm:$0xff] %v5230
        %5390 = vst [vmem:[#allocation3 + $0xe0] sm:$0xff] %v5232
        %5391 = vst.msk [vmem:[#allocation3 + $0xe8] sm:$0xff] %vm639, %v5344
        %5392 = vst [vmem:[#allocation3 + $0xf0] sm:$0xff] %v5117
        %5393 = vst [vmem:[#allocation3 + $0xf8] sm:$0xff] %v5119
        %5394 = vst [vmem:[#allocation3 + $0x100] sm:$0xff] %v5236
        %5395 = vst [vmem:[#allocation3 + $0x108] sm:$0xff] %v5238
        %5396 = vst.msk [vmem:[#allocation3 + $0x110] sm:$0xff] %vm639, %v5349
        %5397 = vst [vmem:[#allocation3 + $0x118] sm:$0xff] %v5123
        %5398 = vst [vmem:[#allocation3 + $0x120] sm:$0xff] %v5125
        %5399 = vst [vmem:[#allocation3 + $0x128] sm:$0xff] %v5242
        %5400 = vst [vmem:[#allocation3 + $0x130] sm:$0xff] %v5244
        %5401 = vst.msk [vmem:[#allocation3 + $0x138] sm:$0xff] %vm639, %v5354
        %5402 = vst [vmem:[#allocation3 + $0x140] sm:$0xff] %v5129
        %5403 = vst [vmem:[#allocation3 + $0x148] sm:$0xff] %v5131
        %5404 = vst [vmem:[#allocation3 + $0x150] sm:$0xff] %v5248
        %5405 = vst [vmem:[#allocation3 + $0x158] sm:$0xff] %v5250
        %5406 = vst.msk [vmem:[#allocation3 + $0x160] sm:$0xff] %vm639, %v5359
        %v5407 = vld [vmem:[#allocation3] sm:$0xff]
        %v5408 = vld [vmem:[#allocation3 + $0x8] sm:$0xff]
        %v5409 = vld [vmem:[#allocation3 + $0x10] sm:$0xff]
        %v5410 = vld [vmem:[#allocation3 + $0x18] sm:$0xff]
        %v5411 = vadd.f32 %v5407, 0.0
        %v5412 = vadd.f32 %v5408, 0.0
        %v5413 = vadd.f32 %v5409, 0.0
        %v5414 = vadd.f32 %v5410, 0.0
        %v5415 = vld [vmem:[#allocation3 + $0x28] sm:$0xff]
        %v5416 = vld [vmem:[#allocation3 + $0x30] sm:$0xff]
        %v5417 = vld [vmem:[#allocation3 + $0x38] sm:$0xff]
        %v5418 = vld [vmem:[#allocation3 + $0x40] sm:$0xff]
        %5423 = vrot.lane.b32.xlu0 %v5415, 127
        %v5424 = vpop.permute.xlu0 %5423
        %5425 = vrot.lane.b32.xlu0 %v5416, 127
        %v5426 = vpop.permute.xlu0 %5425
        %5427 = vrot.lane.b32.xlu0 %v5417, 127
        %v5428 = vpop.permute.xlu0 %5427
        %5429 = vrot.lane.b32.xlu0 %v5418, 127
        %v5430 = vpop.permute.xlu0 %5429
        %v5431 = vsel %vm1123, %v5424, %v5426
        %v5432 = vsel %vm1123, %v5426, %v5428
        %v5433 = vsel %vm1123, %v5428, %v5430
        %v5438 = vadd.f32 %v5411, %v5431
        %v5439 = vadd.f32 %v5412, %v5432
        %v5440 = vadd.f32 %v5413, %v5433
        %v5441 = vadd.f32 %v5414, %v5430
        %v5442 = vld [vmem:[#allocation3 + $0x50] sm:$0xff]
        %v5443 = vld [vmem:[#allocation3 + $0x58] sm:$0xff]
        %v5444 = vld [vmem:[#allocation3 + $0x60] sm:$0xff]
        %v5445 = vld [vmem:[#allocation3 + $0x68] sm:$0xff]
        %5450 = vrot.lane.b32.xlu0 %v5442, 126
        %v5451 = vpop.permute.xlu0 %5450
        %5452 = vrot.lane.b32.xlu0 %v5443, 126
        %v5453 = vpop.permute.xlu0 %5452
        %5454 = vrot.lane.b32.xlu0 %v5444, 126
        %v5455 = vpop.permute.xlu0 %5454
        %5456 = vrot.lane.b32.xlu0 %v5445, 126
        %v5457 = vpop.permute.xlu0 %5456
        %v5458 = vsel %vm1151, %v5451, %v5453
        %v5459 = vsel %vm1151, %v5453, %v5455
        %v5460 = vsel %vm1151, %v5455, %v5457
        %v5465 = vadd.f32 %v5438, %v5458
        %v5466 = vadd.f32 %v5439, %v5459
        %v5467 = vadd.f32 %v5440, %v5460
        %v5468 = vadd.f32 %v5441, %v5457
        %v5469 = vld [vmem:[#allocation3 + $0x78] sm:$0xff]
        %v5470 = vld [vmem:[#allocation3 + $0x80] sm:$0xff]
        %v5471 = vld [vmem:[#allocation3 + $0x88] sm:$0xff]
        %v5472 = vld [vmem:[#allocation3 + $0x90] sm:$0xff]
        %5477 = vrot.lane.b32.xlu0 %v5469, 110
        %v5478 = vpop.permute.xlu0 %5477
        %5479 = vrot.lane.b32.xlu0 %v5470, 110
        %v5480 = vpop.permute.xlu0 %5479
        %5481 = vrot.lane.b32.xlu0 %v5471, 110
        %v5482 = vpop.permute.xlu0 %5481
        %5483 = vrot.lane.b32.xlu0 %v5472, 110
        %v5484 = vpop.permute.xlu0 %5483
        %v5485 = vsel %vm1179, %v5478, %v5480
        %v5486 = vsel %vm1179, %v5480, %v5482
        %v5487 = vsel %vm1179, %v5482, %v5484
        %v5492 = vadd.f32 %v5465, %v5485
        %v5493 = vadd.f32 %v5466, %v5486
        %v5494 = vadd.f32 %v5467, %v5487
        %v5495 = vadd.f32 %v5468, %v5484
        %v5496 = vld [vmem:[#allocation3 + $0xa8] sm:$0xff]
        %v5497 = vld [vmem:[#allocation3 + $0xb0] sm:$0xff]
        %v5498 = vld [vmem:[#allocation3 + $0xb8] sm:$0xff]
        %5502 = vrot.lane.b32.xlu0 %v5496, 109
        %v5503 = vpop.permute.xlu0 %5502
        %5504 = vrot.lane.b32.xlu0 %v5497, 109
        %v5505 = vpop.permute.xlu0 %5504
        %5506 = vrot.lane.b32.xlu0 %v5498, 109
        %v5507 = vpop.permute.xlu0 %5506
        %v5508 = vsel %vm1203, %v5503, %v5505
        %v5509 = vsel %vm1203, %v5505, %v5507
        %v5514 = vadd.f32 %v5492, %v5503
        %v5515 = vadd.f32 %v5493, %v5508
        %v5516 = vadd.f32 %v5494, %v5509
        %v5517 = vadd.f32 %v5495, %v5507
        %v5518 = vld [vmem:[#allocation3 + $0xd0] sm:$0xff]
        %v5519 = vld [vmem:[#allocation3 + $0xd8] sm:$0xff]
        %v5520 = vld [vmem:[#allocation3 + $0xe0] sm:$0xff]
        %5524 = vrot.lane.b32.xlu0 %v5518, 108
        %v5525 = vpop.permute.xlu0 %5524
        %5526 = vrot.lane.b32.xlu0 %v5519, 108
        %v5527 = vpop.permute.xlu0 %5526
        %5528 = vrot.lane.b32.xlu0 %v5520, 108
        %v5529 = vpop.permute.xlu0 %5528
        %v5530 = vsel %vm1226, %v5525, %v5527
        %v5531 = vsel %vm1226, %v5527, %v5529
        %v5536 = vadd.f32 %v5514, %v5525
        %v5537 = vadd.f32 %v5515, %v5530
        %v5538 = vadd.f32 %v5516, %v5531
        %v5539 = vadd.f32 %v5517, %v5529
        %v5540 = vld [vmem:[#allocation3 + $0xf8] sm:$0xff]
        %v5541 = vld [vmem:[#allocation3 + $0x100] sm:$0xff]
        %v5542 = vld [vmem:[#allocation3 + $0x108] sm:$0xff]
        %5546 = vrot.lane.b32.xlu0 %v5540, 92
        %v5547 = vpop.permute.xlu0 %5546
        %5548 = vrot.lane.b32.xlu0 %v5541, 92
        %v5549 = vpop.permute.xlu0 %5548
        %5550 = vrot.lane.b32.xlu0 %v5542, 92
        %v5551 = vpop.permute.xlu0 %5550
        %v5552 = vsel %vm1249, %v5547, %v5549
        %v5553 = vsel %vm1249, %v5549, %v5551
        %v5558 = vadd.f32 %v5536, %v5547
        %v5559 = vadd.f32 %v5537, %v5552
        %v5560 = vadd.f32 %v5538, %v5553
        %v5561 = vadd.f32 %v5539, %v5551
        %v5562 = vld [vmem:[#allocation3 + $0x120] sm:$0xff]
        %v5563 = vld [vmem:[#allocation3 + $0x128] sm:$0xff]
        %v5564 = vld [vmem:[#allocation3 + $0x130] sm:$0xff]
        %5568 = vrot.lane.b32.xlu0 %v5562, 91
        %v5569 = vpop.permute.xlu0 %5568
        %5570 = vrot.lane.b32.xlu0 %v5563, 91
        %v5571 = vpop.permute.xlu0 %5570
        %5572 = vrot.lane.b32.xlu0 %v5564, 91
        %v5573 = vpop.permute.xlu0 %5572
        %v5574 = vsel %vm1272, %v5569, %v5571
        %v5575 = vsel %vm1272, %v5571, %v5573
        %v5580 = vadd.f32 %v5558, %v5569
        %v5581 = vadd.f32 %v5559, %v5574
        %v5582 = vadd.f32 %v5560, %v5575
        %v5583 = vadd.f32 %v5561, %v5573
        %v5584 = vld [vmem:[#allocation3 + $0x148] sm:$0xff]
        %v5585 = vld [vmem:[#allocation3 + $0x150] sm:$0xff]
        %v5586 = vld [vmem:[#allocation3 + $0x158] sm:$0xff]
        %5590 = vrot.lane.b32.xlu0 %v5584, 90
        %v5591 = vpop.permute.xlu0 %5590
        %5592 = vrot.lane.b32.xlu0 %v5585, 90
        %v5593 = vpop.permute.xlu0 %5592
        %5594 = vrot.lane.b32.xlu0 %v5586, 90
        %v5595 = vpop.permute.xlu0 %5594
        %v5596 = vsel %vm1295, %v5591, %v5593
        %v5597 = vsel %vm1295, %v5593, %v5595
        %v5602 = vadd.f32 %v5580, %v5591
        %v5603 = vadd.f32 %v5581, %v5596
        %v5604 = vadd.f32 %v5582, %v5597
        %v5605 = vadd.f32 %v5583, %v5595
        %5607 = vset.pattern.permute.xlu0 0
        %5608 = vperm.xlu0 %5607, %v4950
        %v5609 = vpop.permute.xlu0 %5608
        %v5611 = vadd.f32 %v5602, %v5609
        %v5612 = vadd.f32 %v5603, %v5609
        %v5613 = vadd.f32 %v5604, %v5609
        %v5614 = vadd.f32 %v5605, %v5609
        %v5615 = vmax.f32 %v5611, 0.0
        %v5616 = vmax.f32 %v5612, 0.0
        %v5617 = vmax.f32 %v5613, 0.0
        %v5618 = vmax.f32 %v5614, 0.0
        %v5619 = vld [vmem:[%s1] sm:$0x7]
        %v5621 = vlaneseq
        %v5622 = vshrl.u32 %v5621, 7
        %v5623 = vsub.s32 0, %v5622
        %v5624 = vrot.slane %v5619, %v5623
        %v5625 = vlaneseq
        %v5626 = vshrl.u32 %v5625, 7
        %v5627 = vsub.s32 1, %v5626
        %v5628 = vrot.slane %v5619, %v5627
        %v5629 = vlaneseq
        %v5630 = vshrl.u32 %v5629, 7
        %v5631 = vsub.s32 2, %v5630
        %v5632 = vrot.slane %v5619, %v5631
        %5633 = vrot.lane.b32.xlu0 %v5624, 109
        %v5634 = vpop.permute.xlu0 %5633
        %5635 = vrot.lane.b32.xlu0 %v5628, 109
        %v5636 = vpop.permute.xlu0 %5635
        %5637 = vrot.lane.b32.xlu0 %v5632, 109
        %v5638 = vpop.permute.xlu0 %5637
        %v5639 = vsel %vm1203, %v5634, %v5636
        %v5640 = vsel %vm1203, %v5636, %v5638
        %v5645 = vmul.f32 %v5615, %v5634
        %v5646 = vmul.f32 %v5616, %v5639
        %v5647 = vmul.f32 %v5617, %v5640
        %v5648 = vmul.f32 %v5618, %v5638
        %5653 = vrot.lane.b32.xlu0 %v5645, 19
        %v5654 = vpop.permute.xlu0 %5653
        %5655 = vrot.lane.b32.xlu0 %v5646, 19
        %v5656 = vpop.permute.xlu0 %5655
        %5657 = vrot.lane.b32.xlu0 %v5647, 19
        %v5658 = vpop.permute.xlu0 %5657
        %5659 = vrot.lane.b32.xlu0 %v5648, 19
        %v5660 = vpop.permute.xlu0 %5659
        %v5661 = vsel %vm1361, %v5654, %v5656
        %v5662 = vsel %vm1361, %v5656, %v5658
        %v5663 = vsel %vm1361, %v5658, %v5660
        %5667 = vst [vmem:[#allocation2 + $0x120] sm:$0xff] %v5661
        %5668 = vst [vmem:[#allocation2 + $0x128] sm:$0xff] %v5662
        %5669 = vst.msk [vmem:[#allocation2 + $0x130] sm:$0xff] %vm639, %v5663
        %v5670 = vld [vmem:[%s9] sm:$0xff]
        %v5671 = vld [vmem:[%s9 + $0x8] sm:$0xff]
        %v5672 = vld [vmem:[%s9 + $0x10] sm:$0xff]
        %v5673 = vld [vmem:[%s9 + $0x18] sm:$0xff]
        %v5674 = vld [vmem:[%s9 + $0x20] sm:$0xff]
        %v5675 = vld [vmem:[%s9 + $0x28] sm:$0xff]
        %v5676 = vld [vmem:[%s9 + $0x30] sm:$0xff]
        %v5677 = vld [vmem:[%s9 + $0x38] sm:$0xff]
        %v5678 = vld [vmem:[%s9 + $0x40] sm:$0xff]
        %v5679 = vld [vmem:[%s17] sm:$0xff]
        %v5680 = vld [vmem:[#allocation2] sm:$0xff]
        %v5681 = vld [vmem:[#allocation2 + $0x8] sm:$0xff]
        %v5682 = vld [vmem:[#allocation2 + $0x10] sm:$0xff]
        %v5683 = vld [vmem:[#allocation2 + $0x18] sm:$0xff]
        %v5684 = vld [vmem:[#allocation2 + $0x20] sm:$0xff]
        %v5685 = vld [vmem:[#allocation2 + $0x28] sm:$0xff]
        %v5686 = vld [vmem:[#allocation2 + $0x30] sm:$0xff]
        %v5687 = vld [vmem:[#allocation2 + $0x38] sm:$0xff]
        %v5688 = vld [vmem:[#allocation2 + $0x40] sm:$0xff]
        %v5689 = vld [vmem:[#allocation2 + $0x48] sm:$0xff]
        %v5690 = vld [vmem:[#allocation2 + $0x50] sm:$0xff]
        %v5691 = vld [vmem:[#allocation2 + $0x58] sm:$0xff]
        %v5692 = vld [vmem:[#allocation2 + $0x60] sm:$0xff]
        %v5693 = vld [vmem:[#allocation2 + $0x68] sm:$0xff]
        %v5694 = vld [vmem:[#allocation2 + $0x70] sm:$0xff]
        %v5695 = vld [vmem:[#allocation2 + $0x78] sm:$0xff]
        %v5696 = vld [vmem:[#allocation2 + $0x80] sm:$0xff]
        %v5697 = vld [vmem:[#allocation2 + $0x88] sm:$0xff]
        %v5698 = vld [vmem:[#allocation2 + $0x90] sm:$0xff]
        %v5699 = vld [vmem:[#allocation2 + $0x98] sm:$0xff]
        %v5700 = vld [vmem:[#allocation2 + $0xa0] sm:$0xff]
        %v5701 = vld [vmem:[#allocation2 + $0xa8] sm:$0xff]
        %v5702 = vld [vmem:[#allocation2 + $0xb0] sm:$0xff]
        %v5703 = vld [vmem:[#allocation2 + $0xb8] sm:$0xff]
        %v5704 = vld [vmem:[#allocation2 + $0xc0] sm:$0xff]
        %v5705 = vld [vmem:[#allocation2 + $0xc8] sm:$0xff]
        %v5706 = vld [vmem:[#allocation2 + $0xd0] sm:$0xff]
        %v5707 = vld [vmem:[#allocation2 + $0xd8] sm:$0xff]
        %v5708 = vld [vmem:[#allocation2 + $0xe0] sm:$0xff]
        %v5709 = vld [vmem:[#allocation2 + $0xe8] sm:$0xff]
        %v5710 = vld [vmem:[#allocation2 + $0xf0] sm:$0xff]
        %v5711 = vld [vmem:[#allocation2 + $0xf8] sm:$0xff]
        %v5712 = vld [vmem:[#allocation2 + $0x100] sm:$0xff]
        %v5713 = vld [vmem:[#allocation2 + $0x108] sm:$0xff]
        %v5714 = vld [vmem:[#allocation2 + $0x110] sm:$0xff]
        %v5715 = vld [vmem:[#allocation2 + $0x118] sm:$0xff]
        %v5716 = vld [vmem:[#allocation2 + $0x120] sm:$0xff]
        %v5717 = vld [vmem:[#allocation2 + $0x128] sm:$0xff]
        %v5718 = vld [vmem:[#allocation2 + $0x130] sm:$0xff]
        %v5719 = vld [vmem:[#allocation2 + $0x138] sm:$0xff]
        %vm5720 = vcmask 523264
        %v5722 = vsel %vm5720, %v5670, 0
        %v5725 = vsel %vm5720, %v5671, 0
        %v5728 = vsel %vm5720, %v5672, 0
        %v5731 = vsel %vm5720, %v5673, 0
        %v5734 = vsel %vm5720, %v5674, 0
        %v5737 = vsel %vm5720, %v5675, 0
        %v5740 = vsel %vm5720, %v5676, 0
        %v5743 = vsel %vm5720, %v5677, 0
        %v5746 = vsel %vm5720, %v5678, 0
        %5748 = vmatprep.subr.mxu0 0.0
        %5749 = vmatpush1.msra.mxu0 0.0
        %5750 = vmatprep.subr.mxu0 0.0
        %5751 = vmatpush1.msra.mxu0 0.0
        %5752 = vmatprep.subr.mxu0 0.0
        %5753 = vmatpush1.msra.mxu0 0.0
        %5754 = vmatprep.subr.mxu0 0.0
        %5755 = vmatpush1.msra.mxu0 0.0
        %5756 = vmatprep.subr.mxu0 0.0
        %5757 = vmatpush1.msra.mxu0 0.0
        %5758 = vmatprep.subr.mxu0 0.0
        %5759 = vmatpush1.msra.mxu0 0.0
        %5760 = vmatprep.subr.mxu0 0.0
        %5761 = vmatpush1.msra.mxu0 0.0
        %5762 = vmatprep.subr.mxu0 0.0
        %5763 = vmatpush1.msra.mxu0 0.0
        %5764 = vmatprep.subr.mxu0 %v5716
        %5765 = vmatpush1.msra.mxu0 %v5715
        %5766 = vmatprep.subr.mxu0 %v5711
        %5767 = vmatpush1.msra.mxu0 %v5710
        %5768 = vmatprep.subr.mxu0 %v5706
        %5769 = vmatpush1.msra.mxu0 %v5705
        %5770 = vmatprep.subr.mxu0 %v5701
        %5771 = vmatpush1.msra.mxu0 %v5700
        %5772 = vmatprep.subr.mxu0 %v5696
        %5773 = vmatpush1.msra.mxu0 %v5695
        %5774 = vmatprep.subr.mxu0 %v5691
        %5775 = vmatpush1.msra.mxu0 %v5690
        %5776 = vmatprep.subr.mxu0 %v5686
        %5777 = vmatpush1.msra.mxu0 %v5685
        %5778 = vmatprep.subr.mxu0 %v5681
        %5779 = vmatpush1.msra.mxu0 %v5680
        %5780 = vmatprep.subr.mxu0 0.0
        %5781 = vmatpush2.msra.mxu0 0.0
        %5782 = vmatprep.subr.mxu0 0.0
        %5783 = vmatpush2.msra.mxu0 0.0
        %5784 = vmatprep.subr.mxu0 0.0
        %5785 = vmatpush2.msra.mxu0 0.0
        %5786 = vmatprep.subr.mxu0 0.0
        %5787 = vmatpush2.msra.mxu0 0.0
        %5788 = vmatprep.subr.mxu0 0.0
        %5789 = vmatpush2.msra.mxu0 0.0
        %5790 = vmatprep.subr.mxu0 0.0
        %5791 = vmatpush2.msra.mxu0 0.0
        %5792 = vmatprep.subr.mxu0 0.0
        %5793 = vmatpush2.msra.mxu0 0.0
        %5794 = vmatprep.subr.mxu0 0.0
        %5795 = vmatpush2.msra.mxu0 0.0
        %5796 = vmatprep.subr.mxu0 0.0
        %5797 = vmatpush2.msra.mxu0 0.0
        %5798 = vmatprep.subr.mxu0 0.0
        %5799 = vmatpush2.msra.mxu0 0.0
        %5800 = vmatprep.subr.mxu0 0.0
        %5801 = vmatpush2.msra.mxu0 0.0
        %5802 = vmatprep.subr.mxu0 0.0
        %5803 = vmatpush2.msra.mxu0 0.0
        %5804 = vmatprep.subr.mxu0 0.0
        %5805 = vmatpush2.msra.mxu0 0.0
        %5806 = vmatprep.subr.mxu0 0.0
        %5807 = vmatpush2.msra.mxu0 0.0
        %5808 = vmatprep.subr.mxu0 0.0
        %5809 = vmatpush2.msra.mxu0 0.0
        %5810 = vmatprep.subr.mxu0 0.0
        %5811 = vmatpush2.msra.mxu0 0.0
        %5812 = vmatprep.mubr.f32.mxu0 0.0
        %5813 = vmatmul.mubr.f32.gmra.mxu0 %v5722
        %v5814 = vpop.f32.mrf.mxu0
        %v5815 = vadd.f32 0.0, %v5814
        %v5816 = vpop.f32.mrf.mxu0
        %v5817 = vadd.f32 0.0, %v5816
        %5818 = vmatprep.mubr.f32.mxu0 0.0
        %5819 = vmatmul.mubr.f32.gmra.mxu0 %v5725
        %v5820 = vpop.f32.mrf.mxu0
        %v5821 = vadd.f32 0.0, %v5820
        %v5822 = vpop.f32.mrf.mxu0
        %v5823 = vadd.f32 0.0, %v5822
        %5824 = vmatprep.mubr.f32.mxu0 0.0
        %5825 = vmatmul.mubr.f32.gmra.mxu0 %v5728
        %v5826 = vpop.f32.mrf.mxu0
        %v5827 = vadd.f32 0.0, %v5826
        %v5828 = vpop.f32.mrf.mxu0
        %v5829 = vadd.f32 0.0, %v5828
        %5830 = vmatprep.mubr.f32.mxu0 0.0
        %5831 = vmatmul.mubr.f32.gmra.mxu0 %v5731
        %v5832 = vpop.f32.mrf.mxu0
        %v5833 = vadd.f32 0.0, %v5832
        %v5834 = vpop.f32.mrf.mxu0
        %v5835 = vadd.f32 0.0, %v5834
        %5836 = vmatprep.mubr.f32.mxu0 0.0
        %5837 = vmatmul.mubr.f32.gmra.mxu0 %v5734
        %v5838 = vpop.f32.mrf.mxu0
        %v5839 = vadd.f32 0.0, %v5838
        %v5840 = vpop.f32.mrf.mxu0
        %v5841 = vadd.f32 0.0, %v5840
        %5842 = vmatprep.mubr.f32.mxu0 0.0
        %5843 = vmatmul.mubr.f32.gmra.mxu0 %v5737
        %v5844 = vpop.f32.mrf.mxu0
        %v5845 = vadd.f32 0.0, %v5844
        %v5846 = vpop.f32.mrf.mxu0
        %v5847 = vadd.f32 0.0, %v5846
        %5848 = vmatprep.mubr.f32.mxu0 0.0
        %5849 = vmatmul.mubr.f32.gmra.mxu0 %v5740
        %v5850 = vpop.f32.mrf.mxu0
        %v5851 = vadd.f32 0.0, %v5850
        %v5852 = vpop.f32.mrf.mxu0
        %v5853 = vadd.f32 0.0, %v5852
        %5854 = vmatprep.mubr.f32.mxu0 0.0
        %5855 = vmatmul.mubr.f32.gmra.mxu0 %v5743
        %v5856 = vpop.f32.mrf.mxu0
        %v5857 = vadd.f32 0.0, %v5856
        %v5858 = vpop.f32.mrf.mxu0
        %v5859 = vadd.f32 0.0, %v5858
        %5860 = vmatprep.mubr.f32.mxu0 0.0
        %5861 = vmatmul.mubr.f32.gmra.mxu0 %v5746
        %v5862 = vpop.f32.mrf.mxu0
        %v5863 = vadd.f32 0.0, %v5862
        %v5864 = vpop.f32.mrf.mxu0
        %v5865 = vadd.f32 0.0, %v5864
        %5866 = vdwg.mxu0
        %5867 = vmatprep.subr.mxu0 0.0
        %5868 = vmatpush1.msra.mxu0 0.0
        %5869 = vmatprep.subr.mxu0 0.0
        %5870 = vmatpush1.msra.mxu0 0.0
        %5871 = vmatprep.subr.mxu0 0.0
        %5872 = vmatpush1.msra.mxu0 0.0
        %5873 = vmatprep.subr.mxu0 0.0
        %5874 = vmatpush1.msra.mxu0 0.0
        %5875 = vmatprep.subr.mxu0 0.0
        %5876 = vmatpush1.msra.mxu0 0.0
        %5877 = vmatprep.subr.mxu0 0.0
        %5878 = vmatpush1.msra.mxu0 0.0
        %5879 = vmatprep.subr.mxu0 0.0
        %5880 = vmatpush1.msra.mxu0 0.0
        %5881 = vmatprep.subr.mxu0 0.0
        %5882 = vmatpush1.msra.mxu0 0.0
        %5883 = vmatprep.subr.mxu0 %v5718
        %5884 = vmatpush1.msra.mxu0 %v5717
        %5885 = vmatprep.subr.mxu0 %v5713
        %5886 = vmatpush1.msra.mxu0 %v5712
        %5887 = vmatprep.subr.mxu0 %v5708
        %5888 = vmatpush1.msra.mxu0 %v5707
        %5889 = vmatprep.subr.mxu0 %v5703
        %5890 = vmatpush1.msra.mxu0 %v5702
        %5891 = vmatprep.subr.mxu0 %v5698
        %5892 = vmatpush1.msra.mxu0 %v5697
        %5893 = vmatprep.subr.mxu0 %v5693
        %5894 = vmatpush1.msra.mxu0 %v5692
        %5895 = vmatprep.subr.mxu0 %v5688
        %5896 = vmatpush1.msra.mxu0 %v5687
        %5897 = vmatprep.subr.mxu0 %v5683
        %5898 = vmatpush1.msra.mxu0 %v5682
        %5899 = vmatprep.subr.mxu0 0.0
        %5900 = vmatpush2.msra.mxu0 0.0
        %5901 = vmatprep.subr.mxu0 0.0
        %5902 = vmatpush2.msra.mxu0 0.0
        %5903 = vmatprep.subr.mxu0 0.0
        %5904 = vmatpush2.msra.mxu0 0.0
        %5905 = vmatprep.subr.mxu0 0.0
        %5906 = vmatpush2.msra.mxu0 0.0
        %5907 = vmatprep.subr.mxu0 0.0
        %5908 = vmatpush2.msra.mxu0 0.0
        %5909 = vmatprep.subr.mxu0 0.0
        %5910 = vmatpush2.msra.mxu0 0.0
        %5911 = vmatprep.subr.mxu0 0.0
        %5912 = vmatpush2.msra.mxu0 0.0
        %5913 = vmatprep.subr.mxu0 0.0
        %5914 = vmatpush2.msra.mxu0 0.0
        %5915 = vmatprep.subr.mxu0 0.0
        %5916 = vmatpush2.msra.mxu0 0.0
        %5917 = vmatprep.subr.mxu0 0.0
        %5918 = vmatpush2.msra.mxu0 0.0
        %5919 = vmatprep.subr.mxu0 0.0
        %5920 = vmatpush2.msra.mxu0 0.0
        %5921 = vmatprep.subr.mxu0 0.0
        %5922 = vmatpush2.msra.mxu0 0.0
        %5923 = vmatprep.subr.mxu0 0.0
        %5924 = vmatpush2.msra.mxu0 0.0
        %5925 = vmatprep.subr.mxu0 0.0
        %5926 = vmatpush2.msra.mxu0 0.0
        %5927 = vmatprep.subr.mxu0 0.0
        %5928 = vmatpush2.msra.mxu0 0.0
        %5929 = vmatprep.subr.mxu0 0.0
        %5930 = vmatpush2.msra.mxu0 0.0
        %5931 = vmatprep.mubr.f32.mxu0 0.0
        %5932 = vmatmul.mubr.f32.gmra.mxu0 %v5722
        %v5933 = vpop.f32.mrf.mxu0
        %v5934 = vadd.f32 0.0, %v5933
        %v5935 = vpop.f32.mrf.mxu0
        %v5936 = vadd.f32 0.0, %v5935
        %5937 = vmatprep.mubr.f32.mxu0 0.0
        %5938 = vmatmul.mubr.f32.gmra.mxu0 %v5725
        %v5939 = vpop.f32.mrf.mxu0
        %v5940 = vadd.f32 0.0, %v5939
        %v5941 = vpop.f32.mrf.mxu0
        %v5942 = vadd.f32 0.0, %v5941
        %5943 = vmatprep.mubr.f32.mxu0 0.0
        %5944 = vmatmul.mubr.f32.gmra.mxu0 %v5728
        %v5945 = vpop.f32.mrf.mxu0
        %v5946 = vadd.f32 0.0, %v5945
        %v5947 = vpop.f32.mrf.mxu0
        %v5948 = vadd.f32 0.0, %v5947
        %5949 = vmatprep.mubr.f32.mxu0 0.0
        %5950 = vmatmul.mubr.f32.gmra.mxu0 %v5731
        %v5951 = vpop.f32.mrf.mxu0
        %v5952 = vadd.f32 0.0, %v5951
        %v5953 = vpop.f32.mrf.mxu0
        %v5954 = vadd.f32 0.0, %v5953
        %5955 = vmatprep.mubr.f32.mxu0 0.0
        %5956 = vmatmul.mubr.f32.gmra.mxu0 %v5734
        %v5957 = vpop.f32.mrf.mxu0
        %v5958 = vadd.f32 0.0, %v5957
        %v5959 = vpop.f32.mrf.mxu0
        %v5960 = vadd.f32 0.0, %v5959
        %5961 = vmatprep.mubr.f32.mxu0 0.0
        %5962 = vmatmul.mubr.f32.gmra.mxu0 %v5737
        %v5963 = vpop.f32.mrf.mxu0
        %v5964 = vadd.f32 0.0, %v5963
        %v5965 = vpop.f32.mrf.mxu0
        %v5966 = vadd.f32 0.0, %v5965
        %5967 = vmatprep.mubr.f32.mxu0 0.0
        %5968 = vmatmul.mubr.f32.gmra.mxu0 %v5740
        %v5969 = vpop.f32.mrf.mxu0
        %v5970 = vadd.f32 0.0, %v5969
        %v5971 = vpop.f32.mrf.mxu0
        %v5972 = vadd.f32 0.0, %v5971
        %5973 = vmatprep.mubr.f32.mxu0 0.0
        %5974 = vmatmul.mubr.f32.gmra.mxu0 %v5743
        %v5975 = vpop.f32.mrf.mxu0
        %v5976 = vadd.f32 0.0, %v5975
        %v5977 = vpop.f32.mrf.mxu0
        %v5978 = vadd.f32 0.0, %v5977
        %5979 = vmatprep.mubr.f32.mxu0 0.0
        %5980 = vmatmul.mubr.f32.gmra.mxu0 %v5746
        %v5981 = vpop.f32.mrf.mxu0
        %v5982 = vadd.f32 0.0, %v5981
        %v5983 = vpop.f32.mrf.mxu0
        %v5984 = vadd.f32 0.0, %v5983
        %5985 = vdwg.mxu0
        %5986 = vmatprep.subr.mxu0 0.0
        %5987 = vmatpush1.msra.mxu0 0.0
        %5988 = vmatprep.subr.mxu0 0.0
        %5989 = vmatpush1.msra.mxu0 0.0
        %5990 = vmatprep.subr.mxu0 0.0
        %5991 = vmatpush1.msra.mxu0 0.0
        %5992 = vmatprep.subr.mxu0 0.0
        %5993 = vmatpush1.msra.mxu0 0.0
        %5994 = vmatprep.subr.mxu0 0.0
        %5995 = vmatpush1.msra.mxu0 0.0
        %5996 = vmatprep.subr.mxu0 0.0
        %5997 = vmatpush1.msra.mxu0 0.0
        %5998 = vmatprep.subr.mxu0 0.0
        %5999 = vmatpush1.msra.mxu0 0.0
        %6000 = vmatprep.subr.mxu0 0.0
        %6001 = vmatpush1.msra.mxu0 0.0
        %6002 = vmatprep.subr.mxu0 0.0
        %6003 = vmatpush1.msra.mxu0 %v5719
        %6004 = vmatprep.subr.mxu0 0.0
        %6005 = vmatpush1.msra.mxu0 %v5714
        %6006 = vmatprep.subr.mxu0 0.0
        %6007 = vmatpush1.msra.mxu0 %v5709
        %6008 = vmatprep.subr.mxu0 0.0
        %6009 = vmatpush1.msra.mxu0 %v5704
        %6010 = vmatprep.subr.mxu0 0.0
        %6011 = vmatpush1.msra.mxu0 %v5699
        %6012 = vmatprep.subr.mxu0 0.0
        %6013 = vmatpush1.msra.mxu0 %v5694
        %6014 = vmatprep.subr.mxu0 0.0
        %6015 = vmatpush1.msra.mxu0 %v5689
        %6016 = vmatprep.subr.mxu0 0.0
        %6017 = vmatpush1.msra.mxu0 %v5684
        %6018 = vmatprep.subr.mxu0 0.0
        %6019 = vmatpush2.msra.mxu0 0.0
        %6020 = vmatprep.subr.mxu0 0.0
        %6021 = vmatpush2.msra.mxu0 0.0
        %6022 = vmatprep.subr.mxu0 0.0
        %6023 = vmatpush2.msra.mxu0 0.0
        %6024 = vmatprep.subr.mxu0 0.0
        %6025 = vmatpush2.msra.mxu0 0.0
        %6026 = vmatprep.subr.mxu0 0.0
        %6027 = vmatpush2.msra.mxu0 0.0
        %6028 = vmatprep.subr.mxu0 0.0
        %6029 = vmatpush2.msra.mxu0 0.0
        %6030 = vmatprep.subr.mxu0 0.0
        %6031 = vmatpush2.msra.mxu0 0.0
        %6032 = vmatprep.subr.mxu0 0.0
        %6033 = vmatpush2.msra.mxu0 0.0
        %6034 = vmatprep.subr.mxu0 0.0
        %6035 = vmatpush2.msra.mxu0 0.0
        %6036 = vmatprep.subr.mxu0 0.0
        %6037 = vmatpush2.msra.mxu0 0.0
        %6038 = vmatprep.subr.mxu0 0.0
        %6039 = vmatpush2.msra.mxu0 0.0
        %6040 = vmatprep.subr.mxu0 0.0
        %6041 = vmatpush2.msra.mxu0 0.0
        %6042 = vmatprep.subr.mxu0 0.0
        %6043 = vmatpush2.msra.mxu0 0.0
        %6044 = vmatprep.subr.mxu0 0.0
        %6045 = vmatpush2.msra.mxu0 0.0
        %6046 = vmatprep.subr.mxu0 0.0
        %6047 = vmatpush2.msra.mxu0 0.0
        %6048 = vmatprep.subr.mxu0 0.0
        %6049 = vmatpush2.msra.mxu0 0.0
        %6050 = vmatprep.mubr.f32.mxu0 0.0
        %6051 = vmatmul.mubr.f32.gmra.mxu0 %v5722
        %v6052 = vpop.f32.mrf.mxu0
        %v6053 = vadd.f32 0.0, %v6052
        %v6054 = vpop.f32.mrf.mxu0
        %6055 = vmatprep.mubr.f32.mxu0 0.0
        %6056 = vmatmul.mubr.f32.gmra.mxu0 %v5725
        %v6057 = vpop.f32.mrf.mxu0
        %v6058 = vadd.f32 0.0, %v6057
        %v6059 = vpop.f32.mrf.mxu0
        %6060 = vmatprep.mubr.f32.mxu0 0.0
        %6061 = vmatmul.mubr.f32.gmra.mxu0 %v5728
        %v6062 = vpop.f32.mrf.mxu0
        %v6063 = vadd.f32 0.0, %v6062
        %v6064 = vpop.f32.mrf.mxu0
        %6065 = vmatprep.mubr.f32.mxu0 0.0
        %6066 = vmatmul.mubr.f32.gmra.mxu0 %v5731
        %v6067 = vpop.f32.mrf.mxu0
        %v6068 = vadd.f32 0.0, %v6067
        %v6069 = vpop.f32.mrf.mxu0
        %6070 = vmatprep.mubr.f32.mxu0 0.0
        %6071 = vmatmul.mubr.f32.gmra.mxu0 %v5734
        %v6072 = vpop.f32.mrf.mxu0
        %v6073 = vadd.f32 0.0, %v6072
        %v6074 = vpop.f32.mrf.mxu0
        %6075 = vmatprep.mubr.f32.mxu0 0.0
        %6076 = vmatmul.mubr.f32.gmra.mxu0 %v5737
        %v6077 = vpop.f32.mrf.mxu0
        %v6078 = vadd.f32 0.0, %v6077
        %v6079 = vpop.f32.mrf.mxu0
        %6080 = vmatprep.mubr.f32.mxu0 0.0
        %6081 = vmatmul.mubr.f32.gmra.mxu0 %v5740
        %v6082 = vpop.f32.mrf.mxu0
        %v6083 = vadd.f32 0.0, %v6082
        %v6084 = vpop.f32.mrf.mxu0
        %6085 = vmatprep.mubr.f32.mxu0 0.0
        %6086 = vmatmul.mubr.f32.gmra.mxu0 %v5743
        %v6087 = vpop.f32.mrf.mxu0
        %v6088 = vadd.f32 0.0, %v6087
        %v6089 = vpop.f32.mrf.mxu0
        %6090 = vmatprep.mubr.f32.mxu0 0.0
        %6091 = vmatmul.mubr.f32.gmra.mxu0 %v5746
        %v6092 = vpop.f32.mrf.mxu0
        %v6093 = vadd.f32 0.0, %v6092
        %v6094 = vpop.f32.mrf.mxu0
        %6095 = vdwg.mxu0
        %6096 = vst [vmem:[#allocation3] sm:$0xff] %v5815
        %6097 = vst [vmem:[#allocation3 + $0x8] sm:$0xff] %v5817
        %6098 = vst [vmem:[#allocation3 + $0x10] sm:$0xff] %v5934
        %6099 = vst [vmem:[#allocation3 + $0x18] sm:$0xff] %v5936
        %6100 = vst.msk [vmem:[#allocation3 + $0x20] sm:$0xff] %vm639, %v6053
        %6101 = vst [vmem:[#allocation3 + $0x28] sm:$0xff] %v5821
        %6102 = vst [vmem:[#allocation3 + $0x30] sm:$0xff] %v5823
        %6103 = vst [vmem:[#allocation3 + $0x38] sm:$0xff] %v5940
        %6104 = vst [vmem:[#allocation3 + $0x40] sm:$0xff] %v5942
        %6105 = vst.msk [vmem:[#allocation3 + $0x48] sm:$0xff] %vm639, %v6058
        %6106 = vst [vmem:[#allocation3 + $0x50] sm:$0xff] %v5827
        %6107 = vst [vmem:[#allocation3 + $0x58] sm:$0xff] %v5829
        %6108 = vst [vmem:[#allocation3 + $0x60] sm:$0xff] %v5946
        %6109 = vst [vmem:[#allocation3 + $0x68] sm:$0xff] %v5948
        %6110 = vst.msk [vmem:[#allocation3 + $0x70] sm:$0xff] %vm639, %v6063
        %6111 = vst [vmem:[#allocation3 + $0x78] sm:$0xff] %v5833
        %6112 = vst [vmem:[#allocation3 + $0x80] sm:$0xff] %v5835
        %6113 = vst [vmem:[#allocation3 + $0x88] sm:$0xff] %v5952
        %6114 = vst [vmem:[#allocation3 + $0x90] sm:$0xff] %v5954
        %6115 = vst.msk [vmem:[#allocation3 + $0x98] sm:$0xff] %vm639, %v6068
        %6116 = vst [vmem:[#allocation3 + $0xa0] sm:$0xff] %v5839
        %6117 = vst [vmem:[#allocation3 + $0xa8] sm:$0xff] %v5841
        %6118 = vst [vmem:[#allocation3 + $0xb0] sm:$0xff] %v5958
        %6119 = vst [vmem:[#allocation3 + $0xb8] sm:$0xff] %v5960
        %6120 = vst.msk [vmem:[#allocation3 + $0xc0] sm:$0xff] %vm639, %v6073
        %6121 = vst [vmem:[#allocation3 + $0xc8] sm:$0xff] %v5845
        %6122 = vst [vmem:[#allocation3 + $0xd0] sm:$0xff] %v5847
        %6123 = vst [vmem:[#allocation3 + $0xd8] sm:$0xff] %v5964
        %6124 = vst [vmem:[#allocation3 + $0xe0] sm:$0xff] %v5966
        %6125 = vst.msk [vmem:[#allocation3 + $0xe8] sm:$0xff] %vm639, %v6078
        %6126 = vst [vmem:[#allocation3 + $0xf0] sm:$0xff] %v5851
        %6127 = vst [vmem:[#allocation3 + $0xf8] sm:$0xff] %v5853
        %6128 = vst [vmem:[#allocation3 + $0x100] sm:$0xff] %v5970
        %6129 = vst [vmem:[#allocation3 + $0x108] sm:$0xff] %v5972
        %6130 = vst.msk [vmem:[#allocation3 + $0x110] sm:$0xff] %vm639, %v6083
        %6131 = vst [vmem:[#allocation3 + $0x118] sm:$0xff] %v5857
        %6132 = vst [vmem:[#allocation3 + $0x120] sm:$0xff] %v5859
        %6133 = vst [vmem:[#allocation3 + $0x128] sm:$0xff] %v5976
        %6134 = vst [vmem:[#allocation3 + $0x130] sm:$0xff] %v5978
        %6135 = vst.msk [vmem:[#allocation3 + $0x138] sm:$0xff] %vm639, %v6088
        %6136 = vst [vmem:[#allocation3 + $0x140] sm:$0xff] %v5863
        %6137 = vst [vmem:[#allocation3 + $0x148] sm:$0xff] %v5865
        %6138 = vst [vmem:[#allocation3 + $0x150] sm:$0xff] %v5982
        %6139 = vst [vmem:[#allocation3 + $0x158] sm:$0xff] %v5984
        %6140 = vst.msk [vmem:[#allocation3 + $0x160] sm:$0xff] %vm639, %v6093
        %v6141 = vld [vmem:[#allocation3] sm:$0xff]
        %v6142 = vld [vmem:[#allocation3 + $0x8] sm:$0xff]
        %v6143 = vld [vmem:[#allocation3 + $0x10] sm:$0xff]
        %v6144 = vld [vmem:[#allocation3 + $0x18] sm:$0xff]
        %v6145 = vadd.f32 %v6141, 0.0
        %v6146 = vadd.f32 %v6142, 0.0
        %v6147 = vadd.f32 %v6143, 0.0
        %v6148 = vadd.f32 %v6144, 0.0
        %v6149 = vld [vmem:[#allocation3 + $0x28] sm:$0xff]
        %v6150 = vld [vmem:[#allocation3 + $0x30] sm:$0xff]
        %v6151 = vld [vmem:[#allocation3 + $0x38] sm:$0xff]
        %v6152 = vld [vmem:[#allocation3 + $0x40] sm:$0xff]
        %6157 = vrot.lane.b32.xlu0 %v6149, 127
        %v6158 = vpop.permute.xlu0 %6157
        %6159 = vrot.lane.b32.xlu0 %v6150, 127
        %v6160 = vpop.permute.xlu0 %6159
        %6161 = vrot.lane.b32.xlu0 %v6151, 127
        %v6162 = vpop.permute.xlu0 %6161
        %6163 = vrot.lane.b32.xlu0 %v6152, 127
        %v6164 = vpop.permute.xlu0 %6163
        %v6165 = vsel %vm1123, %v6158, %v6160
        %v6166 = vsel %vm1123, %v6160, %v6162
        %v6167 = vsel %vm1123, %v6162, %v6164
        %v6172 = vadd.f32 %v6145, %v6165
        %v6173 = vadd.f32 %v6146, %v6166
        %v6174 = vadd.f32 %v6147, %v6167
        %v6175 = vadd.f32 %v6148, %v6164
        %v6176 = vld [vmem:[#allocation3 + $0x50] sm:$0xff]
        %v6177 = vld [vmem:[#allocation3 + $0x58] sm:$0xff]
        %v6178 = vld [vmem:[#allocation3 + $0x60] sm:$0xff]
        %v6179 = vld [vmem:[#allocation3 + $0x68] sm:$0xff]
        %6184 = vrot.lane.b32.xlu0 %v6176, 126
        %v6185 = vpop.permute.xlu0 %6184
        %6186 = vrot.lane.b32.xlu0 %v6177, 126
        %v6187 = vpop.permute.xlu0 %6186
        %6188 = vrot.lane.b32.xlu0 %v6178, 126
        %v6189 = vpop.permute.xlu0 %6188
        %6190 = vrot.lane.b32.xlu0 %v6179, 126
        %v6191 = vpop.permute.xlu0 %6190
        %v6192 = vsel %vm1151, %v6185, %v6187
        %v6193 = vsel %vm1151, %v6187, %v6189
        %v6194 = vsel %vm1151, %v6189, %v6191
        %v6199 = vadd.f32 %v6172, %v6192
        %v6200 = vadd.f32 %v6173, %v6193
        %v6201 = vadd.f32 %v6174, %v6194
        %v6202 = vadd.f32 %v6175, %v6191
        %v6203 = vld [vmem:[#allocation3 + $0x78] sm:$0xff]
        %v6204 = vld [vmem:[#allocation3 + $0x80] sm:$0xff]
        %v6205 = vld [vmem:[#allocation3 + $0x88] sm:$0xff]
        %v6206 = vld [vmem:[#allocation3 + $0x90] sm:$0xff]
        %6211 = vrot.lane.b32.xlu0 %v6203, 110
        %v6212 = vpop.permute.xlu0 %6211
        %6213 = vrot.lane.b32.xlu0 %v6204, 110
        %v6214 = vpop.permute.xlu0 %6213
        %6215 = vrot.lane.b32.xlu0 %v6205, 110
        %v6216 = vpop.permute.xlu0 %6215
        %6217 = vrot.lane.b32.xlu0 %v6206, 110
        %v6218 = vpop.permute.xlu0 %6217
        %v6219 = vsel %vm1179, %v6212, %v6214
        %v6220 = vsel %vm1179, %v6214, %v6216
        %v6221 = vsel %vm1179, %v6216, %v6218
        %v6226 = vadd.f32 %v6199, %v6219
        %v6227 = vadd.f32 %v6200, %v6220
        %v6228 = vadd.f32 %v6201, %v6221
        %v6229 = vadd.f32 %v6202, %v6218
        %v6230 = vld [vmem:[#allocation3 + $0xa8] sm:$0xff]
        %v6231 = vld [vmem:[#allocation3 + $0xb0] sm:$0xff]
        %v6232 = vld [vmem:[#allocation3 + $0xb8] sm:$0xff]
        %6236 = vrot.lane.b32.xlu0 %v6230, 109
        %v6237 = vpop.permute.xlu0 %6236
        %6238 = vrot.lane.b32.xlu0 %v6231, 109
        %v6239 = vpop.permute.xlu0 %6238
        %6240 = vrot.lane.b32.xlu0 %v6232, 109
        %v6241 = vpop.permute.xlu0 %6240
        %v6242 = vsel %vm1203, %v6237, %v6239
        %v6243 = vsel %vm1203, %v6239, %v6241
        %v6248 = vadd.f32 %v6226, %v6237
        %v6249 = vadd.f32 %v6227, %v6242
        %v6250 = vadd.f32 %v6228, %v6243
        %v6251 = vadd.f32 %v6229, %v6241
        %v6252 = vld [vmem:[#allocation3 + $0xd0] sm:$0xff]
        %v6253 = vld [vmem:[#allocation3 + $0xd8] sm:$0xff]
        %v6254 = vld [vmem:[#allocation3 + $0xe0] sm:$0xff]
        %6258 = vrot.lane.b32.xlu0 %v6252, 108
        %v6259 = vpop.permute.xlu0 %6258
        %6260 = vrot.lane.b32.xlu0 %v6253, 108
        %v6261 = vpop.permute.xlu0 %6260
        %6262 = vrot.lane.b32.xlu0 %v6254, 108
        %v6263 = vpop.permute.xlu0 %6262
        %v6264 = vsel %vm1226, %v6259, %v6261
        %v6265 = vsel %vm1226, %v6261, %v6263
        %v6270 = vadd.f32 %v6248, %v6259
        %v6271 = vadd.f32 %v6249, %v6264
        %v6272 = vadd.f32 %v6250, %v6265
        %v6273 = vadd.f32 %v6251, %v6263
        %v6274 = vld [vmem:[#allocation3 + $0xf8] sm:$0xff]
        %v6275 = vld [vmem:[#allocation3 + $0x100] sm:$0xff]
        %v6276 = vld [vmem:[#allocation3 + $0x108] sm:$0xff]
        %6280 = vrot.lane.b32.xlu0 %v6274, 92
        %v6281 = vpop.permute.xlu0 %6280
        %6282 = vrot.lane.b32.xlu0 %v6275, 92
        %v6283 = vpop.permute.xlu0 %6282
        %6284 = vrot.lane.b32.xlu0 %v6276, 92
        %v6285 = vpop.permute.xlu0 %6284
        %v6286 = vsel %vm1249, %v6281, %v6283
        %v6287 = vsel %vm1249, %v6283, %v6285
        %v6292 = vadd.f32 %v6270, %v6281
        %v6293 = vadd.f32 %v6271, %v6286
        %v6294 = vadd.f32 %v6272, %v6287
        %v6295 = vadd.f32 %v6273, %v6285
        %v6296 = vld [vmem:[#allocation3 + $0x120] sm:$0xff]
        %v6297 = vld [vmem:[#allocation3 + $0x128] sm:$0xff]
        %v6298 = vld [vmem:[#allocation3 + $0x130] sm:$0xff]
        %6302 = vrot.lane.b32.xlu0 %v6296, 91
        %v6303 = vpop.permute.xlu0 %6302
        %6304 = vrot.lane.b32.xlu0 %v6297, 91
        %v6305 = vpop.permute.xlu0 %6304
        %6306 = vrot.lane.b32.xlu0 %v6298, 91
        %v6307 = vpop.permute.xlu0 %6306
        %v6308 = vsel %vm1272, %v6303, %v6305
        %v6309 = vsel %vm1272, %v6305, %v6307
        %v6314 = vadd.f32 %v6292, %v6303
        %v6315 = vadd.f32 %v6293, %v6308
        %v6316 = vadd.f32 %v6294, %v6309
        %v6317 = vadd.f32 %v6295, %v6307
        %v6318 = vld [vmem:[#allocation3 + $0x148] sm:$0xff]
        %v6319 = vld [vmem:[#allocation3 + $0x150] sm:$0xff]
        %v6320 = vld [vmem:[#allocation3 + $0x158] sm:$0xff]
        %6324 = vrot.lane.b32.xlu0 %v6318, 90
        %v6325 = vpop.permute.xlu0 %6324
        %6326 = vrot.lane.b32.xlu0 %v6319, 90
        %v6327 = vpop.permute.xlu0 %6326
        %6328 = vrot.lane.b32.xlu0 %v6320, 90
        %v6329 = vpop.permute.xlu0 %6328
        %v6330 = vsel %vm1295, %v6325, %v6327
        %v6331 = vsel %vm1295, %v6327, %v6329
        %v6336 = vadd.f32 %v6314, %v6325
        %v6337 = vadd.f32 %v6315, %v6330
        %v6338 = vadd.f32 %v6316, %v6331
        %v6339 = vadd.f32 %v6317, %v6329
        %6341 = vset.pattern.permute.xlu0 0
        %6342 = vperm.xlu0 %6341, %v5679
        %v6343 = vpop.permute.xlu0 %6342
        %v6345 = vadd.f32 %v6336, %v6343
        %v6346 = vadd.f32 %v6337, %v6343
        %v6347 = vadd.f32 %v6338, %v6343
        %v6348 = vadd.f32 %v6339, %v6343
        %v6349 = vmax.f32 %v6345, 0.0
        %v6350 = vmax.f32 %v6346, 0.0
        %v6351 = vmax.f32 %v6347, 0.0
        %v6352 = vmax.f32 %v6348, 0.0
        %v6353 = vld [vmem:[%s1] sm:$0x7]
        %v6355 = vlaneseq
        %v6356 = vshrl.u32 %v6355, 7
        %v6357 = vsub.s32 0, %v6356
        %v6358 = vrot.slane %v6353, %v6357
        %v6359 = vlaneseq
        %v6360 = vshrl.u32 %v6359, 7
        %v6361 = vsub.s32 1, %v6360
        %v6362 = vrot.slane %v6353, %v6361
        %v6363 = vlaneseq
        %v6364 = vshrl.u32 %v6363, 7
        %v6365 = vsub.s32 2, %v6364
        %v6366 = vrot.slane %v6353, %v6365
        %6367 = vrot.lane.b32.xlu0 %v6358, 109
        %v6368 = vpop.permute.xlu0 %6367
        %6369 = vrot.lane.b32.xlu0 %v6362, 109
        %v6370 = vpop.permute.xlu0 %6369
        %6371 = vrot.lane.b32.xlu0 %v6366, 109
        %v6372 = vpop.permute.xlu0 %6371
        %v6373 = vsel %vm1203, %v6368, %v6370
        %v6374 = vsel %vm1203, %v6370, %v6372
        %v6379 = vmul.f32 %v6349, %v6368
        %v6380 = vmul.f32 %v6350, %v6373
        %v6381 = vmul.f32 %v6351, %v6374
        %v6382 = vmul.f32 %v6352, %v6372
        %6387 = vrot.lane.b32.xlu0 %v6379, 19
        %v6388 = vpop.permute.xlu0 %6387
        %6389 = vrot.lane.b32.xlu0 %v6380, 19
        %v6390 = vpop.permute.xlu0 %6389
        %6391 = vrot.lane.b32.xlu0 %v6381, 19
        %v6392 = vpop.permute.xlu0 %6391
        %6393 = vrot.lane.b32.xlu0 %v6382, 19
        %v6394 = vpop.permute.xlu0 %6393
        %v6395 = vsel %vm1361, %v6388, %v6390
        %v6396 = vsel %vm1361, %v6390, %v6392
        %v6397 = vsel %vm1361, %v6392, %v6394
        %6401 = vst [vmem:[#allocation2 + $0x148] sm:$0xff] %v6395
        %6402 = vst [vmem:[#allocation2 + $0x150] sm:$0xff] %v6396
        %6403 = vst.msk [vmem:[#allocation2 + $0x158] sm:$0xff] %vm639, %v6397
        %v6404 = vld [vmem:[%s18] sm:$0xff]
        %v6405 = vld [vmem:[%s19] sm:$0xff]
        %v6406 = vld [vmem:[#allocation2 + $0x8] sm:$0xff]
        %v6407 = vld [vmem:[#allocation2 + $0x10] sm:$0xff]
        %v6408 = vld [vmem:[#allocation2 + $0x18] sm:$0xff]
        %v6409 = vld [vmem:[#allocation2 + $0x30] sm:$0xff]
        %v6410 = vld [vmem:[#allocation2 + $0x38] sm:$0xff]
        %v6411 = vld [vmem:[#allocation2 + $0x40] sm:$0xff]
        %v6412 = vld [vmem:[#allocation2 + $0x58] sm:$0xff]
        %v6413 = vld [vmem:[#allocation2 + $0x60] sm:$0xff]
        %v6414 = vld [vmem:[#allocation2 + $0x68] sm:$0xff]
        %v6415 = vld [vmem:[#allocation2 + $0x80] sm:$0xff]
        %v6416 = vld [vmem:[#allocation2 + $0x88] sm:$0xff]
        %v6417 = vld [vmem:[#allocation2 + $0x90] sm:$0xff]
        %v6418 = vld [vmem:[#allocation2 + $0xa8] sm:$0xff]
        %v6419 = vld [vmem:[#allocation2 + $0xb0] sm:$0xff]
        %v6420 = vld [vmem:[#allocation2 + $0xb8] sm:$0xff]
        %v6421 = vld [vmem:[#allocation2 + $0xd0] sm:$0xff]
        %v6422 = vld [vmem:[#allocation2 + $0xd8] sm:$0xff]
        %v6423 = vld [vmem:[#allocation2 + $0xe0] sm:$0xff]
        %v6424 = vld [vmem:[#allocation2 + $0xf8] sm:$0xff]
        %v6425 = vld [vmem:[#allocation2 + $0x100] sm:$0xff]
        %v6426 = vld [vmem:[#allocation2 + $0x108] sm:$0xff]
        %v6427 = vld [vmem:[#allocation2 + $0x120] sm:$0xff]
        %v6428 = vld [vmem:[#allocation2 + $0x128] sm:$0xff]
        %v6429 = vld [vmem:[#allocation2 + $0x130] sm:$0xff]
        %v6430 = vld [vmem:[#allocation2 + $0x148] sm:$0xff]
        %v6431 = vld [vmem:[#allocation2 + $0x150] sm:$0xff]
        %v6432 = vld [vmem:[#allocation2 + $0x158] sm:$0xff]
        %6434 = vset.pattern.permute.xlu0 0
        %6435 = vperm.xlu0 %6434, %v6405
        %v6436 = vpop.permute.xlu0 %6435
        %vm6438 = vcmask 588800
        %v6440 = vsel %vm6438, %v6404, 0
        %6442 = vmatprep.subr.mxu0 0.0
        %6443 = vmatpush1.msra.mxu0 0.0
        %6444 = vmatprep.subr.mxu0 0.0
        %6445 = vmatpush1.msra.mxu0 0.0
        %6446 = vmatprep.subr.mxu0 0.0
        %6447 = vmatpush1.msra.mxu0 0.0
        %6448 = vmatprep.subr.mxu0 0.0
        %6449 = vmatpush1.msra.mxu0 0.0
        %6450 = vmatprep.subr.mxu0 0.0
        %6451 = vmatpush1.msra.mxu0 0.0
        %6452 = vmatprep.subr.mxu0 0.0
        %6453 = vmatpush1.msra.mxu0 0.0
        %6454 = vmatprep.subr.mxu0 0.0
        %6455 = vmatpush1.msra.mxu0 0.0
        %6456 = vmatprep.subr.mxu0 %v6431
        %6457 = vmatpush1.msra.mxu0 %v6430
        %6458 = vmatprep.subr.mxu0 %v6428
        %6459 = vmatpush1.msra.mxu0 %v6427
        %6460 = vmatprep.subr.mxu0 %v6425
        %6461 = vmatpush1.msra.mxu0 %v6424
        %6462 = vmatprep.subr.mxu0 %v6422
        %6463 = vmatpush1.msra.mxu0 %v6421
        %6464 = vmatprep.subr.mxu0 %v6419
        %6465 = vmatpush1.msra.mxu0 %v6418
        %6466 = vmatprep.subr.mxu0 %v6416
        %6467 = vmatpush1.msra.mxu0 %v6415
        %6468 = vmatprep.subr.mxu0 %v6413
        %6469 = vmatpush1.msra.mxu0 %v6412
        %6470 = vmatprep.subr.mxu0 %v6410
        %6471 = vmatpush1.msra.mxu0 %v6409
        %6472 = vmatprep.subr.mxu0 %v6407
        %6473 = vmatpush1.msra.mxu0 %v6406
        %6474 = vmatprep.subr.mxu0 0.0
        %6475 = vmatpush2.msra.mxu0 0.0
        %6476 = vmatprep.subr.mxu0 0.0
        %6477 = vmatpush2.msra.mxu0 0.0
        %6478 = vmatprep.subr.mxu0 0.0
        %6479 = vmatpush2.msra.mxu0 0.0
        %6480 = vmatprep.subr.mxu0 0.0
        %6481 = vmatpush2.msra.mxu0 0.0
        %6482 = vmatprep.subr.mxu0 0.0
        %6483 = vmatpush2.msra.mxu0 0.0
        %6484 = vmatprep.subr.mxu0 0.0
        %6485 = vmatpush2.msra.mxu0 0.0
        %6486 = vmatprep.subr.mxu0 0.0
        %6487 = vmatpush2.msra.mxu0 0.0
        %6488 = vmatprep.subr.mxu0 0.0
        %6489 = vmatpush2.msra.mxu0 0.0
        %6490 = vmatprep.subr.mxu0 0.0
        %6491 = vmatpush2.msra.mxu0 0.0
        %6492 = vmatprep.subr.mxu0 0.0
        %6493 = vmatpush2.msra.mxu0 0.0
        %6494 = vmatprep.subr.mxu0 0.0
        %6495 = vmatpush2.msra.mxu0 0.0
        %6496 = vmatprep.subr.mxu0 0.0
        %6497 = vmatpush2.msra.mxu0 0.0
        %6498 = vmatprep.subr.mxu0 0.0
        %6499 = vmatpush2.msra.mxu0 0.0
        %6500 = vmatprep.subr.mxu0 0.0
        %6501 = vmatpush2.msra.mxu0 0.0
        %6502 = vmatprep.subr.mxu0 0.0
        %6503 = vmatpush2.msra.mxu0 0.0
        %6504 = vmatprep.subr.mxu0 0.0
        %6505 = vmatpush2.msra.mxu0 0.0
        %6506 = vmatprep.mubr.f32.mxu0 0.0
        %6507 = vmatmul.mubr.f32.gmra.mxu0 %v6440
        %v6508 = vpop.f32.mrf.mxu0
        %v6509 = vadd.f32 %v6436, %v6508
        %v6510 = vpop.f32.mrf.mxu0
        %v6511 = vadd.f32 %v6436, %v6510
        %6512 = vdwg.mxu0
        %6513 = vmatprep.subr.mxu0 0.0
        %6514 = vmatpush1.msra.mxu0 0.0
        %6515 = vmatprep.subr.mxu0 0.0
        %6516 = vmatpush1.msra.mxu0 0.0
        %6517 = vmatprep.subr.mxu0 0.0
        %6518 = vmatpush1.msra.mxu0 0.0
        %6519 = vmatprep.subr.mxu0 0.0
        %6520 = vmatpush1.msra.mxu0 0.0
        %6521 = vmatprep.subr.mxu0 0.0
        %6522 = vmatpush1.msra.mxu0 0.0
        %6523 = vmatprep.subr.mxu0 0.0
        %6524 = vmatpush1.msra.mxu0 0.0
        %6525 = vmatprep.subr.mxu0 0.0
        %6526 = vmatpush1.msra.mxu0 0.0
        %6527 = vmatprep.subr.mxu0 0.0
        %6528 = vmatpush1.msra.mxu0 %v6432
        %6529 = vmatprep.subr.mxu0 0.0
        %6530 = vmatpush1.msra.mxu0 %v6429
        %6531 = vmatprep.subr.mxu0 0.0
        %6532 = vmatpush1.msra.mxu0 %v6426
        %6533 = vmatprep.subr.mxu0 0.0
        %6534 = vmatpush1.msra.mxu0 %v6423
        %6535 = vmatprep.subr.mxu0 0.0
        %6536 = vmatpush1.msra.mxu0 %v6420
        %6537 = vmatprep.subr.mxu0 0.0
        %6538 = vmatpush1.msra.mxu0 %v6417
        %6539 = vmatprep.subr.mxu0 0.0
        %6540 = vmatpush1.msra.mxu0 %v6414
        %6541 = vmatprep.subr.mxu0 0.0
        %6542 = vmatpush1.msra.mxu0 %v6411
        %6543 = vmatprep.subr.mxu0 0.0
        %6544 = vmatpush1.msra.mxu0 %v6408
        %6545 = vmatprep.subr.mxu0 0.0
        %6546 = vmatpush2.msra.mxu0 0.0
        %6547 = vmatprep.subr.mxu0 0.0
        %6548 = vmatpush2.msra.mxu0 0.0
        %6549 = vmatprep.subr.mxu0 0.0
        %6550 = vmatpush2.msra.mxu0 0.0
        %6551 = vmatprep.subr.mxu0 0.0
        %6552 = vmatpush2.msra.mxu0 0.0
        %6553 = vmatprep.subr.mxu0 0.0
        %6554 = vmatpush2.msra.mxu0 0.0
        %6555 = vmatprep.subr.mxu0 0.0
        %6556 = vmatpush2.msra.mxu0 0.0
        %6557 = vmatprep.subr.mxu0 0.0
        %6558 = vmatpush2.msra.mxu0 0.0
        %6559 = vmatprep.subr.mxu0 0.0
        %6560 = vmatpush2.msra.mxu0 0.0
        %6561 = vmatprep.subr.mxu0 0.0
        %6562 = vmatpush2.msra.mxu0 0.0
        %6563 = vmatprep.subr.mxu0 0.0
        %6564 = vmatpush2.msra.mxu0 0.0
        %6565 = vmatprep.subr.mxu0 0.0
        %6566 = vmatpush2.msra.mxu0 0.0
        %6567 = vmatprep.subr.mxu0 0.0
        %6568 = vmatpush2.msra.mxu0 0.0
        %6569 = vmatprep.subr.mxu0 0.0
        %6570 = vmatpush2.msra.mxu0 0.0
        %6571 = vmatprep.subr.mxu0 0.0
        %6572 = vmatpush2.msra.mxu0 0.0
        %6573 = vmatprep.subr.mxu0 0.0
        %6574 = vmatpush2.msra.mxu0 0.0
        %6575 = vmatprep.subr.mxu0 0.0
        %6576 = vmatpush2.msra.mxu0 0.0
        %6577 = vmatprep.mubr.f32.mxu0 0.0
        %6578 = vmatmul.mubr.f32.gmra.mxu0 %v6440
        %v6579 = vpop.f32.mrf.mxu0
        %v6580 = vadd.f32 %v6436, %v6579
        %v6581 = vpop.f32.mrf.mxu0
        %6582 = vdwg.mxu0
        %v6583 = vld [vmem:[%s627] sm:$0xff]
        %v6584 = vld [vmem:[%s627 + $0x8] sm:$0xff]
        %v6585 = vld [vmem:[%s627 + $0x10] sm:$0xff]
        %v6586 = vmul.f32 %v6509, 0.2
        %v6587 = vmul.f32 %v6511, 0.2
        %v6588 = vmul.f32 %v6580, 0.2
        %v6589 = vadd.f32 %v6586, %v6583
        %v6590 = vadd.f32 %v6587, %v6584
        %v6591 = vadd.f32 %v6588, %v6585
        %6592 = vst [vmem:[%s622] sm:$0xff] %v6589
        %6593 = vst [vmem:[%s622 + $0x8] sm:$0xff] %v6590
        %6594 = vst.msk [vmem:[%s622 + $0x10] sm:$0xff] %vm639, %v6591
        %s6595 = sand.u32 %s467, 1
        %s6596 = scalar_lea.sflag [#allocation5], %s6595
        %s6597 = sand.u32 %s467, 1
        %s6598 = smul.addr %s6597, 24
        %s6599 = scalar_lea.vmem [#allocation4], %s6598
        // Predicated region
        $region101: #{tpu_custom_call.1} parent=99 // pred_check
          %p6600 = pneg %p477
        $region102: #{tpu_custom_call.1} parent=99 // pred_check_branch
          %6602 = sbr.rel (%p6600) target = $region104
        $region103: #{tpu_custom_call.1} parent=99 // pred_region
          %s6604 = ssub.s32 384, 384
          %6605 = vsyncadd %s6596, %s6604
          %s6606 = smul.addr %s34, 3
          %s6607 = smul.addr %s6606, 128
          %s6608 = scalar_lea.hbm %s20, %s6607
          %s6610 = sshll.u32 %s6599, 4
          %s6611 = int_to_ptr.vmem [resolvable:$true] %s6610
          %6613 = dma.vmem_to_hbm [thread:$0]  %s6611, 384, %s6608, %s6596
        $region104: #{tpu_custom_call.1} parent=99 // pred_fallthru
          _
      $region100: #{tpu_custom_call.1} parent=5 // pred_fallthru
        _
      %p6614 = scmp.le.s32.totalorder 2, %s29
      // Predicated region
      $region105: #{tpu_custom_call.1} parent=5 // pred_check
        %p6615 = pneg %p6614
      $region106: #{tpu_custom_call.1} parent=5 // pred_check_branch
        %6617 = sbr.rel (%p6615) target = $region108
      $region107: #{tpu_custom_call.1} parent=5 // pred_region
        %s6618 = ssub.s32 %s29, 2
        // Predicated region
        $region109: #{tpu_custom_call.1} parent=107 // pred_check
          %p6619 = pneg %p483
        $region110: #{tpu_custom_call.1} parent=107 // pred_check_branch
          %6621 = sbr.rel (%p6619) target = $region112
        $region111: #{tpu_custom_call.1} parent=107 // pred_region
          %s6622 = sand.u32 %s468, 1
          %s6623 = scalar_lea.sflag [#allocation5], %s6622
          %s6624 = sand.u32 %s468, 1
          %s6625 = smul.addr %s6624, 24
          %s6626 = scalar_lea.vmem [#allocation4], %s6625
          %6627 = dma.done %s6623, 384
        $region112: #{tpu_custom_call.1} parent=107 // pred_fallthru
          _
      $region108: #{tpu_custom_call.1} parent=5 // pred_fallthru
        _
    $region6: #{tpu_custom_call.1} parent=1 // loop_footer
      %s33 = sadd.s32 1, %s29
    $region7: #{tpu_custom_call.1} parent=1 // loop_footer_branch
      %28 = sbr.rel target = $region3
    $region8: #{tpu_custom_call.1} parent=1 // loop_exit
      _
    %6628 = vsyncpa [#allocation5], 1
    %s6629 = scalar_lea.sflag [#allocation5], 1
    %6630 = vsyncpa %s6629, 1

</llo_original>
